<compile_context>
chip_gen: v6e
topology: v6e:2x2x1
jax: 0.10.0
libtpu: 0.0.40
codegen_flags: <defaults>
</compile_context>

<pallas_src>
import numpy as np
import jax
import jax.numpy as jnp
from jax import lax
from jax.experimental import pallas as pl
from jax.experimental.pallas import tpu as pltpu

# ----------------------------- configuration -------------------------------
B, T, H, W, N = 2, 8, 16, 16, 16
GRID_CIN, GRID_CHID, GRID_COUT = 4, 8, 4
GRAPH_DIN, GRAPH_DHID, GRAPH_DOUT = 8, 32, 8
GRID_T, GRAPH_T = 3, 4     # t_prime for grid / graph decoders

H_OFF = 8                  # sublane-aligned offset of the H interior in the volumes
VOL_H = 32                 # padded H extent (>= H_OFF + H + 1)
WCIN = GRID_CIN * W        # 64  lane-packed 4-channel width
WCHID = GRID_CHID * W      # 128 lane-packed 8-channel width
WCOUT = GRID_COUT * W      # 64  (all 4 channels kept lane-dense; slice to 3 outside)
TOK = B * GRAPH_T * N      # 128 graph tokens (B folded onto lanes)


# ----------------------------- fused Pallas kernel --------------------------
def _fused_forward_kernel(
        xg_ref,
        eb1_ref, ec1_ref, eb2_ref, ec2_ref,
        db1_ref, dc1_ref, db2_ref, dc2_ref,
        gx_ref, gw1, gb1, gw2, gb2, gw3, gb3, gw4, gb4, gwt, gbt,
        grid_out_ref, graph_out_ref,
        xvol, hvol):
    D, Hh, Wd = T, H, W
    DH = D * Hh

    # ---- zero ONLY the conv halos (interiors are fully rewritten below).  Done
    # every step (cheap) so it is safe however the parallel grid is split over cores.
    def _zero_halo(vol, lanes):
        zp = jnp.zeros((1, Hh + 2, lanes), jnp.float32)
        vol[pl.ds(0, 1), pl.ds(H_OFF - 1, Hh + 2), :] = zp
        vol[pl.ds(D + 1, 1), pl.ds(H_OFF - 1, Hh + 2), :] = zp
        zr = jnp.zeros((D, 1, lanes), jnp.float32)
        vol[pl.ds(1, D), pl.ds(H_OFF - 1, 1), :] = zr
        vol[pl.ds(1, D), pl.ds(H_OFF + Hh, 1), :] = zr

    _zero_halo(xvol, WCIN)
    _zero_halo(hvol, WCHID)

    # One 3x3x3 conv (same padding) as 9 banded matmuls with K = lane width.
    def _conv9(vol, band_ref, bias_ref, k_lanes, n_lanes):
        acc = jnp.zeros((DH, n_lanes), jnp.float32)
        t = 0
        for kd in range(3):
            for kh in range(3):
                a = vol[pl.ds(kd, D), pl.ds(H_OFF - 1 + kh, Hh), :].reshape(DH, k_lanes)
                acc = acc + jnp.dot(a, band_ref[t],
                                    preferred_element_type=jnp.float32)
                t += 1
        return acc + bias_ref[...]

    # ---- GridEncoder: conv1 + ReLU + conv2 + ReLU ----
    xvol[pl.ds(1, D), pl.ds(H_OFF, Hh), :] = xg_ref[...]          # in-kernel padding
    h1 = jnp.maximum(_conv9(xvol, eb1_ref, ec1_ref, WCIN, WCHID), 0.0)
    hvol[pl.ds(1, D), pl.ds(H_OFF, Hh), :] = h1.reshape(D, Hh, WCHID)
    enc = jnp.maximum(_conv9(hvol, eb2_ref, ec2_ref, WCHID, WCOUT), 0.0)

    # ---- in-kernel (T,C)->(C',D') permute/reshape reinterpretation ----
    # enc rows are (t, h), lanes are (c*W + w); decoder input needs rows (d', h) and
    # lanes (c'*W + w) with 4*t + c = 8*c' + d'.  With channel-major lane packing
    # this is a pure 16x16 lane-block tile-grid transpose (no cross-lane arithmetic).
    e3 = enc.reshape(D, Hh, WCOUT)
    for dp in range(D):                       # destination depth d'
        a_i, c_s = dp // 4, dp % 4            # t = 2*c' + a_i, source channel c_s
        pieces = [e3[2 * cp + a_i: 2 * cp + a_i + 1, :, c_s * Wd:(c_s + 1) * Wd]
                  for cp in range(GRID_COUT)]
        xvol[pl.ds(1 + dp, 1), pl.ds(H_OFF, Hh), :] = jnp.concatenate(pieces, axis=-1)

    # ---- GridDecoder: conv1 + ReLU + conv2 (all 4 channels, lane-dense) ----
    h2 = jnp.maximum(_conv9(xvol, db1_ref, dc1_ref, WCIN, WCHID), 0.0)
    hvol[pl.ds(1, D), pl.ds(H_OFF, Hh), :] = h2.reshape(D, Hh, WCHID)
    grid_out_ref[...] = _conv9(hvol, db2_ref, dc2_ref, WCHID, WCOUT).astype(
        grid_out_ref.dtype)

    # ---- Graph encoder + decoder: 5 tiny matmuls, tokens (B*T'*N = 128) on lanes.
    # Recomputed each step and written to this step's own output block so the
    # batch-parallel grid stays race free on multi-TensorCore chips.
    x = gx_ref[...]
    hh = jnp.maximum(jnp.dot(gw1[...], x, preferred_element_type=jnp.float32) + gb1[...], 0.0)
    ee = jnp.maximum(jnp.dot(gw2[...], hh, preferred_element_type=jnp.float32) + gb2[...], 0.0)
    gg = jnp.maximum(jnp.dot(gw3[...], ee, preferred_element_type=jnp.float32) + gb3[...], 0.0)
    yy = jnp.dot(gw4[...], gg, preferred_element_type=jnp.float32) + gb4[...]
    oo = jnp.dot(gwt[...], yy, preferred_element_type=jnp.float32) + gbt[...]
    graph_out_ref[...] = oo.astype(graph_out_ref.dtype)


def _const_spec(shape):
    nd = len(shape)
    return pl.BlockSpec(shape, lambda b, _nd=nd: (0,) * _nd)


# ----------------------------- Pallas forward -------------------------------
def pallas_forward(grid_input, graph_input, pp):
    Bn, Tn, Cin, Hh, Ww = grid_input.shape

    # grid input -> (B, T, H, C*W) with channel-major lane packing
    xg = jnp.transpose(grid_input, (0, 1, 3, 2, 4)).reshape(Bn, Tn, Hh, Cin * Ww)
    # graph input: only the first GRAPH_T time steps survive; B folded onto lanes
    gx = graph_input[:, :GRAPH_T].reshape(Bn * GRAPH_T * N, GRAPH_DIN)
    gxt = jnp.transpose(gx, (1, 0))                                 # (Din, 128)

    (gw1, gb1), (gw2, gb2), (gw3, gb3), (gw4, gb4), (gwt, gbt) = pp['graph']

    conv_flops = 2 * 9 * (T * H) * (WCIN * WCHID + WCHID * WCOUT) * 2
    graph_flops = 2 * TOK * (GRAPH_DHID * GRAPH_DIN + GRAPH_DOUT * GRAPH_DHID
                             + GRAPH_DHID * GRAPH_DOUT + GRAPH_DOUT * GRAPH_DHID
                             + GRAPH_T * GRAPH_DOUT)
    flops = B * (conv_flops + graph_flops)
    bytes_accessed = 4 * (B * T * H * WCIN + GRAPH_DIN * TOK
                          + 2 * 9 * (WCIN * WCHID + WCHID * WCOUT)
                          + B * T * H * WCOUT + B * GRAPH_T * TOK)

    grid_raw, graph_raw = pl.pallas_call(
        _fused_forward_kernel,
        out_shape=(jax.ShapeDtypeStruct((Bn, Tn * Hh, WCOUT), jnp.float32),
                   jax.ShapeDtypeStruct((Bn, GRAPH_T, TOK), jnp.float32)),
        grid=(Bn,),
        in_specs=[
            pl.BlockSpec((None, Tn, Hh, Cin * Ww), lambda b: (b, 0, 0, 0)),
            _const_spec(pp['enc_band1'].shape), _const_spec(pp['enc_bias1'].shape),
            _const_spec(pp['enc_band2'].shape), _const_spec(pp['enc_bias2'].shape),
            _const_spec(pp['dec_band1'].shape), _const_spec(pp['dec_bias1'].shape),
            _const_spec(pp['dec_band2'].shape), _const_spec(pp['dec_bias2'].shape),
            _const_spec(gxt.shape),
            _const_spec(gw1.shape), _const_spec(gb1.shape),
            _const_spec(gw2.shape), _const_spec(gb2.shape),
            _const_spec(gw3.shape), _const_spec(gb3.shape),
            _const_spec(gw4.shape), _const_spec(gb4.shape),
            _const_spec(gwt.shape), _const_spec(gbt.shape),
        ],
        out_specs=(
            pl.BlockSpec((None, Tn * Hh, WCOUT), lambda b: (b, 0, 0)),
            pl.BlockSpec((None, GRAPH_T, TOK), lambda b: (b, 0, 0)),
        ),
        scratch_shapes=[
            pltpu.VMEM((Tn + 2, VOL_H, WCIN), jnp.float32),    # reused: enc in / dec in
            pltpu.VMEM((Tn + 2, VOL_H, WCHID), jnp.float32),   # reused: enc hid / dec hid
        ],
        compiler_params=pltpu.CompilerParams(dimension_semantics=("parallel",)),
        cost_estimate=pl.CostEstimate(flops=flops, transcendentals=0,
                                      bytes_accessed=bytes_accessed),
    )(xg,
      pp['enc_band1'], pp['enc_bias1'], pp['enc_band2'], pp['enc_bias2'],
      pp['dec_band1'], pp['dec_bias1'], pp['dec_band2'], pp['dec_bias2'],
      gxt, gw1, gb1, gw2, gb2, gw3, gb3, gw4, gb4, gwt, gbt)

    # grid output: rows (d', h), lanes (c*W + w) -> NCDHW, keep first GRID_T channels
    g = grid_raw.reshape(Bn, Tn, Hh, GRID_COUT, Ww)
    grid_pred = jnp.transpose(g, (0, 3, 1, 2, 4))[:, :GRID_T]
    # graph output: every step wrote an identical copy; take step 0's block
    go = graph_raw[0].reshape(GRAPH_T, Bn, GRAPH_T, N)
    graph_pred = jnp.transpose(go, (1, 2, 3, 0))
    return grid_pred, graph_pred


# --------------------------- parameter creation -----------------------------
def init_params(key):
    ks = jax.random.split(key, 16)

    def lin(k, out_d, in_d):
        k1, k2 = jax.random.split(k)
        s = 1.0 / jnp.sqrt(jnp.float32(in_d))
        return (jax.random.uniform(k1, (out_d, in_d), jnp.float32, -s, s),
                jax.random.uniform(k2, (out_d,), jnp.float32, -s, s))

    def conv(k, out_c, in_c):
        k1, k2 = jax.random.split(k)
        s = 1.0 / jnp.sqrt(jnp.float32(in_c * 27))
        return (jax.random.uniform(k1, (out_c, in_c, 3, 3, 3), jnp.float32, -s, s),
                jax.random.uniform(k2, (out_c,), jnp.float32, -s, s))

    p = {}
    # GridEncoder / GridDecoder conv weights (PyTorch OIDHW layout).
    p['ge_w1'], p['ge_b1'] = conv(ks[0], GRID_CHID, GRID_CIN)
    p['ge_w2'], p['ge_b2'] = conv(ks[1], GRID_COUT, GRID_CHID)
    p['gd_w1'], p['gd_b1'] = conv(ks[2], GRID_CHID, GRID_COUT)
    p['gd_w2'], p['gd_b2'] = conv(ks[3], GRID_COUT, GRID_CHID)
    # TODO(synk): GridDecoder.upsample (ConvTranspose3d) is defined in __init__ but
    # never used in forward(), so it is intentionally not instantiated here.
    # GraphEncoder / GraphDecoder linear weights (PyTorch (out, in) layout).
    p['gre_w1'], p['gre_b1'] = lin(ks[4], GRAPH_DHID, GRAPH_DIN)
    p['gre_w2'], p['gre_b2'] = lin(ks[5], GRAPH_DOUT, GRAPH_DHID)
    p['grd_w1'], p['grd_b1'] = lin(ks[6], GRAPH_DHID, GRAPH_DOUT)
    p['grd_w2'], p['grd_b2'] = lin(ks[7], GRAPH_DOUT, GRAPH_DHID)
    p['grd_wt'], p['grd_bt'] = lin(ks[8], GRAPH_T, GRAPH_DOUT)
    return p


def _band_weights(w_oidhw, w_dim):
    """PyTorch (O, I, 3, 3, 3) conv weight -> (9, w_dim*I, w_dim*O) banded matrices
    for channel-major lane packing lane = c*w_dim + w (kw folded into the band)."""
    wn = np.asarray(jax.device_get(w_oidhw)).astype(np.float32)
    bands = np.zeros((9, wn.shape[1] * w_dim, wn.shape[0] * w_dim), np.float32)
    for kd in range(3):
        for kh in range(3):
            for kw in range(3):
                shift = np.eye(w_dim, k=1 - kw, dtype=np.float32)   # [w_in, w_out]
                bands[kd * 3 + kh] += np.kron(wn[:, :, kd, kh, kw].T, shift)
    return jnp.asarray(bands)


def _tile_bias(b, w_dim):
    bn = np.asarray(jax.device_get(b)).astype(np.float32)
    return jnp.asarray(np.repeat(bn, w_dim).reshape(1, -1))          # (1, O*w_dim)


def prepare_pallas_params(p):
    """One-time (outside jit) weight re-layout: no per-forward transposes remain."""
    pp = {}
    pp['enc_band1'] = _band_weights(p['ge_w1'], W)
    pp['enc_bias1'] = _tile_bias(p['ge_b1'], W)
    pp['enc_band2'] = _band_weights(p['ge_w2'], W)
    pp['enc_bias2'] = _tile_bias(p['ge_b2'], W)
    pp['dec_band1'] = _band_weights(p['gd_w1'], W)
    pp['dec_bias1'] = _tile_bias(p['gd_b1'], W)
    # Keep ALL 4 decoder output channels (lane-dense 64-wide matmul / store); the
    # GRID_T slice is applied in the wrapper.
    pp['dec_band2'] = _band_weights(p['gd_w2'], W)
    pp['dec_bias2'] = _tile_bias(p['gd_b2'], W)
    # Graph MLP weights: PyTorch (out, in) layout used as-is in transposed orientation.
    pp['graph'] = [
        (p['gre_w1'], p['gre_b1'].reshape(-1, 1)),
        (p['gre_w2'], p['gre_b2'].reshape(-1, 1)),
        (p['grd_w1'], p['grd_b1'].reshape(-1, 1)),
        (p['grd_w2'], p['grd_b2'].reshape(-1, 1)),
        (p['grd_wt'], p['grd_bt'].reshape(-1, 1)),
    ]
    return pp


# ---------------------- pure-JAX reference (PyTorch semantics) ---------------
def _conv3d_ref(x_ncdhw, w_oidhw, b):
    out = lax.conv_general_dilated(
        x_ncdhw, w_oidhw, window_strides=(1, 1, 1),
        padding=((1, 1), (1, 1), (1, 1)),
        dimension_numbers=('NCDHW', 'OIDHW', 'NCDHW'),
        precision=lax.Precision.HIGHEST)
    return out + b[None, :, None, None, None]


def reference_forward(grid_input, graph_input, p):
    # GridEncoder
    x = jnp.transpose(grid_input, (0, 2, 1, 3, 4))
    x = jax.nn.relu(_conv3d_ref(x, p['ge_w1'], p['ge_b1']))
    x = jax.nn.relu(_conv3d_ref(x, p['ge_w2'], p['ge_b2']))
    grid_encoded = x
    # GraphEncoder
    Bg, Tg, Ng, Dg = graph_input.shape
    g = graph_input.reshape(Bg * Tg, Ng, Dg)
    hi = lax.Precision.HIGHEST
    g = jax.nn.relu(jnp.matmul(g, p['gre_w1'].T, precision=hi) + p['gre_b1'])
    g = jax.nn.relu(jnp.matmul(g, p['gre_w2'].T, precision=hi) + p['gre_b2'])
    graph_encoded = g.reshape(Bg, Tg, Ng, -1)
    # GridDecoder
    y = jnp.transpose(grid_encoded, (0, 2, 1, 3, 4))
    y = y.reshape(y.shape[0], y.shape[2], y.shape[1], y.shape[3], y.shape[4])
    y = jax.nn.relu(_conv3d_ref(y, p['gd_w1'], p['gd_b1']))
    y = _conv3d_ref(y, p['gd_w2'], p['gd_b2'])
    grid_pred = y[:, :GRID_T]
    # GraphDecoder
    h = graph_encoded.reshape(Bg * Tg, Ng, -1)
    h = jax.nn.relu(jnp.matmul(h, p['grd_w1'].T, precision=hi) + p['grd_b1'])
    h = jnp.matmul(h, p['grd_w2'].T, precision=hi) + p['grd_b2']
    h = h.reshape(Bg, Tg, Ng, -1)
    h = jnp.matmul(h, p['grd_wt'].T, precision=hi) + p['grd_bt']
    graph_pred = h[:, :GRAPH_T]
    return grid_pred, graph_pred


# --------------------------------- main -------------------------------------
if __name__ == "__main__":
    key = jax.random.PRNGKey(0)
    k_grid, k_graph = jax.random.split(key)
    grid_input = jax.random.normal(k_grid, (B, T, GRID_CIN, H, W), jnp.float32)
    graph_input = jax.random.normal(k_graph, (B, T, N, GRAPH_DIN), jnp.float32)
    params = init_params(jax.random.PRNGKey(42))
    pparams = prepare_pallas_params(params)   # one-time weight re-layout (outside jit)

    fwd = jax.jit(pallas_forward)
    grid_pred, graph_pred = fwd(grid_input, graph_input, pparams)
    jax.block_until_ready((grid_pred, graph_pred))

    assert grid_pred.shape == (B, GRID_T, T, H, W), grid_pred.shape
    assert graph_pred.shape == (B, GRAPH_T, N, GRAPH_T), graph_pred.shape

    ref_grid, ref_graph = reference_forward(grid_input, graph_input, params)
    assert jnp.allclose(grid_pred, ref_grid, atol=2e-3, rtol=2e-3), \
        float(jnp.max(jnp.abs(grid_pred - ref_grid)))
    assert jnp.allclose(graph_pred, ref_graph, atol=2e-3, rtol=2e-3), \
        float(jnp.max(jnp.abs(graph_pred - ref_graph)))

    print("KERNEL_OK")
</pallas_src>

<mosaic_0001>
module attributes {stable_mosaic.version = 11 : i64} {
  func.func @_fused_forward_kernel(%arg0: i32, %arg1: memref<1x8x16x64xf32, #tpu.memory_space<vmem>>, %arg2: memref<9x64x128xf32, #tpu.memory_space<vmem>>, %arg3: memref<1x128xf32, #tpu.memory_space<vmem>>, %arg4: memref<9x128x64xf32, #tpu.memory_space<vmem>>, %arg5: memref<1x64xf32, #tpu.memory_space<vmem>>, %arg6: memref<9x64x128xf32, #tpu.memory_space<vmem>>, %arg7: memref<1x128xf32, #tpu.memory_space<vmem>>, %arg8: memref<9x128x64xf32, #tpu.memory_space<vmem>>, %arg9: memref<1x64xf32, #tpu.memory_space<vmem>>, %arg10: memref<8x128xf32, #tpu.memory_space<vmem>>, %arg11: memref<32x8xf32, #tpu.memory_space<vmem>>, %arg12: memref<32x1xf32, #tpu.memory_space<vmem>>, %arg13: memref<8x32xf32, #tpu.memory_space<vmem>>, %arg14: memref<8x1xf32, #tpu.memory_space<vmem>>, %arg15: memref<32x8xf32, #tpu.memory_space<vmem>>, %arg16: memref<32x1xf32, #tpu.memory_space<vmem>>, %arg17: memref<8x32xf32, #tpu.memory_space<vmem>>, %arg18: memref<8x1xf32, #tpu.memory_space<vmem>>, %arg19: memref<4x8xf32, #tpu.memory_space<vmem>>, %arg20: memref<4x1xf32, #tpu.memory_space<vmem>>, %arg21: memref<1x128x64xf32, #tpu.memory_space<vmem>>, %arg22: memref<1x4x128xf32, #tpu.memory_space<vmem>>, %arg23: memref<10x32x64xf32, #tpu.memory_space<vmem>>, %arg24: memref<10x32x128xf32, #tpu.memory_space<vmem>>) attributes {dimension_semantics = [#tpu.dimension_semantics<parallel>], iteration_bounds = array<i64: 2>, scalar_prefetch = 0 : i64, scratch_operands = 2 : i64, tpu.core_type = #tpu.core_type<tc>, window_params = [{transform_indices = @transform_0, window_bounds = array<i64: 1, 8, 16, 64>}, {pipeline_mode = #tpu.pipeline_mode<synchronous>, transform_indices = @transform_1, window_bounds = array<i64: 9, 64, 128>}, {pipeline_mode = #tpu.pipeline_mode<synchronous>, transform_indices = @transform_2, window_bounds = array<i64: 1, 128>}, {pipeline_mode = #tpu.pipeline_mode<synchronous>, transform_indices = @transform_3, window_bounds = array<i64: 9, 128, 64>}, {pipeline_mode = #tpu.pipeline_mode<synchronous>, transform_indices = @transform_4, window_bounds = array<i64: 1, 64>}, {pipeline_mode = #tpu.pipeline_mode<synchronous>, transform_indices = @transform_5, window_bounds = array<i64: 9, 64, 128>}, {pipeline_mode = #tpu.pipeline_mode<synchronous>, transform_indices = @transform_6, window_bounds = array<i64: 1, 128>}, {pipeline_mode = #tpu.pipeline_mode<synchronous>, transform_indices = @transform_7, window_bounds = array<i64: 9, 128, 64>}, {pipeline_mode = #tpu.pipeline_mode<synchronous>, transform_indices = @transform_8, window_bounds = array<i64: 1, 64>}, {pipeline_mode = #tpu.pipeline_mode<synchronous>, transform_indices = @transform_9, window_bounds = array<i64: 8, 128>}, {pipeline_mode = #tpu.pipeline_mode<synchronous>, transform_indices = @transform_10, window_bounds = array<i64: 32, 8>}, {pipeline_mode = #tpu.pipeline_mode<synchronous>, transform_indices = @transform_11, window_bounds = array<i64: 32, 1>}, {pipeline_mode = #tpu.pipeline_mode<synchronous>, transform_indices = @transform_12, window_bounds = array<i64: 8, 32>}, {pipeline_mode = #tpu.pipeline_mode<synchronous>, transform_indices = @transform_13, window_bounds = array<i64: 8, 1>}, {pipeline_mode = #tpu.pipeline_mode<synchronous>, transform_indices = @transform_14, window_bounds = array<i64: 32, 8>}, {pipeline_mode = #tpu.pipeline_mode<synchronous>, transform_indices = @transform_15, window_bounds = array<i64: 32, 1>}, {pipeline_mode = #tpu.pipeline_mode<synchronous>, transform_indices = @transform_16, window_bounds = array<i64: 8, 32>}, {pipeline_mode = #tpu.pipeline_mode<synchronous>, transform_indices = @transform_17, window_bounds = array<i64: 8, 1>}, {pipeline_mode = #tpu.pipeline_mode<synchronous>, transform_indices = @transform_18, window_bounds = array<i64: 4, 8>}, {pipeline_mode = #tpu.pipeline_mode<synchronous>, transform_indices = @transform_19, window_bounds = array<i64: 4, 1>}, {transform_indices = @transform_20, window_bounds = array<i64: 1, 128, 64>}, {transform_indices = @transform_21, window_bounds = array<i64: 1, 4, 128>}]} {
    %cst = arith.constant 0.000000e+00 : f32
    %0 = vector.broadcast %cst : f32 to vector<1x18x64xf32>
    %c0 = arith.constant 0 : index
    %c7 = arith.constant 7 : index
    %c0_0 = arith.constant 0 : index
    %1 = vector.load %arg23[%c0, %c7, %c0_0] : memref<10x32x64xf32, #tpu.memory_space<vmem>>, vector<1x18x64xf32>
    tpu.vector_store %arg23[%c0, %c7, %c0_0], %0 {strides = array<i32>} : memref<10x32x64xf32, #tpu.memory_space<vmem>>, vector<1x18x64xf32>,
    %c9 = arith.constant 9 : index
    %c7_1 = arith.constant 7 : index
    %c0_2 = arith.constant 0 : index
    %2 = vector.load %arg23[%c9, %c7_1, %c0_2] : memref<10x32x64xf32, #tpu.memory_space<vmem>>, vector<1x18x64xf32>
    tpu.vector_store %arg23[%c9, %c7_1, %c0_2], %0 {strides = array<i32>} : memref<10x32x64xf32, #tpu.memory_space<vmem>>, vector<1x18x64xf32>,
    %cst_3 = arith.constant 0.000000e+00 : f32
    %3 = vector.broadcast %cst_3 : f32 to vector<8x1x64xf32>
    %c1 = arith.constant 1 : index
    %c7_4 = arith.constant 7 : index
    %c0_5 = arith.constant 0 : index
    %4 = vector.load %arg23[%c1, %c7_4, %c0_5] : memref<10x32x64xf32, #tpu.memory_space<vmem>>, vector<8x1x64xf32>
    tpu.vector_store %arg23[%c1, %c7_4, %c0_5], %3 {strides = array<i32>} : memref<10x32x64xf32, #tpu.memory_space<vmem>>, vector<8x1x64xf32>,
    %c1_6 = arith.constant 1 : index
    %c24 = arith.constant 24 : index
    %c0_7 = arith.constant 0 : index
    %5 = vector.load %arg23[%c1_6, %c24, %c0_7] : memref<10x32x64xf32, #tpu.memory_space<vmem>>, vector<8x1x64xf32>
    tpu.vector_store %arg23[%c1_6, %c24, %c0_7], %3 {strides = array<i32>} : memref<10x32x64xf32, #tpu.memory_space<vmem>>, vector<8x1x64xf32>,
    %cst_8 = arith.constant 0.000000e+00 : f32
    %6 = vector.broadcast %cst_8 : f32 to vector<1x18x128xf32>
    %c0_9 = arith.constant 0 : index
    %c7_10 = arith.constant 7 : index
    %c0_11 = arith.constant 0 : index
    %7 = vector.load %arg24[%c0_9, %c7_10, %c0_11] : memref<10x32x128xf32, #tpu.memory_space<vmem>>, vector<1x18x128xf32>
    tpu.vector_store %arg24[%c0_9, %c7_10, %c0_11], %6 {strides = array<i32>} : memref<10x32x128xf32, #tpu.memory_space<vmem>>, vector<1x18x128xf32>,
    %c9_12 = arith.constant 9 : index
    %c7_13 = arith.constant 7 : index
    %c0_14 = arith.constant 0 : index
    %8 = vector.load %arg24[%c9_12, %c7_13, %c0_14] : memref<10x32x128xf32, #tpu.memory_space<vmem>>, vector<1x18x128xf32>
    tpu.vector_store %arg24[%c9_12, %c7_13, %c0_14], %6 {strides = array<i32>} : memref<10x32x128xf32, #tpu.memory_space<vmem>>, vector<1x18x128xf32>,
    %cst_15 = arith.constant 0.000000e+00 : f32
    %9 = vector.broadcast %cst_15 : f32 to vector<8x1x128xf32>
    %c1_16 = arith.constant 1 : index
    %c7_17 = arith.constant 7 : index
    %c0_18 = arith.constant 0 : index
    %10 = vector.load %arg24[%c1_16, %c7_17, %c0_18] : memref<10x32x128xf32, #tpu.memory_space<vmem>>, vector<8x1x128xf32>
    tpu.vector_store %arg24[%c1_16, %c7_17, %c0_18], %9 {strides = array<i32>} : memref<10x32x128xf32, #tpu.memory_space<vmem>>, vector<8x1x128xf32>,
    %c1_19 = arith.constant 1 : index
    %c24_20 = arith.constant 24 : index
    %c0_21 = arith.constant 0 : index
    %11 = vector.load %arg24[%c1_19, %c24_20, %c0_21] : memref<10x32x128xf32, #tpu.memory_space<vmem>>, vector<8x1x128xf32>
    tpu.vector_store %arg24[%c1_19, %c24_20, %c0_21], %9 {strides = array<i32>} : memref<10x32x128xf32, #tpu.memory_space<vmem>>, vector<8x1x128xf32>,
    %c0_22 = arith.constant 0 : index
    %c0_23 = arith.constant 0 : index
    %c0_24 = arith.constant 0 : index
    %c0_25 = arith.constant 0 : index
    %12 = vector.load %arg1[%c0_22, %c0_23, %c0_24, %c0_25] : memref<1x8x16x64xf32, #tpu.memory_space<vmem>>, vector<1x8x16x64xf32>
    %13 = vector.shape_cast %12 : vector<1x8x16x64xf32> to vector<8x16x64xf32>
    %c1_26 = arith.constant 1 : index
    %c8 = arith.constant 8 : index
    %c0_27 = arith.constant 0 : index
    %14 = vector.load %arg23[%c1_26, %c8, %c0_27] : memref<10x32x64xf32, #tpu.memory_space<vmem>>, vector<8x16x64xf32>
    tpu.vector_store %arg23[%c1_26, %c8, %c0_27], %13 {strides = array<i32>} : memref<10x32x64xf32, #tpu.memory_space<vmem>>, vector<8x16x64xf32>,
    %cst_28 = arith.constant 0.000000e+00 : f32
    %15 = vector.broadcast %cst_28 : f32 to vector<128x128xf32>
    %c0_29 = arith.constant 0 : index
    %c7_30 = arith.constant 7 : index
    %c0_31 = arith.constant 0 : index
    %16 = vector.load %arg23[%c0_29, %c7_30, %c0_31] : memref<10x32x64xf32, #tpu.memory_space<vmem>>, vector<8x16x64xf32>
    %17 = vector.shape_cast %16 : vector<8x16x64xf32> to vector<128x64xf32>
    %c0_32 = arith.constant 0 : index
    %c0_33 = arith.constant 0 : index
    %c0_34 = arith.constant 0 : index
    %18 = vector.load %arg2[%c0_32, %c0_33, %c0_34] : memref<9x64x128xf32, #tpu.memory_space<vmem>>, vector<1x64x128xf32>
    %19 = vector.shape_cast %18 : vector<1x64x128xf32> to vector<64x128xf32>
    %cst_35 = arith.constant dense<0.000000e+00> : vector<128x128xf32>
    %20 = tpu.matmul %17, %19, %cst_35 {dimension_numbers = #tpu.dot_dimension_numbers<[1], [0], [0], [1], [0, 0, 1, 1], [], []>} : vector<128x64xf32>, vector<64x128xf32>, vector<128x128xf32> -> vector<128x128xf32>
    %21 = arith.addf %15, %20 : vector<128x128xf32>
    %c0_36 = arith.constant 0 : index
    %c8_37 = arith.constant 8 : index
    %c0_38 = arith.constant 0 : index
    %22 = vector.load %arg23[%c0_36, %c8_37, %c0_38] : memref<10x32x64xf32, #tpu.memory_space<vmem>>, vector<8x16x64xf32>
    %23 = vector.shape_cast %22 : vector<8x16x64xf32> to vector<128x64xf32>
    %c1_39 = arith.constant 1 : index
    %c0_40 = arith.constant 0 : index
    %c0_41 = arith.constant 0 : index
    %24 = vector.load %arg2[%c1_39, %c0_40, %c0_41] : memref<9x64x128xf32, #tpu.memory_space<vmem>>, vector<1x64x128xf32>
    %25 = vector.shape_cast %24 : vector<1x64x128xf32> to vector<64x128xf32>
    %cst_42 = arith.constant dense<0.000000e+00> : vector<128x128xf32>
    %26 = tpu.matmul %23, %25, %cst_42 {dimension_numbers = #tpu.dot_dimension_numbers<[1], [0], [0], [1], [0, 0, 1, 1], [], []>} : vector<128x64xf32>, vector<64x128xf32>, vector<128x128xf32> -> vector<128x128xf32>
    %27 = arith.addf %21, %26 : vector<128x128xf32>
    %c0_43 = arith.constant 0 : index
    %c9_44 = arith.constant 9 : index
    %c0_45 = arith.constant 0 : index
    %28 = vector.load %arg23[%c0_43, %c9_44, %c0_45] : memref<10x32x64xf32, #tpu.memory_space<vmem>>, vector<8x16x64xf32>
    %29 = vector.shape_cast %28 : vector<8x16x64xf32> to vector<128x64xf32>
    %c2 = arith.constant 2 : index
    %c0_46 = arith.constant 0 : index
    %c0_47 = arith.constant 0 : index
    %30 = vector.load %arg2[%c2, %c0_46, %c0_47] : memref<9x64x128xf32, #tpu.memory_space<vmem>>, vector<1x64x128xf32>
    %31 = vector.shape_cast %30 : vector<1x64x128xf32> to vector<64x128xf32>
    %cst_48 = arith.constant dense<0.000000e+00> : vector<128x128xf32>
    %32 = tpu.matmul %29, %31, %cst_48 {dimension_numbers = #tpu.dot_dimension_numbers<[1], [0], [0], [1], [0, 0, 1, 1], [], []>} : vector<128x64xf32>, vector<64x128xf32>, vector<128x128xf32> -> vector<128x128xf32>
    %33 = arith.addf %27, %32 : vector<128x128xf32>
    %c1_49 = arith.constant 1 : index
    %c7_50 = arith.constant 7 : index
    %c0_51 = arith.constant 0 : index
    %34 = vector.load %arg23[%c1_49, %c7_50, %c0_51] : memref<10x32x64xf32, #tpu.memory_space<vmem>>, vector<8x16x64xf32>
    %35 = vector.shape_cast %34 : vector<8x16x64xf32> to vector<128x64xf32>
    %c3 = arith.constant 3 : index
    %c0_52 = arith.constant 0 : index
    %c0_53 = arith.constant 0 : index
    %36 = vector.load %arg2[%c3, %c0_52, %c0_53] : memref<9x64x128xf32, #tpu.memory_space<vmem>>, vector<1x64x128xf32>
    %37 = vector.shape_cast %36 : vector<1x64x128xf32> to vector<64x128xf32>
    %cst_54 = arith.constant dense<0.000000e+00> : vector<128x128xf32>
    %38 = tpu.matmul %35, %37, %cst_54 {dimension_numbers = #tpu.dot_dimension_numbers<[1], [0], [0], [1], [0, 0, 1, 1], [], []>} : vector<128x64xf32>, vector<64x128xf32>, vector<128x128xf32> -> vector<128x128xf32>
    %39 = arith.addf %33, %38 : vector<128x128xf32>
    %c1_55 = arith.constant 1 : index
    %c8_56 = arith.constant 8 : index
    %c0_57 = arith.constant 0 : index
    %40 = vector.load %arg23[%c1_55, %c8_56, %c0_57] : memref<10x32x64xf32, #tpu.memory_space<vmem>>, vector<8x16x64xf32>
    %41 = vector.shape_cast %40 : vector<8x16x64xf32> to vector<128x64xf32>
    %c4 = arith.constant 4 : index
    %c0_58 = arith.constant 0 : index
    %c0_59 = arith.constant 0 : index
    %42 = vector.load %arg2[%c4, %c0_58, %c0_59] : memref<9x64x128xf32, #tpu.memory_space<vmem>>, vector<1x64x128xf32>
    %43 = vector.shape_cast %42 : vector<1x64x128xf32> to vector<64x128xf32>
    %cst_60 = arith.constant dense<0.000000e+00> : vector<128x128xf32>
    %44 = tpu.matmul %41, %43, %cst_60 {dimension_numbers = #tpu.dot_dimension_numbers<[1], [0], [0], [1], [0, 0, 1, 1], [], []>} : vector<128x64xf32>, vector<64x128xf32>, vector<128x128xf32> -> vector<128x128xf32>
    %45 = arith.addf %39, %44 : vector<128x128xf32>
    %c1_61 = arith.constant 1 : index
    %c9_62 = arith.constant 9 : index
    %c0_63 = arith.constant 0 : index
    %46 = vector.load %arg23[%c1_61, %c9_62, %c0_63] : memref<10x32x64xf32, #tpu.memory_space<vmem>>, vector<8x16x64xf32>
    %47 = vector.shape_cast %46 : vector<8x16x64xf32> to vector<128x64xf32>
    %c5 = arith.constant 5 : index
    %c0_64 = arith.constant 0 : index
    %c0_65 = arith.constant 0 : index
    %48 = vector.load %arg2[%c5, %c0_64, %c0_65] : memref<9x64x128xf32, #tpu.memory_space<vmem>>, vector<1x64x128xf32>
    %49 = vector.shape_cast %48 : vector<1x64x128xf32> to vector<64x128xf32>
    %cst_66 = arith.constant dense<0.000000e+00> : vector<128x128xf32>
    %50 = tpu.matmul %47, %49, %cst_66 {dimension_numbers = #tpu.dot_dimension_numbers<[1], [0], [0], [1], [0, 0, 1, 1], [], []>} : vector<128x64xf32>, vector<64x128xf32>, vector<128x128xf32> -> vector<128x128xf32>
    %51 = arith.addf %45, %50 : vector<128x128xf32>
    %c2_67 = arith.constant 2 : index
    %c7_68 = arith.constant 7 : index
    %c0_69 = arith.constant 0 : index
    %52 = vector.load %arg23[%c2_67, %c7_68, %c0_69] : memref<10x32x64xf32, #tpu.memory_space<vmem>>, vector<8x16x64xf32>
    %53 = vector.shape_cast %52 : vector<8x16x64xf32> to vector<128x64xf32>
    %c6 = arith.constant 6 : index
    %c0_70 = arith.constant 0 : index
    %c0_71 = arith.constant 0 : index
    %54 = vector.load %arg2[%c6, %c0_70, %c0_71] : memref<9x64x128xf32, #tpu.memory_space<vmem>>, vector<1x64x128xf32>
    %55 = vector.shape_cast %54 : vector<1x64x128xf32> to vector<64x128xf32>
    %cst_72 = arith.constant dense<0.000000e+00> : vector<128x128xf32>
    %56 = tpu.matmul %53, %55, %cst_72 {dimension_numbers = #tpu.dot_dimension_numbers<[1], [0], [0], [1], [0, 0, 1, 1], [], []>} : vector<128x64xf32>, vector<64x128xf32>, vector<128x128xf32> -> vector<128x128xf32>
    %57 = arith.addf %51, %56 : vector<128x128xf32>
    %c2_73 = arith.constant 2 : index
    %c8_74 = arith.constant 8 : index
    %c0_75 = arith.constant 0 : index
    %58 = vector.load %arg23[%c2_73, %c8_74, %c0_75] : memref<10x32x64xf32, #tpu.memory_space<vmem>>, vector<8x16x64xf32>
    %59 = vector.shape_cast %58 : vector<8x16x64xf32> to vector<128x64xf32>
    %c7_76 = arith.constant 7 : index
    %c0_77 = arith.constant 0 : index
    %c0_78 = arith.constant 0 : index
    %60 = vector.load %arg2[%c7_76, %c0_77, %c0_78] : memref<9x64x128xf32, #tpu.memory_space<vmem>>, vector<1x64x128xf32>
    %61 = vector.shape_cast %60 : vector<1x64x128xf32> to vector<64x128xf32>
    %cst_79 = arith.constant dense<0.000000e+00> : vector<128x128xf32>
    %62 = tpu.matmul %59, %61, %cst_79 {dimension_numbers = #tpu.dot_dimension_numbers<[1], [0], [0], [1], [0, 0, 1, 1], [], []>} : vector<128x64xf32>, vector<64x128xf32>, vector<128x128xf32> -> vector<128x128xf32>
    %63 = arith.addf %57, %62 : vector<128x128xf32>
    %c2_80 = arith.constant 2 : index
    %c9_81 = arith.constant 9 : index
    %c0_82 = arith.constant 0 : index
    %64 = vector.load %arg23[%c2_80, %c9_81, %c0_82] : memref<10x32x64xf32, #tpu.memory_space<vmem>>, vector<8x16x64xf32>
    %65 = vector.shape_cast %64 : vector<8x16x64xf32> to vector<128x64xf32>
    %c8_83 = arith.constant 8 : index
    %c0_84 = arith.constant 0 : index
    %c0_85 = arith.constant 0 : index
    %66 = vector.load %arg2[%c8_83, %c0_84, %c0_85] : memref<9x64x128xf32, #tpu.memory_space<vmem>>, vector<1x64x128xf32>
    %67 = vector.shape_cast %66 : vector<1x64x128xf32> to vector<64x128xf32>
    %cst_86 = arith.constant dense<0.000000e+00> : vector<128x128xf32>
    %68 = tpu.matmul %65, %67, %cst_86 {dimension_numbers = #tpu.dot_dimension_numbers<[1], [0], [0], [1], [0, 0, 1, 1], [], []>} : vector<128x64xf32>, vector<64x128xf32>, vector<128x128xf32> -> vector<128x128xf32>
    %69 = arith.addf %63, %68 : vector<128x128xf32>
    %c0_87 = arith.constant 0 : index
    %c0_88 = arith.constant 0 : index
    %70 = vector.load %arg3[%c0_87, %c0_88] : memref<1x128xf32, #tpu.memory_space<vmem>>, vector<1x128xf32>
    %71 = vector.broadcast %70 : vector<1x128xf32> to vector<128x128xf32>
    %72 = arith.addf %69, %71 : vector<128x128xf32>
    %cst_89 = arith.constant 0.000000e+00 : f32
    %73 = vector.broadcast %cst_89 : f32 to vector<128x128xf32>
    %74 = arith.maximumf %72, %73 : vector<128x128xf32>
    %75 = vector.shape_cast %74 : vector<128x128xf32> to vector<8x16x128xf32>
    %c1_90 = arith.constant 1 : index
    %c8_91 = arith.constant 8 : index
    %c0_92 = arith.constant 0 : index
    %76 = vector.load %arg24[%c1_90, %c8_91, %c0_92] : memref<10x32x128xf32, #tpu.memory_space<vmem>>, vector<8x16x128xf32>
    tpu.vector_store %arg24[%c1_90, %c8_91, %c0_92], %75 {strides = array<i32>} : memref<10x32x128xf32, #tpu.memory_space<vmem>>, vector<8x16x128xf32>,
    %cst_93 = arith.constant 0.000000e+00 : f32
    %77 = vector.broadcast %cst_93 : f32 to vector<128x64xf32>
    %c0_94 = arith.constant 0 : index
    %c7_95 = arith.constant 7 : index
    %c0_96 = arith.constant 0 : index
    %78 = vector.load %arg24[%c0_94, %c7_95, %c0_96] : memref<10x32x128xf32, #tpu.memory_space<vmem>>, vector<8x16x128xf32>
    %79 = vector.shape_cast %78 : vector<8x16x128xf32> to vector<128x128xf32>
    %c0_97 = arith.constant 0 : index
    %c0_98 = arith.constant 0 : index
    %c0_99 = arith.constant 0 : index
    %80 = vector.load %arg4[%c0_97, %c0_98, %c0_99] : memref<9x128x64xf32, #tpu.memory_space<vmem>>, vector<1x128x64xf32>
    %81 = vector.shape_cast %80 : vector<1x128x64xf32> to vector<128x64xf32>
    %cst_100 = arith.constant dense<0.000000e+00> : vector<128x64xf32>
    %82 = tpu.matmul %79, %81, %cst_100 {dimension_numbers = #tpu.dot_dimension_numbers<[1], [0], [0], [1], [0, 0, 1, 1], [], []>} : vector<128x128xf32>, vector<128x64xf32>, vector<128x64xf32> -> vector<128x64xf32>
    %83 = arith.addf %77, %82 : vector<128x64xf32>
    %c0_101 = arith.constant 0 : index
    %c8_102 = arith.constant 8 : index
    %c0_103 = arith.constant 0 : index
    %84 = vector.load %arg24[%c0_101, %c8_102, %c0_103] : memref<10x32x128xf32, #tpu.memory_space<vmem>>, vector<8x16x128xf32>
    %85 = vector.shape_cast %84 : vector<8x16x128xf32> to vector<128x128xf32>
    %c1_104 = arith.constant 1 : index
    %c0_105 = arith.constant 0 : index
    %c0_106 = arith.constant 0 : index
    %86 = vector.load %arg4[%c1_104, %c0_105, %c0_106] : memref<9x128x64xf32, #tpu.memory_space<vmem>>, vector<1x128x64xf32>
    %87 = vector.shape_cast %86 : vector<1x128x64xf32> to vector<128x64xf32>
    %cst_107 = arith.constant dense<0.000000e+00> : vector<128x64xf32>
    %88 = tpu.matmul %85, %87, %cst_107 {dimension_numbers = #tpu.dot_dimension_numbers<[1], [0], [0], [1], [0, 0, 1, 1], [], []>} : vector<128x128xf32>, vector<128x64xf32>, vector<128x64xf32> -> vector<128x64xf32>
    %89 = arith.addf %83, %88 : vector<128x64xf32>
    %c0_108 = arith.constant 0 : index
    %c9_109 = arith.constant 9 : index
    %c0_110 = arith.constant 0 : index
    %90 = vector.load %arg24[%c0_108, %c9_109, %c0_110] : memref<10x32x128xf32, #tpu.memory_space<vmem>>, vector<8x16x128xf32>
    %91 = vector.shape_cast %90 : vector<8x16x128xf32> to vector<128x128xf32>
    %c2_111 = arith.constant 2 : index
    %c0_112 = arith.constant 0 : index
    %c0_113 = arith.constant 0 : index
    %92 = vector.load %arg4[%c2_111, %c0_112, %c0_113] : memref<9x128x64xf32, #tpu.memory_space<vmem>>, vector<1x128x64xf32>
    %93 = vector.shape_cast %92 : vector<1x128x64xf32> to vector<128x64xf32>
    %cst_114 = arith.constant dense<0.000000e+00> : vector<128x64xf32>
    %94 = tpu.matmul %91, %93, %cst_114 {dimension_numbers = #tpu.dot_dimension_numbers<[1], [0], [0], [1], [0, 0, 1, 1], [], []>} : vector<128x128xf32>, vector<128x64xf32>, vector<128x64xf32> -> vector<128x64xf32>
    %95 = arith.addf %89, %94 : vector<128x64xf32>
    %c1_115 = arith.constant 1 : index
    %c7_116 = arith.constant 7 : index
    %c0_117 = arith.constant 0 : index
    %96 = vector.load %arg24[%c1_115, %c7_116, %c0_117] : memref<10x32x128xf32, #tpu.memory_space<vmem>>, vector<8x16x128xf32>
    %97 = vector.shape_cast %96 : vector<8x16x128xf32> to vector<128x128xf32>
    %c3_118 = arith.constant 3 : index
    %c0_119 = arith.constant 0 : index
    %c0_120 = arith.constant 0 : index
    %98 = vector.load %arg4[%c3_118, %c0_119, %c0_120] : memref<9x128x64xf32, #tpu.memory_space<vmem>>, vector<1x128x64xf32>
    %99 = vector.shape_cast %98 : vector<1x128x64xf32> to vector<128x64xf32>
    %cst_121 = arith.constant dense<0.000000e+00> : vector<128x64xf32>
    %100 = tpu.matmul %97, %99, %cst_121 {dimension_numbers = #tpu.dot_dimension_numbers<[1], [0], [0], [1], [0, 0, 1, 1], [], []>} : vector<128x128xf32>, vector<128x64xf32>, vector<128x64xf32> -> vector<128x64xf32>
    %101 = arith.addf %95, %100 : vector<128x64xf32>
    %c1_122 = arith.constant 1 : index
    %c8_123 = arith.constant 8 : index
    %c0_124 = arith.constant 0 : index
    %102 = vector.load %arg24[%c1_122, %c8_123, %c0_124] : memref<10x32x128xf32, #tpu.memory_space<vmem>>, vector<8x16x128xf32>
    %103 = vector.shape_cast %102 : vector<8x16x128xf32> to vector<128x128xf32>
    %c4_125 = arith.constant 4 : index
    %c0_126 = arith.constant 0 : index
    %c0_127 = arith.constant 0 : index
    %104 = vector.load %arg4[%c4_125, %c0_126, %c0_127] : memref<9x128x64xf32, #tpu.memory_space<vmem>>, vector<1x128x64xf32>
    %105 = vector.shape_cast %104 : vector<1x128x64xf32> to vector<128x64xf32>
    %cst_128 = arith.constant dense<0.000000e+00> : vector<128x64xf32>
    %106 = tpu.matmul %103, %105, %cst_128 {dimension_numbers = #tpu.dot_dimension_numbers<[1], [0], [0], [1], [0, 0, 1, 1], [], []>} : vector<128x128xf32>, vector<128x64xf32>, vector<128x64xf32> -> vector<128x64xf32>
    %107 = arith.addf %101, %106 : vector<128x64xf32>
    %c1_129 = arith.constant 1 : index
    %c9_130 = arith.constant 9 : index
    %c0_131 = arith.constant 0 : index
    %108 = vector.load %arg24[%c1_129, %c9_130, %c0_131] : memref<10x32x128xf32, #tpu.memory_space<vmem>>, vector<8x16x128xf32>
    %109 = vector.shape_cast %108 : vector<8x16x128xf32> to vector<128x128xf32>
    %c5_132 = arith.constant 5 : index
    %c0_133 = arith.constant 0 : index
    %c0_134 = arith.constant 0 : index
    %110 = vector.load %arg4[%c5_132, %c0_133, %c0_134] : memref<9x128x64xf32, #tpu.memory_space<vmem>>, vector<1x128x64xf32>
    %111 = vector.shape_cast %110 : vector<1x128x64xf32> to vector<128x64xf32>
    %cst_135 = arith.constant dense<0.000000e+00> : vector<128x64xf32>
    %112 = tpu.matmul %109, %111, %cst_135 {dimension_numbers = #tpu.dot_dimension_numbers<[1], [0], [0], [1], [0, 0, 1, 1], [], []>} : vector<128x128xf32>, vector<128x64xf32>, vector<128x64xf32> -> vector<128x64xf32>
    %113 = arith.addf %107, %112 : vector<128x64xf32>
    %c2_136 = arith.constant 2 : index
    %c7_137 = arith.constant 7 : index
    %c0_138 = arith.constant 0 : index
    %114 = vector.load %arg24[%c2_136, %c7_137, %c0_138] : memref<10x32x128xf32, #tpu.memory_space<vmem>>, vector<8x16x128xf32>
    %115 = vector.shape_cast %114 : vector<8x16x128xf32> to vector<128x128xf32>
    %c6_139 = arith.constant 6 : index
    %c0_140 = arith.constant 0 : index
    %c0_141 = arith.constant 0 : index
    %116 = vector.load %arg4[%c6_139, %c0_140, %c0_141] : memref<9x128x64xf32, #tpu.memory_space<vmem>>, vector<1x128x64xf32>
    %117 = vector.shape_cast %116 : vector<1x128x64xf32> to vector<128x64xf32>
    %cst_142 = arith.constant dense<0.000000e+00> : vector<128x64xf32>
    %118 = tpu.matmul %115, %117, %cst_142 {dimension_numbers = #tpu.dot_dimension_numbers<[1], [0], [0], [1], [0, 0, 1, 1], [], []>} : vector<128x128xf32>, vector<128x64xf32>, vector<128x64xf32> -> vector<128x64xf32>
    %119 = arith.addf %113, %118 : vector<128x64xf32>
    %c2_143 = arith.constant 2 : index
    %c8_144 = arith.constant 8 : index
    %c0_145 = arith.constant 0 : index
    %120 = vector.load %arg24[%c2_143, %c8_144, %c0_145] : memref<10x32x128xf32, #tpu.memory_space<vmem>>, vector<8x16x128xf32>
    %121 = vector.shape_cast %120 : vector<8x16x128xf32> to vector<128x128xf32>
    %c7_146 = arith.constant 7 : index
    %c0_147 = arith.constant 0 : index
    %c0_148 = arith.constant 0 : index
    %122 = vector.load %arg4[%c7_146, %c0_147, %c0_148] : memref<9x128x64xf32, #tpu.memory_space<vmem>>, vector<1x128x64xf32>
    %123 = vector.shape_cast %122 : vector<1x128x64xf32> to vector<128x64xf32>
    %cst_149 = arith.constant dense<0.000000e+00> : vector<128x64xf32>
    %124 = tpu.matmul %121, %123, %cst_149 {dimension_numbers = #tpu.dot_dimension_numbers<[1], [0], [0], [1], [0, 0, 1, 1], [], []>} : vector<128x128xf32>, vector<128x64xf32>, vector<128x64xf32> -> vector<128x64xf32>
    %125 = arith.addf %119, %124 : vector<128x64xf32>
    %c2_150 = arith.constant 2 : index
    %c9_151 = arith.constant 9 : index
    %c0_152 = arith.constant 0 : index
    %126 = vector.load %arg24[%c2_150, %c9_151, %c0_152] : memref<10x32x128xf32, #tpu.memory_space<vmem>>, vector<8x16x128xf32>
    %127 = vector.shape_cast %126 : vector<8x16x128xf32> to vector<128x128xf32>
    %c8_153 = arith.constant 8 : index
    %c0_154 = arith.constant 0 : index
    %c0_155 = arith.constant 0 : index
    %128 = vector.load %arg4[%c8_153, %c0_154, %c0_155] : memref<9x128x64xf32, #tpu.memory_space<vmem>>, vector<1x128x64xf32>
    %129 = vector.shape_cast %128 : vector<1x128x64xf32> to vector<128x64xf32>
    %cst_156 = arith.constant dense<0.000000e+00> : vector<128x64xf32>
    %130 = tpu.matmul %127, %129, %cst_156 {dimension_numbers = #tpu.dot_dimension_numbers<[1], [0], [0], [1], [0, 0, 1, 1], [], []>} : vector<128x128xf32>, vector<128x64xf32>, vector<128x64xf32> -> vector<128x64xf32>
    %131 = arith.addf %125, %130 : vector<128x64xf32>
    %c0_157 = arith.constant 0 : index
    %c0_158 = arith.constant 0 : index
    %132 = vector.load %arg5[%c0_157, %c0_158] : memref<1x64xf32, #tpu.memory_space<vmem>>, vector<1x64xf32>
    %133 = vector.broadcast %132 : vector<1x64xf32> to vector<128x64xf32>
    %134 = arith.addf %131, %133 : vector<128x64xf32>
    %cst_159 = arith.constant 0.000000e+00 : f32
    %135 = vector.broadcast %cst_159 : f32 to vector<128x64xf32>
    %136 = arith.maximumf %134, %135 : vector<128x64xf32>
    %137 = vector.shape_cast %136 : vector<128x64xf32> to vector<8x16x64xf32>
    %138 = vector.extract_strided_slice %137 {offsets = [0, 0, 0], sizes = [1, 16, 16], strides = [1, 1, 1]} : vector<8x16x64xf32> to vector<1x16x16xf32>
    %139 = vector.extract_strided_slice %137 {offsets = [2, 0, 0], sizes = [1, 16, 16], strides = [1, 1, 1]} : vector<8x16x64xf32> to vector<1x16x16xf32>
    %140 = vector.extract_strided_slice %137 {offsets = [4, 0, 0], sizes = [1, 16, 16], strides = [1, 1, 1]} : vector<8x16x64xf32> to vector<1x16x16xf32>
    %141 = vector.extract_strided_slice %137 {offsets = [6, 0, 0], sizes = [1, 16, 16], strides = [1, 1, 1]} : vector<8x16x64xf32> to vector<1x16x16xf32>
    %142 = tpu.concatenate %138, %139, %140, %141 in 2 : vector<1x16x16xf32>, vector<1x16x16xf32>, vector<1x16x16xf32>, vector<1x16x16xf32> -> vector<1x16x64xf32>
    %c1_160 = arith.constant 1 : index
    %c8_161 = arith.constant 8 : index
    %c0_162 = arith.constant 0 : index
    %143 = vector.load %arg23[%c1_160, %c8_161, %c0_162] : memref<10x32x64xf32, #tpu.memory_space<vmem>>, vector<1x16x64xf32>
    tpu.vector_store %arg23[%c1_160, %c8_161, %c0_162], %142 {strides = array<i32>} : memref<10x32x64xf32, #tpu.memory_space<vmem>>, vector<1x16x64xf32>,
    %144 = vector.extract_strided_slice %137 {offsets = [0, 0, 16], sizes = [1, 16, 16], strides = [1, 1, 1]} : vector<8x16x64xf32> to vector<1x16x16xf32>
    %145 = vector.extract_strided_slice %137 {offsets = [2, 0, 16], sizes = [1, 16, 16], strides = [1, 1, 1]} : vector<8x16x64xf32> to vector<1x16x16xf32>
    %146 = vector.extract_strided_slice %137 {offsets = [4, 0, 16], sizes = [1, 16, 16], strides = [1, 1, 1]} : vector<8x16x64xf32> to vector<1x16x16xf32>
    %147 = vector.extract_strided_slice %137 {offsets = [6, 0, 16], sizes = [1, 16, 16], strides = [1, 1, 1]} : vector<8x16x64xf32> to vector<1x16x16xf32>
    %148 = tpu.concatenate %144, %145, %146, %147 in 2 : vector<1x16x16xf32>, vector<1x16x16xf32>, vector<1x16x16xf32>, vector<1x16x16xf32> -> vector<1x16x64xf32>
    %c2_163 = arith.constant 2 : index
    %c8_164 = arith.constant 8 : index
    %c0_165 = arith.constant 0 : index
    %149 = vector.load %arg23[%c2_163, %c8_164, %c0_165] : memref<10x32x64xf32, #tpu.memory_space<vmem>>, vector<1x16x64xf32>
    tpu.vector_store %arg23[%c2_163, %c8_164, %c0_165], %148 {strides = array<i32>} : memref<10x32x64xf32, #tpu.memory_space<vmem>>, vector<1x16x64xf32>,
    %150 = vector.extract_strided_slice %137 {offsets = [0, 0, 32], sizes = [1, 16, 16], strides = [1, 1, 1]} : vector<8x16x64xf32> to vector<1x16x16xf32>
    %151 = vector.extract_strided_slice %137 {offsets = [2, 0, 32], sizes = [1, 16, 16], strides = [1, 1, 1]} : vector<8x16x64xf32> to vector<1x16x16xf32>
    %152 = vector.extract_strided_slice %137 {offsets = [4, 0, 32], sizes = [1, 16, 16], strides = [1, 1, 1]} : vector<8x16x64xf32> to vector<1x16x16xf32>
    %153 = vector.extract_strided_slice %137 {offsets = [6, 0, 32], sizes = [1, 16, 16], strides = [1, 1, 1]} : vector<8x16x64xf32> to vector<1x16x16xf32>
    %154 = tpu.concatenate %150, %151, %152, %153 in 2 : vector<1x16x16xf32>, vector<1x16x16xf32>, vector<1x16x16xf32>, vector<1x16x16xf32> -> vector<1x16x64xf32>
    %c3_166 = arith.constant 3 : index
    %c8_167 = arith.constant 8 : index
    %c0_168 = arith.constant 0 : index
    %155 = vector.load %arg23[%c3_166, %c8_167, %c0_168] : memref<10x32x64xf32, #tpu.memory_space<vmem>>, vector<1x16x64xf32>
    tpu.vector_store %arg23[%c3_166, %c8_167, %c0_168], %154 {strides = array<i32>} : memref<10x32x64xf32, #tpu.memory_space<vmem>>, vector<1x16x64xf32>,
    %156 = vector.extract_strided_slice %137 {offsets = [0, 0, 48], sizes = [1, 16, 16], strides = [1, 1, 1]} : vector<8x16x64xf32> to vector<1x16x16xf32>
    %157 = vector.extract_strided_slice %137 {offsets = [2, 0, 48], sizes = [1, 16, 16], strides = [1, 1, 1]} : vector<8x16x64xf32> to vector<1x16x16xf32>
    %158 = vector.extract_strided_slice %137 {offsets = [4, 0, 48], sizes = [1, 16, 16], strides = [1, 1, 1]} : vector<8x16x64xf32> to vector<1x16x16xf32>
    %159 = vector.extract_strided_slice %137 {offsets = [6, 0, 48], sizes = [1, 16, 16], strides = [1, 1, 1]} : vector<8x16x64xf32> to vector<1x16x16xf32>
    %160 = tpu.concatenate %156, %157, %158, %159 in 2 : vector<1x16x16xf32>, vector<1x16x16xf32>, vector<1x16x16xf32>, vector<1x16x16xf32> -> vector<1x16x64xf32>
    %c4_169 = arith.constant 4 : index
    %c8_170 = arith.constant 8 : index
    %c0_171 = arith.constant 0 : index
    %161 = vector.load %arg23[%c4_169, %c8_170, %c0_171] : memref<10x32x64xf32, #tpu.memory_space<vmem>>, vector<1x16x64xf32>
    tpu.vector_store %arg23[%c4_169, %c8_170, %c0_171], %160 {strides = array<i32>} : memref<10x32x64xf32, #tpu.memory_space<vmem>>, vector<1x16x64xf32>,
    %162 = vector.extract_strided_slice %137 {offsets = [1, 0, 0], sizes = [1, 16, 16], strides = [1, 1, 1]} : vector<8x16x64xf32> to vector<1x16x16xf32>
    %163 = vector.extract_strided_slice %137 {offsets = [3, 0, 0], sizes = [1, 16, 16], strides = [1, 1, 1]} : vector<8x16x64xf32> to vector<1x16x16xf32>
    %164 = vector.extract_strided_slice %137 {offsets = [5, 0, 0], sizes = [1, 16, 16], strides = [1, 1, 1]} : vector<8x16x64xf32> to vector<1x16x16xf32>
    %165 = vector.extract_strided_slice %137 {offsets = [7, 0, 0], sizes = [1, 16, 16], strides = [1, 1, 1]} : vector<8x16x64xf32> to vector<1x16x16xf32>
    %166 = tpu.concatenate %162, %163, %164, %165 in 2 : vector<1x16x16xf32>, vector<1x16x16xf32>, vector<1x16x16xf32>, vector<1x16x16xf32> -> vector<1x16x64xf32>
    %c5_172 = arith.constant 5 : index
    %c8_173 = arith.constant 8 : index
    %c0_174 = arith.constant 0 : index
    %167 = vector.load %arg23[%c5_172, %c8_173, %c0_174] : memref<10x32x64xf32, #tpu.memory_space<vmem>>, vector<1x16x64xf32>
    tpu.vector_store %arg23[%c5_172, %c8_173, %c0_174], %166 {strides = array<i32>} : memref<10x32x64xf32, #tpu.memory_space<vmem>>, vector<1x16x64xf32>,
    %168 = vector.extract_strided_slice %137 {offsets = [1, 0, 16], sizes = [1, 16, 16], strides = [1, 1, 1]} : vector<8x16x64xf32> to vector<1x16x16xf32>
    %169 = vector.extract_strided_slice %137 {offsets = [3, 0, 16], sizes = [1, 16, 16], strides = [1, 1, 1]} : vector<8x16x64xf32> to vector<1x16x16xf32>
    %170 = vector.extract_strided_slice %137 {offsets = [5, 0, 16], sizes = [1, 16, 16], strides = [1, 1, 1]} : vector<8x16x64xf32> to vector<1x16x16xf32>
    %171 = vector.extract_strided_slice %137 {offsets = [7, 0, 16], sizes = [1, 16, 16], strides = [1, 1, 1]} : vector<8x16x64xf32> to vector<1x16x16xf32>
    %172 = tpu.concatenate %168, %169, %170, %171 in 2 : vector<1x16x16xf32>, vector<1x16x16xf32>, vector<1x16x16xf32>, vector<1x16x16xf32> -> vector<1x16x64xf32>
    %c6_175 = arith.constant 6 : index
    %c8_176 = arith.constant 8 : index
    %c0_177 = arith.constant 0 : index
    %173 = vector.load %arg23[%c6_175, %c8_176, %c0_177] : memref<10x32x64xf32, #tpu.memory_space<vmem>>, vector<1x16x64xf32>
    tpu.vector_store %arg23[%c6_175, %c8_176, %c0_177], %172 {strides = array<i32>} : memref<10x32x64xf32, #tpu.memory_space<vmem>>, vector<1x16x64xf32>,
    %174 = vector.extract_strided_slice %137 {offsets = [1, 0, 32], sizes = [1, 16, 16], strides = [1, 1, 1]} : vector<8x16x64xf32> to vector<1x16x16xf32>
    %175 = vector.extract_strided_slice %137 {offsets = [3, 0, 32], sizes = [1, 16, 16], strides = [1, 1, 1]} : vector<8x16x64xf32> to vector<1x16x16xf32>
    %176 = vector.extract_strided_slice %137 {offsets = [5, 0, 32], sizes = [1, 16, 16], strides = [1, 1, 1]} : vector<8x16x64xf32> to vector<1x16x16xf32>
    %177 = vector.extract_strided_slice %137 {offsets = [7, 0, 32], sizes = [1, 16, 16], strides = [1, 1, 1]} : vector<8x16x64xf32> to vector<1x16x16xf32>
    %178 = tpu.concatenate %174, %175, %176, %177 in 2 : vector<1x16x16xf32>, vector<1x16x16xf32>, vector<1x16x16xf32>, vector<1x16x16xf32> -> vector<1x16x64xf32>
    %c7_178 = arith.constant 7 : index
    %c8_179 = arith.constant 8 : index
    %c0_180 = arith.constant 0 : index
    %179 = vector.load %arg23[%c7_178, %c8_179, %c0_180] : memref<10x32x64xf32, #tpu.memory_space<vmem>>, vector<1x16x64xf32>
    tpu.vector_store %arg23[%c7_178, %c8_179, %c0_180], %178 {strides = array<i32>} : memref<10x32x64xf32, #tpu.memory_space<vmem>>, vector<1x16x64xf32>,
    %180 = vector.extract_strided_slice %137 {offsets = [1, 0, 48], sizes = [1, 16, 16], strides = [1, 1, 1]} : vector<8x16x64xf32> to vector<1x16x16xf32>
    %181 = vector.extract_strided_slice %137 {offsets = [3, 0, 48], sizes = [1, 16, 16], strides = [1, 1, 1]} : vector<8x16x64xf32> to vector<1x16x16xf32>
    %182 = vector.extract_strided_slice %137 {offsets = [5, 0, 48], sizes = [1, 16, 16], strides = [1, 1, 1]} : vector<8x16x64xf32> to vector<1x16x16xf32>
    %183 = vector.extract_strided_slice %137 {offsets = [7, 0, 48], sizes = [1, 16, 16], strides = [1, 1, 1]} : vector<8x16x64xf32> to vector<1x16x16xf32>
    %184 = tpu.concatenate %180, %181, %182, %183 in 2 : vector<1x16x16xf32>, vector<1x16x16xf32>, vector<1x16x16xf32>, vector<1x16x16xf32> -> vector<1x16x64xf32>
    %c8_181 = arith.constant 8 : index
    %c8_182 = arith.constant 8 : index
    %c0_183 = arith.constant 0 : index
    %185 = vector.load %arg23[%c8_181, %c8_182, %c0_183] : memref<10x32x64xf32, #tpu.memory_space<vmem>>, vector<1x16x64xf32>
    tpu.vector_store %arg23[%c8_181, %c8_182, %c0_183], %184 {strides = array<i32>} : memref<10x32x64xf32, #tpu.memory_space<vmem>>, vector<1x16x64xf32>,
    %cst_184 = arith.constant 0.000000e+00 : f32
    %186 = vector.broadcast %cst_184 : f32 to vector<128x128xf32>
    %c0_185 = arith.constant 0 : index
    %c7_186 = arith.constant 7 : index
    %c0_187 = arith.constant 0 : index
    %187 = vector.load %arg23[%c0_185, %c7_186, %c0_187] : memref<10x32x64xf32, #tpu.memory_space<vmem>>, vector<8x16x64xf32>
    %188 = vector.shape_cast %187 : vector<8x16x64xf32> to vector<128x64xf32>
    %c0_188 = arith.constant 0 : index
    %c0_189 = arith.constant 0 : index
    %c0_190 = arith.constant 0 : index
    %189 = vector.load %arg6[%c0_188, %c0_189, %c0_190] : memref<9x64x128xf32, #tpu.memory_space<vmem>>, vector<1x64x128xf32>
    %190 = vector.shape_cast %189 : vector<1x64x128xf32> to vector<64x128xf32>
    %cst_191 = arith.constant dense<0.000000e+00> : vector<128x128xf32>
    %191 = tpu.matmul %188, %190, %cst_191 {dimension_numbers = #tpu.dot_dimension_numbers<[1], [0], [0], [1], [0, 0, 1, 1], [], []>} : vector<128x64xf32>, vector<64x128xf32>, vector<128x128xf32> -> vector<128x128xf32>
    %192 = arith.addf %186, %191 : vector<128x128xf32>
    %c0_192 = arith.constant 0 : index
    %c8_193 = arith.constant 8 : index
    %c0_194 = arith.constant 0 : index
    %193 = vector.load %arg23[%c0_192, %c8_193, %c0_194] : memref<10x32x64xf32, #tpu.memory_space<vmem>>, vector<8x16x64xf32>
    %194 = vector.shape_cast %193 : vector<8x16x64xf32> to vector<128x64xf32>
    %c1_195 = arith.constant 1 : index
    %c0_196 = arith.constant 0 : index
    %c0_197 = arith.constant 0 : index
    %195 = vector.load %arg6[%c1_195, %c0_196, %c0_197] : memref<9x64x128xf32, #tpu.memory_space<vmem>>, vector<1x64x128xf32>
    %196 = vector.shape_cast %195 : vector<1x64x128xf32> to vector<64x128xf32>
    %cst_198 = arith.constant dense<0.000000e+00> : vector<128x128xf32>
    %197 = tpu.matmul %194, %196, %cst_198 {dimension_numbers = #tpu.dot_dimension_numbers<[1], [0], [0], [1], [0, 0, 1, 1], [], []>} : vector<128x64xf32>, vector<64x128xf32>, vector<128x128xf32> -> vector<128x128xf32>
    %198 = arith.addf %192, %197 : vector<128x128xf32>
    %c0_199 = arith.constant 0 : index
    %c9_200 = arith.constant 9 : index
    %c0_201 = arith.constant 0 : index
    %199 = vector.load %arg23[%c0_199, %c9_200, %c0_201] : memref<10x32x64xf32, #tpu.memory_space<vmem>>, vector<8x16x64xf32>
    %200 = vector.shape_cast %199 : vector<8x16x64xf32> to vector<128x64xf32>
    %c2_202 = arith.constant 2 : index
    %c0_203 = arith.constant 0 : index
    %c0_204 = arith.constant 0 : index
    %201 = vector.load %arg6[%c2_202, %c0_203, %c0_204] : memref<9x64x128xf32, #tpu.memory_space<vmem>>, vector<1x64x128xf32>
    %202 = vector.shape_cast %201 : vector<1x64x128xf32> to vector<64x128xf32>
    %cst_205 = arith.constant dense<0.000000e+00> : vector<128x128xf32>
    %203 = tpu.matmul %200, %202, %cst_205 {dimension_numbers = #tpu.dot_dimension_numbers<[1], [0], [0], [1], [0, 0, 1, 1], [], []>} : vector<128x64xf32>, vector<64x128xf32>, vector<128x128xf32> -> vector<128x128xf32>
    %204 = arith.addf %198, %203 : vector<128x128xf32>
    %c1_206 = arith.constant 1 : index
    %c7_207 = arith.constant 7 : index
    %c0_208 = arith.constant 0 : index
    %205 = vector.load %arg23[%c1_206, %c7_207, %c0_208] : memref<10x32x64xf32, #tpu.memory_space<vmem>>, vector<8x16x64xf32>
    %206 = vector.shape_cast %205 : vector<8x16x64xf32> to vector<128x64xf32>
    %c3_209 = arith.constant 3 : index
    %c0_210 = arith.constant 0 : index
    %c0_211 = arith.constant 0 : index
    %207 = vector.load %arg6[%c3_209, %c0_210, %c0_211] : memref<9x64x128xf32, #tpu.memory_space<vmem>>, vector<1x64x128xf32>
    %208 = vector.shape_cast %207 : vector<1x64x128xf32> to vector<64x128xf32>
    %cst_212 = arith.constant dense<0.000000e+00> : vector<128x128xf32>
    %209 = tpu.matmul %206, %208, %cst_212 {dimension_numbers = #tpu.dot_dimension_numbers<[1], [0], [0], [1], [0, 0, 1, 1], [], []>} : vector<128x64xf32>, vector<64x128xf32>, vector<128x128xf32> -> vector<128x128xf32>
    %210 = arith.addf %204, %209 : vector<128x128xf32>
    %c1_213 = arith.constant 1 : index
    %c8_214 = arith.constant 8 : index
    %c0_215 = arith.constant 0 : index
    %211 = vector.load %arg23[%c1_213, %c8_214, %c0_215] : memref<10x32x64xf32, #tpu.memory_space<vmem>>, vector<8x16x64xf32>
    %212 = vector.shape_cast %211 : vector<8x16x64xf32> to vector<128x64xf32>
    %c4_216 = arith.constant 4 : index
    %c0_217 = arith.constant 0 : index
    %c0_218 = arith.constant 0 : index
    %213 = vector.load %arg6[%c4_216, %c0_217, %c0_218] : memref<9x64x128xf32, #tpu.memory_space<vmem>>, vector<1x64x128xf32>
    %214 = vector.shape_cast %213 : vector<1x64x128xf32> to vector<64x128xf32>
    %cst_219 = arith.constant dense<0.000000e+00> : vector<128x128xf32>
    %215 = tpu.matmul %212, %214, %cst_219 {dimension_numbers = #tpu.dot_dimension_numbers<[1], [0], [0], [1], [0, 0, 1, 1], [], []>} : vector<128x64xf32>, vector<64x128xf32>, vector<128x128xf32> -> vector<128x128xf32>
    %216 = arith.addf %210, %215 : vector<128x128xf32>
    %c1_220 = arith.constant 1 : index
    %c9_221 = arith.constant 9 : index
    %c0_222 = arith.constant 0 : index
    %217 = vector.load %arg23[%c1_220, %c9_221, %c0_222] : memref<10x32x64xf32, #tpu.memory_space<vmem>>, vector<8x16x64xf32>
    %218 = vector.shape_cast %217 : vector<8x16x64xf32> to vector<128x64xf32>
    %c5_223 = arith.constant 5 : index
    %c0_224 = arith.constant 0 : index
    %c0_225 = arith.constant 0 : index
    %219 = vector.load %arg6[%c5_223, %c0_224, %c0_225] : memref<9x64x128xf32, #tpu.memory_space<vmem>>, vector<1x64x128xf32>
    %220 = vector.shape_cast %219 : vector<1x64x128xf32> to vector<64x128xf32>
    %cst_226 = arith.constant dense<0.000000e+00> : vector<128x128xf32>
    %221 = tpu.matmul %218, %220, %cst_226 {dimension_numbers = #tpu.dot_dimension_numbers<[1], [0], [0], [1], [0, 0, 1, 1], [], []>} : vector<128x64xf32>, vector<64x128xf32>, vector<128x128xf32> -> vector<128x128xf32>
    %222 = arith.addf %216, %221 : vector<128x128xf32>
    %c2_227 = arith.constant 2 : index
    %c7_228 = arith.constant 7 : index
    %c0_229 = arith.constant 0 : index
    %223 = vector.load %arg23[%c2_227, %c7_228, %c0_229] : memref<10x32x64xf32, #tpu.memory_space<vmem>>, vector<8x16x64xf32>
    %224 = vector.shape_cast %223 : vector<8x16x64xf32> to vector<128x64xf32>
    %c6_230 = arith.constant 6 : index
    %c0_231 = arith.constant 0 : index
    %c0_232 = arith.constant 0 : index
    %225 = vector.load %arg6[%c6_230, %c0_231, %c0_232] : memref<9x64x128xf32, #tpu.memory_space<vmem>>, vector<1x64x128xf32>
    %226 = vector.shape_cast %225 : vector<1x64x128xf32> to vector<64x128xf32>
    %cst_233 = arith.constant dense<0.000000e+00> : vector<128x128xf32>
    %227 = tpu.matmul %224, %226, %cst_233 {dimension_numbers = #tpu.dot_dimension_numbers<[1], [0], [0], [1], [0, 0, 1, 1], [], []>} : vector<128x64xf32>, vector<64x128xf32>, vector<128x128xf32> -> vector<128x128xf32>
    %228 = arith.addf %222, %227 : vector<128x128xf32>
    %c2_234 = arith.constant 2 : index
    %c8_235 = arith.constant 8 : index
    %c0_236 = arith.constant 0 : index
    %229 = vector.load %arg23[%c2_234, %c8_235, %c0_236] : memref<10x32x64xf32, #tpu.memory_space<vmem>>, vector<8x16x64xf32>
    %230 = vector.shape_cast %229 : vector<8x16x64xf32> to vector<128x64xf32>
    %c7_237 = arith.constant 7 : index
    %c0_238 = arith.constant 0 : index
    %c0_239 = arith.constant 0 : index
    %231 = vector.load %arg6[%c7_237, %c0_238, %c0_239] : memref<9x64x128xf32, #tpu.memory_space<vmem>>, vector<1x64x128xf32>
    %232 = vector.shape_cast %231 : vector<1x64x128xf32> to vector<64x128xf32>
    %cst_240 = arith.constant dense<0.000000e+00> : vector<128x128xf32>
    %233 = tpu.matmul %230, %232, %cst_240 {dimension_numbers = #tpu.dot_dimension_numbers<[1], [0], [0], [1], [0, 0, 1, 1], [], []>} : vector<128x64xf32>, vector<64x128xf32>, vector<128x128xf32> -> vector<128x128xf32>
    %234 = arith.addf %228, %233 : vector<128x128xf32>
    %c2_241 = arith.constant 2 : index
    %c9_242 = arith.constant 9 : index
    %c0_243 = arith.constant 0 : index
    %235 = vector.load %arg23[%c2_241, %c9_242, %c0_243] : memref<10x32x64xf32, #tpu.memory_space<vmem>>, vector<8x16x64xf32>
    %236 = vector.shape_cast %235 : vector<8x16x64xf32> to vector<128x64xf32>
    %c8_244 = arith.constant 8 : index
    %c0_245 = arith.constant 0 : index
    %c0_246 = arith.constant 0 : index
    %237 = vector.load %arg6[%c8_244, %c0_245, %c0_246] : memref<9x64x128xf32, #tpu.memory_space<vmem>>, vector<1x64x128xf32>
    %238 = vector.shape_cast %237 : vector<1x64x128xf32> to vector<64x128xf32>
    %cst_247 = arith.constant dense<0.000000e+00> : vector<128x128xf32>
    %239 = tpu.matmul %236, %238, %cst_247 {dimension_numbers = #tpu.dot_dimension_numbers<[1], [0], [0], [1], [0, 0, 1, 1], [], []>} : vector<128x64xf32>, vector<64x128xf32>, vector<128x128xf32> -> vector<128x128xf32>
    %240 = arith.addf %234, %239 : vector<128x128xf32>
    %c0_248 = arith.constant 0 : index
    %c0_249 = arith.constant 0 : index
    %241 = vector.load %arg7[%c0_248, %c0_249] : memref<1x128xf32, #tpu.memory_space<vmem>>, vector<1x128xf32>
    %242 = vector.broadcast %241 : vector<1x128xf32> to vector<128x128xf32>
    %243 = arith.addf %240, %242 : vector<128x128xf32>
    %cst_250 = arith.constant 0.000000e+00 : f32
    %244 = vector.broadcast %cst_250 : f32 to vector<128x128xf32>
    %245 = arith.maximumf %243, %244 : vector<128x128xf32>
    %246 = vector.shape_cast %245 : vector<128x128xf32> to vector<8x16x128xf32>
    %c1_251 = arith.constant 1 : index
    %c8_252 = arith.constant 8 : index
    %c0_253 = arith.constant 0 : index
    %247 = vector.load %arg24[%c1_251, %c8_252, %c0_253] : memref<10x32x128xf32, #tpu.memory_space<vmem>>, vector<8x16x128xf32>
    tpu.vector_store %arg24[%c1_251, %c8_252, %c0_253], %246 {strides = array<i32>} : memref<10x32x128xf32, #tpu.memory_space<vmem>>, vector<8x16x128xf32>,
    %cst_254 = arith.constant 0.000000e+00 : f32
    %248 = vector.broadcast %cst_254 : f32 to vector<128x64xf32>
    %c0_255 = arith.constant 0 : index
    %c7_256 = arith.constant 7 : index
    %c0_257 = arith.constant 0 : index
    %249 = vector.load %arg24[%c0_255, %c7_256, %c0_257] : memref<10x32x128xf32, #tpu.memory_space<vmem>>, vector<8x16x128xf32>
    %250 = vector.shape_cast %249 : vector<8x16x128xf32> to vector<128x128xf32>
    %c0_258 = arith.constant 0 : index
    %c0_259 = arith.constant 0 : index
    %c0_260 = arith.constant 0 : index
    %251 = vector.load %arg8[%c0_258, %c0_259, %c0_260] : memref<9x128x64xf32, #tpu.memory_space<vmem>>, vector<1x128x64xf32>
    %252 = vector.shape_cast %251 : vector<1x128x64xf32> to vector<128x64xf32>
    %cst_261 = arith.constant dense<0.000000e+00> : vector<128x64xf32>
    %253 = tpu.matmul %250, %252, %cst_261 {dimension_numbers = #tpu.dot_dimension_numbers<[1], [0], [0], [1], [0, 0, 1, 1], [], []>} : vector<128x128xf32>, vector<128x64xf32>, vector<128x64xf32> -> vector<128x64xf32>
    %254 = arith.addf %248, %253 : vector<128x64xf32>
    %c0_262 = arith.constant 0 : index
    %c8_263 = arith.constant 8 : index
    %c0_264 = arith.constant 0 : index
    %255 = vector.load %arg24[%c0_262, %c8_263, %c0_264] : memref<10x32x128xf32, #tpu.memory_space<vmem>>, vector<8x16x128xf32>
    %256 = vector.shape_cast %255 : vector<8x16x128xf32> to vector<128x128xf32>
    %c1_265 = arith.constant 1 : index
    %c0_266 = arith.constant 0 : index
    %c0_267 = arith.constant 0 : index
    %257 = vector.load %arg8[%c1_265, %c0_266, %c0_267] : memref<9x128x64xf32, #tpu.memory_space<vmem>>, vector<1x128x64xf32>
    %258 = vector.shape_cast %257 : vector<1x128x64xf32> to vector<128x64xf32>
    %cst_268 = arith.constant dense<0.000000e+00> : vector<128x64xf32>
    %259 = tpu.matmul %256, %258, %cst_268 {dimension_numbers = #tpu.dot_dimension_numbers<[1], [0], [0], [1], [0, 0, 1, 1], [], []>} : vector<128x128xf32>, vector<128x64xf32>, vector<128x64xf32> -> vector<128x64xf32>
    %260 = arith.addf %254, %259 : vector<128x64xf32>
    %c0_269 = arith.constant 0 : index
    %c9_270 = arith.constant 9 : index
    %c0_271 = arith.constant 0 : index
    %261 = vector.load %arg24[%c0_269, %c9_270, %c0_271] : memref<10x32x128xf32, #tpu.memory_space<vmem>>, vector<8x16x128xf32>
    %262 = vector.shape_cast %261 : vector<8x16x128xf32> to vector<128x128xf32>
    %c2_272 = arith.constant 2 : index
    %c0_273 = arith.constant 0 : index
    %c0_274 = arith.constant 0 : index
    %263 = vector.load %arg8[%c2_272, %c0_273, %c0_274] : memref<9x128x64xf32, #tpu.memory_space<vmem>>, vector<1x128x64xf32>
    %264 = vector.shape_cast %263 : vector<1x128x64xf32> to vector<128x64xf32>
    %cst_275 = arith.constant dense<0.000000e+00> : vector<128x64xf32>
    %265 = tpu.matmul %262, %264, %cst_275 {dimension_numbers = #tpu.dot_dimension_numbers<[1], [0], [0], [1], [0, 0, 1, 1], [], []>} : vector<128x128xf32>, vector<128x64xf32>, vector<128x64xf32> -> vector<128x64xf32>
    %266 = arith.addf %260, %265 : vector<128x64xf32>
    %c1_276 = arith.constant 1 : index
    %c7_277 = arith.constant 7 : index
    %c0_278 = arith.constant 0 : index
    %267 = vector.load %arg24[%c1_276, %c7_277, %c0_278] : memref<10x32x128xf32, #tpu.memory_space<vmem>>, vector<8x16x128xf32>
    %268 = vector.shape_cast %267 : vector<8x16x128xf32> to vector<128x128xf32>
    %c3_279 = arith.constant 3 : index
    %c0_280 = arith.constant 0 : index
    %c0_281 = arith.constant 0 : index
    %269 = vector.load %arg8[%c3_279, %c0_280, %c0_281] : memref<9x128x64xf32, #tpu.memory_space<vmem>>, vector<1x128x64xf32>
    %270 = vector.shape_cast %269 : vector<1x128x64xf32> to vector<128x64xf32>
    %cst_282 = arith.constant dense<0.000000e+00> : vector<128x64xf32>
    %271 = tpu.matmul %268, %270, %cst_282 {dimension_numbers = #tpu.dot_dimension_numbers<[1], [0], [0], [1], [0, 0, 1, 1], [], []>} : vector<128x128xf32>, vector<128x64xf32>, vector<128x64xf32> -> vector<128x64xf32>
    %272 = arith.addf %266, %271 : vector<128x64xf32>
    %c1_283 = arith.constant 1 : index
    %c8_284 = arith.constant 8 : index
    %c0_285 = arith.constant 0 : index
    %273 = vector.load %arg24[%c1_283, %c8_284, %c0_285] : memref<10x32x128xf32, #tpu.memory_space<vmem>>, vector<8x16x128xf32>
    %274 = vector.shape_cast %273 : vector<8x16x128xf32> to vector<128x128xf32>
    %c4_286 = arith.constant 4 : index
    %c0_287 = arith.constant 0 : index
    %c0_288 = arith.constant 0 : index
    %275 = vector.load %arg8[%c4_286, %c0_287, %c0_288] : memref<9x128x64xf32, #tpu.memory_space<vmem>>, vector<1x128x64xf32>
    %276 = vector.shape_cast %275 : vector<1x128x64xf32> to vector<128x64xf32>
    %cst_289 = arith.constant dense<0.000000e+00> : vector<128x64xf32>
    %277 = tpu.matmul %274, %276, %cst_289 {dimension_numbers = #tpu.dot_dimension_numbers<[1], [0], [0], [1], [0, 0, 1, 1], [], []>} : vector<128x128xf32>, vector<128x64xf32>, vector<128x64xf32> -> vector<128x64xf32>
    %278 = arith.addf %272, %277 : vector<128x64xf32>
    %c1_290 = arith.constant 1 : index
    %c9_291 = arith.constant 9 : index
    %c0_292 = arith.constant 0 : index
    %279 = vector.load %arg24[%c1_290, %c9_291, %c0_292] : memref<10x32x128xf32, #tpu.memory_space<vmem>>, vector<8x16x128xf32>
    %280 = vector.shape_cast %279 : vector<8x16x128xf32> to vector<128x128xf32>
    %c5_293 = arith.constant 5 : index
    %c0_294 = arith.constant 0 : index
    %c0_295 = arith.constant 0 : index
    %281 = vector.load %arg8[%c5_293, %c0_294, %c0_295] : memref<9x128x64xf32, #tpu.memory_space<vmem>>, vector<1x128x64xf32>
    %282 = vector.shape_cast %281 : vector<1x128x64xf32> to vector<128x64xf32>
    %cst_296 = arith.constant dense<0.000000e+00> : vector<128x64xf32>
    %283 = tpu.matmul %280, %282, %cst_296 {dimension_numbers = #tpu.dot_dimension_numbers<[1], [0], [0], [1], [0, 0, 1, 1], [], []>} : vector<128x128xf32>, vector<128x64xf32>, vector<128x64xf32> -> vector<128x64xf32>
    %284 = arith.addf %278, %283 : vector<128x64xf32>
    %c2_297 = arith.constant 2 : index
    %c7_298 = arith.constant 7 : index
    %c0_299 = arith.constant 0 : index
    %285 = vector.load %arg24[%c2_297, %c7_298, %c0_299] : memref<10x32x128xf32, #tpu.memory_space<vmem>>, vector<8x16x128xf32>
    %286 = vector.shape_cast %285 : vector<8x16x128xf32> to vector<128x128xf32>
    %c6_300 = arith.constant 6 : index
    %c0_301 = arith.constant 0 : index
    %c0_302 = arith.constant 0 : index
    %287 = vector.load %arg8[%c6_300, %c0_301, %c0_302] : memref<9x128x64xf32, #tpu.memory_space<vmem>>, vector<1x128x64xf32>
    %288 = vector.shape_cast %287 : vector<1x128x64xf32> to vector<128x64xf32>
    %cst_303 = arith.constant dense<0.000000e+00> : vector<128x64xf32>
    %289 = tpu.matmul %286, %288, %cst_303 {dimension_numbers = #tpu.dot_dimension_numbers<[1], [0], [0], [1], [0, 0, 1, 1], [], []>} : vector<128x128xf32>, vector<128x64xf32>, vector<128x64xf32> -> vector<128x64xf32>
    %290 = arith.addf %284, %289 : vector<128x64xf32>
    %c2_304 = arith.constant 2 : index
    %c8_305 = arith.constant 8 : index
    %c0_306 = arith.constant 0 : index
    %291 = vector.load %arg24[%c2_304, %c8_305, %c0_306] : memref<10x32x128xf32, #tpu.memory_space<vmem>>, vector<8x16x128xf32>
    %292 = vector.shape_cast %291 : vector<8x16x128xf32> to vector<128x128xf32>
    %c7_307 = arith.constant 7 : index
    %c0_308 = arith.constant 0 : index
    %c0_309 = arith.constant 0 : index
    %293 = vector.load %arg8[%c7_307, %c0_308, %c0_309] : memref<9x128x64xf32, #tpu.memory_space<vmem>>, vector<1x128x64xf32>
    %294 = vector.shape_cast %293 : vector<1x128x64xf32> to vector<128x64xf32>
    %cst_310 = arith.constant dense<0.000000e+00> : vector<128x64xf32>
    %295 = tpu.matmul %292, %294, %cst_310 {dimension_numbers = #tpu.dot_dimension_numbers<[1], [0], [0], [1], [0, 0, 1, 1], [], []>} : vector<128x128xf32>, vector<128x64xf32>, vector<128x64xf32> -> vector<128x64xf32>
    %296 = arith.addf %290, %295 : vector<128x64xf32>
    %c2_311 = arith.constant 2 : index
    %c9_312 = arith.constant 9 : index
    %c0_313 = arith.constant 0 : index
    %297 = vector.load %arg24[%c2_311, %c9_312, %c0_313] : memref<10x32x128xf32, #tpu.memory_space<vmem>>, vector<8x16x128xf32>
    %298 = vector.shape_cast %297 : vector<8x16x128xf32> to vector<128x128xf32>
    %c8_314 = arith.constant 8 : index
    %c0_315 = arith.constant 0 : index
    %c0_316 = arith.constant 0 : index
    %299 = vector.load %arg8[%c8_314, %c0_315, %c0_316] : memref<9x128x64xf32, #tpu.memory_space<vmem>>, vector<1x128x64xf32>
    %300 = vector.shape_cast %299 : vector<1x128x64xf32> to vector<128x64xf32>
    %cst_317 = arith.constant dense<0.000000e+00> : vector<128x64xf32>
    %301 = tpu.matmul %298, %300, %cst_317 {dimension_numbers = #tpu.dot_dimension_numbers<[1], [0], [0], [1], [0, 0, 1, 1], [], []>} : vector<128x128xf32>, vector<128x64xf32>, vector<128x64xf32> -> vector<128x64xf32>
    %302 = arith.addf %296, %301 : vector<128x64xf32>
    %c0_318 = arith.constant 0 : index
    %c0_319 = arith.constant 0 : index
    %303 = vector.load %arg9[%c0_318, %c0_319] : memref<1x64xf32, #tpu.memory_space<vmem>>, vector<1x64xf32>
    %304 = vector.broadcast %303 : vector<1x64xf32> to vector<128x64xf32>
    %305 = arith.addf %302, %304 : vector<128x64xf32>
    %c0_320 = arith.constant 0 : index
    %c0_321 = arith.constant 0 : index
    %c0_322 = arith.constant 0 : index
    %306 = vector.load %arg21[%c0_320, %c0_321, %c0_322] : memref<1x128x64xf32, #tpu.memory_space<vmem>>, vector<1x128x64xf32>
    %307 = vector.shape_cast %306 : vector<1x128x64xf32> to vector<128x64xf32>
    %308 = vector.shape_cast %305 : vector<128x64xf32> to vector<1x128x64xf32>
    tpu.vector_store %arg21[%c0_320, %c0_321, %c0_322], %308 {strides = array<i32>} : memref<1x128x64xf32, #tpu.memory_space<vmem>>, vector<1x128x64xf32>,
    %c0_323 = arith.constant 0 : index
    %c0_324 = arith.constant 0 : index
    %309 = vector.load %arg10[%c0_323, %c0_324] : memref<8x128xf32, #tpu.memory_space<vmem>>, vector<8x128xf32>
    %c0_325 = arith.constant 0 : index
    %c0_326 = arith.constant 0 : index
    %310 = vector.load %arg11[%c0_325, %c0_326] : memref<32x8xf32, #tpu.memory_space<vmem>>, vector<32x8xf32>
    %cst_327 = arith.constant dense<0.000000e+00> : vector<32x128xf32>
    %311 = tpu.matmul %310, %309, %cst_327 {dimension_numbers = #tpu.dot_dimension_numbers<[1], [0], [0], [1], [0, 0, 1, 1], [], []>} : vector<32x8xf32>, vector<8x128xf32>, vector<32x128xf32> -> vector<32x128xf32>
    %c0_328 = arith.constant 0 : index
    %c0_329 = arith.constant 0 : index
    %312 = vector.load %arg12[%c0_328, %c0_329] : memref<32x1xf32, #tpu.memory_space<vmem>>, vector<32x1xf32>
    %313 = vector.broadcast %312 : vector<32x1xf32> to vector<32x128xf32>
    %314 = arith.addf %311, %313 : vector<32x128xf32>
    %cst_330 = arith.constant 0.000000e+00 : f32
    %315 = vector.broadcast %cst_330 : f32 to vector<32x128xf32>
    %316 = arith.maximumf %314, %315 : vector<32x128xf32>
    %c0_331 = arith.constant 0 : index
    %c0_332 = arith.constant 0 : index
    %317 = vector.load %arg13[%c0_331, %c0_332] : memref<8x32xf32, #tpu.memory_space<vmem>>, vector<8x32xf32>
    %cst_333 = arith.constant dense<0.000000e+00> : vector<8x128xf32>
    %318 = tpu.matmul %317, %316, %cst_333 {dimension_numbers = #tpu.dot_dimension_numbers<[1], [0], [0], [1], [0, 0, 1, 1], [], []>} : vector<8x32xf32>, vector<32x128xf32>, vector<8x128xf32> -> vector<8x128xf32>
    %c0_334 = arith.constant 0 : index
    %c0_335 = arith.constant 0 : index
    %319 = vector.load %arg14[%c0_334, %c0_335] : memref<8x1xf32, #tpu.memory_space<vmem>>, vector<8x1xf32>
    %320 = vector.broadcast %319 : vector<8x1xf32> to vector<8x128xf32>
    %321 = arith.addf %318, %320 : vector<8x128xf32>
    %cst_336 = arith.constant 0.000000e+00 : f32
    %322 = vector.broadcast %cst_336 : f32 to vector<8x128xf32>
    %323 = arith.maximumf %321, %322 : vector<8x128xf32>
    %c0_337 = arith.constant 0 : index
    %c0_338 = arith.constant 0 : index
    %324 = vector.load %arg15[%c0_337, %c0_338] : memref<32x8xf32, #tpu.memory_space<vmem>>, vector<32x8xf32>
    %cst_339 = arith.constant dense<0.000000e+00> : vector<32x128xf32>
    %325 = tpu.matmul %324, %323, %cst_339 {dimension_numbers = #tpu.dot_dimension_numbers<[1], [0], [0], [1], [0, 0, 1, 1], [], []>} : vector<32x8xf32>, vector<8x128xf32>, vector<32x128xf32> -> vector<32x128xf32>
    %c0_340 = arith.constant 0 : index
    %c0_341 = arith.constant 0 : index
    %326 = vector.load %arg16[%c0_340, %c0_341] : memref<32x1xf32, #tpu.memory_space<vmem>>, vector<32x1xf32>
    %327 = vector.broadcast %326 : vector<32x1xf32> to vector<32x128xf32>
    %328 = arith.addf %325, %327 : vector<32x128xf32>
    %cst_342 = arith.constant 0.000000e+00 : f32
    %329 = vector.broadcast %cst_342 : f32 to vector<32x128xf32>
    %330 = arith.maximumf %328, %329 : vector<32x128xf32>
    %c0_343 = arith.constant 0 : index
    %c0_344 = arith.constant 0 : index
    %331 = vector.load %arg17[%c0_343, %c0_344] : memref<8x32xf32, #tpu.memory_space<vmem>>, vector<8x32xf32>
    %cst_345 = arith.constant dense<0.000000e+00> : vector<8x128xf32>
    %332 = tpu.matmul %331, %330, %cst_345 {dimension_numbers = #tpu.dot_dimension_numbers<[1], [0], [0], [1], [0, 0, 1, 1], [], []>} : vector<8x32xf32>, vector<32x128xf32>, vector<8x128xf32> -> vector<8x128xf32>
    %c0_346 = arith.constant 0 : index
    %c0_347 = arith.constant 0 : index
    %333 = vector.load %arg18[%c0_346, %c0_347] : memref<8x1xf32, #tpu.memory_space<vmem>>, vector<8x1xf32>
    %334 = vector.broadcast %333 : vector<8x1xf32> to vector<8x128xf32>
    %335 = arith.addf %332, %334 : vector<8x128xf32>
    %c0_348 = arith.constant 0 : index
    %c0_349 = arith.constant 0 : index
    %336 = vector.load %arg19[%c0_348, %c0_349] : memref<4x8xf32, #tpu.memory_space<vmem>>, vector<4x8xf32>
    %cst_350 = arith.constant dense<0.000000e+00> : vector<4x128xf32>
    %337 = tpu.matmul %336, %335, %cst_350 {dimension_numbers = #tpu.dot_dimension_numbers<[1], [0], [0], [1], [0, 0, 1, 1], [], []>} : vector<4x8xf32>, vector<8x128xf32>, vector<4x128xf32> -> vector<4x128xf32>
    %c0_351 = arith.constant 0 : index
    %c0_352 = arith.constant 0 : index
    %338 = vector.load %arg20[%c0_351, %c0_352] : memref<4x1xf32, #tpu.memory_space<vmem>>, vector<4x1xf32>
    %339 = vector.broadcast %338 : vector<4x1xf32> to vector<4x128xf32>
    %340 = arith.addf %337, %339 : vector<4x128xf32>
    %c0_353 = arith.constant 0 : index
    %c0_354 = arith.constant 0 : index
    %c0_355 = arith.constant 0 : index
    %341 = vector.load %arg22[%c0_353, %c0_354, %c0_355] : memref<1x4x128xf32, #tpu.memory_space<vmem>>, vector<1x4x128xf32>
    %342 = vector.shape_cast %341 : vector<1x4x128xf32> to vector<4x128xf32>
    %343 = vector.shape_cast %340 : vector<4x128xf32> to vector<1x4x128xf32>
    tpu.vector_store %arg22[%c0_353, %c0_354, %c0_355], %343 {strides = array<i32>} : memref<1x4x128xf32, #tpu.memory_space<vmem>>, vector<1x4x128xf32>,
    return
  }
  func.func @transform_0(%arg0: i32) -> (i32, i32, i32, i32) {
    %c0_i32 = arith.constant 0 : i32
    %c0_i32_0 = arith.constant 0 : i32
    %c0_i32_1 = arith.constant 0 : i32
    %c0_i32_2 = arith.constant 0 : i32
    return %arg0, %c0_i32, %c0_i32_0, %c0_i32_1 : i32, i32, i32, i32
  }
  func.func @transform_1(%arg0: i32) -> (i32, i32, i32) {
    %c0_i32 = arith.constant 0 : i32
    %c0_i32_0 = arith.constant 0 : i32
    %c0_i32_1 = arith.constant 0 : i32
    %c0_i32_2 = arith.constant 0 : i32
    return %c0_i32, %c0_i32_0, %c0_i32_1 : i32, i32, i32
  }
  func.func @transform_2(%arg0: i32) -> (i32, i32) {
    %c0_i32 = arith.constant 0 : i32
    %c0_i32_0 = arith.constant 0 : i32
    %c0_i32_1 = arith.constant 0 : i32
    return %c0_i32, %c0_i32_0 : i32, i32
  }
  func.func @transform_3(%arg0: i32) -> (i32, i32, i32) {
    %c0_i32 = arith.constant 0 : i32
    %c0_i32_0 = arith.constant 0 : i32
    %c0_i32_1 = arith.constant 0 : i32
    %c0_i32_2 = arith.constant 0 : i32
    return %c0_i32, %c0_i32_0, %c0_i32_1 : i32, i32, i32
  }
  func.func @transform_4(%arg0: i32) -> (i32, i32) {
    %c0_i32 = arith.constant 0 : i32
    %c0_i32_0 = arith.constant 0 : i32
    %c0_i32_1 = arith.constant 0 : i32
    return %c0_i32, %c0_i32_0 : i32, i32
  }
  func.func @transform_5(%arg0: i32) -> (i32, i32, i32) {
    %c0_i32 = arith.constant 0 : i32
    %c0_i32_0 = arith.constant 0 : i32
    %c0_i32_1 = arith.constant 0 : i32
    %c0_i32_2 = arith.constant 0 : i32
    return %c0_i32, %c0_i32_0, %c0_i32_1 : i32, i32, i32
  }
  func.func @transform_6(%arg0: i32) -> (i32, i32) {
    %c0_i32 = arith.constant 0 : i32
    %c0_i32_0 = arith.constant 0 : i32
    %c0_i32_1 = arith.constant 0 : i32
    return %c0_i32, %c0_i32_0 : i32, i32
  }
  func.func @transform_7(%arg0: i32) -> (i32, i32, i32) {
    %c0_i32 = arith.constant 0 : i32
    %c0_i32_0 = arith.constant 0 : i32
    %c0_i32_1 = arith.constant 0 : i32
    %c0_i32_2 = arith.constant 0 : i32
    return %c0_i32, %c0_i32_0, %c0_i32_1 : i32, i32, i32
  }
  func.func @transform_8(%arg0: i32) -> (i32, i32) {
    %c0_i32 = arith.constant 0 : i32
    %c0_i32_0 = arith.constant 0 : i32
    %c0_i32_1 = arith.constant 0 : i32
    return %c0_i32, %c0_i32_0 : i32, i32
  }
  func.func @transform_9(%arg0: i32) -> (i32, i32) {
    %c0_i32 = arith.constant 0 : i32
    %c0_i32_0 = arith.constant 0 : i32
    %c0_i32_1 = arith.constant 0 : i32
    return %c0_i32, %c0_i32_0 : i32, i32
  }
  func.func @transform_10(%arg0: i32) -> (i32, i32) {
    %c0_i32 = arith.constant 0 : i32
    %c0_i32_0 = arith.constant 0 : i32
    %c0_i32_1 = arith.constant 0 : i32
    return %c0_i32, %c0_i32_0 : i32, i32
  }
  func.func @transform_11(%arg0: i32) -> (i32, i32) {
    %c0_i32 = arith.constant 0 : i32
    %c0_i32_0 = arith.constant 0 : i32
    %c0_i32_1 = arith.constant 0 : i32
    return %c0_i32, %c0_i32_0 : i32, i32
  }
  func.func @transform_12(%arg0: i32) -> (i32, i32) {
    %c0_i32 = arith.constant 0 : i32
    %c0_i32_0 = arith.constant 0 : i32
    %c0_i32_1 = arith.constant 0 : i32
    return %c0_i32, %c0_i32_0 : i32, i32
  }
  func.func @transform_13(%arg0: i32) -> (i32, i32) {
    %c0_i32 = arith.constant 0 : i32
    %c0_i32_0 = arith.constant 0 : i32
    %c0_i32_1 = arith.constant 0 : i32
    return %c0_i32, %c0_i32_0 : i32, i32
  }
  func.func @transform_14(%arg0: i32) -> (i32, i32) {
    %c0_i32 = arith.constant 0 : i32
    %c0_i32_0 = arith.constant 0 : i32
    %c0_i32_1 = arith.constant 0 : i32
    return %c0_i32, %c0_i32_0 : i32, i32
  }
  func.func @transform_15(%arg0: i32) -> (i32, i32) {
    %c0_i32 = arith.constant 0 : i32
    %c0_i32_0 = arith.constant 0 : i32
    %c0_i32_1 = arith.constant 0 : i32
    return %c0_i32, %c0_i32_0 : i32, i32
  }
  func.func @transform_16(%arg0: i32) -> (i32, i32) {
    %c0_i32 = arith.constant 0 : i32
    %c0_i32_0 = arith.constant 0 : i32
    %c0_i32_1 = arith.constant 0 : i32
    return %c0_i32, %c0_i32_0 : i32, i32
  }
  func.func @transform_17(%arg0: i32) -> (i32, i32) {
    %c0_i32 = arith.constant 0 : i32
    %c0_i32_0 = arith.constant 0 : i32
    %c0_i32_1 = arith.constant 0 : i32
    return %c0_i32, %c0_i32_0 : i32, i32
  }
  func.func @transform_18(%arg0: i32) -> (i32, i32) {
    %c0_i32 = arith.constant 0 : i32
    %c0_i32_0 = arith.constant 0 : i32
    %c0_i32_1 = arith.constant 0 : i32
    return %c0_i32, %c0_i32_0 : i32, i32
  }
  func.func @transform_19(%arg0: i32) -> (i32, i32) {
    %c0_i32 = arith.constant 0 : i32
    %c0_i32_0 = arith.constant 0 : i32
    %c0_i32_1 = arith.constant 0 : i32
    return %c0_i32, %c0_i32_0 : i32, i32
  }
  func.func @transform_20(%arg0: i32) -> (i32, i32, i32) {
    %c0_i32 = arith.constant 0 : i32
    %c0_i32_0 = arith.constant 0 : i32
    %c0_i32_1 = arith.constant 0 : i32
    return %arg0, %c0_i32, %c0_i32_0 : i32, i32, i32
  }
  func.func @transform_21(%arg0: i32) -> (i32, i32, i32) {
    %c0_i32 = arith.constant 0 : i32
    %c0_i32_0 = arith.constant 0 : i32
    %c0_i32_1 = arith.constant 0 : i32
    return %arg0, %c0_i32, %c0_i32_0 : i32, i32, i32
  }
}

</mosaic_0001>

<llo_original>
// kernel: squeeze.1
$region0: #{squeeze.1}
  %s0 = inlined_call_operand.vmem [shape: f32[1,4,128], index: 0, kind: input, shape index: {}]
  %s1 = inlined_call_operand.vmem [shape: f32[4,2,4,16], index: 1, kind: output, shape index: {}]
  $region1: #{squeeze.1} parent=0
    #allocation0 [shape = 'u8[32768]{0}', space=vmem, size = 0x8000, scoped, tag = 'scoped mem for output reshape']
    #allocation1 [shape = 'u8[4096]{0}', space=vmem, size = 0x1000, scoped, tag = 'scoped mem for input reshape']
    %s3 = sshll.u32 1, 4
    %s4 = ssub.s32 %s3, 1
    %v5 = vld [vmem:[%s0] sm:%s4]
    %6 = vst [vmem:[#allocation1] sm:%s4] %v5
    %v7 = vld [vmem:[#allocation1] sm:$0xf]
    %vm8 = vcmask 130048
    %9 = vst.msk [vmem:[#allocation0] ss:$16 sm:$0x3] %vm8, %v7
    %10 = vst.msk [vmem:[#allocation0] ss:$16 sm:$0xc] %vm8, %v7
    %v11 = vld [vmem:[#allocation1] sm:$0xf]
    %12 = vrot.lane.b32.xlu0 %v11, 112
    %v13 = vpop.permute.xlu0 %12
    %vm14 = vcmask 130048
    %s15 = scalar_lea.vmem [#allocation0], 1
    %16 = vst.msk [vmem:[%s15] ss:$16 sm:$0x3] %vm14, %v13
    %s17 = scalar_lea.vmem [#allocation0], 1
    %18 = vst.msk [vmem:[%s17] ss:$16 sm:$0xc] %vm14, %v13
    %v19 = vld [vmem:[#allocation1] sm:$0xf]
    %20 = vrot.lane.b32.xlu0 %v19, 96
    %v21 = vpop.permute.xlu0 %20
    %vm22 = vcmask 130048
    %s23 = scalar_lea.vmem [#allocation0], 2
    %24 = vst.msk [vmem:[%s23] ss:$16 sm:$0x3] %vm22, %v21
    %s25 = scalar_lea.vmem [#allocation0], 2
    %26 = vst.msk [vmem:[%s25] ss:$16 sm:$0xc] %vm22, %v21
    %v27 = vld [vmem:[#allocation1] sm:$0xf]
    %28 = vrot.lane.b32.xlu0 %v27, 80
    %v29 = vpop.permute.xlu0 %28
    %vm30 = vcmask 130048
    %s31 = scalar_lea.vmem [#allocation0], 3
    %32 = vst.msk [vmem:[%s31] ss:$16 sm:$0x3] %vm30, %v29
    %s33 = scalar_lea.vmem [#allocation0], 3
    %34 = vst.msk [vmem:[%s33] ss:$16 sm:$0xc] %vm30, %v29
    %v35 = vld [vmem:[#allocation1] sm:$0xf]
    %36 = vrot.lane.b32.xlu0 %v35, 64
    %v37 = vpop.permute.xlu0 %36
    %vm38 = vcmask 130048
    %s39 = scalar_lea.vmem [#allocation0], 8
    %40 = vst.msk [vmem:[%s39] ss:$16 sm:$0x3] %vm38, %v37
    %s41 = scalar_lea.vmem [#allocation0], 8
    %42 = vst.msk [vmem:[%s41] ss:$16 sm:$0xc] %vm38, %v37
    %v43 = vld [vmem:[#allocation1] sm:$0xf]
    %44 = vrot.lane.b32.xlu0 %v43, 48
    %v45 = vpop.permute.xlu0 %44
    %vm46 = vcmask 130048
    %s47 = scalar_lea.vmem [#allocation0], 9
    %48 = vst.msk [vmem:[%s47] ss:$16 sm:$0x3] %vm46, %v45
    %s49 = scalar_lea.vmem [#allocation0], 9
    %50 = vst.msk [vmem:[%s49] ss:$16 sm:$0xc] %vm46, %v45
    %v51 = vld [vmem:[#allocation1] sm:$0xf]
    %52 = vrot.lane.b32.xlu0 %v51, 32
    %v53 = vpop.permute.xlu0 %52
    %vm54 = vcmask 130048
    %s55 = scalar_lea.vmem [#allocation0], 10
    %56 = vst.msk [vmem:[%s55] ss:$16 sm:$0x3] %vm54, %v53
    %s57 = scalar_lea.vmem [#allocation0], 10
    %58 = vst.msk [vmem:[%s57] ss:$16 sm:$0xc] %vm54, %v53
    %v59 = vld [vmem:[#allocation1] sm:$0xf]
    %60 = vrot.lane.b32.xlu0 %v59, 16
    %v61 = vpop.permute.xlu0 %60
    %vm62 = vcmask 130048
    %s63 = scalar_lea.vmem [#allocation0], 11
    %64 = vst.msk [vmem:[%s63] ss:$16 sm:$0x3] %vm62, %v61
    %s65 = scalar_lea.vmem [#allocation0], 11
    %66 = vst.msk [vmem:[%s65] ss:$16 sm:$0xc] %vm62, %v61
    %s68 = sshll.u32 1, 4
    %s69 = ssub.s32 %s68, 1
    %v71 = vld [vmem:[#allocation0] sm:%s69]
    %s72 = sshll.u32 1, 4
    %s73 = ssub.s32 %s72, 1
    %74 = vst [vmem:[%s1] sm:%s73] %v71
    %s75 = scalar_lea.vmem [#allocation0], 8
    %v76 = vld [vmem:[%s75] sm:%s69]
    %s77 = sshll.u32 1, 4
    %s78 = ssub.s32 %s77, 1
    %s79 = scalar_lea.vmem %s1, 4
    %80 = vst [vmem:[%s79] sm:%s78] %v76
    %s81 = scalar_lea.vmem [#allocation0], 16
    %v82 = vld [vmem:[%s81] sm:%s69]
    %s83 = sshll.u32 1, 4
    %s84 = ssub.s32 %s83, 1
    %s85 = smul.addr 4, 2
    %s86 = scalar_lea.vmem %s1, %s85
    %87 = vst [vmem:[%s86] sm:%s84] %v82
    %s88 = scalar_lea.vmem [#allocation0], 24
    %v89 = vld [vmem:[%s88] sm:%s69]
    %s90 = sshll.u32 1, 4
    %s91 = ssub.s32 %s90, 1
    %s92 = smul.addr 4, 3
    %s93 = scalar_lea.vmem %s1, %s92
    %94 = vst [vmem:[%s93] sm:%s91] %v89
    %s95 = scalar_lea.vmem [#allocation0], 32
    %v96 = vld [vmem:[%s95] sm:%s69]
    %s97 = sshll.u32 1, 4
    %s98 = ssub.s32 %s97, 1
    %s99 = smul.addr 4, 4
    %s100 = scalar_lea.vmem %s1, %s99
    %101 = vst [vmem:[%s100] sm:%s98] %v96
    %s102 = scalar_lea.vmem [#allocation0], 40
    %v103 = vld [vmem:[%s102] sm:%s69]
    %s104 = sshll.u32 1, 4
    %s105 = ssub.s32 %s104, 1
    %s106 = smul.addr 4, 5
    %s107 = scalar_lea.vmem %s1, %s106
    %108 = vst [vmem:[%s107] sm:%s105] %v103
    %s109 = scalar_lea.vmem [#allocation0], 48
    %v110 = vld [vmem:[%s109] sm:%s69]
    %s111 = sshll.u32 1, 4
    %s112 = ssub.s32 %s111, 1
    %s113 = smul.addr 4, 6
    %s114 = scalar_lea.vmem %s1, %s113
    %115 = vst [vmem:[%s114] sm:%s112] %v110
    %s116 = scalar_lea.vmem [#allocation0], 56
    %v117 = vld [vmem:[%s116] sm:%s69]
    %s118 = sshll.u32 1, 4
    %s119 = ssub.s32 %s118, 1
    %s120 = smul.addr 4, 7
    %s121 = scalar_lea.vmem %s1, %s120
    %122 = vst [vmem:[%s121] sm:%s119] %v117

// kernel: pallas_forward.1
$region0: #{pallas_forward.1}
  #allocation0 [shape = 'u32[]', space=smem, size = 0x4, offset = 0x4, fixed_abs, tag = 'smem constant byte address 0x4 - core index']
  #allocation1 [shape = 'u32[144,128]{1,0:T(1,128)}', space=vmem, size = 0x12000, scoped, tag = 'internal scratch']
  #allocation2 [shape = 'f32[10,32,64]{2,1,0:T(8,128)}', space=vmem, size = 0x28000, scoped, tag = 'scratch operand']
  #allocation3 [shape = 'f32[10,32,128]{2,1,0:T(8,128)}', space=vmem, size = 0x28000, scoped, tag = 'scratch operand']
  %s0 = inlined_call_operand.vmem [shape: f32[2,8,16,64], index: 0, kind: input, shape index: {}]
  %s1 = inlined_call_operand.vmem [shape: f32[9,64,128], index: 1, kind: input, shape index: {}]
  %s2 = inlined_call_operand.vmem [shape: f32[1,128], index: 2, kind: input, shape index: {}]
  %s3 = inlined_call_operand.vmem [shape: f32[9,128,64], index: 3, kind: input, shape index: {}]
  %s4 = inlined_call_operand.vmem [shape: f32[1,64], index: 4, kind: input, shape index: {}]
  %s5 = inlined_call_operand.vmem [shape: f32[9,64,128], index: 5, kind: input, shape index: {}]
  %s6 = inlined_call_operand.vmem [shape: f32[1,128], index: 6, kind: input, shape index: {}]
  %s7 = inlined_call_operand.vmem [shape: f32[9,128,64], index: 7, kind: input, shape index: {}]
  %s8 = inlined_call_operand.vmem [shape: f32[1,64], index: 8, kind: input, shape index: {}]
  %s9 = inlined_call_operand.vmem [shape: f32[8,128], index: 9, kind: input, shape index: {}]
  %s10 = inlined_call_operand.vmem [shape: f32[32,8], index: 10, kind: input, shape index: {}]
  %s11 = inlined_call_operand.vmem [shape: f32[32,1], index: 11, kind: input, shape index: {}]
  %s12 = inlined_call_operand.vmem [shape: f32[8,32], index: 12, kind: input, shape index: {}]
  %s13 = inlined_call_operand.vmem [shape: f32[8,1], index: 13, kind: input, shape index: {}]
  %s14 = inlined_call_operand.vmem [shape: f32[32,8], index: 14, kind: input, shape index: {}]
  %s15 = inlined_call_operand.vmem [shape: f32[32,1], index: 15, kind: input, shape index: {}]
  %s16 = inlined_call_operand.vmem [shape: f32[8,32], index: 16, kind: input, shape index: {}]
  %s17 = inlined_call_operand.vmem [shape: f32[8,1], index: 17, kind: input, shape index: {}]
  %s18 = inlined_call_operand.vmem [shape: f32[4,8], index: 18, kind: input, shape index: {}]
  %s19 = inlined_call_operand.vmem [shape: f32[4,1], index: 19, kind: input, shape index: {}]
  %s20 = inlined_call_operand.vmem [shape: f32[2,128,64], index: 20, kind: output, shape index: {0}]
  %s21 = inlined_call_operand.vmem [shape: f32[2,4,128], index: 21, kind: output, shape index: {1}]
  %22 = xla_tuple %s20, %s21
  %s23 = sld [smem:[#allocation0]]
  $region121: #{pallas_forward.1} parent=0
    _
  %s25 = ssub.s32 1, %s23
  %s26 = scalar_select 0, %s25, %s23
  loop: start=0, step=1, limit=4
  $region2: #{pallas_forward.1} parent=0 // loop_pre_header
    _
  $region3: #{pallas_forward.1} parent=0 // loop_header
    %s28 = sphi 0, %s32
    %p29 = scmp.ge.s32.totalorder %s28, 4
    %s38 = sphi 0, %s40
    %s41 = sphi 0, %s38
    %s42 = sphi 0, %s41
    %s58 = sphi 0, %s42
    %s62 = sphi 0, %s62
    %s64 = sphi 0, %s62
    %s65 = sphi 0, %s64
    %s79 = sphi 0, %s65
    %s83 = sphi 0, %s83
    %s85 = sphi 0, %s83
    %s86 = sphi 0, %s85
    %s100 = sphi 0, %s86
    %s104 = sphi 0, %s104
    %s106 = sphi 0, %s104
    %s107 = sphi 0, %s106
    %s121 = sphi 0, %s107
    %s125 = sphi 0, %s125
    %s127 = sphi 0, %s125
    %s128 = sphi 0, %s127
    %s142 = sphi 0, %s128
    %s146 = sphi 0, %s146
    %s148 = sphi 0, %s146
    %s149 = sphi 0, %s148
    %s163 = sphi 0, %s149
    %s167 = sphi 0, %s167
    %s169 = sphi 0, %s167
    %s170 = sphi 0, %s169
    %s184 = sphi 0, %s170
    %s188 = sphi 0, %s188
    %s190 = sphi 0, %s188
    %s191 = sphi 0, %s190
    %s205 = sphi 0, %s191
    %s209 = sphi 0, %s209
    %s211 = sphi 0, %s209
    %s212 = sphi 0, %s211
    %s226 = sphi 0, %s212
    %s230 = sphi 0, %s230
    %s232 = sphi 0, %s230
    %s233 = sphi 0, %s232
    %s247 = sphi 0, %s233
    %s251 = sphi 0, %s251
    %s253 = sphi 0, %s251
    %s254 = sphi 0, %s253
    %s268 = sphi 0, %s254
    %s272 = sphi 0, %s272
    %s274 = sphi 0, %s272
    %s275 = sphi 0, %s274
    %s289 = sphi 0, %s275
    %s293 = sphi 0, %s293
    %s295 = sphi 0, %s293
    %s296 = sphi 0, %s295
    %s310 = sphi 0, %s296
    %s314 = sphi 0, %s314
    %s316 = sphi 0, %s314
    %s317 = sphi 0, %s316
    %s331 = sphi 0, %s317
    %s335 = sphi 0, %s335
    %s337 = sphi 0, %s335
    %s338 = sphi 0, %s337
    %s352 = sphi 0, %s338
    %s356 = sphi 0, %s356
    %s358 = sphi 0, %s356
    %s359 = sphi 0, %s358
    %s373 = sphi 0, %s359
    %s377 = sphi 0, %s377
    %s379 = sphi 0, %s377
    %s380 = sphi 0, %s379
    %s394 = sphi 0, %s380
    %s398 = sphi 0, %s398
    %s400 = sphi 0, %s398
    %s401 = sphi 0, %s400
    %s415 = sphi 0, %s401
    %s419 = sphi 0, %s419
    %s421 = sphi 0, %s419
    %s422 = sphi 0, %s421
    %s436 = sphi 0, %s422
    %s440 = sphi 0, %s440
    %s442 = sphi 0, %s440
    %s443 = sphi 0, %s442
    %s457 = sphi 0, %s443
    %s463 = sphi 0, %s465
    %s466 = sphi 0, %s463
    %s467 = sphi 0, %s466
    %s483 = sphi 0, %s467
    %s489 = sphi 0, %s491
    %s492 = sphi 0, %s489
    %s493 = sphi 0, %s492
    %s509 = sphi 0, %s493
  $region4: #{pallas_forward.1} parent=0 // loop_header_branch
    %31 = sbr.rel (%p29) target = $region8
  $region5: #{pallas_forward.1} parent=0 // loop_body
    %s33 = ssub.s32 %s28, 1
    %s34 = ssub.s32 %s28, 2
    %s35 = sadd.s32 %s28, 1
    %s36 = ssub.s32 %s28, %s35
    %p37 = scmp.eq.s32.totalorder %s36, 0
    %s39 = sadd.s32 %s38, 1
    %s40 = scalar_select %p37, %s38, %s39
    %p43 = pneg %p37
    %p44 = scmp.eq.s32.totalorder %s28, 1
    %p45 = por %p43, %p44
    %p46 = scmp.ne.s32.totalorder %s38, %s41
    %p47 = scmp.eq.s32.totalorder %s28, 0
    %p48 = por %p46, %p47
    %p49 = scmp.ne.s32.totalorder %s38, %s41
    %p50 = scmp.eq.s32.totalorder %s33, 1
    %p51 = por %p49, %p50
    %p52 = scmp.ne.s32.totalorder %s41, %s42
    %p53 = scmp.eq.s32.totalorder %s33, 0
    %p54 = por %p52, %p53
    %p55 = scmp.ne.s32.totalorder %s41, %s42
    %p56 = scmp.eq.s32.totalorder %s34, 1
    %p57 = por %p55, %p56
    %p59 = scmp.ne.s32.totalorder %s42, %s58
    %p60 = scmp.eq.s32.totalorder %s34, 0
    %p61 = por %p59, %p60
    %s63 = sadd.s32 %s62, 1
    %p66 = scmp.eq.s32.totalorder %s28, 1
    %p67 = scmp.ne.s32.totalorder %s62, %s64
    %p68 = scmp.eq.s32.totalorder %s28, 0
    %p69 = por %p67, %p68
    %p70 = scmp.ne.s32.totalorder %s62, %s64
    %p71 = scmp.eq.s32.totalorder %s33, 1
    %p72 = por %p70, %p71
    %p73 = scmp.ne.s32.totalorder %s64, %s65
    %p74 = scmp.eq.s32.totalorder %s33, 0
    %p75 = por %p73, %p74
    %p76 = scmp.ne.s32.totalorder %s64, %s65
    %p77 = scmp.eq.s32.totalorder %s34, 1
    %p78 = por %p76, %p77
    %p80 = scmp.ne.s32.totalorder %s65, %s79
    %p81 = scmp.eq.s32.totalorder %s34, 0
    %p82 = por %p80, %p81
    %s84 = sadd.s32 %s83, 1
    %p87 = scmp.eq.s32.totalorder %s28, 1
    %p88 = scmp.ne.s32.totalorder %s83, %s85
    %p89 = scmp.eq.s32.totalorder %s28, 0
    %p90 = por %p88, %p89
    %p91 = scmp.ne.s32.totalorder %s83, %s85
    %p92 = scmp.eq.s32.totalorder %s33, 1
    %p93 = por %p91, %p92
    %p94 = scmp.ne.s32.totalorder %s85, %s86
    %p95 = scmp.eq.s32.totalorder %s33, 0
    %p96 = por %p94, %p95
    %p97 = scmp.ne.s32.totalorder %s85, %s86
    %p98 = scmp.eq.s32.totalorder %s34, 1
    %p99 = por %p97, %p98
    %p101 = scmp.ne.s32.totalorder %s86, %s100
    %p102 = scmp.eq.s32.totalorder %s34, 0
    %p103 = por %p101, %p102
    %s105 = sadd.s32 %s104, 1
    %p108 = scmp.eq.s32.totalorder %s28, 1
    %p109 = scmp.ne.s32.totalorder %s104, %s106
    %p110 = scmp.eq.s32.totalorder %s28, 0
    %p111 = por %p109, %p110
    %p112 = scmp.ne.s32.totalorder %s104, %s106
    %p113 = scmp.eq.s32.totalorder %s33, 1
    %p114 = por %p112, %p113
    %p115 = scmp.ne.s32.totalorder %s106, %s107
    %p116 = scmp.eq.s32.totalorder %s33, 0
    %p117 = por %p115, %p116
    %p118 = scmp.ne.s32.totalorder %s106, %s107
    %p119 = scmp.eq.s32.totalorder %s34, 1
    %p120 = por %p118, %p119
    %p122 = scmp.ne.s32.totalorder %s107, %s121
    %p123 = scmp.eq.s32.totalorder %s34, 0
    %p124 = por %p122, %p123
    %s126 = sadd.s32 %s125, 1
    %p129 = scmp.eq.s32.totalorder %s28, 1
    %p130 = scmp.ne.s32.totalorder %s125, %s127
    %p131 = scmp.eq.s32.totalorder %s28, 0
    %p132 = por %p130, %p131
    %p133 = scmp.ne.s32.totalorder %s125, %s127
    %p134 = scmp.eq.s32.totalorder %s33, 1
    %p135 = por %p133, %p134
    %p136 = scmp.ne.s32.totalorder %s127, %s128
    %p137 = scmp.eq.s32.totalorder %s33, 0
    %p138 = por %p136, %p137
    %p139 = scmp.ne.s32.totalorder %s127, %s128
    %p140 = scmp.eq.s32.totalorder %s34, 1
    %p141 = por %p139, %p140
    %p143 = scmp.ne.s32.totalorder %s128, %s142
    %p144 = scmp.eq.s32.totalorder %s34, 0
    %p145 = por %p143, %p144
    %s147 = sadd.s32 %s146, 1
    %p150 = scmp.eq.s32.totalorder %s28, 1
    %p151 = scmp.ne.s32.totalorder %s146, %s148
    %p152 = scmp.eq.s32.totalorder %s28, 0
    %p153 = por %p151, %p152
    %p154 = scmp.ne.s32.totalorder %s146, %s148
    %p155 = scmp.eq.s32.totalorder %s33, 1
    %p156 = por %p154, %p155
    %p157 = scmp.ne.s32.totalorder %s148, %s149
    %p158 = scmp.eq.s32.totalorder %s33, 0
    %p159 = por %p157, %p158
    %p160 = scmp.ne.s32.totalorder %s148, %s149
    %p161 = scmp.eq.s32.totalorder %s34, 1
    %p162 = por %p160, %p161
    %p164 = scmp.ne.s32.totalorder %s149, %s163
    %p165 = scmp.eq.s32.totalorder %s34, 0
    %p166 = por %p164, %p165
    %s168 = sadd.s32 %s167, 1
    %p171 = scmp.eq.s32.totalorder %s28, 1
    %p172 = scmp.ne.s32.totalorder %s167, %s169
    %p173 = scmp.eq.s32.totalorder %s28, 0
    %p174 = por %p172, %p173
    %p175 = scmp.ne.s32.totalorder %s167, %s169
    %p176 = scmp.eq.s32.totalorder %s33, 1
    %p177 = por %p175, %p176
    %p178 = scmp.ne.s32.totalorder %s169, %s170
    %p179 = scmp.eq.s32.totalorder %s33, 0
    %p180 = por %p178, %p179
    %p181 = scmp.ne.s32.totalorder %s169, %s170
    %p182 = scmp.eq.s32.totalorder %s34, 1
    %p183 = por %p181, %p182
    %p185 = scmp.ne.s32.totalorder %s170, %s184
    %p186 = scmp.eq.s32.totalorder %s34, 0
    %p187 = por %p185, %p186
    %s189 = sadd.s32 %s188, 1
    %p192 = scmp.eq.s32.totalorder %s28, 1
    %p193 = scmp.ne.s32.totalorder %s188, %s190
    %p194 = scmp.eq.s32.totalorder %s28, 0
    %p195 = por %p193, %p194
    %p196 = scmp.ne.s32.totalorder %s188, %s190
    %p197 = scmp.eq.s32.totalorder %s33, 1
    %p198 = por %p196, %p197
    %p199 = scmp.ne.s32.totalorder %s190, %s191
    %p200 = scmp.eq.s32.totalorder %s33, 0
    %p201 = por %p199, %p200
    %p202 = scmp.ne.s32.totalorder %s190, %s191
    %p203 = scmp.eq.s32.totalorder %s34, 1
    %p204 = por %p202, %p203
    %p206 = scmp.ne.s32.totalorder %s191, %s205
    %p207 = scmp.eq.s32.totalorder %s34, 0
    %p208 = por %p206, %p207
    %s210 = sadd.s32 %s209, 1
    %p213 = scmp.eq.s32.totalorder %s28, 1
    %p214 = scmp.ne.s32.totalorder %s209, %s211
    %p215 = scmp.eq.s32.totalorder %s28, 0
    %p216 = por %p214, %p215
    %p217 = scmp.ne.s32.totalorder %s209, %s211
    %p218 = scmp.eq.s32.totalorder %s33, 1
    %p219 = por %p217, %p218
    %p220 = scmp.ne.s32.totalorder %s211, %s212
    %p221 = scmp.eq.s32.totalorder %s33, 0
    %p222 = por %p220, %p221
    %p223 = scmp.ne.s32.totalorder %s211, %s212
    %p224 = scmp.eq.s32.totalorder %s34, 1
    %p225 = por %p223, %p224
    %p227 = scmp.ne.s32.totalorder %s212, %s226
    %p228 = scmp.eq.s32.totalorder %s34, 0
    %p229 = por %p227, %p228
    %s231 = sadd.s32 %s230, 1
    %p234 = scmp.eq.s32.totalorder %s28, 1
    %p235 = scmp.ne.s32.totalorder %s230, %s232
    %p236 = scmp.eq.s32.totalorder %s28, 0
    %p237 = por %p235, %p236
    %p238 = scmp.ne.s32.totalorder %s230, %s232
    %p239 = scmp.eq.s32.totalorder %s33, 1
    %p240 = por %p238, %p239
    %p241 = scmp.ne.s32.totalorder %s232, %s233
    %p242 = scmp.eq.s32.totalorder %s33, 0
    %p243 = por %p241, %p242
    %p244 = scmp.ne.s32.totalorder %s232, %s233
    %p245 = scmp.eq.s32.totalorder %s34, 1
    %p246 = por %p244, %p245
    %p248 = scmp.ne.s32.totalorder %s233, %s247
    %p249 = scmp.eq.s32.totalorder %s34, 0
    %p250 = por %p248, %p249
    %s252 = sadd.s32 %s251, 1
    %p255 = scmp.eq.s32.totalorder %s28, 1
    %p256 = scmp.ne.s32.totalorder %s251, %s253
    %p257 = scmp.eq.s32.totalorder %s28, 0
    %p258 = por %p256, %p257
    %p259 = scmp.ne.s32.totalorder %s251, %s253
    %p260 = scmp.eq.s32.totalorder %s33, 1
    %p261 = por %p259, %p260
    %p262 = scmp.ne.s32.totalorder %s253, %s254
    %p263 = scmp.eq.s32.totalorder %s33, 0
    %p264 = por %p262, %p263
    %p265 = scmp.ne.s32.totalorder %s253, %s254
    %p266 = scmp.eq.s32.totalorder %s34, 1
    %p267 = por %p265, %p266
    %p269 = scmp.ne.s32.totalorder %s254, %s268
    %p270 = scmp.eq.s32.totalorder %s34, 0
    %p271 = por %p269, %p270
    %s273 = sadd.s32 %s272, 1
    %p276 = scmp.eq.s32.totalorder %s28, 1
    %p277 = scmp.ne.s32.totalorder %s272, %s274
    %p278 = scmp.eq.s32.totalorder %s28, 0
    %p279 = por %p277, %p278
    %p280 = scmp.ne.s32.totalorder %s272, %s274
    %p281 = scmp.eq.s32.totalorder %s33, 1
    %p282 = por %p280, %p281
    %p283 = scmp.ne.s32.totalorder %s274, %s275
    %p284 = scmp.eq.s32.totalorder %s33, 0
    %p285 = por %p283, %p284
    %p286 = scmp.ne.s32.totalorder %s274, %s275
    %p287 = scmp.eq.s32.totalorder %s34, 1
    %p288 = por %p286, %p287
    %p290 = scmp.ne.s32.totalorder %s275, %s289
    %p291 = scmp.eq.s32.totalorder %s34, 0
    %p292 = por %p290, %p291
    %s294 = sadd.s32 %s293, 1
    %p297 = scmp.eq.s32.totalorder %s28, 1
    %p298 = scmp.ne.s32.totalorder %s293, %s295
    %p299 = scmp.eq.s32.totalorder %s28, 0
    %p300 = por %p298, %p299
    %p301 = scmp.ne.s32.totalorder %s293, %s295
    %p302 = scmp.eq.s32.totalorder %s33, 1
    %p303 = por %p301, %p302
    %p304 = scmp.ne.s32.totalorder %s295, %s296
    %p305 = scmp.eq.s32.totalorder %s33, 0
    %p306 = por %p304, %p305
    %p307 = scmp.ne.s32.totalorder %s295, %s296
    %p308 = scmp.eq.s32.totalorder %s34, 1
    %p309 = por %p307, %p308
    %p311 = scmp.ne.s32.totalorder %s296, %s310
    %p312 = scmp.eq.s32.totalorder %s34, 0
    %p313 = por %p311, %p312
    %s315 = sadd.s32 %s314, 1
    %p318 = scmp.eq.s32.totalorder %s28, 1
    %p319 = scmp.ne.s32.totalorder %s314, %s316
    %p320 = scmp.eq.s32.totalorder %s28, 0
    %p321 = por %p319, %p320
    %p322 = scmp.ne.s32.totalorder %s314, %s316
    %p323 = scmp.eq.s32.totalorder %s33, 1
    %p324 = por %p322, %p323
    %p325 = scmp.ne.s32.totalorder %s316, %s317
    %p326 = scmp.eq.s32.totalorder %s33, 0
    %p327 = por %p325, %p326
    %p328 = scmp.ne.s32.totalorder %s316, %s317
    %p329 = scmp.eq.s32.totalorder %s34, 1
    %p330 = por %p328, %p329
    %p332 = scmp.ne.s32.totalorder %s317, %s331
    %p333 = scmp.eq.s32.totalorder %s34, 0
    %p334 = por %p332, %p333
    %s336 = sadd.s32 %s335, 1
    %p339 = scmp.eq.s32.totalorder %s28, 1
    %p340 = scmp.ne.s32.totalorder %s335, %s337
    %p341 = scmp.eq.s32.totalorder %s28, 0
    %p342 = por %p340, %p341
    %p343 = scmp.ne.s32.totalorder %s335, %s337
    %p344 = scmp.eq.s32.totalorder %s33, 1
    %p345 = por %p343, %p344
    %p346 = scmp.ne.s32.totalorder %s337, %s338
    %p347 = scmp.eq.s32.totalorder %s33, 0
    %p348 = por %p346, %p347
    %p349 = scmp.ne.s32.totalorder %s337, %s338
    %p350 = scmp.eq.s32.totalorder %s34, 1
    %p351 = por %p349, %p350
    %p353 = scmp.ne.s32.totalorder %s338, %s352
    %p354 = scmp.eq.s32.totalorder %s34, 0
    %p355 = por %p353, %p354
    %s357 = sadd.s32 %s356, 1
    %p360 = scmp.eq.s32.totalorder %s28, 1
    %p361 = scmp.ne.s32.totalorder %s356, %s358
    %p362 = scmp.eq.s32.totalorder %s28, 0
    %p363 = por %p361, %p362
    %p364 = scmp.ne.s32.totalorder %s356, %s358
    %p365 = scmp.eq.s32.totalorder %s33, 1
    %p366 = por %p364, %p365
    %p367 = scmp.ne.s32.totalorder %s358, %s359
    %p368 = scmp.eq.s32.totalorder %s33, 0
    %p369 = por %p367, %p368
    %p370 = scmp.ne.s32.totalorder %s358, %s359
    %p371 = scmp.eq.s32.totalorder %s34, 1
    %p372 = por %p370, %p371
    %p374 = scmp.ne.s32.totalorder %s359, %s373
    %p375 = scmp.eq.s32.totalorder %s34, 0
    %p376 = por %p374, %p375
    %s378 = sadd.s32 %s377, 1
    %p381 = scmp.eq.s32.totalorder %s28, 1
    %p382 = scmp.ne.s32.totalorder %s377, %s379
    %p383 = scmp.eq.s32.totalorder %s28, 0
    %p384 = por %p382, %p383
    %p385 = scmp.ne.s32.totalorder %s377, %s379
    %p386 = scmp.eq.s32.totalorder %s33, 1
    %p387 = por %p385, %p386
    %p388 = scmp.ne.s32.totalorder %s379, %s380
    %p389 = scmp.eq.s32.totalorder %s33, 0
    %p390 = por %p388, %p389
    %p391 = scmp.ne.s32.totalorder %s379, %s380
    %p392 = scmp.eq.s32.totalorder %s34, 1
    %p393 = por %p391, %p392
    %p395 = scmp.ne.s32.totalorder %s380, %s394
    %p396 = scmp.eq.s32.totalorder %s34, 0
    %p397 = por %p395, %p396
    %s399 = sadd.s32 %s398, 1
    %p402 = scmp.eq.s32.totalorder %s28, 1
    %p403 = scmp.ne.s32.totalorder %s398, %s400
    %p404 = scmp.eq.s32.totalorder %s28, 0
    %p405 = por %p403, %p404
    %p406 = scmp.ne.s32.totalorder %s398, %s400
    %p407 = scmp.eq.s32.totalorder %s33, 1
    %p408 = por %p406, %p407
    %p409 = scmp.ne.s32.totalorder %s400, %s401
    %p410 = scmp.eq.s32.totalorder %s33, 0
    %p411 = por %p409, %p410
    %p412 = scmp.ne.s32.totalorder %s400, %s401
    %p413 = scmp.eq.s32.totalorder %s34, 1
    %p414 = por %p412, %p413
    %p416 = scmp.ne.s32.totalorder %s401, %s415
    %p417 = scmp.eq.s32.totalorder %s34, 0
    %p418 = por %p416, %p417
    %s420 = sadd.s32 %s419, 1
    %p423 = scmp.eq.s32.totalorder %s28, 1
    %p424 = scmp.ne.s32.totalorder %s419, %s421
    %p425 = scmp.eq.s32.totalorder %s28, 0
    %p426 = por %p424, %p425
    %p427 = scmp.ne.s32.totalorder %s419, %s421
    %p428 = scmp.eq.s32.totalorder %s33, 1
    %p429 = por %p427, %p428
    %p430 = scmp.ne.s32.totalorder %s421, %s422
    %p431 = scmp.eq.s32.totalorder %s33, 0
    %p432 = por %p430, %p431
    %p433 = scmp.ne.s32.totalorder %s421, %s422
    %p434 = scmp.eq.s32.totalorder %s34, 1
    %p435 = por %p433, %p434
    %p437 = scmp.ne.s32.totalorder %s422, %s436
    %p438 = scmp.eq.s32.totalorder %s34, 0
    %p439 = por %p437, %p438
    %s441 = sadd.s32 %s440, 1
    %p444 = scmp.eq.s32.totalorder %s28, 1
    %p445 = scmp.ne.s32.totalorder %s440, %s442
    %p446 = scmp.eq.s32.totalorder %s28, 0
    %p447 = por %p445, %p446
    %p448 = scmp.ne.s32.totalorder %s440, %s442
    %p449 = scmp.eq.s32.totalorder %s33, 1
    %p450 = por %p448, %p449
    %p451 = scmp.ne.s32.totalorder %s442, %s443
    %p452 = scmp.eq.s32.totalorder %s33, 0
    %p453 = por %p451, %p452
    %p454 = scmp.ne.s32.totalorder %s442, %s443
    %p455 = scmp.eq.s32.totalorder %s34, 1
    %p456 = por %p454, %p455
    %p458 = scmp.ne.s32.totalorder %s443, %s457
    %p459 = scmp.eq.s32.totalorder %s34, 0
    %p460 = por %p458, %p459
    %s461 = ssub.s32 %s28, %s35
    %p462 = scmp.eq.s32.totalorder %s461, 0
    %s464 = sadd.s32 %s463, 1
    %s465 = scalar_select %p462, %s463, %s464
    %p468 = pneg %p462
    %p469 = scmp.eq.s32.totalorder %s28, 1
    %p470 = por %p468, %p469
    %p471 = scmp.ne.s32.totalorder %s463, %s466
    %p472 = scmp.eq.s32.totalorder %s28, 0
    %p473 = por %p471, %p472
    %p474 = scmp.ne.s32.totalorder %s463, %s466
    %p475 = scmp.eq.s32.totalorder %s33, 1
    %p476 = por %p474, %p475
    %p477 = scmp.ne.s32.totalorder %s466, %s467
    %p478 = scmp.eq.s32.totalorder %s33, 0
    %p479 = por %p477, %p478
    %p480 = scmp.ne.s32.totalorder %s466, %s467
    %p481 = scmp.eq.s32.totalorder %s34, 1
    %p482 = por %p480, %p481
    %p484 = scmp.ne.s32.totalorder %s467, %s483
    %p485 = scmp.eq.s32.totalorder %s34, 0
    %p486 = por %p484, %p485
    %s487 = ssub.s32 %s28, %s35
    %p488 = scmp.eq.s32.totalorder %s487, 0
    %s490 = sadd.s32 %s489, 1
    %s491 = scalar_select %p488, %s489, %s490
    %p494 = pneg %p488
    %p495 = scmp.eq.s32.totalorder %s28, 1
    %p496 = por %p494, %p495
    %p497 = scmp.ne.s32.totalorder %s489, %s492
    %p498 = scmp.eq.s32.totalorder %s28, 0
    %p499 = por %p497, %p498
    %p500 = scmp.ne.s32.totalorder %s489, %s492
    %p501 = scmp.eq.s32.totalorder %s33, 1
    %p502 = por %p500, %p501
    %p503 = scmp.ne.s32.totalorder %s492, %s493
    %p504 = scmp.eq.s32.totalorder %s33, 0
    %p505 = por %p503, %p504
    %p506 = scmp.ne.s32.totalorder %s492, %s493
    %p507 = scmp.eq.s32.totalorder %s34, 1
    %p508 = por %p506, %p507
    %p510 = scmp.ne.s32.totalorder %s493, %s509
    %p511 = scmp.eq.s32.totalorder %s34, 0
    %p512 = por %p510, %p511
    %p513 = scmp.le.s32.totalorder 1, %s28
    %p514 = scmp.lt.s32.totalorder %s28, 3
    %p515 = pnand %p513, %p514
    %p516 = pneg %p515
    // Predicated region
    $region9: #{pallas_forward.1} parent=5 // pred_check
      _
    $region10: #{pallas_forward.1} parent=5 // pred_check_branch
      %518 = sbr.rel (%p515) target = $region12
    $region11: #{pallas_forward.1} parent=5 // pred_region
      %s519 = ssub.s32 %s28, 1
      // Predicated region
      $region13: #{pallas_forward.1} parent=11 // pred_check
        %p520 = pneg %p75
      $region14: #{pallas_forward.1} parent=11 // pred_check_branch
        %522 = sbr.rel (%p520) target = $region16
      $region15: #{pallas_forward.1} parent=11 // pred_region
        _
      $region16: #{pallas_forward.1} parent=11 // pred_fallthru
        _
      // Predicated region
      $region17: #{pallas_forward.1} parent=11 // pred_check
        %p523 = pneg %p96
      $region18: #{pallas_forward.1} parent=11 // pred_check_branch
        %525 = sbr.rel (%p523) target = $region20
      $region19: #{pallas_forward.1} parent=11 // pred_region
        _
      $region20: #{pallas_forward.1} parent=11 // pred_fallthru
        _
      // Predicated region
      $region21: #{pallas_forward.1} parent=11 // pred_check
        %p526 = pneg %p117
      $region22: #{pallas_forward.1} parent=11 // pred_check_branch
        %528 = sbr.rel (%p526) target = $region24
      $region23: #{pallas_forward.1} parent=11 // pred_region
        _
      $region24: #{pallas_forward.1} parent=11 // pred_fallthru
        _
      // Predicated region
      $region25: #{pallas_forward.1} parent=11 // pred_check
        %p529 = pneg %p138
      $region26: #{pallas_forward.1} parent=11 // pred_check_branch
        %531 = sbr.rel (%p529) target = $region28
      $region27: #{pallas_forward.1} parent=11 // pred_region
        _
      $region28: #{pallas_forward.1} parent=11 // pred_fallthru
        _
      // Predicated region
      $region29: #{pallas_forward.1} parent=11 // pred_check
        %p532 = pneg %p159
      $region30: #{pallas_forward.1} parent=11 // pred_check_branch
        %534 = sbr.rel (%p532) target = $region32
      $region31: #{pallas_forward.1} parent=11 // pred_region
        _
      $region32: #{pallas_forward.1} parent=11 // pred_fallthru
        _
      // Predicated region
      $region33: #{pallas_forward.1} parent=11 // pred_check
        %p535 = pneg %p180
      $region34: #{pallas_forward.1} parent=11 // pred_check_branch
        %537 = sbr.rel (%p535) target = $region36
      $region35: #{pallas_forward.1} parent=11 // pred_region
        _
      $region36: #{pallas_forward.1} parent=11 // pred_fallthru
        _
      // Predicated region
      $region37: #{pallas_forward.1} parent=11 // pred_check
        %p538 = pneg %p201
      $region38: #{pallas_forward.1} parent=11 // pred_check_branch
        %540 = sbr.rel (%p538) target = $region40
      $region39: #{pallas_forward.1} parent=11 // pred_region
        _
      $region40: #{pallas_forward.1} parent=11 // pred_fallthru
        _
      // Predicated region
      $region41: #{pallas_forward.1} parent=11 // pred_check
        %p541 = pneg %p222
      $region42: #{pallas_forward.1} parent=11 // pred_check_branch
        %543 = sbr.rel (%p541) target = $region44
      $region43: #{pallas_forward.1} parent=11 // pred_region
        _
      $region44: #{pallas_forward.1} parent=11 // pred_fallthru
        _
      // Predicated region
      $region45: #{pallas_forward.1} parent=11 // pred_check
        %p544 = pneg %p243
      $region46: #{pallas_forward.1} parent=11 // pred_check_branch
        %546 = sbr.rel (%p544) target = $region48
      $region47: #{pallas_forward.1} parent=11 // pred_region
        _
      $region48: #{pallas_forward.1} parent=11 // pred_fallthru
        _
      // Predicated region
      $region49: #{pallas_forward.1} parent=11 // pred_check
        %p547 = pneg %p264
      $region50: #{pallas_forward.1} parent=11 // pred_check_branch
        %549 = sbr.rel (%p547) target = $region52
      $region51: #{pallas_forward.1} parent=11 // pred_region
        _
      $region52: #{pallas_forward.1} parent=11 // pred_fallthru
        _
      // Predicated region
      $region53: #{pallas_forward.1} parent=11 // pred_check
        %p550 = pneg %p285
      $region54: #{pallas_forward.1} parent=11 // pred_check_branch
        %552 = sbr.rel (%p550) target = $region56
      $region55: #{pallas_forward.1} parent=11 // pred_region
        _
      $region56: #{pallas_forward.1} parent=11 // pred_fallthru
        _
      // Predicated region
      $region57: #{pallas_forward.1} parent=11 // pred_check
        %p553 = pneg %p306
      $region58: #{pallas_forward.1} parent=11 // pred_check_branch
        %555 = sbr.rel (%p553) target = $region60
      $region59: #{pallas_forward.1} parent=11 // pred_region
        _
      $region60: #{pallas_forward.1} parent=11 // pred_fallthru
        _
      // Predicated region
      $region61: #{pallas_forward.1} parent=11 // pred_check
        %p556 = pneg %p327
      $region62: #{pallas_forward.1} parent=11 // pred_check_branch
        %558 = sbr.rel (%p556) target = $region64
      $region63: #{pallas_forward.1} parent=11 // pred_region
        _
      $region64: #{pallas_forward.1} parent=11 // pred_fallthru
        _
      // Predicated region
      $region65: #{pallas_forward.1} parent=11 // pred_check
        %p559 = pneg %p348
      $region66: #{pallas_forward.1} parent=11 // pred_check_branch
        %561 = sbr.rel (%p559) target = $region68
      $region67: #{pallas_forward.1} parent=11 // pred_region
        _
      $region68: #{pallas_forward.1} parent=11 // pred_fallthru
        _
      // Predicated region
      $region69: #{pallas_forward.1} parent=11 // pred_check
        %p562 = pneg %p369
      $region70: #{pallas_forward.1} parent=11 // pred_check_branch
        %564 = sbr.rel (%p562) target = $region72
      $region71: #{pallas_forward.1} parent=11 // pred_region
        _
      $region72: #{pallas_forward.1} parent=11 // pred_fallthru
        _
      // Predicated region
      $region73: #{pallas_forward.1} parent=11 // pred_check
        %p565 = pneg %p390
      $region74: #{pallas_forward.1} parent=11 // pred_check_branch
        %567 = sbr.rel (%p565) target = $region76
      $region75: #{pallas_forward.1} parent=11 // pred_region
        _
      $region76: #{pallas_forward.1} parent=11 // pred_fallthru
        _
      // Predicated region
      $region77: #{pallas_forward.1} parent=11 // pred_check
        %p568 = pneg %p411
      $region78: #{pallas_forward.1} parent=11 // pred_check_branch
        %570 = sbr.rel (%p568) target = $region80
      $region79: #{pallas_forward.1} parent=11 // pred_region
        _
      $region80: #{pallas_forward.1} parent=11 // pred_fallthru
        _
      // Predicated region
      $region81: #{pallas_forward.1} parent=11 // pred_check
        %p571 = pneg %p432
      $region82: #{pallas_forward.1} parent=11 // pred_check_branch
        %573 = sbr.rel (%p571) target = $region84
      $region83: #{pallas_forward.1} parent=11 // pred_region
        _
      $region84: #{pallas_forward.1} parent=11 // pred_fallthru
        _
      // Predicated region
      $region85: #{pallas_forward.1} parent=11 // pred_check
        %p574 = pneg %p453
      $region86: #{pallas_forward.1} parent=11 // pred_check_branch
        %576 = sbr.rel (%p574) target = $region88
      $region87: #{pallas_forward.1} parent=11 // pred_region
        _
      $region88: #{pallas_forward.1} parent=11 // pred_fallthru
        _
    $region12: #{pallas_forward.1} parent=5 // pred_fallthru
      _
    %p577 = scmp.lt.s32.totalorder %s28, 2
    // Predicated region
    $region89: #{pallas_forward.1} parent=5 // pred_check
      %p578 = pneg %p577
    $region90: #{pallas_forward.1} parent=5 // pred_check_branch
      %580 = sbr.rel (%p578) target = $region92
    $region91: #{pallas_forward.1} parent=5 // pred_region
      // Predicated region
      $region93: #{pallas_forward.1} parent=91 // pred_check
        %p581 = pneg %p48
      $region94: #{pallas_forward.1} parent=91 // pred_check_branch
        %583 = sbr.rel (%p581) target = $region96
      $region95: #{pallas_forward.1} parent=91 // pred_region
        %p584 = scmp.lt.s32.totalorder %s28, 1
        %s585 = scalar_select %p584, %s28, 1
        %s586 = smul.addr %s585, 16
        %s587 = smul.addr %s586, 8
        %s588 = scalar_lea.vmem %s0, %s587
      $region96: #{pallas_forward.1} parent=91 // pred_fallthru
        _
    $region92: #{pallas_forward.1} parent=5 // pred_fallthru
      _
    %p589 = scmp.le.s32.totalorder 1, %s28
    %p590 = scmp.lt.s32.totalorder %s28, 3
    %p591 = pnand %p589, %p590
    %p592 = pneg %p591
    // Predicated region
    $region97: #{pallas_forward.1} parent=5 // pred_check
      _
    $region98: #{pallas_forward.1} parent=5 // pred_check_branch
      %594 = sbr.rel (%p591) target = $region100
    $region99: #{pallas_forward.1} parent=5 // pred_region
      %s595 = ssub.s32 %s28, 1
      %p596 = scmp.lt.s32.totalorder %s33, 1
      %s597 = scalar_select %p596, %s33, 1
      %s598 = smul.addr %s597, 16
      %s599 = smul.addr %s598, 8
      %s600 = scalar_lea.vmem %s0, %s599
      %p601 = pneg %p54
      %p602 = pneg %p51
      %p603 = pneg %p75
      %p604 = pneg %p72
      %p605 = pneg %p96
      %p606 = pneg %p93
      %p607 = pneg %p117
      %p608 = pneg %p114
      %p609 = pneg %p138
      %p610 = pneg %p135
      %p611 = pneg %p159
      %p612 = pneg %p156
      %p613 = pneg %p180
      %p614 = pneg %p177
      %p615 = pneg %p201
      %p616 = pneg %p198
      %p617 = pneg %p222
      %p618 = pneg %p219
      %p619 = pneg %p243
      %p620 = pneg %p240
      %p621 = pneg %p264
      %p622 = pneg %p261
      %p623 = pneg %p285
      %p624 = pneg %p282
      %p625 = pneg %p306
      %p626 = pneg %p303
      %p627 = pneg %p327
      %p628 = pneg %p324
      %p629 = pneg %p348
      %p630 = pneg %p345
      %p631 = pneg %p369
      %p632 = pneg %p366
      %p633 = pneg %p390
      %p634 = pneg %p387
      %p635 = pneg %p411
      %p636 = pneg %p408
      %p637 = pneg %p432
      %p638 = pneg %p429
      %p639 = pneg %p453
      %p640 = pneg %p450
      %p641 = pneg %p479
      %p642 = pneg %p476
      %p643 = scmp.lt.s32.totalorder %s33, 1
      %s644 = scalar_select %p643, %s33, 1
      %s645 = smul.addr %s644, 16
      %s646 = smul.addr %s645, 8
      %s647 = scalar_lea.vmem %s20, %s646
      %p648 = pneg %p505
      %p649 = pneg %p502
      %p650 = scmp.lt.s32.totalorder %s33, 1
      %s651 = scalar_select %p650, %s33, 1
      %s652 = smul.addr %s651, 4
      %s653 = scalar_lea.vmem %s21, %s652
      %p654 = scmp.lt.s32.totalorder %s33, 1
      %s655 = scalar_select %p654, %s33, 1
      %s656 = smul.addr %s655, 16
      %s657 = smul.addr %s656, 8
      %s658 = scalar_lea.vmem %s0, %s657
      %p659 = scmp.lt.s32.totalorder %s33, 1
      %s660 = scalar_select %p659, %s33, 1
      %s661 = smul.addr %s660, 16
      %s662 = smul.addr %s661, 8
      %s663 = scalar_lea.vmem %s20, %s662
      %p664 = scmp.lt.s32.totalorder %s33, 1
      %s665 = scalar_select %p664, %s33, 1
      %s666 = smul.addr %s665, 4
      %s667 = scalar_lea.vmem %s21, %s666
      %vm668 = vcmask 523264
      %669 = vst.msk [vmem:[#allocation2 + $0x7] sm:$0xff] %vm668, 0.0
      %670 = vst.msk [vmem:[#allocation2 + $0xf] sm:$0xff] %vm668, 0.0
      %vm671 = vcmask 517120
      %672 = vst.msk [vmem:[#allocation2 + $0x17] sm:$0x3] %vm671, 0.0
      %s673 = scalar_lea.vmem [#allocation2], 288
      %674 = vst.msk [vmem:[%s673 + $0x7] sm:$0xff] %vm668, 0.0
      %675 = vst.msk [vmem:[%s673 + $0xf] sm:$0xff] %vm668, 0.0
      %676 = vst.msk [vmem:[%s673 + $0x17] sm:$0x3] %vm671, 0.0
      %s677 = scalar_lea.vmem [#allocation2], 32
      %vm678 = vcmask 516096
      %679 = vst.msk [vmem:[%s677 + $0x7] sm:$0x1] %vm678, 0.0
      %680 = vst.msk [vmem:[%s677 + $0x27] sm:$0x1] %vm678, 0.0
      %681 = vst.msk [vmem:[%s677 + $0x47] sm:$0x1] %vm678, 0.0
      %682 = vst.msk [vmem:[%s677 + $0x67] sm:$0x1] %vm678, 0.0
      %683 = vst.msk [vmem:[%s677 + $0x87] sm:$0x1] %vm678, 0.0
      %684 = vst.msk [vmem:[%s677 + $0xa7] sm:$0x1] %vm678, 0.0
      %685 = vst.msk [vmem:[%s677 + $0xc7] sm:$0x1] %vm678, 0.0
      %686 = vst.msk [vmem:[%s677 + $0xe7] sm:$0x1] %vm678, 0.0
      %687 = vst.msk [vmem:[%s677 + $0x18] sm:$0x1] %vm678, 0.0
      %688 = vst.msk [vmem:[%s677 + $0x38] sm:$0x1] %vm678, 0.0
      %689 = vst.msk [vmem:[%s677 + $0x58] sm:$0x1] %vm678, 0.0
      %690 = vst.msk [vmem:[%s677 + $0x78] sm:$0x1] %vm678, 0.0
      %691 = vst.msk [vmem:[%s677 + $0x98] sm:$0x1] %vm678, 0.0
      %692 = vst.msk [vmem:[%s677 + $0xb8] sm:$0x1] %vm678, 0.0
      %693 = vst.msk [vmem:[%s677 + $0xd8] sm:$0x1] %vm678, 0.0
      %694 = vst.msk [vmem:[%s677 + $0xf8] sm:$0x1] %vm678, 0.0
      %695 = vst [vmem:[#allocation3 + $0x7] sm:$0xff] 0.0
      %696 = vst [vmem:[#allocation3 + $0xf] sm:$0xff] 0.0
      %697 = vst [vmem:[#allocation3 + $0x17] sm:$0x3] 0.0
      %s698 = scalar_lea.vmem [#allocation3], 288
      %699 = vst [vmem:[%s698 + $0x7] sm:$0xff] 0.0
      %700 = vst [vmem:[%s698 + $0xf] sm:$0xff] 0.0
      %701 = vst [vmem:[%s698 + $0x17] sm:$0x3] 0.0
      %s702 = scalar_lea.vmem [#allocation3], 32
      %703 = vst [vmem:[%s702 + $0x7] sm:$0x1] 0.0
      %704 = vst [vmem:[%s702 + $0x27] sm:$0x1] 0.0
      %705 = vst [vmem:[%s702 + $0x47] sm:$0x1] 0.0
      %706 = vst [vmem:[%s702 + $0x67] sm:$0x1] 0.0
      %707 = vst [vmem:[%s702 + $0x87] sm:$0x1] 0.0
      %708 = vst [vmem:[%s702 + $0xa7] sm:$0x1] 0.0
      %709 = vst [vmem:[%s702 + $0xc7] sm:$0x1] 0.0
      %710 = vst [vmem:[%s702 + $0xe7] sm:$0x1] 0.0
      %711 = vst [vmem:[%s702 + $0x18] sm:$0x1] 0.0
      %712 = vst [vmem:[%s702 + $0x38] sm:$0x1] 0.0
      %713 = vst [vmem:[%s702 + $0x58] sm:$0x1] 0.0
      %714 = vst [vmem:[%s702 + $0x78] sm:$0x1] 0.0
      %715 = vst [vmem:[%s702 + $0x98] sm:$0x1] 0.0
      %716 = vst [vmem:[%s702 + $0xb8] sm:$0x1] 0.0
      %717 = vst [vmem:[%s702 + $0xd8] sm:$0x1] 0.0
      %718 = vst [vmem:[%s702 + $0xf8] sm:$0x1] 0.0
      %v719 = vld [vmem:[%s658] sm:$0xff]
      %v720 = vld [vmem:[%s658 + $0x8] sm:$0xff]
      %v721 = vld [vmem:[%s658 + $0x10] sm:$0xff]
      %v722 = vld [vmem:[%s658 + $0x18] sm:$0xff]
      %v723 = vld [vmem:[%s658 + $0x20] sm:$0xff]
      %v724 = vld [vmem:[%s658 + $0x28] sm:$0xff]
      %v725 = vld [vmem:[%s658 + $0x30] sm:$0xff]
      %v726 = vld [vmem:[%s658 + $0x38] sm:$0xff]
      %v727 = vld [vmem:[%s658 + $0x40] sm:$0xff]
      %v728 = vld [vmem:[%s658 + $0x48] sm:$0xff]
      %v729 = vld [vmem:[%s658 + $0x50] sm:$0xff]
      %v730 = vld [vmem:[%s658 + $0x58] sm:$0xff]
      %v731 = vld [vmem:[%s658 + $0x60] sm:$0xff]
      %v732 = vld [vmem:[%s658 + $0x68] sm:$0xff]
      %v733 = vld [vmem:[%s658 + $0x70] sm:$0xff]
      %v734 = vld [vmem:[%s658 + $0x78] sm:$0xff]
      %735 = vst.msk [vmem:[%s677 + $0x8] sm:$0xff] %vm668, %v719
      %736 = vst.msk [vmem:[%s677 + $0x10] sm:$0xff] %vm668, %v720
      %737 = vst.msk [vmem:[%s677 + $0x28] sm:$0xff] %vm668, %v721
      %738 = vst.msk [vmem:[%s677 + $0x30] sm:$0xff] %vm668, %v722
      %739 = vst.msk [vmem:[%s677 + $0x48] sm:$0xff] %vm668, %v723
      %740 = vst.msk [vmem:[%s677 + $0x50] sm:$0xff] %vm668, %v724
      %741 = vst.msk [vmem:[%s677 + $0x68] sm:$0xff] %vm668, %v725
      %742 = vst.msk [vmem:[%s677 + $0x70] sm:$0xff] %vm668, %v726
      %743 = vst.msk [vmem:[%s677 + $0x88] sm:$0xff] %vm668, %v727
      %744 = vst.msk [vmem:[%s677 + $0x90] sm:$0xff] %vm668, %v728
      %745 = vst.msk [vmem:[%s677 + $0xa8] sm:$0xff] %vm668, %v729
      %746 = vst.msk [vmem:[%s677 + $0xb0] sm:$0xff] %vm668, %v730
      %747 = vst.msk [vmem:[%s677 + $0xc8] sm:$0xff] %vm668, %v731
      %748 = vst.msk [vmem:[%s677 + $0xd0] sm:$0xff] %vm668, %v732
      %749 = vst.msk [vmem:[%s677 + $0xe8] sm:$0xff] %vm668, %v733
      %750 = vst.msk [vmem:[%s677 + $0xf0] sm:$0xff] %vm668, %v734
      %v751 = vld [vmem:[#allocation2 + $0x7] sm:$0xff]
      %v752 = vld [vmem:[#allocation2 + $0xf] sm:$0xff]
      %v753 = vld [vmem:[#allocation2 + $0x27] sm:$0xff]
      %v754 = vld [vmem:[#allocation2 + $0x2f] sm:$0xff]
      %v755 = vld [vmem:[#allocation2 + $0x47] sm:$0xff]
      %v756 = vld [vmem:[#allocation2 + $0x4f] sm:$0xff]
      %v757 = vld [vmem:[#allocation2 + $0x67] sm:$0xff]
      %v758 = vld [vmem:[#allocation2 + $0x6f] sm:$0xff]
      %v759 = vld [vmem:[#allocation2 + $0x87] sm:$0xff]
      %v760 = vld [vmem:[#allocation2 + $0x8f] sm:$0xff]
      %v761 = vld [vmem:[#allocation2 + $0xa7] sm:$0xff]
      %v762 = vld [vmem:[#allocation2 + $0xaf] sm:$0xff]
      %v763 = vld [vmem:[#allocation2 + $0xc7] sm:$0xff]
      %v764 = vld [vmem:[#allocation2 + $0xcf] sm:$0xff]
      %v765 = vld [vmem:[#allocation2 + $0xe7] sm:$0xff]
      %v766 = vld [vmem:[#allocation2 + $0xef] sm:$0xff]
      %v767 = vld [vmem:[%s1] sm:$0xff]
      %v768 = vld [vmem:[%s1 + $0x8] sm:$0xff]
      %v769 = vld [vmem:[%s1 + $0x10] sm:$0xff]
      %v770 = vld [vmem:[%s1 + $0x18] sm:$0xff]
      %v771 = vld [vmem:[%s1 + $0x20] sm:$0xff]
      %v772 = vld [vmem:[%s1 + $0x28] sm:$0xff]
      %v773 = vld [vmem:[%s1 + $0x30] sm:$0xff]
      %v774 = vld [vmem:[%s1 + $0x38] sm:$0xff]
      %v775 = vld [vmem:[#allocation2 + $0x8] sm:$0xff]
      %v776 = vld [vmem:[#allocation2 + $0x10] sm:$0xff]
      %v777 = vld [vmem:[#allocation2 + $0x28] sm:$0xff]
      %v778 = vld [vmem:[#allocation2 + $0x30] sm:$0xff]
      %v779 = vld [vmem:[#allocation2 + $0x48] sm:$0xff]
      %v780 = vld [vmem:[#allocation2 + $0x50] sm:$0xff]
      %v781 = vld [vmem:[#allocation2 + $0x68] sm:$0xff]
      %v782 = vld [vmem:[#allocation2 + $0x70] sm:$0xff]
      %v783 = vld [vmem:[#allocation2 + $0x88] sm:$0xff]
      %v784 = vld [vmem:[#allocation2 + $0x90] sm:$0xff]
      %v785 = vld [vmem:[#allocation2 + $0xa8] sm:$0xff]
      %v786 = vld [vmem:[#allocation2 + $0xb0] sm:$0xff]
      %v787 = vld [vmem:[#allocation2 + $0xc8] sm:$0xff]
      %v788 = vld [vmem:[#allocation2 + $0xd0] sm:$0xff]
      %v789 = vld [vmem:[#allocation2 + $0xe8] sm:$0xff]
      %v790 = vld [vmem:[#allocation2 + $0xf0] sm:$0xff]
      %s791 = scalar_lea.vmem %s1, 64
      %v792 = vld [vmem:[%s791] sm:$0xff]
      %v793 = vld [vmem:[%s791 + $0x8] sm:$0xff]
      %v794 = vld [vmem:[%s791 + $0x10] sm:$0xff]
      %v795 = vld [vmem:[%s791 + $0x18] sm:$0xff]
      %v796 = vld [vmem:[%s791 + $0x20] sm:$0xff]
      %v797 = vld [vmem:[%s791 + $0x28] sm:$0xff]
      %v798 = vld [vmem:[%s791 + $0x30] sm:$0xff]
      %v799 = vld [vmem:[%s791 + $0x38] sm:$0xff]
      %v801 = vsel %vm668, %v775, 0
      %v804 = vsel %vm668, %v776, 0
      %v807 = vsel %vm668, %v777, 0
      %v810 = vsel %vm668, %v778, 0
      %v813 = vsel %vm668, %v779, 0
      %v816 = vsel %vm668, %v780, 0
      %v819 = vsel %vm668, %v781, 0
      %v822 = vsel %vm668, %v782, 0
      %v825 = vsel %vm668, %v783, 0
      %v828 = vsel %vm668, %v784, 0
      %v831 = vsel %vm668, %v785, 0
      %v834 = vsel %vm668, %v786, 0
      %v837 = vsel %vm668, %v787, 0
      %v840 = vsel %vm668, %v788, 0
      %v843 = vsel %vm668, %v789, 0
      %v846 = vsel %vm668, %v790, 0
      %848 = vmatprep.subr.mxu0 0.0
      %849 = vmatpush1.msra.mxu0 0.0
      %850 = vmatprep.subr.mxu0 0.0
      %851 = vmatpush1.msra.mxu0 0.0
      %852 = vmatprep.subr.mxu0 0.0
      %853 = vmatpush1.msra.mxu0 0.0
      %854 = vmatprep.subr.mxu0 0.0
      %855 = vmatpush1.msra.mxu0 0.0
      %856 = vmatprep.subr.mxu0 0.0
      %857 = vmatpush1.msra.mxu0 0.0
      %858 = vmatprep.subr.mxu0 0.0
      %859 = vmatpush1.msra.mxu0 0.0
      %860 = vmatprep.subr.mxu0 0.0
      %861 = vmatpush1.msra.mxu0 0.0
      %862 = vmatprep.subr.mxu0 0.0
      %863 = vmatpush1.msra.mxu0 0.0
      %864 = vmatprep.subr.mxu0 0.0
      %865 = vmatpush1.msra.mxu0 %v799
      %866 = vmatprep.subr.mxu0 0.0
      %867 = vmatpush1.msra.mxu0 %v798
      %868 = vmatprep.subr.mxu0 0.0
      %869 = vmatpush1.msra.mxu0 %v797
      %870 = vmatprep.subr.mxu0 0.0
      %871 = vmatpush1.msra.mxu0 %v796
      %872 = vmatprep.subr.mxu0 0.0
      %873 = vmatpush1.msra.mxu0 %v795
      %874 = vmatprep.subr.mxu0 0.0
      %875 = vmatpush1.msra.mxu0 %v794
      %876 = vmatprep.subr.mxu0 0.0
      %877 = vmatpush1.msra.mxu0 %v793
      %878 = vmatprep.subr.mxu0 0.0
      %879 = vmatpush1.msra.mxu0 %v792
      %880 = vmatprep.subr.mxu0 0.0
      %881 = vmatpush2.msra.mxu0 0.0
      %882 = vmatprep.subr.mxu0 0.0
      %883 = vmatpush2.msra.mxu0 0.0
      %884 = vmatprep.subr.mxu0 0.0
      %885 = vmatpush2.msra.mxu0 0.0
      %886 = vmatprep.subr.mxu0 0.0
      %887 = vmatpush2.msra.mxu0 0.0
      %888 = vmatprep.subr.mxu0 0.0
      %889 = vmatpush2.msra.mxu0 0.0
      %890 = vmatprep.subr.mxu0 0.0
      %891 = vmatpush2.msra.mxu0 0.0
      %892 = vmatprep.subr.mxu0 0.0
      %893 = vmatpush2.msra.mxu0 0.0
      %894 = vmatprep.subr.mxu0 0.0
      %895 = vmatpush2.msra.mxu0 0.0
      %896 = vmatprep.subr.mxu0 0.0
      %897 = vmatpush2.msra.mxu0 0.0
      %898 = vmatprep.subr.mxu0 0.0
      %899 = vmatpush2.msra.mxu0 0.0
      %900 = vmatprep.subr.mxu0 0.0
      %901 = vmatpush2.msra.mxu0 0.0
      %902 = vmatprep.subr.mxu0 0.0
      %903 = vmatpush2.msra.mxu0 0.0
      %904 = vmatprep.subr.mxu0 0.0
      %905 = vmatpush2.msra.mxu0 0.0
      %906 = vmatprep.subr.mxu0 0.0
      %907 = vmatpush2.msra.mxu0 0.0
      %908 = vmatprep.subr.mxu0 0.0
      %909 = vmatpush2.msra.mxu0 0.0
      %910 = vmatprep.subr.mxu0 0.0
      %911 = vmatpush2.msra.mxu0 0.0
      %912 = vmatprep.mubr.f32.mxu0 0.0
      %913 = vmatmul.mubr.f32.gmra.mxu0 %v801
      %v914 = vpop.f32.mrf.mxu0
      %v915 = vadd.f32 0.0, %v914
      %v916 = vpop.f32.mrf.mxu0
      %917 = vmatprep.mubr.f32.mxu0 0.0
      %918 = vmatmul.mubr.f32.gmra.mxu0 %v804
      %v919 = vpop.f32.mrf.mxu0
      %v920 = vadd.f32 0.0, %v919
      %v921 = vpop.f32.mrf.mxu0
      %922 = vmatprep.mubr.f32.mxu0 0.0
      %923 = vmatmul.mubr.f32.gmra.mxu0 %v807
      %v924 = vpop.f32.mrf.mxu0
      %v925 = vadd.f32 0.0, %v924
      %v926 = vpop.f32.mrf.mxu0
      %927 = vmatprep.mubr.f32.mxu0 0.0
      %928 = vmatmul.mubr.f32.gmra.mxu0 %v810
      %v929 = vpop.f32.mrf.mxu0
      %v930 = vadd.f32 0.0, %v929
      %v931 = vpop.f32.mrf.mxu0
      %932 = vmatprep.mubr.f32.mxu0 0.0
      %933 = vmatmul.mubr.f32.gmra.mxu0 %v813
      %v934 = vpop.f32.mrf.mxu0
      %v935 = vadd.f32 0.0, %v934
      %v936 = vpop.f32.mrf.mxu0
      %937 = vmatprep.mubr.f32.mxu0 0.0
      %938 = vmatmul.mubr.f32.gmra.mxu0 %v816
      %v939 = vpop.f32.mrf.mxu0
      %v940 = vadd.f32 0.0, %v939
      %v941 = vpop.f32.mrf.mxu0
      %942 = vmatprep.mubr.f32.mxu0 0.0
      %943 = vmatmul.mubr.f32.gmra.mxu0 %v819
      %v944 = vpop.f32.mrf.mxu0
      %v945 = vadd.f32 0.0, %v944
      %v946 = vpop.f32.mrf.mxu0
      %947 = vmatprep.mubr.f32.mxu0 0.0
      %948 = vmatmul.mubr.f32.gmra.mxu0 %v822
      %v949 = vpop.f32.mrf.mxu0
      %v950 = vadd.f32 0.0, %v949
      %v951 = vpop.f32.mrf.mxu0
      %952 = vmatprep.mubr.f32.mxu0 0.0
      %953 = vmatmul.mubr.f32.gmra.mxu0 %v825
      %v954 = vpop.f32.mrf.mxu0
      %v955 = vadd.f32 0.0, %v954
      %v956 = vpop.f32.mrf.mxu0
      %957 = vmatprep.mubr.f32.mxu0 0.0
      %958 = vmatmul.mubr.f32.gmra.mxu0 %v828
      %v959 = vpop.f32.mrf.mxu0
      %v960 = vadd.f32 0.0, %v959
      %v961 = vpop.f32.mrf.mxu0
      %962 = vmatprep.mubr.f32.mxu0 0.0
      %963 = vmatmul.mubr.f32.gmra.mxu0 %v831
      %v964 = vpop.f32.mrf.mxu0
      %v965 = vadd.f32 0.0, %v964
      %v966 = vpop.f32.mrf.mxu0
      %967 = vmatprep.mubr.f32.mxu0 0.0
      %968 = vmatmul.mubr.f32.gmra.mxu0 %v834
      %v969 = vpop.f32.mrf.mxu0
      %v970 = vadd.f32 0.0, %v969
      %v971 = vpop.f32.mrf.mxu0
      %972 = vmatprep.mubr.f32.mxu0 0.0
      %973 = vmatmul.mubr.f32.gmra.mxu0 %v837
      %v974 = vpop.f32.mrf.mxu0
      %v975 = vadd.f32 0.0, %v974
      %v976 = vpop.f32.mrf.mxu0
      %977 = vmatprep.mubr.f32.mxu0 0.0
      %978 = vmatmul.mubr.f32.gmra.mxu0 %v840
      %v979 = vpop.f32.mrf.mxu0
      %v980 = vadd.f32 0.0, %v979
      %v981 = vpop.f32.mrf.mxu0
      %982 = vmatprep.mubr.f32.mxu0 0.0
      %983 = vmatmul.mubr.f32.gmra.mxu0 %v843
      %v984 = vpop.f32.mrf.mxu0
      %v985 = vadd.f32 0.0, %v984
      %v986 = vpop.f32.mrf.mxu0
      %987 = vmatprep.mubr.f32.mxu0 0.0
      %988 = vmatmul.mubr.f32.gmra.mxu0 %v846
      %v989 = vpop.f32.mrf.mxu0
      %v990 = vadd.f32 0.0, %v989
      %v991 = vpop.f32.mrf.mxu0
      %992 = vdwg.mxu0
      %v994 = vsel %vm668, %v751, 0
      %v997 = vsel %vm668, %v752, 0
      %v1000 = vsel %vm668, %v753, 0
      %v1003 = vsel %vm668, %v754, 0
      %v1006 = vsel %vm668, %v755, 0
      %v1009 = vsel %vm668, %v756, 0
      %v1012 = vsel %vm668, %v757, 0
      %v1015 = vsel %vm668, %v758, 0
      %v1018 = vsel %vm668, %v759, 0
      %v1021 = vsel %vm668, %v760, 0
      %v1024 = vsel %vm668, %v761, 0
      %v1027 = vsel %vm668, %v762, 0
      %v1030 = vsel %vm668, %v763, 0
      %v1033 = vsel %vm668, %v764, 0
      %v1036 = vsel %vm668, %v765, 0
      %v1039 = vsel %vm668, %v766, 0
      %1041 = vmatprep.subr.mxu0 0.0
      %1042 = vmatpush1.msra.mxu0 0.0
      %1043 = vmatprep.subr.mxu0 0.0
      %1044 = vmatpush1.msra.mxu0 0.0
      %1045 = vmatprep.subr.mxu0 0.0
      %1046 = vmatpush1.msra.mxu0 0.0
      %1047 = vmatprep.subr.mxu0 0.0
      %1048 = vmatpush1.msra.mxu0 0.0
      %1049 = vmatprep.subr.mxu0 0.0
      %1050 = vmatpush1.msra.mxu0 0.0
      %1051 = vmatprep.subr.mxu0 0.0
      %1052 = vmatpush1.msra.mxu0 0.0
      %1053 = vmatprep.subr.mxu0 0.0
      %1054 = vmatpush1.msra.mxu0 0.0
      %1055 = vmatprep.subr.mxu0 0.0
      %1056 = vmatpush1.msra.mxu0 0.0
      %1057 = vmatprep.subr.mxu0 0.0
      %1058 = vmatpush1.msra.mxu0 %v774
      %1059 = vmatprep.subr.mxu0 0.0
      %1060 = vmatpush1.msra.mxu0 %v773
      %1061 = vmatprep.subr.mxu0 0.0
      %1062 = vmatpush1.msra.mxu0 %v772
      %1063 = vmatprep.subr.mxu0 0.0
      %1064 = vmatpush1.msra.mxu0 %v771
      %1065 = vmatprep.subr.mxu0 0.0
      %1066 = vmatpush1.msra.mxu0 %v770
      %1067 = vmatprep.subr.mxu0 0.0
      %1068 = vmatpush1.msra.mxu0 %v769
      %1069 = vmatprep.subr.mxu0 0.0
      %1070 = vmatpush1.msra.mxu0 %v768
      %1071 = vmatprep.subr.mxu0 0.0
      %1072 = vmatpush1.msra.mxu0 %v767
      %1073 = vmatprep.subr.mxu0 0.0
      %1074 = vmatpush2.msra.mxu0 0.0
      %1075 = vmatprep.subr.mxu0 0.0
      %1076 = vmatpush2.msra.mxu0 0.0
      %1077 = vmatprep.subr.mxu0 0.0
      %1078 = vmatpush2.msra.mxu0 0.0
      %1079 = vmatprep.subr.mxu0 0.0
      %1080 = vmatpush2.msra.mxu0 0.0
      %1081 = vmatprep.subr.mxu0 0.0
      %1082 = vmatpush2.msra.mxu0 0.0
      %1083 = vmatprep.subr.mxu0 0.0
      %1084 = vmatpush2.msra.mxu0 0.0
      %1085 = vmatprep.subr.mxu0 0.0
      %1086 = vmatpush2.msra.mxu0 0.0
      %1087 = vmatprep.subr.mxu0 0.0
      %1088 = vmatpush2.msra.mxu0 0.0
      %1089 = vmatprep.subr.mxu0 0.0
      %1090 = vmatpush2.msra.mxu0 0.0
      %1091 = vmatprep.subr.mxu0 0.0
      %1092 = vmatpush2.msra.mxu0 0.0
      %1093 = vmatprep.subr.mxu0 0.0
      %1094 = vmatpush2.msra.mxu0 0.0
      %1095 = vmatprep.subr.mxu0 0.0
      %1096 = vmatpush2.msra.mxu0 0.0
      %1097 = vmatprep.subr.mxu0 0.0
      %1098 = vmatpush2.msra.mxu0 0.0
      %1099 = vmatprep.subr.mxu0 0.0
      %1100 = vmatpush2.msra.mxu0 0.0
      %1101 = vmatprep.subr.mxu0 0.0
      %1102 = vmatpush2.msra.mxu0 0.0
      %1103 = vmatprep.subr.mxu0 0.0
      %1104 = vmatpush2.msra.mxu0 0.0
      %1105 = vmatprep.mubr.f32.mxu0 0.0
      %1106 = vmatmul.mubr.f32.gmra.mxu0 %v994
      %v1107 = vpop.f32.mrf.mxu0
      %v1108 = vadd.f32 %v915, %v1107
      %v1109 = vpop.f32.mrf.mxu0
      %1110 = vmatprep.mubr.f32.mxu0 0.0
      %1111 = vmatmul.mubr.f32.gmra.mxu0 %v997
      %v1112 = vpop.f32.mrf.mxu0
      %v1113 = vadd.f32 %v920, %v1112
      %v1114 = vpop.f32.mrf.mxu0
      %1115 = vmatprep.mubr.f32.mxu0 0.0
      %1116 = vmatmul.mubr.f32.gmra.mxu0 %v1000
      %v1117 = vpop.f32.mrf.mxu0
      %v1118 = vadd.f32 %v925, %v1117
      %v1119 = vpop.f32.mrf.mxu0
      %1120 = vmatprep.mubr.f32.mxu0 0.0
      %1121 = vmatmul.mubr.f32.gmra.mxu0 %v1003
      %v1122 = vpop.f32.mrf.mxu0
      %v1123 = vadd.f32 %v930, %v1122
      %v1124 = vpop.f32.mrf.mxu0
      %1125 = vmatprep.mubr.f32.mxu0 0.0
      %1126 = vmatmul.mubr.f32.gmra.mxu0 %v1006
      %v1127 = vpop.f32.mrf.mxu0
      %v1128 = vadd.f32 %v935, %v1127
      %v1129 = vpop.f32.mrf.mxu0
      %1130 = vmatprep.mubr.f32.mxu0 0.0
      %1131 = vmatmul.mubr.f32.gmra.mxu0 %v1009
      %v1132 = vpop.f32.mrf.mxu0
      %v1133 = vadd.f32 %v940, %v1132
      %v1134 = vpop.f32.mrf.mxu0
      %1135 = vmatprep.mubr.f32.mxu0 0.0
      %1136 = vmatmul.mubr.f32.gmra.mxu0 %v1012
      %v1137 = vpop.f32.mrf.mxu0
      %v1138 = vadd.f32 %v945, %v1137
      %v1139 = vpop.f32.mrf.mxu0
      %1140 = vmatprep.mubr.f32.mxu0 0.0
      %1141 = vmatmul.mubr.f32.gmra.mxu0 %v1015
      %v1142 = vpop.f32.mrf.mxu0
      %v1143 = vadd.f32 %v950, %v1142
      %v1144 = vpop.f32.mrf.mxu0
      %1145 = vmatprep.mubr.f32.mxu0 0.0
      %1146 = vmatmul.mubr.f32.gmra.mxu0 %v1018
      %v1147 = vpop.f32.mrf.mxu0
      %v1148 = vadd.f32 %v955, %v1147
      %v1149 = vpop.f32.mrf.mxu0
      %1150 = vmatprep.mubr.f32.mxu0 0.0
      %1151 = vmatmul.mubr.f32.gmra.mxu0 %v1021
      %v1152 = vpop.f32.mrf.mxu0
      %v1153 = vadd.f32 %v960, %v1152
      %v1154 = vpop.f32.mrf.mxu0
      %1155 = vmatprep.mubr.f32.mxu0 0.0
      %1156 = vmatmul.mubr.f32.gmra.mxu0 %v1024
      %v1157 = vpop.f32.mrf.mxu0
      %v1158 = vadd.f32 %v965, %v1157
      %v1159 = vpop.f32.mrf.mxu0
      %1160 = vmatprep.mubr.f32.mxu0 0.0
      %1161 = vmatmul.mubr.f32.gmra.mxu0 %v1027
      %v1162 = vpop.f32.mrf.mxu0
      %v1163 = vadd.f32 %v970, %v1162
      %v1164 = vpop.f32.mrf.mxu0
      %1165 = vmatprep.mubr.f32.mxu0 0.0
      %1166 = vmatmul.mubr.f32.gmra.mxu0 %v1030
      %v1167 = vpop.f32.mrf.mxu0
      %v1168 = vadd.f32 %v975, %v1167
      %v1169 = vpop.f32.mrf.mxu0
      %1170 = vmatprep.mubr.f32.mxu0 0.0
      %1171 = vmatmul.mubr.f32.gmra.mxu0 %v1033
      %v1172 = vpop.f32.mrf.mxu0
      %v1173 = vadd.f32 %v980, %v1172
      %v1174 = vpop.f32.mrf.mxu0
      %1175 = vmatprep.mubr.f32.mxu0 0.0
      %1176 = vmatmul.mubr.f32.gmra.mxu0 %v1036
      %v1177 = vpop.f32.mrf.mxu0
      %v1178 = vadd.f32 %v985, %v1177
      %v1179 = vpop.f32.mrf.mxu0
      %1180 = vmatprep.mubr.f32.mxu0 0.0
      %1181 = vmatmul.mubr.f32.gmra.mxu0 %v1039
      %v1182 = vpop.f32.mrf.mxu0
      %v1183 = vadd.f32 %v990, %v1182
      %v1184 = vpop.f32.mrf.mxu0
      %1185 = vdwg.mxu0
      %v1186 = vld [vmem:[#allocation2 + $0x9] sm:$0xff]
      %v1187 = vld [vmem:[#allocation2 + $0x11] sm:$0xff]
      %v1188 = vld [vmem:[#allocation2 + $0x29] sm:$0xff]
      %v1189 = vld [vmem:[#allocation2 + $0x31] sm:$0xff]
      %v1190 = vld [vmem:[#allocation2 + $0x49] sm:$0xff]
      %v1191 = vld [vmem:[#allocation2 + $0x51] sm:$0xff]
      %v1192 = vld [vmem:[#allocation2 + $0x69] sm:$0xff]
      %v1193 = vld [vmem:[#allocation2 + $0x71] sm:$0xff]
      %v1194 = vld [vmem:[#allocation2 + $0x89] sm:$0xff]
      %v1195 = vld [vmem:[#allocation2 + $0x91] sm:$0xff]
      %v1196 = vld [vmem:[#allocation2 + $0xa9] sm:$0xff]
      %v1197 = vld [vmem:[#allocation2 + $0xb1] sm:$0xff]
      %v1198 = vld [vmem:[#allocation2 + $0xc9] sm:$0xff]
      %v1199 = vld [vmem:[#allocation2 + $0xd1] sm:$0xff]
      %v1200 = vld [vmem:[#allocation2 + $0xe9] sm:$0xff]
      %v1201 = vld [vmem:[#allocation2 + $0xf1] sm:$0xff]
      %s1202 = scalar_lea.vmem %s1, 128
      %v1203 = vld [vmem:[%s1202] sm:$0xff]
      %v1204 = vld [vmem:[%s1202 + $0x8] sm:$0xff]
      %v1205 = vld [vmem:[%s1202 + $0x10] sm:$0xff]
      %v1206 = vld [vmem:[%s1202 + $0x18] sm:$0xff]
      %v1207 = vld [vmem:[%s1202 + $0x20] sm:$0xff]
      %v1208 = vld [vmem:[%s1202 + $0x28] sm:$0xff]
      %v1209 = vld [vmem:[%s1202 + $0x30] sm:$0xff]
      %v1210 = vld [vmem:[%s1202 + $0x38] sm:$0xff]
      %v1212 = vsel %vm668, %v1186, 0
      %v1215 = vsel %vm668, %v1187, 0
      %v1218 = vsel %vm668, %v1188, 0
      %v1221 = vsel %vm668, %v1189, 0
      %v1224 = vsel %vm668, %v1190, 0
      %v1227 = vsel %vm668, %v1191, 0
      %v1230 = vsel %vm668, %v1192, 0
      %v1233 = vsel %vm668, %v1193, 0
      %v1236 = vsel %vm668, %v1194, 0
      %v1239 = vsel %vm668, %v1195, 0
      %v1242 = vsel %vm668, %v1196, 0
      %v1245 = vsel %vm668, %v1197, 0
      %v1248 = vsel %vm668, %v1198, 0
      %v1251 = vsel %vm668, %v1199, 0
      %v1254 = vsel %vm668, %v1200, 0
      %v1257 = vsel %vm668, %v1201, 0
      %1259 = vmatprep.subr.mxu0 0.0
      %1260 = vmatpush1.msra.mxu0 0.0
      %1261 = vmatprep.subr.mxu0 0.0
      %1262 = vmatpush1.msra.mxu0 0.0
      %1263 = vmatprep.subr.mxu0 0.0
      %1264 = vmatpush1.msra.mxu0 0.0
      %1265 = vmatprep.subr.mxu0 0.0
      %1266 = vmatpush1.msra.mxu0 0.0
      %1267 = vmatprep.subr.mxu0 0.0
      %1268 = vmatpush1.msra.mxu0 0.0
      %1269 = vmatprep.subr.mxu0 0.0
      %1270 = vmatpush1.msra.mxu0 0.0
      %1271 = vmatprep.subr.mxu0 0.0
      %1272 = vmatpush1.msra.mxu0 0.0
      %1273 = vmatprep.subr.mxu0 0.0
      %1274 = vmatpush1.msra.mxu0 0.0
      %1275 = vmatprep.subr.mxu0 0.0
      %1276 = vmatpush1.msra.mxu0 %v1210
      %1277 = vmatprep.subr.mxu0 0.0
      %1278 = vmatpush1.msra.mxu0 %v1209
      %1279 = vmatprep.subr.mxu0 0.0
      %1280 = vmatpush1.msra.mxu0 %v1208
      %1281 = vmatprep.subr.mxu0 0.0
      %1282 = vmatpush1.msra.mxu0 %v1207
      %1283 = vmatprep.subr.mxu0 0.0
      %1284 = vmatpush1.msra.mxu0 %v1206
      %1285 = vmatprep.subr.mxu0 0.0
      %1286 = vmatpush1.msra.mxu0 %v1205
      %1287 = vmatprep.subr.mxu0 0.0
      %1288 = vmatpush1.msra.mxu0 %v1204
      %1289 = vmatprep.subr.mxu0 0.0
      %1290 = vmatpush1.msra.mxu0 %v1203
      %1291 = vmatprep.subr.mxu0 0.0
      %1292 = vmatpush2.msra.mxu0 0.0
      %1293 = vmatprep.subr.mxu0 0.0
      %1294 = vmatpush2.msra.mxu0 0.0
      %1295 = vmatprep.subr.mxu0 0.0
      %1296 = vmatpush2.msra.mxu0 0.0
      %1297 = vmatprep.subr.mxu0 0.0
      %1298 = vmatpush2.msra.mxu0 0.0
      %1299 = vmatprep.subr.mxu0 0.0
      %1300 = vmatpush2.msra.mxu0 0.0
      %1301 = vmatprep.subr.mxu0 0.0
      %1302 = vmatpush2.msra.mxu0 0.0
      %1303 = vmatprep.subr.mxu0 0.0
      %1304 = vmatpush2.msra.mxu0 0.0
      %1305 = vmatprep.subr.mxu0 0.0
      %1306 = vmatpush2.msra.mxu0 0.0
      %1307 = vmatprep.subr.mxu0 0.0
      %1308 = vmatpush2.msra.mxu0 0.0
      %1309 = vmatprep.subr.mxu0 0.0
      %1310 = vmatpush2.msra.mxu0 0.0
      %1311 = vmatprep.subr.mxu0 0.0
      %1312 = vmatpush2.msra.mxu0 0.0
      %1313 = vmatprep.subr.mxu0 0.0
      %1314 = vmatpush2.msra.mxu0 0.0
      %1315 = vmatprep.subr.mxu0 0.0
      %1316 = vmatpush2.msra.mxu0 0.0
      %1317 = vmatprep.subr.mxu0 0.0
      %1318 = vmatpush2.msra.mxu0 0.0
      %1319 = vmatprep.subr.mxu0 0.0
      %1320 = vmatpush2.msra.mxu0 0.0
      %1321 = vmatprep.subr.mxu0 0.0
      %1322 = vmatpush2.msra.mxu0 0.0
      %1323 = vmatprep.mubr.f32.mxu0 0.0
      %1324 = vmatmul.mubr.f32.gmra.mxu0 %v1212
      %v1325 = vpop.f32.mrf.mxu0
      %v1326 = vadd.f32 0.0, %v1325
      %v1327 = vpop.f32.mrf.mxu0
      %1328 = vmatprep.mubr.f32.mxu0 0.0
      %1329 = vmatmul.mubr.f32.gmra.mxu0 %v1215
      %v1330 = vpop.f32.mrf.mxu0
      %v1331 = vadd.f32 0.0, %v1330
      %v1332 = vpop.f32.mrf.mxu0
      %1333 = vmatprep.mubr.f32.mxu0 0.0
      %1334 = vmatmul.mubr.f32.gmra.mxu0 %v1218
      %v1335 = vpop.f32.mrf.mxu0
      %v1336 = vadd.f32 0.0, %v1335
      %v1337 = vpop.f32.mrf.mxu0
      %1338 = vmatprep.mubr.f32.mxu0 0.0
      %1339 = vmatmul.mubr.f32.gmra.mxu0 %v1221
      %v1340 = vpop.f32.mrf.mxu0
      %v1341 = vadd.f32 0.0, %v1340
      %v1342 = vpop.f32.mrf.mxu0
      %1343 = vmatprep.mubr.f32.mxu0 0.0
      %1344 = vmatmul.mubr.f32.gmra.mxu0 %v1224
      %v1345 = vpop.f32.mrf.mxu0
      %v1346 = vadd.f32 0.0, %v1345
      %v1347 = vpop.f32.mrf.mxu0
      %1348 = vmatprep.mubr.f32.mxu0 0.0
      %1349 = vmatmul.mubr.f32.gmra.mxu0 %v1227
      %v1350 = vpop.f32.mrf.mxu0
      %v1351 = vadd.f32 0.0, %v1350
      %v1352 = vpop.f32.mrf.mxu0
      %1353 = vmatprep.mubr.f32.mxu0 0.0
      %1354 = vmatmul.mubr.f32.gmra.mxu0 %v1230
      %v1355 = vpop.f32.mrf.mxu0
      %v1356 = vadd.f32 0.0, %v1355
      %v1357 = vpop.f32.mrf.mxu0
      %1358 = vmatprep.mubr.f32.mxu0 0.0
      %1359 = vmatmul.mubr.f32.gmra.mxu0 %v1233
      %v1360 = vpop.f32.mrf.mxu0
      %v1361 = vadd.f32 0.0, %v1360
      %v1362 = vpop.f32.mrf.mxu0
      %1363 = vmatprep.mubr.f32.mxu0 0.0
      %1364 = vmatmul.mubr.f32.gmra.mxu0 %v1236
      %v1365 = vpop.f32.mrf.mxu0
      %v1366 = vadd.f32 0.0, %v1365
      %v1367 = vpop.f32.mrf.mxu0
      %1368 = vmatprep.mubr.f32.mxu0 0.0
      %1369 = vmatmul.mubr.f32.gmra.mxu0 %v1239
      %v1370 = vpop.f32.mrf.mxu0
      %v1371 = vadd.f32 0.0, %v1370
      %v1372 = vpop.f32.mrf.mxu0
      %1373 = vmatprep.mubr.f32.mxu0 0.0
      %1374 = vmatmul.mubr.f32.gmra.mxu0 %v1242
      %v1375 = vpop.f32.mrf.mxu0
      %v1376 = vadd.f32 0.0, %v1375
      %v1377 = vpop.f32.mrf.mxu0
      %1378 = vmatprep.mubr.f32.mxu0 0.0
      %1379 = vmatmul.mubr.f32.gmra.mxu0 %v1245
      %v1380 = vpop.f32.mrf.mxu0
      %v1381 = vadd.f32 0.0, %v1380
      %v1382 = vpop.f32.mrf.mxu0
      %1383 = vmatprep.mubr.f32.mxu0 0.0
      %1384 = vmatmul.mubr.f32.gmra.mxu0 %v1248
      %v1385 = vpop.f32.mrf.mxu0
      %v1386 = vadd.f32 0.0, %v1385
      %v1387 = vpop.f32.mrf.mxu0
      %1388 = vmatprep.mubr.f32.mxu0 0.0
      %1389 = vmatmul.mubr.f32.gmra.mxu0 %v1251
      %v1390 = vpop.f32.mrf.mxu0
      %v1391 = vadd.f32 0.0, %v1390
      %v1392 = vpop.f32.mrf.mxu0
      %1393 = vmatprep.mubr.f32.mxu0 0.0
      %1394 = vmatmul.mubr.f32.gmra.mxu0 %v1254
      %v1395 = vpop.f32.mrf.mxu0
      %v1396 = vadd.f32 0.0, %v1395
      %v1397 = vpop.f32.mrf.mxu0
      %1398 = vmatprep.mubr.f32.mxu0 0.0
      %1399 = vmatmul.mubr.f32.gmra.mxu0 %v1257
      %v1400 = vpop.f32.mrf.mxu0
      %v1401 = vadd.f32 0.0, %v1400
      %v1402 = vpop.f32.mrf.mxu0
      %1403 = vdwg.mxu0
      %v1404 = vadd.f32 %v1108, %v1326
      %v1405 = vadd.f32 %v1113, %v1331
      %v1406 = vadd.f32 %v1118, %v1336
      %v1407 = vadd.f32 %v1123, %v1341
      %v1408 = vadd.f32 %v1128, %v1346
      %v1409 = vadd.f32 %v1133, %v1351
      %v1410 = vadd.f32 %v1138, %v1356
      %v1411 = vadd.f32 %v1143, %v1361
      %v1412 = vadd.f32 %v1148, %v1366
      %v1413 = vadd.f32 %v1153, %v1371
      %v1414 = vadd.f32 %v1158, %v1376
      %v1415 = vadd.f32 %v1163, %v1381
      %v1416 = vadd.f32 %v1168, %v1386
      %v1417 = vadd.f32 %v1173, %v1391
      %v1418 = vadd.f32 %v1178, %v1396
      %v1419 = vadd.f32 %v1183, %v1401
      %v1420 = vld [vmem:[%s677 + $0x7] sm:$0xff]
      %v1421 = vld [vmem:[%s677 + $0xf] sm:$0xff]
      %v1422 = vld [vmem:[%s677 + $0x27] sm:$0xff]
      %v1423 = vld [vmem:[%s677 + $0x2f] sm:$0xff]
      %v1424 = vld [vmem:[%s677 + $0x47] sm:$0xff]
      %v1425 = vld [vmem:[%s677 + $0x4f] sm:$0xff]
      %v1426 = vld [vmem:[%s677 + $0x67] sm:$0xff]
      %v1427 = vld [vmem:[%s677 + $0x6f] sm:$0xff]
      %v1428 = vld [vmem:[%s677 + $0x87] sm:$0xff]
      %v1429 = vld [vmem:[%s677 + $0x8f] sm:$0xff]
      %v1430 = vld [vmem:[%s677 + $0xa7] sm:$0xff]
      %v1431 = vld [vmem:[%s677 + $0xaf] sm:$0xff]
      %v1432 = vld [vmem:[%s677 + $0xc7] sm:$0xff]
      %v1433 = vld [vmem:[%s677 + $0xcf] sm:$0xff]
      %v1434 = vld [vmem:[%s677 + $0xe7] sm:$0xff]
      %v1435 = vld [vmem:[%s677 + $0xef] sm:$0xff]
      %s1436 = scalar_lea.vmem %s1, 192
      %v1437 = vld [vmem:[%s1436] sm:$0xff]
      %v1438 = vld [vmem:[%s1436 + $0x8] sm:$0xff]
      %v1439 = vld [vmem:[%s1436 + $0x10] sm:$0xff]
      %v1440 = vld [vmem:[%s1436 + $0x18] sm:$0xff]
      %v1441 = vld [vmem:[%s1436 + $0x20] sm:$0xff]
      %v1442 = vld [vmem:[%s1436 + $0x28] sm:$0xff]
      %v1443 = vld [vmem:[%s1436 + $0x30] sm:$0xff]
      %v1444 = vld [vmem:[%s1436 + $0x38] sm:$0xff]
      %v1446 = vsel %vm668, %v1420, 0
      %v1449 = vsel %vm668, %v1421, 0
      %v1452 = vsel %vm668, %v1422, 0
      %v1455 = vsel %vm668, %v1423, 0
      %v1458 = vsel %vm668, %v1424, 0
      %v1461 = vsel %vm668, %v1425, 0
      %v1464 = vsel %vm668, %v1426, 0
      %v1467 = vsel %vm668, %v1427, 0
      %v1470 = vsel %vm668, %v1428, 0
      %v1473 = vsel %vm668, %v1429, 0
      %v1476 = vsel %vm668, %v1430, 0
      %v1479 = vsel %vm668, %v1431, 0
      %v1482 = vsel %vm668, %v1432, 0
      %v1485 = vsel %vm668, %v1433, 0
      %v1488 = vsel %vm668, %v1434, 0
      %v1491 = vsel %vm668, %v1435, 0
      %1493 = vmatprep.subr.mxu0 0.0
      %1494 = vmatpush1.msra.mxu0 0.0
      %1495 = vmatprep.subr.mxu0 0.0
      %1496 = vmatpush1.msra.mxu0 0.0
      %1497 = vmatprep.subr.mxu0 0.0
      %1498 = vmatpush1.msra.mxu0 0.0
      %1499 = vmatprep.subr.mxu0 0.0
      %1500 = vmatpush1.msra.mxu0 0.0
      %1501 = vmatprep.subr.mxu0 0.0
      %1502 = vmatpush1.msra.mxu0 0.0
      %1503 = vmatprep.subr.mxu0 0.0
      %1504 = vmatpush1.msra.mxu0 0.0
      %1505 = vmatprep.subr.mxu0 0.0
      %1506 = vmatpush1.msra.mxu0 0.0
      %1507 = vmatprep.subr.mxu0 0.0
      %1508 = vmatpush1.msra.mxu0 0.0
      %1509 = vmatprep.subr.mxu0 0.0
      %1510 = vmatpush1.msra.mxu0 %v1444
      %1511 = vmatprep.subr.mxu0 0.0
      %1512 = vmatpush1.msra.mxu0 %v1443
      %1513 = vmatprep.subr.mxu0 0.0
      %1514 = vmatpush1.msra.mxu0 %v1442
      %1515 = vmatprep.subr.mxu0 0.0
      %1516 = vmatpush1.msra.mxu0 %v1441
      %1517 = vmatprep.subr.mxu0 0.0
      %1518 = vmatpush1.msra.mxu0 %v1440
      %1519 = vmatprep.subr.mxu0 0.0
      %1520 = vmatpush1.msra.mxu0 %v1439
      %1521 = vmatprep.subr.mxu0 0.0
      %1522 = vmatpush1.msra.mxu0 %v1438
      %1523 = vmatprep.subr.mxu0 0.0
      %1524 = vmatpush1.msra.mxu0 %v1437
      %1525 = vmatprep.subr.mxu0 0.0
      %1526 = vmatpush2.msra.mxu0 0.0
      %1527 = vmatprep.subr.mxu0 0.0
      %1528 = vmatpush2.msra.mxu0 0.0
      %1529 = vmatprep.subr.mxu0 0.0
      %1530 = vmatpush2.msra.mxu0 0.0
      %1531 = vmatprep.subr.mxu0 0.0
      %1532 = vmatpush2.msra.mxu0 0.0
      %1533 = vmatprep.subr.mxu0 0.0
      %1534 = vmatpush2.msra.mxu0 0.0
      %1535 = vmatprep.subr.mxu0 0.0
      %1536 = vmatpush2.msra.mxu0 0.0
      %1537 = vmatprep.subr.mxu0 0.0
      %1538 = vmatpush2.msra.mxu0 0.0
      %1539 = vmatprep.subr.mxu0 0.0
      %1540 = vmatpush2.msra.mxu0 0.0
      %1541 = vmatprep.subr.mxu0 0.0
      %1542 = vmatpush2.msra.mxu0 0.0
      %1543 = vmatprep.subr.mxu0 0.0
      %1544 = vmatpush2.msra.mxu0 0.0
      %1545 = vmatprep.subr.mxu0 0.0
      %1546 = vmatpush2.msra.mxu0 0.0
      %1547 = vmatprep.subr.mxu0 0.0
      %1548 = vmatpush2.msra.mxu0 0.0
      %1549 = vmatprep.subr.mxu0 0.0
      %1550 = vmatpush2.msra.mxu0 0.0
      %1551 = vmatprep.subr.mxu0 0.0
      %1552 = vmatpush2.msra.mxu0 0.0
      %1553 = vmatprep.subr.mxu0 0.0
      %1554 = vmatpush2.msra.mxu0 0.0
      %1555 = vmatprep.subr.mxu0 0.0
      %1556 = vmatpush2.msra.mxu0 0.0
      %1557 = vmatprep.mubr.f32.mxu0 0.0
      %1558 = vmatmul.mubr.f32.gmra.mxu0 %v1446
      %v1559 = vpop.f32.mrf.mxu0
      %v1560 = vadd.f32 0.0, %v1559
      %v1561 = vpop.f32.mrf.mxu0
      %1562 = vmatprep.mubr.f32.mxu0 0.0
      %1563 = vmatmul.mubr.f32.gmra.mxu0 %v1449
      %v1564 = vpop.f32.mrf.mxu0
      %v1565 = vadd.f32 0.0, %v1564
      %v1566 = vpop.f32.mrf.mxu0
      %1567 = vmatprep.mubr.f32.mxu0 0.0
      %1568 = vmatmul.mubr.f32.gmra.mxu0 %v1452
      %v1569 = vpop.f32.mrf.mxu0
      %v1570 = vadd.f32 0.0, %v1569
      %v1571 = vpop.f32.mrf.mxu0
      %1572 = vmatprep.mubr.f32.mxu0 0.0
      %1573 = vmatmul.mubr.f32.gmra.mxu0 %v1455
      %v1574 = vpop.f32.mrf.mxu0
      %v1575 = vadd.f32 0.0, %v1574
      %v1576 = vpop.f32.mrf.mxu0
      %1577 = vmatprep.mubr.f32.mxu0 0.0
      %1578 = vmatmul.mubr.f32.gmra.mxu0 %v1458
      %v1579 = vpop.f32.mrf.mxu0
      %v1580 = vadd.f32 0.0, %v1579
      %v1581 = vpop.f32.mrf.mxu0
      %1582 = vmatprep.mubr.f32.mxu0 0.0
      %1583 = vmatmul.mubr.f32.gmra.mxu0 %v1461
      %v1584 = vpop.f32.mrf.mxu0
      %v1585 = vadd.f32 0.0, %v1584
      %v1586 = vpop.f32.mrf.mxu0
      %1587 = vmatprep.mubr.f32.mxu0 0.0
      %1588 = vmatmul.mubr.f32.gmra.mxu0 %v1464
      %v1589 = vpop.f32.mrf.mxu0
      %v1590 = vadd.f32 0.0, %v1589
      %v1591 = vpop.f32.mrf.mxu0
      %1592 = vmatprep.mubr.f32.mxu0 0.0
      %1593 = vmatmul.mubr.f32.gmra.mxu0 %v1467
      %v1594 = vpop.f32.mrf.mxu0
      %v1595 = vadd.f32 0.0, %v1594
      %v1596 = vpop.f32.mrf.mxu0
      %1597 = vmatprep.mubr.f32.mxu0 0.0
      %1598 = vmatmul.mubr.f32.gmra.mxu0 %v1470
      %v1599 = vpop.f32.mrf.mxu0
      %v1600 = vadd.f32 0.0, %v1599
      %v1601 = vpop.f32.mrf.mxu0
      %1602 = vmatprep.mubr.f32.mxu0 0.0
      %1603 = vmatmul.mubr.f32.gmra.mxu0 %v1473
      %v1604 = vpop.f32.mrf.mxu0
      %v1605 = vadd.f32 0.0, %v1604
      %v1606 = vpop.f32.mrf.mxu0
      %1607 = vmatprep.mubr.f32.mxu0 0.0
      %1608 = vmatmul.mubr.f32.gmra.mxu0 %v1476
      %v1609 = vpop.f32.mrf.mxu0
      %v1610 = vadd.f32 0.0, %v1609
      %v1611 = vpop.f32.mrf.mxu0
      %1612 = vmatprep.mubr.f32.mxu0 0.0
      %1613 = vmatmul.mubr.f32.gmra.mxu0 %v1479
      %v1614 = vpop.f32.mrf.mxu0
      %v1615 = vadd.f32 0.0, %v1614
      %v1616 = vpop.f32.mrf.mxu0
      %1617 = vmatprep.mubr.f32.mxu0 0.0
      %1618 = vmatmul.mubr.f32.gmra.mxu0 %v1482
      %v1619 = vpop.f32.mrf.mxu0
      %v1620 = vadd.f32 0.0, %v1619
      %v1621 = vpop.f32.mrf.mxu0
      %1622 = vmatprep.mubr.f32.mxu0 0.0
      %1623 = vmatmul.mubr.f32.gmra.mxu0 %v1485
      %v1624 = vpop.f32.mrf.mxu0
      %v1625 = vadd.f32 0.0, %v1624
      %v1626 = vpop.f32.mrf.mxu0
      %1627 = vmatprep.mubr.f32.mxu0 0.0
      %1628 = vmatmul.mubr.f32.gmra.mxu0 %v1488
      %v1629 = vpop.f32.mrf.mxu0
      %v1630 = vadd.f32 0.0, %v1629
      %v1631 = vpop.f32.mrf.mxu0
      %1632 = vmatprep.mubr.f32.mxu0 0.0
      %1633 = vmatmul.mubr.f32.gmra.mxu0 %v1491
      %v1634 = vpop.f32.mrf.mxu0
      %v1635 = vadd.f32 0.0, %v1634
      %v1636 = vpop.f32.mrf.mxu0
      %1637 = vdwg.mxu0
      %v1638 = vadd.f32 %v1404, %v1560
      %v1639 = vadd.f32 %v1405, %v1565
      %v1640 = vadd.f32 %v1406, %v1570
      %v1641 = vadd.f32 %v1407, %v1575
      %v1642 = vadd.f32 %v1408, %v1580
      %v1643 = vadd.f32 %v1409, %v1585
      %v1644 = vadd.f32 %v1410, %v1590
      %v1645 = vadd.f32 %v1411, %v1595
      %v1646 = vadd.f32 %v1412, %v1600
      %v1647 = vadd.f32 %v1413, %v1605
      %v1648 = vadd.f32 %v1414, %v1610
      %v1649 = vadd.f32 %v1415, %v1615
      %v1650 = vadd.f32 %v1416, %v1620
      %v1651 = vadd.f32 %v1417, %v1625
      %v1652 = vadd.f32 %v1418, %v1630
      %v1653 = vadd.f32 %v1419, %v1635
      %v1654 = vld [vmem:[%s677 + $0x8] sm:$0xff]
      %v1655 = vld [vmem:[%s677 + $0x10] sm:$0xff]
      %v1656 = vld [vmem:[%s677 + $0x28] sm:$0xff]
      %v1657 = vld [vmem:[%s677 + $0x30] sm:$0xff]
      %v1658 = vld [vmem:[%s677 + $0x48] sm:$0xff]
      %v1659 = vld [vmem:[%s677 + $0x50] sm:$0xff]
      %v1660 = vld [vmem:[%s677 + $0x68] sm:$0xff]
      %v1661 = vld [vmem:[%s677 + $0x70] sm:$0xff]
      %v1662 = vld [vmem:[%s677 + $0x88] sm:$0xff]
      %v1663 = vld [vmem:[%s677 + $0x90] sm:$0xff]
      %v1664 = vld [vmem:[%s677 + $0xa8] sm:$0xff]
      %v1665 = vld [vmem:[%s677 + $0xb0] sm:$0xff]
      %v1666 = vld [vmem:[%s677 + $0xc8] sm:$0xff]
      %v1667 = vld [vmem:[%s677 + $0xd0] sm:$0xff]
      %v1668 = vld [vmem:[%s677 + $0xe8] sm:$0xff]
      %v1669 = vld [vmem:[%s677 + $0xf0] sm:$0xff]
      %s1670 = scalar_lea.vmem %s1, 256
      %v1671 = vld [vmem:[%s1670] sm:$0xff]
      %v1672 = vld [vmem:[%s1670 + $0x8] sm:$0xff]
      %v1673 = vld [vmem:[%s1670 + $0x10] sm:$0xff]
      %v1674 = vld [vmem:[%s1670 + $0x18] sm:$0xff]
      %v1675 = vld [vmem:[%s1670 + $0x20] sm:$0xff]
      %v1676 = vld [vmem:[%s1670 + $0x28] sm:$0xff]
      %v1677 = vld [vmem:[%s1670 + $0x30] sm:$0xff]
      %v1678 = vld [vmem:[%s1670 + $0x38] sm:$0xff]
      %v1680 = vsel %vm668, %v1654, 0
      %v1683 = vsel %vm668, %v1655, 0
      %v1686 = vsel %vm668, %v1656, 0
      %v1689 = vsel %vm668, %v1657, 0
      %v1692 = vsel %vm668, %v1658, 0
      %v1695 = vsel %vm668, %v1659, 0
      %v1698 = vsel %vm668, %v1660, 0
      %v1701 = vsel %vm668, %v1661, 0
      %v1704 = vsel %vm668, %v1662, 0
      %v1707 = vsel %vm668, %v1663, 0
      %v1710 = vsel %vm668, %v1664, 0
      %v1713 = vsel %vm668, %v1665, 0
      %v1716 = vsel %vm668, %v1666, 0
      %v1719 = vsel %vm668, %v1667, 0
      %v1722 = vsel %vm668, %v1668, 0
      %v1725 = vsel %vm668, %v1669, 0
      %1727 = vmatprep.subr.mxu0 0.0
      %1728 = vmatpush1.msra.mxu0 0.0
      %1729 = vmatprep.subr.mxu0 0.0
      %1730 = vmatpush1.msra.mxu0 0.0
      %1731 = vmatprep.subr.mxu0 0.0
      %1732 = vmatpush1.msra.mxu0 0.0
      %1733 = vmatprep.subr.mxu0 0.0
      %1734 = vmatpush1.msra.mxu0 0.0
      %1735 = vmatprep.subr.mxu0 0.0
      %1736 = vmatpush1.msra.mxu0 0.0
      %1737 = vmatprep.subr.mxu0 0.0
      %1738 = vmatpush1.msra.mxu0 0.0
      %1739 = vmatprep.subr.mxu0 0.0
      %1740 = vmatpush1.msra.mxu0 0.0
      %1741 = vmatprep.subr.mxu0 0.0
      %1742 = vmatpush1.msra.mxu0 0.0
      %1743 = vmatprep.subr.mxu0 0.0
      %1744 = vmatpush1.msra.mxu0 %v1678
      %1745 = vmatprep.subr.mxu0 0.0
      %1746 = vmatpush1.msra.mxu0 %v1677
      %1747 = vmatprep.subr.mxu0 0.0
      %1748 = vmatpush1.msra.mxu0 %v1676
      %1749 = vmatprep.subr.mxu0 0.0
      %1750 = vmatpush1.msra.mxu0 %v1675
      %1751 = vmatprep.subr.mxu0 0.0
      %1752 = vmatpush1.msra.mxu0 %v1674
      %1753 = vmatprep.subr.mxu0 0.0
      %1754 = vmatpush1.msra.mxu0 %v1673
      %1755 = vmatprep.subr.mxu0 0.0
      %1756 = vmatpush1.msra.mxu0 %v1672
      %1757 = vmatprep.subr.mxu0 0.0
      %1758 = vmatpush1.msra.mxu0 %v1671
      %1759 = vmatprep.subr.mxu0 0.0
      %1760 = vmatpush2.msra.mxu0 0.0
      %1761 = vmatprep.subr.mxu0 0.0
      %1762 = vmatpush2.msra.mxu0 0.0
      %1763 = vmatprep.subr.mxu0 0.0
      %1764 = vmatpush2.msra.mxu0 0.0
      %1765 = vmatprep.subr.mxu0 0.0
      %1766 = vmatpush2.msra.mxu0 0.0
      %1767 = vmatprep.subr.mxu0 0.0
      %1768 = vmatpush2.msra.mxu0 0.0
      %1769 = vmatprep.subr.mxu0 0.0
      %1770 = vmatpush2.msra.mxu0 0.0
      %1771 = vmatprep.subr.mxu0 0.0
      %1772 = vmatpush2.msra.mxu0 0.0
      %1773 = vmatprep.subr.mxu0 0.0
      %1774 = vmatpush2.msra.mxu0 0.0
      %1775 = vmatprep.subr.mxu0 0.0
      %1776 = vmatpush2.msra.mxu0 0.0
      %1777 = vmatprep.subr.mxu0 0.0
      %1778 = vmatpush2.msra.mxu0 0.0
      %1779 = vmatprep.subr.mxu0 0.0
      %1780 = vmatpush2.msra.mxu0 0.0
      %1781 = vmatprep.subr.mxu0 0.0
      %1782 = vmatpush2.msra.mxu0 0.0
      %1783 = vmatprep.subr.mxu0 0.0
      %1784 = vmatpush2.msra.mxu0 0.0
      %1785 = vmatprep.subr.mxu0 0.0
      %1786 = vmatpush2.msra.mxu0 0.0
      %1787 = vmatprep.subr.mxu0 0.0
      %1788 = vmatpush2.msra.mxu0 0.0
      %1789 = vmatprep.subr.mxu0 0.0
      %1790 = vmatpush2.msra.mxu0 0.0
      %1791 = vmatprep.mubr.f32.mxu0 0.0
      %1792 = vmatmul.mubr.f32.gmra.mxu0 %v1680
      %v1793 = vpop.f32.mrf.mxu0
      %v1794 = vadd.f32 0.0, %v1793
      %v1795 = vpop.f32.mrf.mxu0
      %1796 = vmatprep.mubr.f32.mxu0 0.0
      %1797 = vmatmul.mubr.f32.gmra.mxu0 %v1683
      %v1798 = vpop.f32.mrf.mxu0
      %v1799 = vadd.f32 0.0, %v1798
      %v1800 = vpop.f32.mrf.mxu0
      %1801 = vmatprep.mubr.f32.mxu0 0.0
      %1802 = vmatmul.mubr.f32.gmra.mxu0 %v1686
      %v1803 = vpop.f32.mrf.mxu0
      %v1804 = vadd.f32 0.0, %v1803
      %v1805 = vpop.f32.mrf.mxu0
      %1806 = vmatprep.mubr.f32.mxu0 0.0
      %1807 = vmatmul.mubr.f32.gmra.mxu0 %v1689
      %v1808 = vpop.f32.mrf.mxu0
      %v1809 = vadd.f32 0.0, %v1808
      %v1810 = vpop.f32.mrf.mxu0
      %1811 = vmatprep.mubr.f32.mxu0 0.0
      %1812 = vmatmul.mubr.f32.gmra.mxu0 %v1692
      %v1813 = vpop.f32.mrf.mxu0
      %v1814 = vadd.f32 0.0, %v1813
      %v1815 = vpop.f32.mrf.mxu0
      %1816 = vmatprep.mubr.f32.mxu0 0.0
      %1817 = vmatmul.mubr.f32.gmra.mxu0 %v1695
      %v1818 = vpop.f32.mrf.mxu0
      %v1819 = vadd.f32 0.0, %v1818
      %v1820 = vpop.f32.mrf.mxu0
      %1821 = vmatprep.mubr.f32.mxu0 0.0
      %1822 = vmatmul.mubr.f32.gmra.mxu0 %v1698
      %v1823 = vpop.f32.mrf.mxu0
      %v1824 = vadd.f32 0.0, %v1823
      %v1825 = vpop.f32.mrf.mxu0
      %1826 = vmatprep.mubr.f32.mxu0 0.0
      %1827 = vmatmul.mubr.f32.gmra.mxu0 %v1701
      %v1828 = vpop.f32.mrf.mxu0
      %v1829 = vadd.f32 0.0, %v1828
      %v1830 = vpop.f32.mrf.mxu0
      %1831 = vmatprep.mubr.f32.mxu0 0.0
      %1832 = vmatmul.mubr.f32.gmra.mxu0 %v1704
      %v1833 = vpop.f32.mrf.mxu0
      %v1834 = vadd.f32 0.0, %v1833
      %v1835 = vpop.f32.mrf.mxu0
      %1836 = vmatprep.mubr.f32.mxu0 0.0
      %1837 = vmatmul.mubr.f32.gmra.mxu0 %v1707
      %v1838 = vpop.f32.mrf.mxu0
      %v1839 = vadd.f32 0.0, %v1838
      %v1840 = vpop.f32.mrf.mxu0
      %1841 = vmatprep.mubr.f32.mxu0 0.0
      %1842 = vmatmul.mubr.f32.gmra.mxu0 %v1710
      %v1843 = vpop.f32.mrf.mxu0
      %v1844 = vadd.f32 0.0, %v1843
      %v1845 = vpop.f32.mrf.mxu0
      %1846 = vmatprep.mubr.f32.mxu0 0.0
      %1847 = vmatmul.mubr.f32.gmra.mxu0 %v1713
      %v1848 = vpop.f32.mrf.mxu0
      %v1849 = vadd.f32 0.0, %v1848
      %v1850 = vpop.f32.mrf.mxu0
      %1851 = vmatprep.mubr.f32.mxu0 0.0
      %1852 = vmatmul.mubr.f32.gmra.mxu0 %v1716
      %v1853 = vpop.f32.mrf.mxu0
      %v1854 = vadd.f32 0.0, %v1853
      %v1855 = vpop.f32.mrf.mxu0
      %1856 = vmatprep.mubr.f32.mxu0 0.0
      %1857 = vmatmul.mubr.f32.gmra.mxu0 %v1719
      %v1858 = vpop.f32.mrf.mxu0
      %v1859 = vadd.f32 0.0, %v1858
      %v1860 = vpop.f32.mrf.mxu0
      %1861 = vmatprep.mubr.f32.mxu0 0.0
      %1862 = vmatmul.mubr.f32.gmra.mxu0 %v1722
      %v1863 = vpop.f32.mrf.mxu0
      %v1864 = vadd.f32 0.0, %v1863
      %v1865 = vpop.f32.mrf.mxu0
      %1866 = vmatprep.mubr.f32.mxu0 0.0
      %1867 = vmatmul.mubr.f32.gmra.mxu0 %v1725
      %v1868 = vpop.f32.mrf.mxu0
      %v1869 = vadd.f32 0.0, %v1868
      %v1870 = vpop.f32.mrf.mxu0
      %1871 = vdwg.mxu0
      %v1872 = vadd.f32 %v1638, %v1794
      %v1873 = vadd.f32 %v1639, %v1799
      %v1874 = vadd.f32 %v1640, %v1804
      %v1875 = vadd.f32 %v1641, %v1809
      %v1876 = vadd.f32 %v1642, %v1814
      %v1877 = vadd.f32 %v1643, %v1819
      %v1878 = vadd.f32 %v1644, %v1824
      %v1879 = vadd.f32 %v1645, %v1829
      %v1880 = vadd.f32 %v1646, %v1834
      %v1881 = vadd.f32 %v1647, %v1839
      %v1882 = vadd.f32 %v1648, %v1844
      %v1883 = vadd.f32 %v1649, %v1849
      %v1884 = vadd.f32 %v1650, %v1854
      %v1885 = vadd.f32 %v1651, %v1859
      %v1886 = vadd.f32 %v1652, %v1864
      %v1887 = vadd.f32 %v1653, %v1869
      %v1888 = vld [vmem:[%s677 + $0x9] sm:$0xff]
      %v1889 = vld [vmem:[%s677 + $0x11] sm:$0xff]
      %v1890 = vld [vmem:[%s677 + $0x29] sm:$0xff]
      %v1891 = vld [vmem:[%s677 + $0x31] sm:$0xff]
      %v1892 = vld [vmem:[%s677 + $0x49] sm:$0xff]
      %v1893 = vld [vmem:[%s677 + $0x51] sm:$0xff]
      %v1894 = vld [vmem:[%s677 + $0x69] sm:$0xff]
      %v1895 = vld [vmem:[%s677 + $0x71] sm:$0xff]
      %v1896 = vld [vmem:[%s677 + $0x89] sm:$0xff]
      %v1897 = vld [vmem:[%s677 + $0x91] sm:$0xff]
      %v1898 = vld [vmem:[%s677 + $0xa9] sm:$0xff]
      %v1899 = vld [vmem:[%s677 + $0xb1] sm:$0xff]
      %v1900 = vld [vmem:[%s677 + $0xc9] sm:$0xff]
      %v1901 = vld [vmem:[%s677 + $0xd1] sm:$0xff]
      %v1902 = vld [vmem:[%s677 + $0xe9] sm:$0xff]
      %v1903 = vld [vmem:[%s677 + $0xf1] sm:$0xff]
      %s1904 = scalar_lea.vmem %s1, 320
      %v1905 = vld [vmem:[%s1904] sm:$0xff]
      %v1906 = vld [vmem:[%s1904 + $0x8] sm:$0xff]
      %v1907 = vld [vmem:[%s1904 + $0x10] sm:$0xff]
      %v1908 = vld [vmem:[%s1904 + $0x18] sm:$0xff]
      %v1909 = vld [vmem:[%s1904 + $0x20] sm:$0xff]
      %v1910 = vld [vmem:[%s1904 + $0x28] sm:$0xff]
      %v1911 = vld [vmem:[%s1904 + $0x30] sm:$0xff]
      %v1912 = vld [vmem:[%s1904 + $0x38] sm:$0xff]
      %v1914 = vsel %vm668, %v1888, 0
      %v1917 = vsel %vm668, %v1889, 0
      %v1920 = vsel %vm668, %v1890, 0
      %v1923 = vsel %vm668, %v1891, 0
      %v1926 = vsel %vm668, %v1892, 0
      %v1929 = vsel %vm668, %v1893, 0
      %v1932 = vsel %vm668, %v1894, 0
      %v1935 = vsel %vm668, %v1895, 0
      %v1938 = vsel %vm668, %v1896, 0
      %v1941 = vsel %vm668, %v1897, 0
      %v1944 = vsel %vm668, %v1898, 0
      %v1947 = vsel %vm668, %v1899, 0
      %v1950 = vsel %vm668, %v1900, 0
      %v1953 = vsel %vm668, %v1901, 0
      %v1956 = vsel %vm668, %v1902, 0
      %v1959 = vsel %vm668, %v1903, 0
      %1961 = vmatprep.subr.mxu0 0.0
      %1962 = vmatpush1.msra.mxu0 0.0
      %1963 = vmatprep.subr.mxu0 0.0
      %1964 = vmatpush1.msra.mxu0 0.0
      %1965 = vmatprep.subr.mxu0 0.0
      %1966 = vmatpush1.msra.mxu0 0.0
      %1967 = vmatprep.subr.mxu0 0.0
      %1968 = vmatpush1.msra.mxu0 0.0
      %1969 = vmatprep.subr.mxu0 0.0
      %1970 = vmatpush1.msra.mxu0 0.0
      %1971 = vmatprep.subr.mxu0 0.0
      %1972 = vmatpush1.msra.mxu0 0.0
      %1973 = vmatprep.subr.mxu0 0.0
      %1974 = vmatpush1.msra.mxu0 0.0
      %1975 = vmatprep.subr.mxu0 0.0
      %1976 = vmatpush1.msra.mxu0 0.0
      %1977 = vmatprep.subr.mxu0 0.0
      %1978 = vmatpush1.msra.mxu0 %v1912
      %1979 = vmatprep.subr.mxu0 0.0
      %1980 = vmatpush1.msra.mxu0 %v1911
      %1981 = vmatprep.subr.mxu0 0.0
      %1982 = vmatpush1.msra.mxu0 %v1910
      %1983 = vmatprep.subr.mxu0 0.0
      %1984 = vmatpush1.msra.mxu0 %v1909
      %1985 = vmatprep.subr.mxu0 0.0
      %1986 = vmatpush1.msra.mxu0 %v1908
      %1987 = vmatprep.subr.mxu0 0.0
      %1988 = vmatpush1.msra.mxu0 %v1907
      %1989 = vmatprep.subr.mxu0 0.0
      %1990 = vmatpush1.msra.mxu0 %v1906
      %1991 = vmatprep.subr.mxu0 0.0
      %1992 = vmatpush1.msra.mxu0 %v1905
      %1993 = vmatprep.subr.mxu0 0.0
      %1994 = vmatpush2.msra.mxu0 0.0
      %1995 = vmatprep.subr.mxu0 0.0
      %1996 = vmatpush2.msra.mxu0 0.0
      %1997 = vmatprep.subr.mxu0 0.0
      %1998 = vmatpush2.msra.mxu0 0.0
      %1999 = vmatprep.subr.mxu0 0.0
      %2000 = vmatpush2.msra.mxu0 0.0
      %2001 = vmatprep.subr.mxu0 0.0
      %2002 = vmatpush2.msra.mxu0 0.0
      %2003 = vmatprep.subr.mxu0 0.0
      %2004 = vmatpush2.msra.mxu0 0.0
      %2005 = vmatprep.subr.mxu0 0.0
      %2006 = vmatpush2.msra.mxu0 0.0
      %2007 = vmatprep.subr.mxu0 0.0
      %2008 = vmatpush2.msra.mxu0 0.0
      %2009 = vmatprep.subr.mxu0 0.0
      %2010 = vmatpush2.msra.mxu0 0.0
      %2011 = vmatprep.subr.mxu0 0.0
      %2012 = vmatpush2.msra.mxu0 0.0
      %2013 = vmatprep.subr.mxu0 0.0
      %2014 = vmatpush2.msra.mxu0 0.0
      %2015 = vmatprep.subr.mxu0 0.0
      %2016 = vmatpush2.msra.mxu0 0.0
      %2017 = vmatprep.subr.mxu0 0.0
      %2018 = vmatpush2.msra.mxu0 0.0
      %2019 = vmatprep.subr.mxu0 0.0
      %2020 = vmatpush2.msra.mxu0 0.0
      %2021 = vmatprep.subr.mxu0 0.0
      %2022 = vmatpush2.msra.mxu0 0.0
      %2023 = vmatprep.subr.mxu0 0.0
      %2024 = vmatpush2.msra.mxu0 0.0
      %2025 = vmatprep.mubr.f32.mxu0 0.0
      %2026 = vmatmul.mubr.f32.gmra.mxu0 %v1914
      %v2027 = vpop.f32.mrf.mxu0
      %v2028 = vadd.f32 0.0, %v2027
      %v2029 = vpop.f32.mrf.mxu0
      %2030 = vmatprep.mubr.f32.mxu0 0.0
      %2031 = vmatmul.mubr.f32.gmra.mxu0 %v1917
      %v2032 = vpop.f32.mrf.mxu0
      %v2033 = vadd.f32 0.0, %v2032
      %v2034 = vpop.f32.mrf.mxu0
      %2035 = vmatprep.mubr.f32.mxu0 0.0
      %2036 = vmatmul.mubr.f32.gmra.mxu0 %v1920
      %v2037 = vpop.f32.mrf.mxu0
      %v2038 = vadd.f32 0.0, %v2037
      %v2039 = vpop.f32.mrf.mxu0
      %2040 = vmatprep.mubr.f32.mxu0 0.0
      %2041 = vmatmul.mubr.f32.gmra.mxu0 %v1923
      %v2042 = vpop.f32.mrf.mxu0
      %v2043 = vadd.f32 0.0, %v2042
      %v2044 = vpop.f32.mrf.mxu0
      %2045 = vmatprep.mubr.f32.mxu0 0.0
      %2046 = vmatmul.mubr.f32.gmra.mxu0 %v1926
      %v2047 = vpop.f32.mrf.mxu0
      %v2048 = vadd.f32 0.0, %v2047
      %v2049 = vpop.f32.mrf.mxu0
      %2050 = vmatprep.mubr.f32.mxu0 0.0
      %2051 = vmatmul.mubr.f32.gmra.mxu0 %v1929
      %v2052 = vpop.f32.mrf.mxu0
      %v2053 = vadd.f32 0.0, %v2052
      %v2054 = vpop.f32.mrf.mxu0
      %2055 = vmatprep.mubr.f32.mxu0 0.0
      %2056 = vmatmul.mubr.f32.gmra.mxu0 %v1932
      %v2057 = vpop.f32.mrf.mxu0
      %v2058 = vadd.f32 0.0, %v2057
      %v2059 = vpop.f32.mrf.mxu0
      %2060 = vmatprep.mubr.f32.mxu0 0.0
      %2061 = vmatmul.mubr.f32.gmra.mxu0 %v1935
      %v2062 = vpop.f32.mrf.mxu0
      %v2063 = vadd.f32 0.0, %v2062
      %v2064 = vpop.f32.mrf.mxu0
      %2065 = vmatprep.mubr.f32.mxu0 0.0
      %2066 = vmatmul.mubr.f32.gmra.mxu0 %v1938
      %v2067 = vpop.f32.mrf.mxu0
      %v2068 = vadd.f32 0.0, %v2067
      %v2069 = vpop.f32.mrf.mxu0
      %2070 = vmatprep.mubr.f32.mxu0 0.0
      %2071 = vmatmul.mubr.f32.gmra.mxu0 %v1941
      %v2072 = vpop.f32.mrf.mxu0
      %v2073 = vadd.f32 0.0, %v2072
      %v2074 = vpop.f32.mrf.mxu0
      %2075 = vmatprep.mubr.f32.mxu0 0.0
      %2076 = vmatmul.mubr.f32.gmra.mxu0 %v1944
      %v2077 = vpop.f32.mrf.mxu0
      %v2078 = vadd.f32 0.0, %v2077
      %v2079 = vpop.f32.mrf.mxu0
      %2080 = vmatprep.mubr.f32.mxu0 0.0
      %2081 = vmatmul.mubr.f32.gmra.mxu0 %v1947
      %v2082 = vpop.f32.mrf.mxu0
      %v2083 = vadd.f32 0.0, %v2082
      %v2084 = vpop.f32.mrf.mxu0
      %2085 = vmatprep.mubr.f32.mxu0 0.0
      %2086 = vmatmul.mubr.f32.gmra.mxu0 %v1950
      %v2087 = vpop.f32.mrf.mxu0
      %v2088 = vadd.f32 0.0, %v2087
      %v2089 = vpop.f32.mrf.mxu0
      %2090 = vmatprep.mubr.f32.mxu0 0.0
      %2091 = vmatmul.mubr.f32.gmra.mxu0 %v1953
      %v2092 = vpop.f32.mrf.mxu0
      %v2093 = vadd.f32 0.0, %v2092
      %v2094 = vpop.f32.mrf.mxu0
      %2095 = vmatprep.mubr.f32.mxu0 0.0
      %2096 = vmatmul.mubr.f32.gmra.mxu0 %v1956
      %v2097 = vpop.f32.mrf.mxu0
      %v2098 = vadd.f32 0.0, %v2097
      %v2099 = vpop.f32.mrf.mxu0
      %2100 = vmatprep.mubr.f32.mxu0 0.0
      %2101 = vmatmul.mubr.f32.gmra.mxu0 %v1959
      %v2102 = vpop.f32.mrf.mxu0
      %v2103 = vadd.f32 0.0, %v2102
      %v2104 = vpop.f32.mrf.mxu0
      %2105 = vdwg.mxu0
      %v2106 = vadd.f32 %v1872, %v2028
      %v2107 = vadd.f32 %v1873, %v2033
      %v2108 = vadd.f32 %v1874, %v2038
      %v2109 = vadd.f32 %v1875, %v2043
      %v2110 = vadd.f32 %v1876, %v2048
      %v2111 = vadd.f32 %v1877, %v2053
      %v2112 = vadd.f32 %v1878, %v2058
      %v2113 = vadd.f32 %v1879, %v2063
      %v2114 = vadd.f32 %v1880, %v2068
      %v2115 = vadd.f32 %v1881, %v2073
      %v2116 = vadd.f32 %v1882, %v2078
      %v2117 = vadd.f32 %v1883, %v2083
      %v2118 = vadd.f32 %v1884, %v2088
      %v2119 = vadd.f32 %v1885, %v2093
      %v2120 = vadd.f32 %v1886, %v2098
      %v2121 = vadd.f32 %v1887, %v2103
      %s2122 = scalar_lea.vmem [#allocation2], 64
      %v2123 = vld [vmem:[%s2122 + $0x7] sm:$0xff]
      %v2124 = vld [vmem:[%s2122 + $0xf] sm:$0xff]
      %v2125 = vld [vmem:[%s2122 + $0x27] sm:$0xff]
      %v2126 = vld [vmem:[%s2122 + $0x2f] sm:$0xff]
      %v2127 = vld [vmem:[%s2122 + $0x47] sm:$0xff]
      %v2128 = vld [vmem:[%s2122 + $0x4f] sm:$0xff]
      %v2129 = vld [vmem:[%s2122 + $0x67] sm:$0xff]
      %v2130 = vld [vmem:[%s2122 + $0x6f] sm:$0xff]
      %v2131 = vld [vmem:[%s2122 + $0x87] sm:$0xff]
      %v2132 = vld [vmem:[%s2122 + $0x8f] sm:$0xff]
      %v2133 = vld [vmem:[%s2122 + $0xa7] sm:$0xff]
      %v2134 = vld [vmem:[%s2122 + $0xaf] sm:$0xff]
      %v2135 = vld [vmem:[%s2122 + $0xc7] sm:$0xff]
      %v2136 = vld [vmem:[%s2122 + $0xcf] sm:$0xff]
      %v2137 = vld [vmem:[%s2122 + $0xe7] sm:$0xff]
      %v2138 = vld [vmem:[%s2122 + $0xef] sm:$0xff]
      %s2139 = scalar_lea.vmem %s1, 384
      %v2140 = vld [vmem:[%s2139] sm:$0xff]
      %v2141 = vld [vmem:[%s2139 + $0x8] sm:$0xff]
      %v2142 = vld [vmem:[%s2139 + $0x10] sm:$0xff]
      %v2143 = vld [vmem:[%s2139 + $0x18] sm:$0xff]
      %v2144 = vld [vmem:[%s2139 + $0x20] sm:$0xff]
      %v2145 = vld [vmem:[%s2139 + $0x28] sm:$0xff]
      %v2146 = vld [vmem:[%s2139 + $0x30] sm:$0xff]
      %v2147 = vld [vmem:[%s2139 + $0x38] sm:$0xff]
      %v2149 = vsel %vm668, %v2123, 0
      %v2152 = vsel %vm668, %v2124, 0
      %v2155 = vsel %vm668, %v2125, 0
      %v2158 = vsel %vm668, %v2126, 0
      %v2161 = vsel %vm668, %v2127, 0
      %v2164 = vsel %vm668, %v2128, 0
      %v2167 = vsel %vm668, %v2129, 0
      %v2170 = vsel %vm668, %v2130, 0
      %v2173 = vsel %vm668, %v2131, 0
      %v2176 = vsel %vm668, %v2132, 0
      %v2179 = vsel %vm668, %v2133, 0
      %v2182 = vsel %vm668, %v2134, 0
      %v2185 = vsel %vm668, %v2135, 0
      %v2188 = vsel %vm668, %v2136, 0
      %v2191 = vsel %vm668, %v2137, 0
      %v2194 = vsel %vm668, %v2138, 0
      %2196 = vmatprep.subr.mxu0 0.0
      %2197 = vmatpush1.msra.mxu0 0.0
      %2198 = vmatprep.subr.mxu0 0.0
      %2199 = vmatpush1.msra.mxu0 0.0
      %2200 = vmatprep.subr.mxu0 0.0
      %2201 = vmatpush1.msra.mxu0 0.0
      %2202 = vmatprep.subr.mxu0 0.0
      %2203 = vmatpush1.msra.mxu0 0.0
      %2204 = vmatprep.subr.mxu0 0.0
      %2205 = vmatpush1.msra.mxu0 0.0
      %2206 = vmatprep.subr.mxu0 0.0
      %2207 = vmatpush1.msra.mxu0 0.0
      %2208 = vmatprep.subr.mxu0 0.0
      %2209 = vmatpush1.msra.mxu0 0.0
      %2210 = vmatprep.subr.mxu0 0.0
      %2211 = vmatpush1.msra.mxu0 0.0
      %2212 = vmatprep.subr.mxu0 0.0
      %2213 = vmatpush1.msra.mxu0 %v2147
      %2214 = vmatprep.subr.mxu0 0.0
      %2215 = vmatpush1.msra.mxu0 %v2146
      %2216 = vmatprep.subr.mxu0 0.0
      %2217 = vmatpush1.msra.mxu0 %v2145
      %2218 = vmatprep.subr.mxu0 0.0
      %2219 = vmatpush1.msra.mxu0 %v2144
      %2220 = vmatprep.subr.mxu0 0.0
      %2221 = vmatpush1.msra.mxu0 %v2143
      %2222 = vmatprep.subr.mxu0 0.0
      %2223 = vmatpush1.msra.mxu0 %v2142
      %2224 = vmatprep.subr.mxu0 0.0
      %2225 = vmatpush1.msra.mxu0 %v2141
      %2226 = vmatprep.subr.mxu0 0.0
      %2227 = vmatpush1.msra.mxu0 %v2140
      %2228 = vmatprep.subr.mxu0 0.0
      %2229 = vmatpush2.msra.mxu0 0.0
      %2230 = vmatprep.subr.mxu0 0.0
      %2231 = vmatpush2.msra.mxu0 0.0
      %2232 = vmatprep.subr.mxu0 0.0
      %2233 = vmatpush2.msra.mxu0 0.0
      %2234 = vmatprep.subr.mxu0 0.0
      %2235 = vmatpush2.msra.mxu0 0.0
      %2236 = vmatprep.subr.mxu0 0.0
      %2237 = vmatpush2.msra.mxu0 0.0
      %2238 = vmatprep.subr.mxu0 0.0
      %2239 = vmatpush2.msra.mxu0 0.0
      %2240 = vmatprep.subr.mxu0 0.0
      %2241 = vmatpush2.msra.mxu0 0.0
      %2242 = vmatprep.subr.mxu0 0.0
      %2243 = vmatpush2.msra.mxu0 0.0
      %2244 = vmatprep.subr.mxu0 0.0
      %2245 = vmatpush2.msra.mxu0 0.0
      %2246 = vmatprep.subr.mxu0 0.0
      %2247 = vmatpush2.msra.mxu0 0.0
      %2248 = vmatprep.subr.mxu0 0.0
      %2249 = vmatpush2.msra.mxu0 0.0
      %2250 = vmatprep.subr.mxu0 0.0
      %2251 = vmatpush2.msra.mxu0 0.0
      %2252 = vmatprep.subr.mxu0 0.0
      %2253 = vmatpush2.msra.mxu0 0.0
      %2254 = vmatprep.subr.mxu0 0.0
      %2255 = vmatpush2.msra.mxu0 0.0
      %2256 = vmatprep.subr.mxu0 0.0
      %2257 = vmatpush2.msra.mxu0 0.0
      %2258 = vmatprep.subr.mxu0 0.0
      %2259 = vmatpush2.msra.mxu0 0.0
      %2260 = vmatprep.mubr.f32.mxu0 0.0
      %2261 = vmatmul.mubr.f32.gmra.mxu0 %v2149
      %v2262 = vpop.f32.mrf.mxu0
      %v2263 = vadd.f32 0.0, %v2262
      %v2264 = vpop.f32.mrf.mxu0
      %2265 = vmatprep.mubr.f32.mxu0 0.0
      %2266 = vmatmul.mubr.f32.gmra.mxu0 %v2152
      %v2267 = vpop.f32.mrf.mxu0
      %v2268 = vadd.f32 0.0, %v2267
      %v2269 = vpop.f32.mrf.mxu0
      %2270 = vmatprep.mubr.f32.mxu0 0.0
      %2271 = vmatmul.mubr.f32.gmra.mxu0 %v2155
      %v2272 = vpop.f32.mrf.mxu0
      %v2273 = vadd.f32 0.0, %v2272
      %v2274 = vpop.f32.mrf.mxu0
      %2275 = vmatprep.mubr.f32.mxu0 0.0
      %2276 = vmatmul.mubr.f32.gmra.mxu0 %v2158
      %v2277 = vpop.f32.mrf.mxu0
      %v2278 = vadd.f32 0.0, %v2277
      %v2279 = vpop.f32.mrf.mxu0
      %2280 = vmatprep.mubr.f32.mxu0 0.0
      %2281 = vmatmul.mubr.f32.gmra.mxu0 %v2161
      %v2282 = vpop.f32.mrf.mxu0
      %v2283 = vadd.f32 0.0, %v2282
      %v2284 = vpop.f32.mrf.mxu0
      %2285 = vmatprep.mubr.f32.mxu0 0.0
      %2286 = vmatmul.mubr.f32.gmra.mxu0 %v2164
      %v2287 = vpop.f32.mrf.mxu0
      %v2288 = vadd.f32 0.0, %v2287
      %v2289 = vpop.f32.mrf.mxu0
      %2290 = vmatprep.mubr.f32.mxu0 0.0
      %2291 = vmatmul.mubr.f32.gmra.mxu0 %v2167
      %v2292 = vpop.f32.mrf.mxu0
      %v2293 = vadd.f32 0.0, %v2292
      %v2294 = vpop.f32.mrf.mxu0
      %2295 = vmatprep.mubr.f32.mxu0 0.0
      %2296 = vmatmul.mubr.f32.gmra.mxu0 %v2170
      %v2297 = vpop.f32.mrf.mxu0
      %v2298 = vadd.f32 0.0, %v2297
      %v2299 = vpop.f32.mrf.mxu0
      %2300 = vmatprep.mubr.f32.mxu0 0.0
      %2301 = vmatmul.mubr.f32.gmra.mxu0 %v2173
      %v2302 = vpop.f32.mrf.mxu0
      %v2303 = vadd.f32 0.0, %v2302
      %v2304 = vpop.f32.mrf.mxu0
      %2305 = vmatprep.mubr.f32.mxu0 0.0
      %2306 = vmatmul.mubr.f32.gmra.mxu0 %v2176
      %v2307 = vpop.f32.mrf.mxu0
      %v2308 = vadd.f32 0.0, %v2307
      %v2309 = vpop.f32.mrf.mxu0
      %2310 = vmatprep.mubr.f32.mxu0 0.0
      %2311 = vmatmul.mubr.f32.gmra.mxu0 %v2179
      %v2312 = vpop.f32.mrf.mxu0
      %v2313 = vadd.f32 0.0, %v2312
      %v2314 = vpop.f32.mrf.mxu0
      %2315 = vmatprep.mubr.f32.mxu0 0.0
      %2316 = vmatmul.mubr.f32.gmra.mxu0 %v2182
      %v2317 = vpop.f32.mrf.mxu0
      %v2318 = vadd.f32 0.0, %v2317
      %v2319 = vpop.f32.mrf.mxu0
      %2320 = vmatprep.mubr.f32.mxu0 0.0
      %2321 = vmatmul.mubr.f32.gmra.mxu0 %v2185
      %v2322 = vpop.f32.mrf.mxu0
      %v2323 = vadd.f32 0.0, %v2322
      %v2324 = vpop.f32.mrf.mxu0
      %2325 = vmatprep.mubr.f32.mxu0 0.0
      %2326 = vmatmul.mubr.f32.gmra.mxu0 %v2188
      %v2327 = vpop.f32.mrf.mxu0
      %v2328 = vadd.f32 0.0, %v2327
      %v2329 = vpop.f32.mrf.mxu0
      %2330 = vmatprep.mubr.f32.mxu0 0.0
      %2331 = vmatmul.mubr.f32.gmra.mxu0 %v2191
      %v2332 = vpop.f32.mrf.mxu0
      %v2333 = vadd.f32 0.0, %v2332
      %v2334 = vpop.f32.mrf.mxu0
      %2335 = vmatprep.mubr.f32.mxu0 0.0
      %2336 = vmatmul.mubr.f32.gmra.mxu0 %v2194
      %v2337 = vpop.f32.mrf.mxu0
      %v2338 = vadd.f32 0.0, %v2337
      %v2339 = vpop.f32.mrf.mxu0
      %2340 = vdwg.mxu0
      %v2341 = vadd.f32 %v2106, %v2263
      %v2342 = vadd.f32 %v2107, %v2268
      %v2343 = vadd.f32 %v2108, %v2273
      %v2344 = vadd.f32 %v2109, %v2278
      %v2345 = vadd.f32 %v2110, %v2283
      %v2346 = vadd.f32 %v2111, %v2288
      %v2347 = vadd.f32 %v2112, %v2293
      %v2348 = vadd.f32 %v2113, %v2298
      %v2349 = vadd.f32 %v2114, %v2303
      %v2350 = vadd.f32 %v2115, %v2308
      %v2351 = vadd.f32 %v2116, %v2313
      %v2352 = vadd.f32 %v2117, %v2318
      %v2353 = vadd.f32 %v2118, %v2323
      %v2354 = vadd.f32 %v2119, %v2328
      %v2355 = vadd.f32 %v2120, %v2333
      %v2356 = vadd.f32 %v2121, %v2338
      %v2357 = vld [vmem:[%s2122 + $0x8] sm:$0xff]
      %v2358 = vld [vmem:[%s2122 + $0x10] sm:$0xff]
      %v2359 = vld [vmem:[%s2122 + $0x28] sm:$0xff]
      %v2360 = vld [vmem:[%s2122 + $0x30] sm:$0xff]
      %v2361 = vld [vmem:[%s2122 + $0x48] sm:$0xff]
      %v2362 = vld [vmem:[%s2122 + $0x50] sm:$0xff]
      %v2363 = vld [vmem:[%s2122 + $0x68] sm:$0xff]
      %v2364 = vld [vmem:[%s2122 + $0x70] sm:$0xff]
      %v2365 = vld [vmem:[%s2122 + $0x88] sm:$0xff]
      %v2366 = vld [vmem:[%s2122 + $0x90] sm:$0xff]
      %v2367 = vld [vmem:[%s2122 + $0xa8] sm:$0xff]
      %v2368 = vld [vmem:[%s2122 + $0xb0] sm:$0xff]
      %v2369 = vld [vmem:[%s2122 + $0xc8] sm:$0xff]
      %v2370 = vld [vmem:[%s2122 + $0xd0] sm:$0xff]
      %v2371 = vld [vmem:[%s2122 + $0xe8] sm:$0xff]
      %v2372 = vld [vmem:[%s2122 + $0xf0] sm:$0xff]
      %s2373 = scalar_lea.vmem %s1, 448
      %v2374 = vld [vmem:[%s2373] sm:$0xff]
      %v2375 = vld [vmem:[%s2373 + $0x8] sm:$0xff]
      %v2376 = vld [vmem:[%s2373 + $0x10] sm:$0xff]
      %v2377 = vld [vmem:[%s2373 + $0x18] sm:$0xff]
      %v2378 = vld [vmem:[%s2373 + $0x20] sm:$0xff]
      %v2379 = vld [vmem:[%s2373 + $0x28] sm:$0xff]
      %v2380 = vld [vmem:[%s2373 + $0x30] sm:$0xff]
      %v2381 = vld [vmem:[%s2373 + $0x38] sm:$0xff]
      %v2383 = vsel %vm668, %v2357, 0
      %v2386 = vsel %vm668, %v2358, 0
      %v2389 = vsel %vm668, %v2359, 0
      %v2392 = vsel %vm668, %v2360, 0
      %v2395 = vsel %vm668, %v2361, 0
      %v2398 = vsel %vm668, %v2362, 0
      %v2401 = vsel %vm668, %v2363, 0
      %v2404 = vsel %vm668, %v2364, 0
      %v2407 = vsel %vm668, %v2365, 0
      %v2410 = vsel %vm668, %v2366, 0
      %v2413 = vsel %vm668, %v2367, 0
      %v2416 = vsel %vm668, %v2368, 0
      %v2419 = vsel %vm668, %v2369, 0
      %v2422 = vsel %vm668, %v2370, 0
      %v2425 = vsel %vm668, %v2371, 0
      %v2428 = vsel %vm668, %v2372, 0
      %2430 = vmatprep.subr.mxu0 0.0
      %2431 = vmatpush1.msra.mxu0 0.0
      %2432 = vmatprep.subr.mxu0 0.0
      %2433 = vmatpush1.msra.mxu0 0.0
      %2434 = vmatprep.subr.mxu0 0.0
      %2435 = vmatpush1.msra.mxu0 0.0
      %2436 = vmatprep.subr.mxu0 0.0
      %2437 = vmatpush1.msra.mxu0 0.0
      %2438 = vmatprep.subr.mxu0 0.0
      %2439 = vmatpush1.msra.mxu0 0.0
      %2440 = vmatprep.subr.mxu0 0.0
      %2441 = vmatpush1.msra.mxu0 0.0
      %2442 = vmatprep.subr.mxu0 0.0
      %2443 = vmatpush1.msra.mxu0 0.0
      %2444 = vmatprep.subr.mxu0 0.0
      %2445 = vmatpush1.msra.mxu0 0.0
      %2446 = vmatprep.subr.mxu0 0.0
      %2447 = vmatpush1.msra.mxu0 %v2381
      %2448 = vmatprep.subr.mxu0 0.0
      %2449 = vmatpush1.msra.mxu0 %v2380
      %2450 = vmatprep.subr.mxu0 0.0
      %2451 = vmatpush1.msra.mxu0 %v2379
      %2452 = vmatprep.subr.mxu0 0.0
      %2453 = vmatpush1.msra.mxu0 %v2378
      %2454 = vmatprep.subr.mxu0 0.0
      %2455 = vmatpush1.msra.mxu0 %v2377
      %2456 = vmatprep.subr.mxu0 0.0
      %2457 = vmatpush1.msra.mxu0 %v2376
      %2458 = vmatprep.subr.mxu0 0.0
      %2459 = vmatpush1.msra.mxu0 %v2375
      %2460 = vmatprep.subr.mxu0 0.0
      %2461 = vmatpush1.msra.mxu0 %v2374
      %2462 = vmatprep.subr.mxu0 0.0
      %2463 = vmatpush2.msra.mxu0 0.0
      %2464 = vmatprep.subr.mxu0 0.0
      %2465 = vmatpush2.msra.mxu0 0.0
      %2466 = vmatprep.subr.mxu0 0.0
      %2467 = vmatpush2.msra.mxu0 0.0
      %2468 = vmatprep.subr.mxu0 0.0
      %2469 = vmatpush2.msra.mxu0 0.0
      %2470 = vmatprep.subr.mxu0 0.0
      %2471 = vmatpush2.msra.mxu0 0.0
      %2472 = vmatprep.subr.mxu0 0.0
      %2473 = vmatpush2.msra.mxu0 0.0
      %2474 = vmatprep.subr.mxu0 0.0
      %2475 = vmatpush2.msra.mxu0 0.0
      %2476 = vmatprep.subr.mxu0 0.0
      %2477 = vmatpush2.msra.mxu0 0.0
      %2478 = vmatprep.subr.mxu0 0.0
      %2479 = vmatpush2.msra.mxu0 0.0
      %2480 = vmatprep.subr.mxu0 0.0
      %2481 = vmatpush2.msra.mxu0 0.0
      %2482 = vmatprep.subr.mxu0 0.0
      %2483 = vmatpush2.msra.mxu0 0.0
      %2484 = vmatprep.subr.mxu0 0.0
      %2485 = vmatpush2.msra.mxu0 0.0
      %2486 = vmatprep.subr.mxu0 0.0
      %2487 = vmatpush2.msra.mxu0 0.0
      %2488 = vmatprep.subr.mxu0 0.0
      %2489 = vmatpush2.msra.mxu0 0.0
      %2490 = vmatprep.subr.mxu0 0.0
      %2491 = vmatpush2.msra.mxu0 0.0
      %2492 = vmatprep.subr.mxu0 0.0
      %2493 = vmatpush2.msra.mxu0 0.0
      %2494 = vmatprep.mubr.f32.mxu0 0.0
      %2495 = vmatmul.mubr.f32.gmra.mxu0 %v2383
      %v2496 = vpop.f32.mrf.mxu0
      %v2497 = vadd.f32 0.0, %v2496
      %v2498 = vpop.f32.mrf.mxu0
      %2499 = vmatprep.mubr.f32.mxu0 0.0
      %2500 = vmatmul.mubr.f32.gmra.mxu0 %v2386
      %v2501 = vpop.f32.mrf.mxu0
      %v2502 = vadd.f32 0.0, %v2501
      %v2503 = vpop.f32.mrf.mxu0
      %2504 = vmatprep.mubr.f32.mxu0 0.0
      %2505 = vmatmul.mubr.f32.gmra.mxu0 %v2389
      %v2506 = vpop.f32.mrf.mxu0
      %v2507 = vadd.f32 0.0, %v2506
      %v2508 = vpop.f32.mrf.mxu0
      %2509 = vmatprep.mubr.f32.mxu0 0.0
      %2510 = vmatmul.mubr.f32.gmra.mxu0 %v2392
      %v2511 = vpop.f32.mrf.mxu0
      %v2512 = vadd.f32 0.0, %v2511
      %v2513 = vpop.f32.mrf.mxu0
      %2514 = vmatprep.mubr.f32.mxu0 0.0
      %2515 = vmatmul.mubr.f32.gmra.mxu0 %v2395
      %v2516 = vpop.f32.mrf.mxu0
      %v2517 = vadd.f32 0.0, %v2516
      %v2518 = vpop.f32.mrf.mxu0
      %2519 = vmatprep.mubr.f32.mxu0 0.0
      %2520 = vmatmul.mubr.f32.gmra.mxu0 %v2398
      %v2521 = vpop.f32.mrf.mxu0
      %v2522 = vadd.f32 0.0, %v2521
      %v2523 = vpop.f32.mrf.mxu0
      %2524 = vmatprep.mubr.f32.mxu0 0.0
      %2525 = vmatmul.mubr.f32.gmra.mxu0 %v2401
      %v2526 = vpop.f32.mrf.mxu0
      %v2527 = vadd.f32 0.0, %v2526
      %v2528 = vpop.f32.mrf.mxu0
      %2529 = vmatprep.mubr.f32.mxu0 0.0
      %2530 = vmatmul.mubr.f32.gmra.mxu0 %v2404
      %v2531 = vpop.f32.mrf.mxu0
      %v2532 = vadd.f32 0.0, %v2531
      %v2533 = vpop.f32.mrf.mxu0
      %2534 = vmatprep.mubr.f32.mxu0 0.0
      %2535 = vmatmul.mubr.f32.gmra.mxu0 %v2407
      %v2536 = vpop.f32.mrf.mxu0
      %v2537 = vadd.f32 0.0, %v2536
      %v2538 = vpop.f32.mrf.mxu0
      %2539 = vmatprep.mubr.f32.mxu0 0.0
      %2540 = vmatmul.mubr.f32.gmra.mxu0 %v2410
      %v2541 = vpop.f32.mrf.mxu0
      %v2542 = vadd.f32 0.0, %v2541
      %v2543 = vpop.f32.mrf.mxu0
      %2544 = vmatprep.mubr.f32.mxu0 0.0
      %2545 = vmatmul.mubr.f32.gmra.mxu0 %v2413
      %v2546 = vpop.f32.mrf.mxu0
      %v2547 = vadd.f32 0.0, %v2546
      %v2548 = vpop.f32.mrf.mxu0
      %2549 = vmatprep.mubr.f32.mxu0 0.0
      %2550 = vmatmul.mubr.f32.gmra.mxu0 %v2416
      %v2551 = vpop.f32.mrf.mxu0
      %v2552 = vadd.f32 0.0, %v2551
      %v2553 = vpop.f32.mrf.mxu0
      %2554 = vmatprep.mubr.f32.mxu0 0.0
      %2555 = vmatmul.mubr.f32.gmra.mxu0 %v2419
      %v2556 = vpop.f32.mrf.mxu0
      %v2557 = vadd.f32 0.0, %v2556
      %v2558 = vpop.f32.mrf.mxu0
      %2559 = vmatprep.mubr.f32.mxu0 0.0
      %2560 = vmatmul.mubr.f32.gmra.mxu0 %v2422
      %v2561 = vpop.f32.mrf.mxu0
      %v2562 = vadd.f32 0.0, %v2561
      %v2563 = vpop.f32.mrf.mxu0
      %2564 = vmatprep.mubr.f32.mxu0 0.0
      %2565 = vmatmul.mubr.f32.gmra.mxu0 %v2425
      %v2566 = vpop.f32.mrf.mxu0
      %v2567 = vadd.f32 0.0, %v2566
      %v2568 = vpop.f32.mrf.mxu0
      %2569 = vmatprep.mubr.f32.mxu0 0.0
      %2570 = vmatmul.mubr.f32.gmra.mxu0 %v2428
      %v2571 = vpop.f32.mrf.mxu0
      %v2572 = vadd.f32 0.0, %v2571
      %v2573 = vpop.f32.mrf.mxu0
      %2574 = vdwg.mxu0
      %v2575 = vadd.f32 %v2341, %v2497
      %v2576 = vadd.f32 %v2342, %v2502
      %v2577 = vadd.f32 %v2343, %v2507
      %v2578 = vadd.f32 %v2344, %v2512
      %v2579 = vadd.f32 %v2345, %v2517
      %v2580 = vadd.f32 %v2346, %v2522
      %v2581 = vadd.f32 %v2347, %v2527
      %v2582 = vadd.f32 %v2348, %v2532
      %v2583 = vadd.f32 %v2349, %v2537
      %v2584 = vadd.f32 %v2350, %v2542
      %v2585 = vadd.f32 %v2351, %v2547
      %v2586 = vadd.f32 %v2352, %v2552
      %v2587 = vadd.f32 %v2353, %v2557
      %v2588 = vadd.f32 %v2354, %v2562
      %v2589 = vadd.f32 %v2355, %v2567
      %v2590 = vadd.f32 %v2356, %v2572
      %v2591 = vld [vmem:[%s2122 + $0x9] sm:$0xff]
      %v2592 = vld [vmem:[%s2122 + $0x11] sm:$0xff]
      %v2593 = vld [vmem:[%s2122 + $0x29] sm:$0xff]
      %v2594 = vld [vmem:[%s2122 + $0x31] sm:$0xff]
      %v2595 = vld [vmem:[%s2122 + $0x49] sm:$0xff]
      %v2596 = vld [vmem:[%s2122 + $0x51] sm:$0xff]
      %v2597 = vld [vmem:[%s2122 + $0x69] sm:$0xff]
      %v2598 = vld [vmem:[%s2122 + $0x71] sm:$0xff]
      %v2599 = vld [vmem:[%s2122 + $0x89] sm:$0xff]
      %v2600 = vld [vmem:[%s2122 + $0x91] sm:$0xff]
      %v2601 = vld [vmem:[%s2122 + $0xa9] sm:$0xff]
      %v2602 = vld [vmem:[%s2122 + $0xb1] sm:$0xff]
      %v2603 = vld [vmem:[%s2122 + $0xc9] sm:$0xff]
      %v2604 = vld [vmem:[%s2122 + $0xd1] sm:$0xff]
      %v2605 = vld [vmem:[%s2122 + $0xe9] sm:$0xff]
      %v2606 = vld [vmem:[%s2122 + $0xf1] sm:$0xff]
      %s2607 = scalar_lea.vmem %s1, 512
      %v2608 = vld [vmem:[%s2607] sm:$0xff]
      %v2609 = vld [vmem:[%s2607 + $0x8] sm:$0xff]
      %v2610 = vld [vmem:[%s2607 + $0x10] sm:$0xff]
      %v2611 = vld [vmem:[%s2607 + $0x18] sm:$0xff]
      %v2612 = vld [vmem:[%s2607 + $0x20] sm:$0xff]
      %v2613 = vld [vmem:[%s2607 + $0x28] sm:$0xff]
      %v2614 = vld [vmem:[%s2607 + $0x30] sm:$0xff]
      %v2615 = vld [vmem:[%s2607 + $0x38] sm:$0xff]
      %v2617 = vsel %vm668, %v2591, 0
      %v2620 = vsel %vm668, %v2592, 0
      %v2623 = vsel %vm668, %v2593, 0
      %v2626 = vsel %vm668, %v2594, 0
      %v2629 = vsel %vm668, %v2595, 0
      %v2632 = vsel %vm668, %v2596, 0
      %v2635 = vsel %vm668, %v2597, 0
      %v2638 = vsel %vm668, %v2598, 0
      %v2641 = vsel %vm668, %v2599, 0
      %v2644 = vsel %vm668, %v2600, 0
      %v2647 = vsel %vm668, %v2601, 0
      %v2650 = vsel %vm668, %v2602, 0
      %v2653 = vsel %vm668, %v2603, 0
      %v2656 = vsel %vm668, %v2604, 0
      %v2659 = vsel %vm668, %v2605, 0
      %v2662 = vsel %vm668, %v2606, 0
      %2664 = vmatprep.subr.mxu0 0.0
      %2665 = vmatpush1.msra.mxu0 0.0
      %2666 = vmatprep.subr.mxu0 0.0
      %2667 = vmatpush1.msra.mxu0 0.0
      %2668 = vmatprep.subr.mxu0 0.0
      %2669 = vmatpush1.msra.mxu0 0.0
      %2670 = vmatprep.subr.mxu0 0.0
      %2671 = vmatpush1.msra.mxu0 0.0
      %2672 = vmatprep.subr.mxu0 0.0
      %2673 = vmatpush1.msra.mxu0 0.0
      %2674 = vmatprep.subr.mxu0 0.0
      %2675 = vmatpush1.msra.mxu0 0.0
      %2676 = vmatprep.subr.mxu0 0.0
      %2677 = vmatpush1.msra.mxu0 0.0
      %2678 = vmatprep.subr.mxu0 0.0
      %2679 = vmatpush1.msra.mxu0 0.0
      %2680 = vmatprep.subr.mxu0 0.0
      %2681 = vmatpush1.msra.mxu0 %v2615
      %2682 = vmatprep.subr.mxu0 0.0
      %2683 = vmatpush1.msra.mxu0 %v2614
      %2684 = vmatprep.subr.mxu0 0.0
      %2685 = vmatpush1.msra.mxu0 %v2613
      %2686 = vmatprep.subr.mxu0 0.0
      %2687 = vmatpush1.msra.mxu0 %v2612
      %2688 = vmatprep.subr.mxu0 0.0
      %2689 = vmatpush1.msra.mxu0 %v2611
      %2690 = vmatprep.subr.mxu0 0.0
      %2691 = vmatpush1.msra.mxu0 %v2610
      %2692 = vmatprep.subr.mxu0 0.0
      %2693 = vmatpush1.msra.mxu0 %v2609
      %2694 = vmatprep.subr.mxu0 0.0
      %2695 = vmatpush1.msra.mxu0 %v2608
      %2696 = vmatprep.subr.mxu0 0.0
      %2697 = vmatpush2.msra.mxu0 0.0
      %2698 = vmatprep.subr.mxu0 0.0
      %2699 = vmatpush2.msra.mxu0 0.0
      %2700 = vmatprep.subr.mxu0 0.0
      %2701 = vmatpush2.msra.mxu0 0.0
      %2702 = vmatprep.subr.mxu0 0.0
      %2703 = vmatpush2.msra.mxu0 0.0
      %2704 = vmatprep.subr.mxu0 0.0
      %2705 = vmatpush2.msra.mxu0 0.0
      %2706 = vmatprep.subr.mxu0 0.0
      %2707 = vmatpush2.msra.mxu0 0.0
      %2708 = vmatprep.subr.mxu0 0.0
      %2709 = vmatpush2.msra.mxu0 0.0
      %2710 = vmatprep.subr.mxu0 0.0
      %2711 = vmatpush2.msra.mxu0 0.0
      %2712 = vmatprep.subr.mxu0 0.0
      %2713 = vmatpush2.msra.mxu0 0.0
      %2714 = vmatprep.subr.mxu0 0.0
      %2715 = vmatpush2.msra.mxu0 0.0
      %2716 = vmatprep.subr.mxu0 0.0
      %2717 = vmatpush2.msra.mxu0 0.0
      %2718 = vmatprep.subr.mxu0 0.0
      %2719 = vmatpush2.msra.mxu0 0.0
      %2720 = vmatprep.subr.mxu0 0.0
      %2721 = vmatpush2.msra.mxu0 0.0
      %2722 = vmatprep.subr.mxu0 0.0
      %2723 = vmatpush2.msra.mxu0 0.0
      %2724 = vmatprep.subr.mxu0 0.0
      %2725 = vmatpush2.msra.mxu0 0.0
      %2726 = vmatprep.subr.mxu0 0.0
      %2727 = vmatpush2.msra.mxu0 0.0
      %2728 = vmatprep.mubr.f32.mxu0 0.0
      %2729 = vmatmul.mubr.f32.gmra.mxu0 %v2617
      %v2730 = vpop.f32.mrf.mxu0
      %v2731 = vadd.f32 0.0, %v2730
      %v2732 = vpop.f32.mrf.mxu0
      %2733 = vmatprep.mubr.f32.mxu0 0.0
      %2734 = vmatmul.mubr.f32.gmra.mxu0 %v2620
      %v2735 = vpop.f32.mrf.mxu0
      %v2736 = vadd.f32 0.0, %v2735
      %v2737 = vpop.f32.mrf.mxu0
      %2738 = vmatprep.mubr.f32.mxu0 0.0
      %2739 = vmatmul.mubr.f32.gmra.mxu0 %v2623
      %v2740 = vpop.f32.mrf.mxu0
      %v2741 = vadd.f32 0.0, %v2740
      %v2742 = vpop.f32.mrf.mxu0
      %2743 = vmatprep.mubr.f32.mxu0 0.0
      %2744 = vmatmul.mubr.f32.gmra.mxu0 %v2626
      %v2745 = vpop.f32.mrf.mxu0
      %v2746 = vadd.f32 0.0, %v2745
      %v2747 = vpop.f32.mrf.mxu0
      %2748 = vmatprep.mubr.f32.mxu0 0.0
      %2749 = vmatmul.mubr.f32.gmra.mxu0 %v2629
      %v2750 = vpop.f32.mrf.mxu0
      %v2751 = vadd.f32 0.0, %v2750
      %v2752 = vpop.f32.mrf.mxu0
      %2753 = vmatprep.mubr.f32.mxu0 0.0
      %2754 = vmatmul.mubr.f32.gmra.mxu0 %v2632
      %v2755 = vpop.f32.mrf.mxu0
      %v2756 = vadd.f32 0.0, %v2755
      %v2757 = vpop.f32.mrf.mxu0
      %2758 = vmatprep.mubr.f32.mxu0 0.0
      %2759 = vmatmul.mubr.f32.gmra.mxu0 %v2635
      %v2760 = vpop.f32.mrf.mxu0
      %v2761 = vadd.f32 0.0, %v2760
      %v2762 = vpop.f32.mrf.mxu0
      %2763 = vmatprep.mubr.f32.mxu0 0.0
      %2764 = vmatmul.mubr.f32.gmra.mxu0 %v2638
      %v2765 = vpop.f32.mrf.mxu0
      %v2766 = vadd.f32 0.0, %v2765
      %v2767 = vpop.f32.mrf.mxu0
      %2768 = vmatprep.mubr.f32.mxu0 0.0
      %2769 = vmatmul.mubr.f32.gmra.mxu0 %v2641
      %v2770 = vpop.f32.mrf.mxu0
      %v2771 = vadd.f32 0.0, %v2770
      %v2772 = vpop.f32.mrf.mxu0
      %2773 = vmatprep.mubr.f32.mxu0 0.0
      %2774 = vmatmul.mubr.f32.gmra.mxu0 %v2644
      %v2775 = vpop.f32.mrf.mxu0
      %v2776 = vadd.f32 0.0, %v2775
      %v2777 = vpop.f32.mrf.mxu0
      %2778 = vmatprep.mubr.f32.mxu0 0.0
      %2779 = vmatmul.mubr.f32.gmra.mxu0 %v2647
      %v2780 = vpop.f32.mrf.mxu0
      %v2781 = vadd.f32 0.0, %v2780
      %v2782 = vpop.f32.mrf.mxu0
      %2783 = vmatprep.mubr.f32.mxu0 0.0
      %2784 = vmatmul.mubr.f32.gmra.mxu0 %v2650
      %v2785 = vpop.f32.mrf.mxu0
      %v2786 = vadd.f32 0.0, %v2785
      %v2787 = vpop.f32.mrf.mxu0
      %2788 = vmatprep.mubr.f32.mxu0 0.0
      %2789 = vmatmul.mubr.f32.gmra.mxu0 %v2653
      %v2790 = vpop.f32.mrf.mxu0
      %v2791 = vadd.f32 0.0, %v2790
      %v2792 = vpop.f32.mrf.mxu0
      %2793 = vmatprep.mubr.f32.mxu0 0.0
      %2794 = vmatmul.mubr.f32.gmra.mxu0 %v2656
      %v2795 = vpop.f32.mrf.mxu0
      %v2796 = vadd.f32 0.0, %v2795
      %v2797 = vpop.f32.mrf.mxu0
      %2798 = vmatprep.mubr.f32.mxu0 0.0
      %2799 = vmatmul.mubr.f32.gmra.mxu0 %v2659
      %v2800 = vpop.f32.mrf.mxu0
      %v2801 = vadd.f32 0.0, %v2800
      %v2802 = vpop.f32.mrf.mxu0
      %2803 = vmatprep.mubr.f32.mxu0 0.0
      %2804 = vmatmul.mubr.f32.gmra.mxu0 %v2662
      %v2805 = vpop.f32.mrf.mxu0
      %v2806 = vadd.f32 0.0, %v2805
      %v2807 = vpop.f32.mrf.mxu0
      %2808 = vdwg.mxu0
      %v2809 = vadd.f32 %v2575, %v2731
      %v2810 = vadd.f32 %v2576, %v2736
      %v2811 = vadd.f32 %v2577, %v2741
      %v2812 = vadd.f32 %v2578, %v2746
      %v2813 = vadd.f32 %v2579, %v2751
      %v2814 = vadd.f32 %v2580, %v2756
      %v2815 = vadd.f32 %v2581, %v2761
      %v2816 = vadd.f32 %v2582, %v2766
      %v2817 = vadd.f32 %v2583, %v2771
      %v2818 = vadd.f32 %v2584, %v2776
      %v2819 = vadd.f32 %v2585, %v2781
      %v2820 = vadd.f32 %v2586, %v2786
      %v2821 = vadd.f32 %v2587, %v2791
      %v2822 = vadd.f32 %v2588, %v2796
      %v2823 = vadd.f32 %v2589, %v2801
      %v2824 = vadd.f32 %v2590, %v2806
      %v2825 = vld [vmem:[%s2] sm:$0x1]
      %v2827 = vlaneseq
      %v2828 = vshrl.u32 %v2827, 7
      %v2829 = vsub.s32 0, %v2828
      %v2830 = vrot.slane %v2825, %v2829
      %v2832 = vadd.f32 %v2809, %v2830
      %v2833 = vadd.f32 %v2810, %v2830
      %v2834 = vadd.f32 %v2811, %v2830
      %v2835 = vadd.f32 %v2812, %v2830
      %v2836 = vadd.f32 %v2813, %v2830
      %v2837 = vadd.f32 %v2814, %v2830
      %v2838 = vadd.f32 %v2815, %v2830
      %v2839 = vadd.f32 %v2816, %v2830
      %v2840 = vadd.f32 %v2817, %v2830
      %v2841 = vadd.f32 %v2818, %v2830
      %v2842 = vadd.f32 %v2819, %v2830
      %v2843 = vadd.f32 %v2820, %v2830
      %v2844 = vadd.f32 %v2821, %v2830
      %v2845 = vadd.f32 %v2822, %v2830
      %v2846 = vadd.f32 %v2823, %v2830
      %v2847 = vadd.f32 %v2824, %v2830
      %v2848 = vmax.f32 %v2832, 0.0
      %v2849 = vmax.f32 %v2833, 0.0
      %v2850 = vmax.f32 %v2834, 0.0
      %v2851 = vmax.f32 %v2835, 0.0
      %v2852 = vmax.f32 %v2836, 0.0
      %v2853 = vmax.f32 %v2837, 0.0
      %v2854 = vmax.f32 %v2838, 0.0
      %v2855 = vmax.f32 %v2839, 0.0
      %v2856 = vmax.f32 %v2840, 0.0
      %v2857 = vmax.f32 %v2841, 0.0
      %v2858 = vmax.f32 %v2842, 0.0
      %v2859 = vmax.f32 %v2843, 0.0
      %v2860 = vmax.f32 %v2844, 0.0
      %v2861 = vmax.f32 %v2845, 0.0
      %v2862 = vmax.f32 %v2846, 0.0
      %v2863 = vmax.f32 %v2847, 0.0
      %2864 = vst [vmem:[%s702 + $0x8] sm:$0xff] %v2848
      %2865 = vst [vmem:[%s702 + $0x10] sm:$0xff] %v2849
      %2866 = vst [vmem:[%s702 + $0x28] sm:$0xff] %v2850
      %2867 = vst [vmem:[%s702 + $0x30] sm:$0xff] %v2851
      %2868 = vst [vmem:[%s702 + $0x48] sm:$0xff] %v2852
      %2869 = vst [vmem:[%s702 + $0x50] sm:$0xff] %v2853
      %2870 = vst [vmem:[%s702 + $0x68] sm:$0xff] %v2854
      %2871 = vst [vmem:[%s702 + $0x70] sm:$0xff] %v2855
      %2872 = vst [vmem:[%s702 + $0x88] sm:$0xff] %v2856
      %2873 = vst [vmem:[%s702 + $0x90] sm:$0xff] %v2857
      %2874 = vst [vmem:[%s702 + $0xa8] sm:$0xff] %v2858
      %2875 = vst [vmem:[%s702 + $0xb0] sm:$0xff] %v2859
      %2876 = vst [vmem:[%s702 + $0xc8] sm:$0xff] %v2860
      %2877 = vst [vmem:[%s702 + $0xd0] sm:$0xff] %v2861
      %2878 = vst [vmem:[%s702 + $0xe8] sm:$0xff] %v2862
      %2879 = vst [vmem:[%s702 + $0xf0] sm:$0xff] %v2863
      %v2880 = vld [vmem:[#allocation3 + $0x7] sm:$0xff]
      %v2881 = vld [vmem:[#allocation3 + $0xf] sm:$0xff]
      %v2882 = vld [vmem:[#allocation3 + $0x27] sm:$0xff]
      %v2883 = vld [vmem:[#allocation3 + $0x2f] sm:$0xff]
      %v2884 = vld [vmem:[#allocation3 + $0x47] sm:$0xff]
      %v2885 = vld [vmem:[#allocation3 + $0x4f] sm:$0xff]
      %v2886 = vld [vmem:[#allocation3 + $0x67] sm:$0xff]
      %v2887 = vld [vmem:[#allocation3 + $0x6f] sm:$0xff]
      %v2888 = vld [vmem:[#allocation3 + $0x87] sm:$0xff]
      %v2889 = vld [vmem:[#allocation3 + $0x8f] sm:$0xff]
      %v2890 = vld [vmem:[#allocation3 + $0xa7] sm:$0xff]
      %v2891 = vld [vmem:[#allocation3 + $0xaf] sm:$0xff]
      %v2892 = vld [vmem:[#allocation3 + $0xc7] sm:$0xff]
      %v2893 = vld [vmem:[#allocation3 + $0xcf] sm:$0xff]
      %v2894 = vld [vmem:[#allocation3 + $0xe7] sm:$0xff]
      %v2895 = vld [vmem:[#allocation3 + $0xef] sm:$0xff]
      %v2896 = vld [vmem:[%s3] sm:$0xff]
      %v2897 = vld [vmem:[%s3 + $0x8] sm:$0xff]
      %v2898 = vld [vmem:[%s3 + $0x10] sm:$0xff]
      %v2899 = vld [vmem:[%s3 + $0x18] sm:$0xff]
      %v2900 = vld [vmem:[%s3 + $0x20] sm:$0xff]
      %v2901 = vld [vmem:[%s3 + $0x28] sm:$0xff]
      %v2902 = vld [vmem:[%s3 + $0x30] sm:$0xff]
      %v2903 = vld [vmem:[%s3 + $0x38] sm:$0xff]
      %v2904 = vld [vmem:[%s3 + $0x40] sm:$0xff]
      %v2905 = vld [vmem:[%s3 + $0x48] sm:$0xff]
      %v2906 = vld [vmem:[%s3 + $0x50] sm:$0xff]
      %v2907 = vld [vmem:[%s3 + $0x58] sm:$0xff]
      %v2908 = vld [vmem:[%s3 + $0x60] sm:$0xff]
      %v2909 = vld [vmem:[%s3 + $0x68] sm:$0xff]
      %v2910 = vld [vmem:[%s3 + $0x70] sm:$0xff]
      %v2911 = vld [vmem:[%s3 + $0x78] sm:$0xff]
      %v2912 = vld [vmem:[#allocation3 + $0x8] sm:$0xff]
      %v2913 = vld [vmem:[#allocation3 + $0x10] sm:$0xff]
      %v2914 = vld [vmem:[#allocation3 + $0x28] sm:$0xff]
      %v2915 = vld [vmem:[#allocation3 + $0x30] sm:$0xff]
      %v2916 = vld [vmem:[#allocation3 + $0x48] sm:$0xff]
      %v2917 = vld [vmem:[#allocation3 + $0x50] sm:$0xff]
      %v2918 = vld [vmem:[#allocation3 + $0x68] sm:$0xff]
      %v2919 = vld [vmem:[#allocation3 + $0x70] sm:$0xff]
      %v2920 = vld [vmem:[#allocation3 + $0x88] sm:$0xff]
      %v2921 = vld [vmem:[#allocation3 + $0x90] sm:$0xff]
      %v2922 = vld [vmem:[#allocation3 + $0xa8] sm:$0xff]
      %v2923 = vld [vmem:[#allocation3 + $0xb0] sm:$0xff]
      %v2924 = vld [vmem:[#allocation3 + $0xc8] sm:$0xff]
      %v2925 = vld [vmem:[#allocation3 + $0xd0] sm:$0xff]
      %v2926 = vld [vmem:[#allocation3 + $0xe8] sm:$0xff]
      %v2927 = vld [vmem:[#allocation3 + $0xf0] sm:$0xff]
      %s2928 = scalar_lea.vmem %s3, 128
      %v2929 = vld [vmem:[%s2928] sm:$0xff]
      %v2930 = vld [vmem:[%s2928 + $0x8] sm:$0xff]
      %v2931 = vld [vmem:[%s2928 + $0x10] sm:$0xff]
      %v2932 = vld [vmem:[%s2928 + $0x18] sm:$0xff]
      %v2933 = vld [vmem:[%s2928 + $0x20] sm:$0xff]
      %v2934 = vld [vmem:[%s2928 + $0x28] sm:$0xff]
      %v2935 = vld [vmem:[%s2928 + $0x30] sm:$0xff]
      %v2936 = vld [vmem:[%s2928 + $0x38] sm:$0xff]
      %v2937 = vld [vmem:[%s2928 + $0x40] sm:$0xff]
      %v2938 = vld [vmem:[%s2928 + $0x48] sm:$0xff]
      %v2939 = vld [vmem:[%s2928 + $0x50] sm:$0xff]
      %v2940 = vld [vmem:[%s2928 + $0x58] sm:$0xff]
      %v2941 = vld [vmem:[%s2928 + $0x60] sm:$0xff]
      %v2942 = vld [vmem:[%s2928 + $0x68] sm:$0xff]
      %v2943 = vld [vmem:[%s2928 + $0x70] sm:$0xff]
      %v2944 = vld [vmem:[%s2928 + $0x78] sm:$0xff]
      %2945 = vmatprep.subr.mxu0 0.0
      %2946 = vmatpush1.msra.mxu0 %v2944
      %2947 = vmatprep.subr.mxu0 0.0
      %2948 = vmatpush1.msra.mxu0 %v2943
      %2949 = vmatprep.subr.mxu0 0.0
      %2950 = vmatpush1.msra.mxu0 %v2942
      %2951 = vmatprep.subr.mxu0 0.0
      %2952 = vmatpush1.msra.mxu0 %v2941
      %2953 = vmatprep.subr.mxu0 0.0
      %2954 = vmatpush1.msra.mxu0 %v2940
      %2955 = vmatprep.subr.mxu0 0.0
      %2956 = vmatpush1.msra.mxu0 %v2939
      %2957 = vmatprep.subr.mxu0 0.0
      %2958 = vmatpush1.msra.mxu0 %v2938
      %2959 = vmatprep.subr.mxu0 0.0
      %2960 = vmatpush1.msra.mxu0 %v2937
      %2961 = vmatprep.subr.mxu0 0.0
      %2962 = vmatpush1.msra.mxu0 %v2936
      %2963 = vmatprep.subr.mxu0 0.0
      %2964 = vmatpush1.msra.mxu0 %v2935
      %2965 = vmatprep.subr.mxu0 0.0
      %2966 = vmatpush1.msra.mxu0 %v2934
      %2967 = vmatprep.subr.mxu0 0.0
      %2968 = vmatpush1.msra.mxu0 %v2933
      %2969 = vmatprep.subr.mxu0 0.0
      %2970 = vmatpush1.msra.mxu0 %v2932
      %2971 = vmatprep.subr.mxu0 0.0
      %2972 = vmatpush1.msra.mxu0 %v2931
      %2973 = vmatprep.subr.mxu0 0.0
      %2974 = vmatpush1.msra.mxu0 %v2930
      %2975 = vmatprep.subr.mxu0 0.0
      %2976 = vmatpush1.msra.mxu0 %v2929
      %2977 = vmatprep.subr.mxu0 0.0
      %2978 = vmatpush2.msra.mxu0 0.0
      %2979 = vmatprep.subr.mxu0 0.0
      %2980 = vmatpush2.msra.mxu0 0.0
      %2981 = vmatprep.subr.mxu0 0.0
      %2982 = vmatpush2.msra.mxu0 0.0
      %2983 = vmatprep.subr.mxu0 0.0
      %2984 = vmatpush2.msra.mxu0 0.0
      %2985 = vmatprep.subr.mxu0 0.0
      %2986 = vmatpush2.msra.mxu0 0.0
      %2987 = vmatprep.subr.mxu0 0.0
      %2988 = vmatpush2.msra.mxu0 0.0
      %2989 = vmatprep.subr.mxu0 0.0
      %2990 = vmatpush2.msra.mxu0 0.0
      %2991 = vmatprep.subr.mxu0 0.0
      %2992 = vmatpush2.msra.mxu0 0.0
      %2993 = vmatprep.subr.mxu0 0.0
      %2994 = vmatpush2.msra.mxu0 0.0
      %2995 = vmatprep.subr.mxu0 0.0
      %2996 = vmatpush2.msra.mxu0 0.0
      %2997 = vmatprep.subr.mxu0 0.0
      %2998 = vmatpush2.msra.mxu0 0.0
      %2999 = vmatprep.subr.mxu0 0.0
      %3000 = vmatpush2.msra.mxu0 0.0
      %3001 = vmatprep.subr.mxu0 0.0
      %3002 = vmatpush2.msra.mxu0 0.0
      %3003 = vmatprep.subr.mxu0 0.0
      %3004 = vmatpush2.msra.mxu0 0.0
      %3005 = vmatprep.subr.mxu0 0.0
      %3006 = vmatpush2.msra.mxu0 0.0
      %3007 = vmatprep.subr.mxu0 0.0
      %3008 = vmatpush2.msra.mxu0 0.0
      %3009 = vmatprep.mubr.f32.mxu0 0.0
      %3010 = vmatmul.mubr.f32.gmra.mxu0 %v2912
      %v3011 = vpop.f32.mrf.mxu0
      %v3012 = vadd.f32 0.0, %v3011
      %v3013 = vpop.f32.mrf.mxu0
      %3014 = vmatprep.mubr.f32.mxu0 0.0
      %3015 = vmatmul.mubr.f32.gmra.mxu0 %v2913
      %v3016 = vpop.f32.mrf.mxu0
      %v3017 = vadd.f32 0.0, %v3016
      %v3018 = vpop.f32.mrf.mxu0
      %3019 = vmatprep.mubr.f32.mxu0 0.0
      %3020 = vmatmul.mubr.f32.gmra.mxu0 %v2914
      %v3021 = vpop.f32.mrf.mxu0
      %v3022 = vadd.f32 0.0, %v3021
      %v3023 = vpop.f32.mrf.mxu0
      %3024 = vmatprep.mubr.f32.mxu0 0.0
      %3025 = vmatmul.mubr.f32.gmra.mxu0 %v2915
      %v3026 = vpop.f32.mrf.mxu0
      %v3027 = vadd.f32 0.0, %v3026
      %v3028 = vpop.f32.mrf.mxu0
      %3029 = vmatprep.mubr.f32.mxu0 0.0
      %3030 = vmatmul.mubr.f32.gmra.mxu0 %v2916
      %v3031 = vpop.f32.mrf.mxu0
      %v3032 = vadd.f32 0.0, %v3031
      %v3033 = vpop.f32.mrf.mxu0
      %3034 = vmatprep.mubr.f32.mxu0 0.0
      %3035 = vmatmul.mubr.f32.gmra.mxu0 %v2917
      %v3036 = vpop.f32.mrf.mxu0
      %v3037 = vadd.f32 0.0, %v3036
      %v3038 = vpop.f32.mrf.mxu0
      %3039 = vmatprep.mubr.f32.mxu0 0.0
      %3040 = vmatmul.mubr.f32.gmra.mxu0 %v2918
      %v3041 = vpop.f32.mrf.mxu0
      %v3042 = vadd.f32 0.0, %v3041
      %v3043 = vpop.f32.mrf.mxu0
      %3044 = vmatprep.mubr.f32.mxu0 0.0
      %3045 = vmatmul.mubr.f32.gmra.mxu0 %v2919
      %v3046 = vpop.f32.mrf.mxu0
      %v3047 = vadd.f32 0.0, %v3046
      %v3048 = vpop.f32.mrf.mxu0
      %3049 = vmatprep.mubr.f32.mxu0 0.0
      %3050 = vmatmul.mubr.f32.gmra.mxu0 %v2920
      %v3051 = vpop.f32.mrf.mxu0
      %v3052 = vadd.f32 0.0, %v3051
      %v3053 = vpop.f32.mrf.mxu0
      %3054 = vmatprep.mubr.f32.mxu0 0.0
      %3055 = vmatmul.mubr.f32.gmra.mxu0 %v2921
      %v3056 = vpop.f32.mrf.mxu0
      %v3057 = vadd.f32 0.0, %v3056
      %v3058 = vpop.f32.mrf.mxu0
      %3059 = vmatprep.mubr.f32.mxu0 0.0
      %3060 = vmatmul.mubr.f32.gmra.mxu0 %v2922
      %v3061 = vpop.f32.mrf.mxu0
      %v3062 = vadd.f32 0.0, %v3061
      %v3063 = vpop.f32.mrf.mxu0
      %3064 = vmatprep.mubr.f32.mxu0 0.0
      %3065 = vmatmul.mubr.f32.gmra.mxu0 %v2923
      %v3066 = vpop.f32.mrf.mxu0
      %v3067 = vadd.f32 0.0, %v3066
      %v3068 = vpop.f32.mrf.mxu0
      %3069 = vmatprep.mubr.f32.mxu0 0.0
      %3070 = vmatmul.mubr.f32.gmra.mxu0 %v2924
      %v3071 = vpop.f32.mrf.mxu0
      %v3072 = vadd.f32 0.0, %v3071
      %v3073 = vpop.f32.mrf.mxu0
      %3074 = vmatprep.mubr.f32.mxu0 0.0
      %3075 = vmatmul.mubr.f32.gmra.mxu0 %v2925
      %v3076 = vpop.f32.mrf.mxu0
      %v3077 = vadd.f32 0.0, %v3076
      %v3078 = vpop.f32.mrf.mxu0
      %3079 = vmatprep.mubr.f32.mxu0 0.0
      %3080 = vmatmul.mubr.f32.gmra.mxu0 %v2926
      %v3081 = vpop.f32.mrf.mxu0
      %v3082 = vadd.f32 0.0, %v3081
      %v3083 = vpop.f32.mrf.mxu0
      %3084 = vmatprep.mubr.f32.mxu0 0.0
      %3085 = vmatmul.mubr.f32.gmra.mxu0 %v2927
      %v3086 = vpop.f32.mrf.mxu0
      %v3087 = vadd.f32 0.0, %v3086
      %v3088 = vpop.f32.mrf.mxu0
      %3089 = vdwg.mxu0
      %3090 = vmatprep.subr.mxu0 0.0
      %3091 = vmatpush1.msra.mxu0 %v2911
      %3092 = vmatprep.subr.mxu0 0.0
      %3093 = vmatpush1.msra.mxu0 %v2910
      %3094 = vmatprep.subr.mxu0 0.0
      %3095 = vmatpush1.msra.mxu0 %v2909
      %3096 = vmatprep.subr.mxu0 0.0
      %3097 = vmatpush1.msra.mxu0 %v2908
      %3098 = vmatprep.subr.mxu0 0.0
      %3099 = vmatpush1.msra.mxu0 %v2907
      %3100 = vmatprep.subr.mxu0 0.0
      %3101 = vmatpush1.msra.mxu0 %v2906
      %3102 = vmatprep.subr.mxu0 0.0
      %3103 = vmatpush1.msra.mxu0 %v2905
      %3104 = vmatprep.subr.mxu0 0.0
      %3105 = vmatpush1.msra.mxu0 %v2904
      %3106 = vmatprep.subr.mxu0 0.0
      %3107 = vmatpush1.msra.mxu0 %v2903
      %3108 = vmatprep.subr.mxu0 0.0
      %3109 = vmatpush1.msra.mxu0 %v2902
      %3110 = vmatprep.subr.mxu0 0.0
      %3111 = vmatpush1.msra.mxu0 %v2901
      %3112 = vmatprep.subr.mxu0 0.0
      %3113 = vmatpush1.msra.mxu0 %v2900
      %3114 = vmatprep.subr.mxu0 0.0
      %3115 = vmatpush1.msra.mxu0 %v2899
      %3116 = vmatprep.subr.mxu0 0.0
      %3117 = vmatpush1.msra.mxu0 %v2898
      %3118 = vmatprep.subr.mxu0 0.0
      %3119 = vmatpush1.msra.mxu0 %v2897
      %3120 = vmatprep.subr.mxu0 0.0
      %3121 = vmatpush1.msra.mxu0 %v2896
      %3122 = vmatprep.subr.mxu0 0.0
      %3123 = vmatpush2.msra.mxu0 0.0
      %3124 = vmatprep.subr.mxu0 0.0
      %3125 = vmatpush2.msra.mxu0 0.0
      %3126 = vmatprep.subr.mxu0 0.0
      %3127 = vmatpush2.msra.mxu0 0.0
      %3128 = vmatprep.subr.mxu0 0.0
      %3129 = vmatpush2.msra.mxu0 0.0
      %3130 = vmatprep.subr.mxu0 0.0
      %3131 = vmatpush2.msra.mxu0 0.0
      %3132 = vmatprep.subr.mxu0 0.0
      %3133 = vmatpush2.msra.mxu0 0.0
      %3134 = vmatprep.subr.mxu0 0.0
      %3135 = vmatpush2.msra.mxu0 0.0
      %3136 = vmatprep.subr.mxu0 0.0
      %3137 = vmatpush2.msra.mxu0 0.0
      %3138 = vmatprep.subr.mxu0 0.0
      %3139 = vmatpush2.msra.mxu0 0.0
      %3140 = vmatprep.subr.mxu0 0.0
      %3141 = vmatpush2.msra.mxu0 0.0
      %3142 = vmatprep.subr.mxu0 0.0
      %3143 = vmatpush2.msra.mxu0 0.0
      %3144 = vmatprep.subr.mxu0 0.0
      %3145 = vmatpush2.msra.mxu0 0.0
      %3146 = vmatprep.subr.mxu0 0.0
      %3147 = vmatpush2.msra.mxu0 0.0
      %3148 = vmatprep.subr.mxu0 0.0
      %3149 = vmatpush2.msra.mxu0 0.0
      %3150 = vmatprep.subr.mxu0 0.0
      %3151 = vmatpush2.msra.mxu0 0.0
      %3152 = vmatprep.subr.mxu0 0.0
      %3153 = vmatpush2.msra.mxu0 0.0
      %3154 = vmatprep.mubr.f32.mxu0 0.0
      %3155 = vmatmul.mubr.f32.gmra.mxu0 %v2880
      %v3156 = vpop.f32.mrf.mxu0
      %v3157 = vadd.f32 %v3012, %v3156
      %v3158 = vpop.f32.mrf.mxu0
      %3159 = vmatprep.mubr.f32.mxu0 0.0
      %3160 = vmatmul.mubr.f32.gmra.mxu0 %v2881
      %v3161 = vpop.f32.mrf.mxu0
      %v3162 = vadd.f32 %v3017, %v3161
      %v3163 = vpop.f32.mrf.mxu0
      %3164 = vmatprep.mubr.f32.mxu0 0.0
      %3165 = vmatmul.mubr.f32.gmra.mxu0 %v2882
      %v3166 = vpop.f32.mrf.mxu0
      %v3167 = vadd.f32 %v3022, %v3166
      %v3168 = vpop.f32.mrf.mxu0
      %3169 = vmatprep.mubr.f32.mxu0 0.0
      %3170 = vmatmul.mubr.f32.gmra.mxu0 %v2883
      %v3171 = vpop.f32.mrf.mxu0
      %v3172 = vadd.f32 %v3027, %v3171
      %v3173 = vpop.f32.mrf.mxu0
      %3174 = vmatprep.mubr.f32.mxu0 0.0
      %3175 = vmatmul.mubr.f32.gmra.mxu0 %v2884
      %v3176 = vpop.f32.mrf.mxu0
      %v3177 = vadd.f32 %v3032, %v3176
      %v3178 = vpop.f32.mrf.mxu0
      %3179 = vmatprep.mubr.f32.mxu0 0.0
      %3180 = vmatmul.mubr.f32.gmra.mxu0 %v2885
      %v3181 = vpop.f32.mrf.mxu0
      %v3182 = vadd.f32 %v3037, %v3181
      %v3183 = vpop.f32.mrf.mxu0
      %3184 = vmatprep.mubr.f32.mxu0 0.0
      %3185 = vmatmul.mubr.f32.gmra.mxu0 %v2886
      %v3186 = vpop.f32.mrf.mxu0
      %v3187 = vadd.f32 %v3042, %v3186
      %v3188 = vpop.f32.mrf.mxu0
      %3189 = vmatprep.mubr.f32.mxu0 0.0
      %3190 = vmatmul.mubr.f32.gmra.mxu0 %v2887
      %v3191 = vpop.f32.mrf.mxu0
      %v3192 = vadd.f32 %v3047, %v3191
      %v3193 = vpop.f32.mrf.mxu0
      %3194 = vmatprep.mubr.f32.mxu0 0.0
      %3195 = vmatmul.mubr.f32.gmra.mxu0 %v2888
      %v3196 = vpop.f32.mrf.mxu0
      %v3197 = vadd.f32 %v3052, %v3196
      %v3198 = vpop.f32.mrf.mxu0
      %3199 = vmatprep.mubr.f32.mxu0 0.0
      %3200 = vmatmul.mubr.f32.gmra.mxu0 %v2889
      %v3201 = vpop.f32.mrf.mxu0
      %v3202 = vadd.f32 %v3057, %v3201
      %v3203 = vpop.f32.mrf.mxu0
      %3204 = vmatprep.mubr.f32.mxu0 0.0
      %3205 = vmatmul.mubr.f32.gmra.mxu0 %v2890
      %v3206 = vpop.f32.mrf.mxu0
      %v3207 = vadd.f32 %v3062, %v3206
      %v3208 = vpop.f32.mrf.mxu0
      %3209 = vmatprep.mubr.f32.mxu0 0.0
      %3210 = vmatmul.mubr.f32.gmra.mxu0 %v2891
      %v3211 = vpop.f32.mrf.mxu0
      %v3212 = vadd.f32 %v3067, %v3211
      %v3213 = vpop.f32.mrf.mxu0
      %3214 = vmatprep.mubr.f32.mxu0 0.0
      %3215 = vmatmul.mubr.f32.gmra.mxu0 %v2892
      %v3216 = vpop.f32.mrf.mxu0
      %v3217 = vadd.f32 %v3072, %v3216
      %v3218 = vpop.f32.mrf.mxu0
      %3219 = vmatprep.mubr.f32.mxu0 0.0
      %3220 = vmatmul.mubr.f32.gmra.mxu0 %v2893
      %v3221 = vpop.f32.mrf.mxu0
      %v3222 = vadd.f32 %v3077, %v3221
      %v3223 = vpop.f32.mrf.mxu0
      %3224 = vmatprep.mubr.f32.mxu0 0.0
      %3225 = vmatmul.mubr.f32.gmra.mxu0 %v2894
      %v3226 = vpop.f32.mrf.mxu0
      %v3227 = vadd.f32 %v3082, %v3226
      %v3228 = vpop.f32.mrf.mxu0
      %3229 = vmatprep.mubr.f32.mxu0 0.0
      %3230 = vmatmul.mubr.f32.gmra.mxu0 %v2895
      %v3231 = vpop.f32.mrf.mxu0
      %v3232 = vadd.f32 %v3087, %v3231
      %v3233 = vpop.f32.mrf.mxu0
      %3234 = vdwg.mxu0
      %v3235 = vld [vmem:[#allocation3 + $0x9] sm:$0xff]
      %v3236 = vld [vmem:[#allocation3 + $0x11] sm:$0xff]
      %v3237 = vld [vmem:[#allocation3 + $0x29] sm:$0xff]
      %v3238 = vld [vmem:[#allocation3 + $0x31] sm:$0xff]
      %v3239 = vld [vmem:[#allocation3 + $0x49] sm:$0xff]
      %v3240 = vld [vmem:[#allocation3 + $0x51] sm:$0xff]
      %v3241 = vld [vmem:[#allocation3 + $0x69] sm:$0xff]
      %v3242 = vld [vmem:[#allocation3 + $0x71] sm:$0xff]
      %v3243 = vld [vmem:[#allocation3 + $0x89] sm:$0xff]
      %v3244 = vld [vmem:[#allocation3 + $0x91] sm:$0xff]
      %v3245 = vld [vmem:[#allocation3 + $0xa9] sm:$0xff]
      %v3246 = vld [vmem:[#allocation3 + $0xb1] sm:$0xff]
      %v3247 = vld [vmem:[#allocation3 + $0xc9] sm:$0xff]
      %v3248 = vld [vmem:[#allocation3 + $0xd1] sm:$0xff]
      %v3249 = vld [vmem:[#allocation3 + $0xe9] sm:$0xff]
      %v3250 = vld [vmem:[#allocation3 + $0xf1] sm:$0xff]
      %s3251 = scalar_lea.vmem %s3, 256
      %v3252 = vld [vmem:[%s3251] sm:$0xff]
      %v3253 = vld [vmem:[%s3251 + $0x8] sm:$0xff]
      %v3254 = vld [vmem:[%s3251 + $0x10] sm:$0xff]
      %v3255 = vld [vmem:[%s3251 + $0x18] sm:$0xff]
      %v3256 = vld [vmem:[%s3251 + $0x20] sm:$0xff]
      %v3257 = vld [vmem:[%s3251 + $0x28] sm:$0xff]
      %v3258 = vld [vmem:[%s3251 + $0x30] sm:$0xff]
      %v3259 = vld [vmem:[%s3251 + $0x38] sm:$0xff]
      %v3260 = vld [vmem:[%s3251 + $0x40] sm:$0xff]
      %v3261 = vld [vmem:[%s3251 + $0x48] sm:$0xff]
      %v3262 = vld [vmem:[%s3251 + $0x50] sm:$0xff]
      %v3263 = vld [vmem:[%s3251 + $0x58] sm:$0xff]
      %v3264 = vld [vmem:[%s3251 + $0x60] sm:$0xff]
      %v3265 = vld [vmem:[%s3251 + $0x68] sm:$0xff]
      %v3266 = vld [vmem:[%s3251 + $0x70] sm:$0xff]
      %v3267 = vld [vmem:[%s3251 + $0x78] sm:$0xff]
      %3268 = vmatprep.subr.mxu0 0.0
      %3269 = vmatpush1.msra.mxu0 %v3267
      %3270 = vmatprep.subr.mxu0 0.0
      %3271 = vmatpush1.msra.mxu0 %v3266
      %3272 = vmatprep.subr.mxu0 0.0
      %3273 = vmatpush1.msra.mxu0 %v3265
      %3274 = vmatprep.subr.mxu0 0.0
      %3275 = vmatpush1.msra.mxu0 %v3264
      %3276 = vmatprep.subr.mxu0 0.0
      %3277 = vmatpush1.msra.mxu0 %v3263
      %3278 = vmatprep.subr.mxu0 0.0
      %3279 = vmatpush1.msra.mxu0 %v3262
      %3280 = vmatprep.subr.mxu0 0.0
      %3281 = vmatpush1.msra.mxu0 %v3261
      %3282 = vmatprep.subr.mxu0 0.0
      %3283 = vmatpush1.msra.mxu0 %v3260
      %3284 = vmatprep.subr.mxu0 0.0
      %3285 = vmatpush1.msra.mxu0 %v3259
      %3286 = vmatprep.subr.mxu0 0.0
      %3287 = vmatpush1.msra.mxu0 %v3258
      %3288 = vmatprep.subr.mxu0 0.0
      %3289 = vmatpush1.msra.mxu0 %v3257
      %3290 = vmatprep.subr.mxu0 0.0
      %3291 = vmatpush1.msra.mxu0 %v3256
      %3292 = vmatprep.subr.mxu0 0.0
      %3293 = vmatpush1.msra.mxu0 %v3255
      %3294 = vmatprep.subr.mxu0 0.0
      %3295 = vmatpush1.msra.mxu0 %v3254
      %3296 = vmatprep.subr.mxu0 0.0
      %3297 = vmatpush1.msra.mxu0 %v3253
      %3298 = vmatprep.subr.mxu0 0.0
      %3299 = vmatpush1.msra.mxu0 %v3252
      %3300 = vmatprep.subr.mxu0 0.0
      %3301 = vmatpush2.msra.mxu0 0.0
      %3302 = vmatprep.subr.mxu0 0.0
      %3303 = vmatpush2.msra.mxu0 0.0
      %3304 = vmatprep.subr.mxu0 0.0
      %3305 = vmatpush2.msra.mxu0 0.0
      %3306 = vmatprep.subr.mxu0 0.0
      %3307 = vmatpush2.msra.mxu0 0.0
      %3308 = vmatprep.subr.mxu0 0.0
      %3309 = vmatpush2.msra.mxu0 0.0
      %3310 = vmatprep.subr.mxu0 0.0
      %3311 = vmatpush2.msra.mxu0 0.0
      %3312 = vmatprep.subr.mxu0 0.0
      %3313 = vmatpush2.msra.mxu0 0.0
      %3314 = vmatprep.subr.mxu0 0.0
      %3315 = vmatpush2.msra.mxu0 0.0
      %3316 = vmatprep.subr.mxu0 0.0
      %3317 = vmatpush2.msra.mxu0 0.0
      %3318 = vmatprep.subr.mxu0 0.0
      %3319 = vmatpush2.msra.mxu0 0.0
      %3320 = vmatprep.subr.mxu0 0.0
      %3321 = vmatpush2.msra.mxu0 0.0
      %3322 = vmatprep.subr.mxu0 0.0
      %3323 = vmatpush2.msra.mxu0 0.0
      %3324 = vmatprep.subr.mxu0 0.0
      %3325 = vmatpush2.msra.mxu0 0.0
      %3326 = vmatprep.subr.mxu0 0.0
      %3327 = vmatpush2.msra.mxu0 0.0
      %3328 = vmatprep.subr.mxu0 0.0
      %3329 = vmatpush2.msra.mxu0 0.0
      %3330 = vmatprep.subr.mxu0 0.0
      %3331 = vmatpush2.msra.mxu0 0.0
      %3332 = vmatprep.mubr.f32.mxu0 0.0
      %3333 = vmatmul.mubr.f32.gmra.mxu0 %v3235
      %v3334 = vpop.f32.mrf.mxu0
      %v3335 = vadd.f32 0.0, %v3334
      %v3336 = vpop.f32.mrf.mxu0
      %3337 = vmatprep.mubr.f32.mxu0 0.0
      %3338 = vmatmul.mubr.f32.gmra.mxu0 %v3236
      %v3339 = vpop.f32.mrf.mxu0
      %v3340 = vadd.f32 0.0, %v3339
      %v3341 = vpop.f32.mrf.mxu0
      %3342 = vmatprep.mubr.f32.mxu0 0.0
      %3343 = vmatmul.mubr.f32.gmra.mxu0 %v3237
      %v3344 = vpop.f32.mrf.mxu0
      %v3345 = vadd.f32 0.0, %v3344
      %v3346 = vpop.f32.mrf.mxu0
      %3347 = vmatprep.mubr.f32.mxu0 0.0
      %3348 = vmatmul.mubr.f32.gmra.mxu0 %v3238
      %v3349 = vpop.f32.mrf.mxu0
      %v3350 = vadd.f32 0.0, %v3349
      %v3351 = vpop.f32.mrf.mxu0
      %3352 = vmatprep.mubr.f32.mxu0 0.0
      %3353 = vmatmul.mubr.f32.gmra.mxu0 %v3239
      %v3354 = vpop.f32.mrf.mxu0
      %v3355 = vadd.f32 0.0, %v3354
      %v3356 = vpop.f32.mrf.mxu0
      %3357 = vmatprep.mubr.f32.mxu0 0.0
      %3358 = vmatmul.mubr.f32.gmra.mxu0 %v3240
      %v3359 = vpop.f32.mrf.mxu0
      %v3360 = vadd.f32 0.0, %v3359
      %v3361 = vpop.f32.mrf.mxu0
      %3362 = vmatprep.mubr.f32.mxu0 0.0
      %3363 = vmatmul.mubr.f32.gmra.mxu0 %v3241
      %v3364 = vpop.f32.mrf.mxu0
      %v3365 = vadd.f32 0.0, %v3364
      %v3366 = vpop.f32.mrf.mxu0
      %3367 = vmatprep.mubr.f32.mxu0 0.0
      %3368 = vmatmul.mubr.f32.gmra.mxu0 %v3242
      %v3369 = vpop.f32.mrf.mxu0
      %v3370 = vadd.f32 0.0, %v3369
      %v3371 = vpop.f32.mrf.mxu0
      %3372 = vmatprep.mubr.f32.mxu0 0.0
      %3373 = vmatmul.mubr.f32.gmra.mxu0 %v3243
      %v3374 = vpop.f32.mrf.mxu0
      %v3375 = vadd.f32 0.0, %v3374
      %v3376 = vpop.f32.mrf.mxu0
      %3377 = vmatprep.mubr.f32.mxu0 0.0
      %3378 = vmatmul.mubr.f32.gmra.mxu0 %v3244
      %v3379 = vpop.f32.mrf.mxu0
      %v3380 = vadd.f32 0.0, %v3379
      %v3381 = vpop.f32.mrf.mxu0
      %3382 = vmatprep.mubr.f32.mxu0 0.0
      %3383 = vmatmul.mubr.f32.gmra.mxu0 %v3245
      %v3384 = vpop.f32.mrf.mxu0
      %v3385 = vadd.f32 0.0, %v3384
      %v3386 = vpop.f32.mrf.mxu0
      %3387 = vmatprep.mubr.f32.mxu0 0.0
      %3388 = vmatmul.mubr.f32.gmra.mxu0 %v3246
      %v3389 = vpop.f32.mrf.mxu0
      %v3390 = vadd.f32 0.0, %v3389
      %v3391 = vpop.f32.mrf.mxu0
      %3392 = vmatprep.mubr.f32.mxu0 0.0
      %3393 = vmatmul.mubr.f32.gmra.mxu0 %v3247
      %v3394 = vpop.f32.mrf.mxu0
      %v3395 = vadd.f32 0.0, %v3394
      %v3396 = vpop.f32.mrf.mxu0
      %3397 = vmatprep.mubr.f32.mxu0 0.0
      %3398 = vmatmul.mubr.f32.gmra.mxu0 %v3248
      %v3399 = vpop.f32.mrf.mxu0
      %v3400 = vadd.f32 0.0, %v3399
      %v3401 = vpop.f32.mrf.mxu0
      %3402 = vmatprep.mubr.f32.mxu0 0.0
      %3403 = vmatmul.mubr.f32.gmra.mxu0 %v3249
      %v3404 = vpop.f32.mrf.mxu0
      %v3405 = vadd.f32 0.0, %v3404
      %v3406 = vpop.f32.mrf.mxu0
      %3407 = vmatprep.mubr.f32.mxu0 0.0
      %3408 = vmatmul.mubr.f32.gmra.mxu0 %v3250
      %v3409 = vpop.f32.mrf.mxu0
      %v3410 = vadd.f32 0.0, %v3409
      %v3411 = vpop.f32.mrf.mxu0
      %3412 = vdwg.mxu0
      %v3413 = vadd.f32 %v3157, %v3335
      %v3414 = vadd.f32 %v3162, %v3340
      %v3415 = vadd.f32 %v3167, %v3345
      %v3416 = vadd.f32 %v3172, %v3350
      %v3417 = vadd.f32 %v3177, %v3355
      %v3418 = vadd.f32 %v3182, %v3360
      %v3419 = vadd.f32 %v3187, %v3365
      %v3420 = vadd.f32 %v3192, %v3370
      %v3421 = vadd.f32 %v3197, %v3375
      %v3422 = vadd.f32 %v3202, %v3380
      %v3423 = vadd.f32 %v3207, %v3385
      %v3424 = vadd.f32 %v3212, %v3390
      %v3425 = vadd.f32 %v3217, %v3395
      %v3426 = vadd.f32 %v3222, %v3400
      %v3427 = vadd.f32 %v3227, %v3405
      %v3428 = vadd.f32 %v3232, %v3410
      %v3429 = vld [vmem:[%s702 + $0x7] sm:$0xff]
      %v3430 = vld [vmem:[%s702 + $0xf] sm:$0xff]
      %v3431 = vld [vmem:[%s702 + $0x27] sm:$0xff]
      %v3432 = vld [vmem:[%s702 + $0x2f] sm:$0xff]
      %v3433 = vld [vmem:[%s702 + $0x47] sm:$0xff]
      %v3434 = vld [vmem:[%s702 + $0x4f] sm:$0xff]
      %v3435 = vld [vmem:[%s702 + $0x67] sm:$0xff]
      %v3436 = vld [vmem:[%s702 + $0x6f] sm:$0xff]
      %v3437 = vld [vmem:[%s702 + $0x87] sm:$0xff]
      %v3438 = vld [vmem:[%s702 + $0x8f] sm:$0xff]
      %v3439 = vld [vmem:[%s702 + $0xa7] sm:$0xff]
      %v3440 = vld [vmem:[%s702 + $0xaf] sm:$0xff]
      %v3441 = vld [vmem:[%s702 + $0xc7] sm:$0xff]
      %v3442 = vld [vmem:[%s702 + $0xcf] sm:$0xff]
      %v3443 = vld [vmem:[%s702 + $0xe7] sm:$0xff]
      %v3444 = vld [vmem:[%s702 + $0xef] sm:$0xff]
      %s3445 = scalar_lea.vmem %s3, 384
      %v3446 = vld [vmem:[%s3445] sm:$0xff]
      %v3447 = vld [vmem:[%s3445 + $0x8] sm:$0xff]
      %v3448 = vld [vmem:[%s3445 + $0x10] sm:$0xff]
      %v3449 = vld [vmem:[%s3445 + $0x18] sm:$0xff]
      %v3450 = vld [vmem:[%s3445 + $0x20] sm:$0xff]
      %v3451 = vld [vmem:[%s3445 + $0x28] sm:$0xff]
      %v3452 = vld [vmem:[%s3445 + $0x30] sm:$0xff]
      %v3453 = vld [vmem:[%s3445 + $0x38] sm:$0xff]
      %v3454 = vld [vmem:[%s3445 + $0x40] sm:$0xff]
      %v3455 = vld [vmem:[%s3445 + $0x48] sm:$0xff]
      %v3456 = vld [vmem:[%s3445 + $0x50] sm:$0xff]
      %v3457 = vld [vmem:[%s3445 + $0x58] sm:$0xff]
      %v3458 = vld [vmem:[%s3445 + $0x60] sm:$0xff]
      %v3459 = vld [vmem:[%s3445 + $0x68] sm:$0xff]
      %v3460 = vld [vmem:[%s3445 + $0x70] sm:$0xff]
      %v3461 = vld [vmem:[%s3445 + $0x78] sm:$0xff]
      %3462 = vmatprep.subr.mxu0 0.0
      %3463 = vmatpush1.msra.mxu0 %v3461
      %3464 = vmatprep.subr.mxu0 0.0
      %3465 = vmatpush1.msra.mxu0 %v3460
      %3466 = vmatprep.subr.mxu0 0.0
      %3467 = vmatpush1.msra.mxu0 %v3459
      %3468 = vmatprep.subr.mxu0 0.0
      %3469 = vmatpush1.msra.mxu0 %v3458
      %3470 = vmatprep.subr.mxu0 0.0
      %3471 = vmatpush1.msra.mxu0 %v3457
      %3472 = vmatprep.subr.mxu0 0.0
      %3473 = vmatpush1.msra.mxu0 %v3456
      %3474 = vmatprep.subr.mxu0 0.0
      %3475 = vmatpush1.msra.mxu0 %v3455
      %3476 = vmatprep.subr.mxu0 0.0
      %3477 = vmatpush1.msra.mxu0 %v3454
      %3478 = vmatprep.subr.mxu0 0.0
      %3479 = vmatpush1.msra.mxu0 %v3453
      %3480 = vmatprep.subr.mxu0 0.0
      %3481 = vmatpush1.msra.mxu0 %v3452
      %3482 = vmatprep.subr.mxu0 0.0
      %3483 = vmatpush1.msra.mxu0 %v3451
      %3484 = vmatprep.subr.mxu0 0.0
      %3485 = vmatpush1.msra.mxu0 %v3450
      %3486 = vmatprep.subr.mxu0 0.0
      %3487 = vmatpush1.msra.mxu0 %v3449
      %3488 = vmatprep.subr.mxu0 0.0
      %3489 = vmatpush1.msra.mxu0 %v3448
      %3490 = vmatprep.subr.mxu0 0.0
      %3491 = vmatpush1.msra.mxu0 %v3447
      %3492 = vmatprep.subr.mxu0 0.0
      %3493 = vmatpush1.msra.mxu0 %v3446
      %3494 = vmatprep.subr.mxu0 0.0
      %3495 = vmatpush2.msra.mxu0 0.0
      %3496 = vmatprep.subr.mxu0 0.0
      %3497 = vmatpush2.msra.mxu0 0.0
      %3498 = vmatprep.subr.mxu0 0.0
      %3499 = vmatpush2.msra.mxu0 0.0
      %3500 = vmatprep.subr.mxu0 0.0
      %3501 = vmatpush2.msra.mxu0 0.0
      %3502 = vmatprep.subr.mxu0 0.0
      %3503 = vmatpush2.msra.mxu0 0.0
      %3504 = vmatprep.subr.mxu0 0.0
      %3505 = vmatpush2.msra.mxu0 0.0
      %3506 = vmatprep.subr.mxu0 0.0
      %3507 = vmatpush2.msra.mxu0 0.0
      %3508 = vmatprep.subr.mxu0 0.0
      %3509 = vmatpush2.msra.mxu0 0.0
      %3510 = vmatprep.subr.mxu0 0.0
      %3511 = vmatpush2.msra.mxu0 0.0
      %3512 = vmatprep.subr.mxu0 0.0
      %3513 = vmatpush2.msra.mxu0 0.0
      %3514 = vmatprep.subr.mxu0 0.0
      %3515 = vmatpush2.msra.mxu0 0.0
      %3516 = vmatprep.subr.mxu0 0.0
      %3517 = vmatpush2.msra.mxu0 0.0
      %3518 = vmatprep.subr.mxu0 0.0
      %3519 = vmatpush2.msra.mxu0 0.0
      %3520 = vmatprep.subr.mxu0 0.0
      %3521 = vmatpush2.msra.mxu0 0.0
      %3522 = vmatprep.subr.mxu0 0.0
      %3523 = vmatpush2.msra.mxu0 0.0
      %3524 = vmatprep.subr.mxu0 0.0
      %3525 = vmatpush2.msra.mxu0 0.0
      %3526 = vmatprep.mubr.f32.mxu0 0.0
      %3527 = vmatmul.mubr.f32.gmra.mxu0 %v3429
      %v3528 = vpop.f32.mrf.mxu0
      %v3529 = vadd.f32 0.0, %v3528
      %v3530 = vpop.f32.mrf.mxu0
      %3531 = vmatprep.mubr.f32.mxu0 0.0
      %3532 = vmatmul.mubr.f32.gmra.mxu0 %v3430
      %v3533 = vpop.f32.mrf.mxu0
      %v3534 = vadd.f32 0.0, %v3533
      %v3535 = vpop.f32.mrf.mxu0
      %3536 = vmatprep.mubr.f32.mxu0 0.0
      %3537 = vmatmul.mubr.f32.gmra.mxu0 %v3431
      %v3538 = vpop.f32.mrf.mxu0
      %v3539 = vadd.f32 0.0, %v3538
      %v3540 = vpop.f32.mrf.mxu0
      %3541 = vmatprep.mubr.f32.mxu0 0.0
      %3542 = vmatmul.mubr.f32.gmra.mxu0 %v3432
      %v3543 = vpop.f32.mrf.mxu0
      %v3544 = vadd.f32 0.0, %v3543
      %v3545 = vpop.f32.mrf.mxu0
      %3546 = vmatprep.mubr.f32.mxu0 0.0
      %3547 = vmatmul.mubr.f32.gmra.mxu0 %v3433
      %v3548 = vpop.f32.mrf.mxu0
      %v3549 = vadd.f32 0.0, %v3548
      %v3550 = vpop.f32.mrf.mxu0
      %3551 = vmatprep.mubr.f32.mxu0 0.0
      %3552 = vmatmul.mubr.f32.gmra.mxu0 %v3434
      %v3553 = vpop.f32.mrf.mxu0
      %v3554 = vadd.f32 0.0, %v3553
      %v3555 = vpop.f32.mrf.mxu0
      %3556 = vmatprep.mubr.f32.mxu0 0.0
      %3557 = vmatmul.mubr.f32.gmra.mxu0 %v3435
      %v3558 = vpop.f32.mrf.mxu0
      %v3559 = vadd.f32 0.0, %v3558
      %v3560 = vpop.f32.mrf.mxu0
      %3561 = vmatprep.mubr.f32.mxu0 0.0
      %3562 = vmatmul.mubr.f32.gmra.mxu0 %v3436
      %v3563 = vpop.f32.mrf.mxu0
      %v3564 = vadd.f32 0.0, %v3563
      %v3565 = vpop.f32.mrf.mxu0
      %3566 = vmatprep.mubr.f32.mxu0 0.0
      %3567 = vmatmul.mubr.f32.gmra.mxu0 %v3437
      %v3568 = vpop.f32.mrf.mxu0
      %v3569 = vadd.f32 0.0, %v3568
      %v3570 = vpop.f32.mrf.mxu0
      %3571 = vmatprep.mubr.f32.mxu0 0.0
      %3572 = vmatmul.mubr.f32.gmra.mxu0 %v3438
      %v3573 = vpop.f32.mrf.mxu0
      %v3574 = vadd.f32 0.0, %v3573
      %v3575 = vpop.f32.mrf.mxu0
      %3576 = vmatprep.mubr.f32.mxu0 0.0
      %3577 = vmatmul.mubr.f32.gmra.mxu0 %v3439
      %v3578 = vpop.f32.mrf.mxu0
      %v3579 = vadd.f32 0.0, %v3578
      %v3580 = vpop.f32.mrf.mxu0
      %3581 = vmatprep.mubr.f32.mxu0 0.0
      %3582 = vmatmul.mubr.f32.gmra.mxu0 %v3440
      %v3583 = vpop.f32.mrf.mxu0
      %v3584 = vadd.f32 0.0, %v3583
      %v3585 = vpop.f32.mrf.mxu0
      %3586 = vmatprep.mubr.f32.mxu0 0.0
      %3587 = vmatmul.mubr.f32.gmra.mxu0 %v3441
      %v3588 = vpop.f32.mrf.mxu0
      %v3589 = vadd.f32 0.0, %v3588
      %v3590 = vpop.f32.mrf.mxu0
      %3591 = vmatprep.mubr.f32.mxu0 0.0
      %3592 = vmatmul.mubr.f32.gmra.mxu0 %v3442
      %v3593 = vpop.f32.mrf.mxu0
      %v3594 = vadd.f32 0.0, %v3593
      %v3595 = vpop.f32.mrf.mxu0
      %3596 = vmatprep.mubr.f32.mxu0 0.0
      %3597 = vmatmul.mubr.f32.gmra.mxu0 %v3443
      %v3598 = vpop.f32.mrf.mxu0
      %v3599 = vadd.f32 0.0, %v3598
      %v3600 = vpop.f32.mrf.mxu0
      %3601 = vmatprep.mubr.f32.mxu0 0.0
      %3602 = vmatmul.mubr.f32.gmra.mxu0 %v3444
      %v3603 = vpop.f32.mrf.mxu0
      %v3604 = vadd.f32 0.0, %v3603
      %v3605 = vpop.f32.mrf.mxu0
      %3606 = vdwg.mxu0
      %v3607 = vadd.f32 %v3413, %v3529
      %v3608 = vadd.f32 %v3414, %v3534
      %v3609 = vadd.f32 %v3415, %v3539
      %v3610 = vadd.f32 %v3416, %v3544
      %v3611 = vadd.f32 %v3417, %v3549
      %v3612 = vadd.f32 %v3418, %v3554
      %v3613 = vadd.f32 %v3419, %v3559
      %v3614 = vadd.f32 %v3420, %v3564
      %v3615 = vadd.f32 %v3421, %v3569
      %v3616 = vadd.f32 %v3422, %v3574
      %v3617 = vadd.f32 %v3423, %v3579
      %v3618 = vadd.f32 %v3424, %v3584
      %v3619 = vadd.f32 %v3425, %v3589
      %v3620 = vadd.f32 %v3426, %v3594
      %v3621 = vadd.f32 %v3427, %v3599
      %v3622 = vadd.f32 %v3428, %v3604
      %v3623 = vld [vmem:[%s702 + $0x8] sm:$0xff]
      %v3624 = vld [vmem:[%s702 + $0x10] sm:$0xff]
      %v3625 = vld [vmem:[%s702 + $0x28] sm:$0xff]
      %v3626 = vld [vmem:[%s702 + $0x30] sm:$0xff]
      %v3627 = vld [vmem:[%s702 + $0x48] sm:$0xff]
      %v3628 = vld [vmem:[%s702 + $0x50] sm:$0xff]
      %v3629 = vld [vmem:[%s702 + $0x68] sm:$0xff]
      %v3630 = vld [vmem:[%s702 + $0x70] sm:$0xff]
      %v3631 = vld [vmem:[%s702 + $0x88] sm:$0xff]
      %v3632 = vld [vmem:[%s702 + $0x90] sm:$0xff]
      %v3633 = vld [vmem:[%s702 + $0xa8] sm:$0xff]
      %v3634 = vld [vmem:[%s702 + $0xb0] sm:$0xff]
      %v3635 = vld [vmem:[%s702 + $0xc8] sm:$0xff]
      %v3636 = vld [vmem:[%s702 + $0xd0] sm:$0xff]
      %v3637 = vld [vmem:[%s702 + $0xe8] sm:$0xff]
      %v3638 = vld [vmem:[%s702 + $0xf0] sm:$0xff]
      %s3639 = scalar_lea.vmem %s3, 512
      %v3640 = vld [vmem:[%s3639] sm:$0xff]
      %v3641 = vld [vmem:[%s3639 + $0x8] sm:$0xff]
      %v3642 = vld [vmem:[%s3639 + $0x10] sm:$0xff]
      %v3643 = vld [vmem:[%s3639 + $0x18] sm:$0xff]
      %v3644 = vld [vmem:[%s3639 + $0x20] sm:$0xff]
      %v3645 = vld [vmem:[%s3639 + $0x28] sm:$0xff]
      %v3646 = vld [vmem:[%s3639 + $0x30] sm:$0xff]
      %v3647 = vld [vmem:[%s3639 + $0x38] sm:$0xff]
      %v3648 = vld [vmem:[%s3639 + $0x40] sm:$0xff]
      %v3649 = vld [vmem:[%s3639 + $0x48] sm:$0xff]
      %v3650 = vld [vmem:[%s3639 + $0x50] sm:$0xff]
      %v3651 = vld [vmem:[%s3639 + $0x58] sm:$0xff]
      %v3652 = vld [vmem:[%s3639 + $0x60] sm:$0xff]
      %v3653 = vld [vmem:[%s3639 + $0x68] sm:$0xff]
      %v3654 = vld [vmem:[%s3639 + $0x70] sm:$0xff]
      %v3655 = vld [vmem:[%s3639 + $0x78] sm:$0xff]
      %3656 = vmatprep.subr.mxu0 0.0
      %3657 = vmatpush1.msra.mxu0 %v3655
      %3658 = vmatprep.subr.mxu0 0.0
      %3659 = vmatpush1.msra.mxu0 %v3654
      %3660 = vmatprep.subr.mxu0 0.0
      %3661 = vmatpush1.msra.mxu0 %v3653
      %3662 = vmatprep.subr.mxu0 0.0
      %3663 = vmatpush1.msra.mxu0 %v3652
      %3664 = vmatprep.subr.mxu0 0.0
      %3665 = vmatpush1.msra.mxu0 %v3651
      %3666 = vmatprep.subr.mxu0 0.0
      %3667 = vmatpush1.msra.mxu0 %v3650
      %3668 = vmatprep.subr.mxu0 0.0
      %3669 = vmatpush1.msra.mxu0 %v3649
      %3670 = vmatprep.subr.mxu0 0.0
      %3671 = vmatpush1.msra.mxu0 %v3648
      %3672 = vmatprep.subr.mxu0 0.0
      %3673 = vmatpush1.msra.mxu0 %v3647
      %3674 = vmatprep.subr.mxu0 0.0
      %3675 = vmatpush1.msra.mxu0 %v3646
      %3676 = vmatprep.subr.mxu0 0.0
      %3677 = vmatpush1.msra.mxu0 %v3645
      %3678 = vmatprep.subr.mxu0 0.0
      %3679 = vmatpush1.msra.mxu0 %v3644
      %3680 = vmatprep.subr.mxu0 0.0
      %3681 = vmatpush1.msra.mxu0 %v3643
      %3682 = vmatprep.subr.mxu0 0.0
      %3683 = vmatpush1.msra.mxu0 %v3642
      %3684 = vmatprep.subr.mxu0 0.0
      %3685 = vmatpush1.msra.mxu0 %v3641
      %3686 = vmatprep.subr.mxu0 0.0
      %3687 = vmatpush1.msra.mxu0 %v3640
      %3688 = vmatprep.subr.mxu0 0.0
      %3689 = vmatpush2.msra.mxu0 0.0
      %3690 = vmatprep.subr.mxu0 0.0
      %3691 = vmatpush2.msra.mxu0 0.0
      %3692 = vmatprep.subr.mxu0 0.0
      %3693 = vmatpush2.msra.mxu0 0.0
      %3694 = vmatprep.subr.mxu0 0.0
      %3695 = vmatpush2.msra.mxu0 0.0
      %3696 = vmatprep.subr.mxu0 0.0
      %3697 = vmatpush2.msra.mxu0 0.0
      %3698 = vmatprep.subr.mxu0 0.0
      %3699 = vmatpush2.msra.mxu0 0.0
      %3700 = vmatprep.subr.mxu0 0.0
      %3701 = vmatpush2.msra.mxu0 0.0
      %3702 = vmatprep.subr.mxu0 0.0
      %3703 = vmatpush2.msra.mxu0 0.0
      %3704 = vmatprep.subr.mxu0 0.0
      %3705 = vmatpush2.msra.mxu0 0.0
      %3706 = vmatprep.subr.mxu0 0.0
      %3707 = vmatpush2.msra.mxu0 0.0
      %3708 = vmatprep.subr.mxu0 0.0
      %3709 = vmatpush2.msra.mxu0 0.0
      %3710 = vmatprep.subr.mxu0 0.0
      %3711 = vmatpush2.msra.mxu0 0.0
      %3712 = vmatprep.subr.mxu0 0.0
      %3713 = vmatpush2.msra.mxu0 0.0
      %3714 = vmatprep.subr.mxu0 0.0
      %3715 = vmatpush2.msra.mxu0 0.0
      %3716 = vmatprep.subr.mxu0 0.0
      %3717 = vmatpush2.msra.mxu0 0.0
      %3718 = vmatprep.subr.mxu0 0.0
      %3719 = vmatpush2.msra.mxu0 0.0
      %3720 = vmatprep.mubr.f32.mxu0 0.0
      %3721 = vmatmul.mubr.f32.gmra.mxu0 %v3623
      %v3722 = vpop.f32.mrf.mxu0
      %v3723 = vadd.f32 0.0, %v3722
      %v3724 = vpop.f32.mrf.mxu0
      %3725 = vmatprep.mubr.f32.mxu0 0.0
      %3726 = vmatmul.mubr.f32.gmra.mxu0 %v3624
      %v3727 = vpop.f32.mrf.mxu0
      %v3728 = vadd.f32 0.0, %v3727
      %v3729 = vpop.f32.mrf.mxu0
      %3730 = vmatprep.mubr.f32.mxu0 0.0
      %3731 = vmatmul.mubr.f32.gmra.mxu0 %v3625
      %v3732 = vpop.f32.mrf.mxu0
      %v3733 = vadd.f32 0.0, %v3732
      %v3734 = vpop.f32.mrf.mxu0
      %3735 = vmatprep.mubr.f32.mxu0 0.0
      %3736 = vmatmul.mubr.f32.gmra.mxu0 %v3626
      %v3737 = vpop.f32.mrf.mxu0
      %v3738 = vadd.f32 0.0, %v3737
      %v3739 = vpop.f32.mrf.mxu0
      %3740 = vmatprep.mubr.f32.mxu0 0.0
      %3741 = vmatmul.mubr.f32.gmra.mxu0 %v3627
      %v3742 = vpop.f32.mrf.mxu0
      %v3743 = vadd.f32 0.0, %v3742
      %v3744 = vpop.f32.mrf.mxu0
      %3745 = vmatprep.mubr.f32.mxu0 0.0
      %3746 = vmatmul.mubr.f32.gmra.mxu0 %v3628
      %v3747 = vpop.f32.mrf.mxu0
      %v3748 = vadd.f32 0.0, %v3747
      %v3749 = vpop.f32.mrf.mxu0
      %3750 = vmatprep.mubr.f32.mxu0 0.0
      %3751 = vmatmul.mubr.f32.gmra.mxu0 %v3629
      %v3752 = vpop.f32.mrf.mxu0
      %v3753 = vadd.f32 0.0, %v3752
      %v3754 = vpop.f32.mrf.mxu0
      %3755 = vmatprep.mubr.f32.mxu0 0.0
      %3756 = vmatmul.mubr.f32.gmra.mxu0 %v3630
      %v3757 = vpop.f32.mrf.mxu0
      %v3758 = vadd.f32 0.0, %v3757
      %v3759 = vpop.f32.mrf.mxu0
      %3760 = vmatprep.mubr.f32.mxu0 0.0
      %3761 = vmatmul.mubr.f32.gmra.mxu0 %v3631
      %v3762 = vpop.f32.mrf.mxu0
      %v3763 = vadd.f32 0.0, %v3762
      %v3764 = vpop.f32.mrf.mxu0
      %3765 = vmatprep.mubr.f32.mxu0 0.0
      %3766 = vmatmul.mubr.f32.gmra.mxu0 %v3632
      %v3767 = vpop.f32.mrf.mxu0
      %v3768 = vadd.f32 0.0, %v3767
      %v3769 = vpop.f32.mrf.mxu0
      %3770 = vmatprep.mubr.f32.mxu0 0.0
      %3771 = vmatmul.mubr.f32.gmra.mxu0 %v3633
      %v3772 = vpop.f32.mrf.mxu0
      %v3773 = vadd.f32 0.0, %v3772
      %v3774 = vpop.f32.mrf.mxu0
      %3775 = vmatprep.mubr.f32.mxu0 0.0
      %3776 = vmatmul.mubr.f32.gmra.mxu0 %v3634
      %v3777 = vpop.f32.mrf.mxu0
      %v3778 = vadd.f32 0.0, %v3777
      %v3779 = vpop.f32.mrf.mxu0
      %3780 = vmatprep.mubr.f32.mxu0 0.0
      %3781 = vmatmul.mubr.f32.gmra.mxu0 %v3635
      %v3782 = vpop.f32.mrf.mxu0
      %v3783 = vadd.f32 0.0, %v3782
      %v3784 = vpop.f32.mrf.mxu0
      %3785 = vmatprep.mubr.f32.mxu0 0.0
      %3786 = vmatmul.mubr.f32.gmra.mxu0 %v3636
      %v3787 = vpop.f32.mrf.mxu0
      %v3788 = vadd.f32 0.0, %v3787
      %v3789 = vpop.f32.mrf.mxu0
      %3790 = vmatprep.mubr.f32.mxu0 0.0
      %3791 = vmatmul.mubr.f32.gmra.mxu0 %v3637
      %v3792 = vpop.f32.mrf.mxu0
      %v3793 = vadd.f32 0.0, %v3792
      %v3794 = vpop.f32.mrf.mxu0
      %3795 = vmatprep.mubr.f32.mxu0 0.0
      %3796 = vmatmul.mubr.f32.gmra.mxu0 %v3638
      %v3797 = vpop.f32.mrf.mxu0
      %v3798 = vadd.f32 0.0, %v3797
      %v3799 = vpop.f32.mrf.mxu0
      %3800 = vdwg.mxu0
      %v3801 = vadd.f32 %v3607, %v3723
      %v3802 = vadd.f32 %v3608, %v3728
      %v3803 = vadd.f32 %v3609, %v3733
      %v3804 = vadd.f32 %v3610, %v3738
      %v3805 = vadd.f32 %v3611, %v3743
      %v3806 = vadd.f32 %v3612, %v3748
      %v3807 = vadd.f32 %v3613, %v3753
      %v3808 = vadd.f32 %v3614, %v3758
      %v3809 = vadd.f32 %v3615, %v3763
      %v3810 = vadd.f32 %v3616, %v3768
      %v3811 = vadd.f32 %v3617, %v3773
      %v3812 = vadd.f32 %v3618, %v3778
      %v3813 = vadd.f32 %v3619, %v3783
      %v3814 = vadd.f32 %v3620, %v3788
      %v3815 = vadd.f32 %v3621, %v3793
      %v3816 = vadd.f32 %v3622, %v3798
      %v3817 = vld [vmem:[%s702 + $0x9] sm:$0xff]
      %v3818 = vld [vmem:[%s702 + $0x11] sm:$0xff]
      %v3819 = vld [vmem:[%s702 + $0x29] sm:$0xff]
      %v3820 = vld [vmem:[%s702 + $0x31] sm:$0xff]
      %v3821 = vld [vmem:[%s702 + $0x49] sm:$0xff]
      %v3822 = vld [vmem:[%s702 + $0x51] sm:$0xff]
      %v3823 = vld [vmem:[%s702 + $0x69] sm:$0xff]
      %v3824 = vld [vmem:[%s702 + $0x71] sm:$0xff]
      %v3825 = vld [vmem:[%s702 + $0x89] sm:$0xff]
      %v3826 = vld [vmem:[%s702 + $0x91] sm:$0xff]
      %v3827 = vld [vmem:[%s702 + $0xa9] sm:$0xff]
      %v3828 = vld [vmem:[%s702 + $0xb1] sm:$0xff]
      %v3829 = vld [vmem:[%s702 + $0xc9] sm:$0xff]
      %v3830 = vld [vmem:[%s702 + $0xd1] sm:$0xff]
      %v3831 = vld [vmem:[%s702 + $0xe9] sm:$0xff]
      %v3832 = vld [vmem:[%s702 + $0xf1] sm:$0xff]
      %s3833 = scalar_lea.vmem %s3, 640
      %v3834 = vld [vmem:[%s3833] sm:$0xff]
      %v3835 = vld [vmem:[%s3833 + $0x8] sm:$0xff]
      %v3836 = vld [vmem:[%s3833 + $0x10] sm:$0xff]
      %v3837 = vld [vmem:[%s3833 + $0x18] sm:$0xff]
      %v3838 = vld [vmem:[%s3833 + $0x20] sm:$0xff]
      %v3839 = vld [vmem:[%s3833 + $0x28] sm:$0xff]
      %v3840 = vld [vmem:[%s3833 + $0x30] sm:$0xff]
      %v3841 = vld [vmem:[%s3833 + $0x38] sm:$0xff]
      %v3842 = vld [vmem:[%s3833 + $0x40] sm:$0xff]
      %v3843 = vld [vmem:[%s3833 + $0x48] sm:$0xff]
      %v3844 = vld [vmem:[%s3833 + $0x50] sm:$0xff]
      %v3845 = vld [vmem:[%s3833 + $0x58] sm:$0xff]
      %v3846 = vld [vmem:[%s3833 + $0x60] sm:$0xff]
      %v3847 = vld [vmem:[%s3833 + $0x68] sm:$0xff]
      %v3848 = vld [vmem:[%s3833 + $0x70] sm:$0xff]
      %v3849 = vld [vmem:[%s3833 + $0x78] sm:$0xff]
      %3850 = vmatprep.subr.mxu0 0.0
      %3851 = vmatpush1.msra.mxu0 %v3849
      %3852 = vmatprep.subr.mxu0 0.0
      %3853 = vmatpush1.msra.mxu0 %v3848
      %3854 = vmatprep.subr.mxu0 0.0
      %3855 = vmatpush1.msra.mxu0 %v3847
      %3856 = vmatprep.subr.mxu0 0.0
      %3857 = vmatpush1.msra.mxu0 %v3846
      %3858 = vmatprep.subr.mxu0 0.0
      %3859 = vmatpush1.msra.mxu0 %v3845
      %3860 = vmatprep.subr.mxu0 0.0
      %3861 = vmatpush1.msra.mxu0 %v3844
      %3862 = vmatprep.subr.mxu0 0.0
      %3863 = vmatpush1.msra.mxu0 %v3843
      %3864 = vmatprep.subr.mxu0 0.0
      %3865 = vmatpush1.msra.mxu0 %v3842
      %3866 = vmatprep.subr.mxu0 0.0
      %3867 = vmatpush1.msra.mxu0 %v3841
      %3868 = vmatprep.subr.mxu0 0.0
      %3869 = vmatpush1.msra.mxu0 %v3840
      %3870 = vmatprep.subr.mxu0 0.0
      %3871 = vmatpush1.msra.mxu0 %v3839
      %3872 = vmatprep.subr.mxu0 0.0
      %3873 = vmatpush1.msra.mxu0 %v3838
      %3874 = vmatprep.subr.mxu0 0.0
      %3875 = vmatpush1.msra.mxu0 %v3837
      %3876 = vmatprep.subr.mxu0 0.0
      %3877 = vmatpush1.msra.mxu0 %v3836
      %3878 = vmatprep.subr.mxu0 0.0
      %3879 = vmatpush1.msra.mxu0 %v3835
      %3880 = vmatprep.subr.mxu0 0.0
      %3881 = vmatpush1.msra.mxu0 %v3834
      %3882 = vmatprep.subr.mxu0 0.0
      %3883 = vmatpush2.msra.mxu0 0.0
      %3884 = vmatprep.subr.mxu0 0.0
      %3885 = vmatpush2.msra.mxu0 0.0
      %3886 = vmatprep.subr.mxu0 0.0
      %3887 = vmatpush2.msra.mxu0 0.0
      %3888 = vmatprep.subr.mxu0 0.0
      %3889 = vmatpush2.msra.mxu0 0.0
      %3890 = vmatprep.subr.mxu0 0.0
      %3891 = vmatpush2.msra.mxu0 0.0
      %3892 = vmatprep.subr.mxu0 0.0
      %3893 = vmatpush2.msra.mxu0 0.0
      %3894 = vmatprep.subr.mxu0 0.0
      %3895 = vmatpush2.msra.mxu0 0.0
      %3896 = vmatprep.subr.mxu0 0.0
      %3897 = vmatpush2.msra.mxu0 0.0
      %3898 = vmatprep.subr.mxu0 0.0
      %3899 = vmatpush2.msra.mxu0 0.0
      %3900 = vmatprep.subr.mxu0 0.0
      %3901 = vmatpush2.msra.mxu0 0.0
      %3902 = vmatprep.subr.mxu0 0.0
      %3903 = vmatpush2.msra.mxu0 0.0
      %3904 = vmatprep.subr.mxu0 0.0
      %3905 = vmatpush2.msra.mxu0 0.0
      %3906 = vmatprep.subr.mxu0 0.0
      %3907 = vmatpush2.msra.mxu0 0.0
      %3908 = vmatprep.subr.mxu0 0.0
      %3909 = vmatpush2.msra.mxu0 0.0
      %3910 = vmatprep.subr.mxu0 0.0
      %3911 = vmatpush2.msra.mxu0 0.0
      %3912 = vmatprep.subr.mxu0 0.0
      %3913 = vmatpush2.msra.mxu0 0.0
      %3914 = vmatprep.mubr.f32.mxu0 0.0
      %3915 = vmatmul.mubr.f32.gmra.mxu0 %v3817
      %v3916 = vpop.f32.mrf.mxu0
      %v3917 = vadd.f32 0.0, %v3916
      %v3918 = vpop.f32.mrf.mxu0
      %3919 = vmatprep.mubr.f32.mxu0 0.0
      %3920 = vmatmul.mubr.f32.gmra.mxu0 %v3818
      %v3921 = vpop.f32.mrf.mxu0
      %v3922 = vadd.f32 0.0, %v3921
      %v3923 = vpop.f32.mrf.mxu0
      %3924 = vmatprep.mubr.f32.mxu0 0.0
      %3925 = vmatmul.mubr.f32.gmra.mxu0 %v3819
      %v3926 = vpop.f32.mrf.mxu0
      %v3927 = vadd.f32 0.0, %v3926
      %v3928 = vpop.f32.mrf.mxu0
      %3929 = vmatprep.mubr.f32.mxu0 0.0
      %3930 = vmatmul.mubr.f32.gmra.mxu0 %v3820
      %v3931 = vpop.f32.mrf.mxu0
      %v3932 = vadd.f32 0.0, %v3931
      %v3933 = vpop.f32.mrf.mxu0
      %3934 = vmatprep.mubr.f32.mxu0 0.0
      %3935 = vmatmul.mubr.f32.gmra.mxu0 %v3821
      %v3936 = vpop.f32.mrf.mxu0
      %v3937 = vadd.f32 0.0, %v3936
      %v3938 = vpop.f32.mrf.mxu0
      %3939 = vmatprep.mubr.f32.mxu0 0.0
      %3940 = vmatmul.mubr.f32.gmra.mxu0 %v3822
      %v3941 = vpop.f32.mrf.mxu0
      %v3942 = vadd.f32 0.0, %v3941
      %v3943 = vpop.f32.mrf.mxu0
      %3944 = vmatprep.mubr.f32.mxu0 0.0
      %3945 = vmatmul.mubr.f32.gmra.mxu0 %v3823
      %v3946 = vpop.f32.mrf.mxu0
      %v3947 = vadd.f32 0.0, %v3946
      %v3948 = vpop.f32.mrf.mxu0
      %3949 = vmatprep.mubr.f32.mxu0 0.0
      %3950 = vmatmul.mubr.f32.gmra.mxu0 %v3824
      %v3951 = vpop.f32.mrf.mxu0
      %v3952 = vadd.f32 0.0, %v3951
      %v3953 = vpop.f32.mrf.mxu0
      %3954 = vmatprep.mubr.f32.mxu0 0.0
      %3955 = vmatmul.mubr.f32.gmra.mxu0 %v3825
      %v3956 = vpop.f32.mrf.mxu0
      %v3957 = vadd.f32 0.0, %v3956
      %v3958 = vpop.f32.mrf.mxu0
      %3959 = vmatprep.mubr.f32.mxu0 0.0
      %3960 = vmatmul.mubr.f32.gmra.mxu0 %v3826
      %v3961 = vpop.f32.mrf.mxu0
      %v3962 = vadd.f32 0.0, %v3961
      %v3963 = vpop.f32.mrf.mxu0
      %3964 = vmatprep.mubr.f32.mxu0 0.0
      %3965 = vmatmul.mubr.f32.gmra.mxu0 %v3827
      %v3966 = vpop.f32.mrf.mxu0
      %v3967 = vadd.f32 0.0, %v3966
      %v3968 = vpop.f32.mrf.mxu0
      %3969 = vmatprep.mubr.f32.mxu0 0.0
      %3970 = vmatmul.mubr.f32.gmra.mxu0 %v3828
      %v3971 = vpop.f32.mrf.mxu0
      %v3972 = vadd.f32 0.0, %v3971
      %v3973 = vpop.f32.mrf.mxu0
      %3974 = vmatprep.mubr.f32.mxu0 0.0
      %3975 = vmatmul.mubr.f32.gmra.mxu0 %v3829
      %v3976 = vpop.f32.mrf.mxu0
      %v3977 = vadd.f32 0.0, %v3976
      %v3978 = vpop.f32.mrf.mxu0
      %3979 = vmatprep.mubr.f32.mxu0 0.0
      %3980 = vmatmul.mubr.f32.gmra.mxu0 %v3830
      %v3981 = vpop.f32.mrf.mxu0
      %v3982 = vadd.f32 0.0, %v3981
      %v3983 = vpop.f32.mrf.mxu0
      %3984 = vmatprep.mubr.f32.mxu0 0.0
      %3985 = vmatmul.mubr.f32.gmra.mxu0 %v3831
      %v3986 = vpop.f32.mrf.mxu0
      %v3987 = vadd.f32 0.0, %v3986
      %v3988 = vpop.f32.mrf.mxu0
      %3989 = vmatprep.mubr.f32.mxu0 0.0
      %3990 = vmatmul.mubr.f32.gmra.mxu0 %v3832
      %v3991 = vpop.f32.mrf.mxu0
      %v3992 = vadd.f32 0.0, %v3991
      %v3993 = vpop.f32.mrf.mxu0
      %3994 = vdwg.mxu0
      %v3995 = vadd.f32 %v3801, %v3917
      %v3996 = vadd.f32 %v3802, %v3922
      %v3997 = vadd.f32 %v3803, %v3927
      %v3998 = vadd.f32 %v3804, %v3932
      %v3999 = vadd.f32 %v3805, %v3937
      %v4000 = vadd.f32 %v3806, %v3942
      %v4001 = vadd.f32 %v3807, %v3947
      %v4002 = vadd.f32 %v3808, %v3952
      %v4003 = vadd.f32 %v3809, %v3957
      %v4004 = vadd.f32 %v3810, %v3962
      %v4005 = vadd.f32 %v3811, %v3967
      %v4006 = vadd.f32 %v3812, %v3972
      %v4007 = vadd.f32 %v3813, %v3977
      %v4008 = vadd.f32 %v3814, %v3982
      %v4009 = vadd.f32 %v3815, %v3987
      %v4010 = vadd.f32 %v3816, %v3992
      %s4011 = scalar_lea.vmem [#allocation3], 64
      %v4012 = vld [vmem:[%s4011 + $0x7] sm:$0xff]
      %v4013 = vld [vmem:[%s4011 + $0xf] sm:$0xff]
      %v4014 = vld [vmem:[%s4011 + $0x27] sm:$0xff]
      %v4015 = vld [vmem:[%s4011 + $0x2f] sm:$0xff]
      %v4016 = vld [vmem:[%s4011 + $0x47] sm:$0xff]
      %v4017 = vld [vmem:[%s4011 + $0x4f] sm:$0xff]
      %v4018 = vld [vmem:[%s4011 + $0x67] sm:$0xff]
      %v4019 = vld [vmem:[%s4011 + $0x6f] sm:$0xff]
      %v4020 = vld [vmem:[%s4011 + $0x87] sm:$0xff]
      %v4021 = vld [vmem:[%s4011 + $0x8f] sm:$0xff]
      %v4022 = vld [vmem:[%s4011 + $0xa7] sm:$0xff]
      %v4023 = vld [vmem:[%s4011 + $0xaf] sm:$0xff]
      %v4024 = vld [vmem:[%s4011 + $0xc7] sm:$0xff]
      %v4025 = vld [vmem:[%s4011 + $0xcf] sm:$0xff]
      %v4026 = vld [vmem:[%s4011 + $0xe7] sm:$0xff]
      %v4027 = vld [vmem:[%s4011 + $0xef] sm:$0xff]
      %s4028 = scalar_lea.vmem %s3, 768
      %v4029 = vld [vmem:[%s4028] sm:$0xff]
      %v4030 = vld [vmem:[%s4028 + $0x8] sm:$0xff]
      %v4031 = vld [vmem:[%s4028 + $0x10] sm:$0xff]
      %v4032 = vld [vmem:[%s4028 + $0x18] sm:$0xff]
      %v4033 = vld [vmem:[%s4028 + $0x20] sm:$0xff]
      %v4034 = vld [vmem:[%s4028 + $0x28] sm:$0xff]
      %v4035 = vld [vmem:[%s4028 + $0x30] sm:$0xff]
      %v4036 = vld [vmem:[%s4028 + $0x38] sm:$0xff]
      %v4037 = vld [vmem:[%s4028 + $0x40] sm:$0xff]
      %v4038 = vld [vmem:[%s4028 + $0x48] sm:$0xff]
      %v4039 = vld [vmem:[%s4028 + $0x50] sm:$0xff]
      %v4040 = vld [vmem:[%s4028 + $0x58] sm:$0xff]
      %v4041 = vld [vmem:[%s4028 + $0x60] sm:$0xff]
      %v4042 = vld [vmem:[%s4028 + $0x68] sm:$0xff]
      %v4043 = vld [vmem:[%s4028 + $0x70] sm:$0xff]
      %v4044 = vld [vmem:[%s4028 + $0x78] sm:$0xff]
      %4045 = vmatprep.subr.mxu0 0.0
      %4046 = vmatpush1.msra.mxu0 %v4044
      %4047 = vmatprep.subr.mxu0 0.0
      %4048 = vmatpush1.msra.mxu0 %v4043
      %4049 = vmatprep.subr.mxu0 0.0
      %4050 = vmatpush1.msra.mxu0 %v4042
      %4051 = vmatprep.subr.mxu0 0.0
      %4052 = vmatpush1.msra.mxu0 %v4041
      %4053 = vmatprep.subr.mxu0 0.0
      %4054 = vmatpush1.msra.mxu0 %v4040
      %4055 = vmatprep.subr.mxu0 0.0
      %4056 = vmatpush1.msra.mxu0 %v4039
      %4057 = vmatprep.subr.mxu0 0.0
      %4058 = vmatpush1.msra.mxu0 %v4038
      %4059 = vmatprep.subr.mxu0 0.0
      %4060 = vmatpush1.msra.mxu0 %v4037
      %4061 = vmatprep.subr.mxu0 0.0
      %4062 = vmatpush1.msra.mxu0 %v4036
      %4063 = vmatprep.subr.mxu0 0.0
      %4064 = vmatpush1.msra.mxu0 %v4035
      %4065 = vmatprep.subr.mxu0 0.0
      %4066 = vmatpush1.msra.mxu0 %v4034
      %4067 = vmatprep.subr.mxu0 0.0
      %4068 = vmatpush1.msra.mxu0 %v4033
      %4069 = vmatprep.subr.mxu0 0.0
      %4070 = vmatpush1.msra.mxu0 %v4032
      %4071 = vmatprep.subr.mxu0 0.0
      %4072 = vmatpush1.msra.mxu0 %v4031
      %4073 = vmatprep.subr.mxu0 0.0
      %4074 = vmatpush1.msra.mxu0 %v4030
      %4075 = vmatprep.subr.mxu0 0.0
      %4076 = vmatpush1.msra.mxu0 %v4029
      %4077 = vmatprep.subr.mxu0 0.0
      %4078 = vmatpush2.msra.mxu0 0.0
      %4079 = vmatprep.subr.mxu0 0.0
      %4080 = vmatpush2.msra.mxu0 0.0
      %4081 = vmatprep.subr.mxu0 0.0
      %4082 = vmatpush2.msra.mxu0 0.0
      %4083 = vmatprep.subr.mxu0 0.0
      %4084 = vmatpush2.msra.mxu0 0.0
      %4085 = vmatprep.subr.mxu0 0.0
      %4086 = vmatpush2.msra.mxu0 0.0
      %4087 = vmatprep.subr.mxu0 0.0
      %4088 = vmatpush2.msra.mxu0 0.0
      %4089 = vmatprep.subr.mxu0 0.0
      %4090 = vmatpush2.msra.mxu0 0.0
      %4091 = vmatprep.subr.mxu0 0.0
      %4092 = vmatpush2.msra.mxu0 0.0
      %4093 = vmatprep.subr.mxu0 0.0
      %4094 = vmatpush2.msra.mxu0 0.0
      %4095 = vmatprep.subr.mxu0 0.0
      %4096 = vmatpush2.msra.mxu0 0.0
      %4097 = vmatprep.subr.mxu0 0.0
      %4098 = vmatpush2.msra.mxu0 0.0
      %4099 = vmatprep.subr.mxu0 0.0
      %4100 = vmatpush2.msra.mxu0 0.0
      %4101 = vmatprep.subr.mxu0 0.0
      %4102 = vmatpush2.msra.mxu0 0.0
      %4103 = vmatprep.subr.mxu0 0.0
      %4104 = vmatpush2.msra.mxu0 0.0
      %4105 = vmatprep.subr.mxu0 0.0
      %4106 = vmatpush2.msra.mxu0 0.0
      %4107 = vmatprep.subr.mxu0 0.0
      %4108 = vmatpush2.msra.mxu0 0.0
      %4109 = vmatprep.mubr.f32.mxu0 0.0
      %4110 = vmatmul.mubr.f32.gmra.mxu0 %v4012
      %v4111 = vpop.f32.mrf.mxu0
      %v4112 = vadd.f32 0.0, %v4111
      %v4113 = vpop.f32.mrf.mxu0
      %4114 = vmatprep.mubr.f32.mxu0 0.0
      %4115 = vmatmul.mubr.f32.gmra.mxu0 %v4013
      %v4116 = vpop.f32.mrf.mxu0
      %v4117 = vadd.f32 0.0, %v4116
      %v4118 = vpop.f32.mrf.mxu0
      %4119 = vmatprep.mubr.f32.mxu0 0.0
      %4120 = vmatmul.mubr.f32.gmra.mxu0 %v4014
      %v4121 = vpop.f32.mrf.mxu0
      %v4122 = vadd.f32 0.0, %v4121
      %v4123 = vpop.f32.mrf.mxu0
      %4124 = vmatprep.mubr.f32.mxu0 0.0
      %4125 = vmatmul.mubr.f32.gmra.mxu0 %v4015
      %v4126 = vpop.f32.mrf.mxu0
      %v4127 = vadd.f32 0.0, %v4126
      %v4128 = vpop.f32.mrf.mxu0
      %4129 = vmatprep.mubr.f32.mxu0 0.0
      %4130 = vmatmul.mubr.f32.gmra.mxu0 %v4016
      %v4131 = vpop.f32.mrf.mxu0
      %v4132 = vadd.f32 0.0, %v4131
      %v4133 = vpop.f32.mrf.mxu0
      %4134 = vmatprep.mubr.f32.mxu0 0.0
      %4135 = vmatmul.mubr.f32.gmra.mxu0 %v4017
      %v4136 = vpop.f32.mrf.mxu0
      %v4137 = vadd.f32 0.0, %v4136
      %v4138 = vpop.f32.mrf.mxu0
      %4139 = vmatprep.mubr.f32.mxu0 0.0
      %4140 = vmatmul.mubr.f32.gmra.mxu0 %v4018
      %v4141 = vpop.f32.mrf.mxu0
      %v4142 = vadd.f32 0.0, %v4141
      %v4143 = vpop.f32.mrf.mxu0
      %4144 = vmatprep.mubr.f32.mxu0 0.0
      %4145 = vmatmul.mubr.f32.gmra.mxu0 %v4019
      %v4146 = vpop.f32.mrf.mxu0
      %v4147 = vadd.f32 0.0, %v4146
      %v4148 = vpop.f32.mrf.mxu0
      %4149 = vmatprep.mubr.f32.mxu0 0.0
      %4150 = vmatmul.mubr.f32.gmra.mxu0 %v4020
      %v4151 = vpop.f32.mrf.mxu0
      %v4152 = vadd.f32 0.0, %v4151
      %v4153 = vpop.f32.mrf.mxu0
      %4154 = vmatprep.mubr.f32.mxu0 0.0
      %4155 = vmatmul.mubr.f32.gmra.mxu0 %v4021
      %v4156 = vpop.f32.mrf.mxu0
      %v4157 = vadd.f32 0.0, %v4156
      %v4158 = vpop.f32.mrf.mxu0
      %4159 = vmatprep.mubr.f32.mxu0 0.0
      %4160 = vmatmul.mubr.f32.gmra.mxu0 %v4022
      %v4161 = vpop.f32.mrf.mxu0
      %v4162 = vadd.f32 0.0, %v4161
      %v4163 = vpop.f32.mrf.mxu0
      %4164 = vmatprep.mubr.f32.mxu0 0.0
      %4165 = vmatmul.mubr.f32.gmra.mxu0 %v4023
      %v4166 = vpop.f32.mrf.mxu0
      %v4167 = vadd.f32 0.0, %v4166
      %v4168 = vpop.f32.mrf.mxu0
      %4169 = vmatprep.mubr.f32.mxu0 0.0
      %4170 = vmatmul.mubr.f32.gmra.mxu0 %v4024
      %v4171 = vpop.f32.mrf.mxu0
      %v4172 = vadd.f32 0.0, %v4171
      %v4173 = vpop.f32.mrf.mxu0
      %4174 = vmatprep.mubr.f32.mxu0 0.0
      %4175 = vmatmul.mubr.f32.gmra.mxu0 %v4025
      %v4176 = vpop.f32.mrf.mxu0
      %v4177 = vadd.f32 0.0, %v4176
      %v4178 = vpop.f32.mrf.mxu0
      %4179 = vmatprep.mubr.f32.mxu0 0.0
      %4180 = vmatmul.mubr.f32.gmra.mxu0 %v4026
      %v4181 = vpop.f32.mrf.mxu0
      %v4182 = vadd.f32 0.0, %v4181
      %v4183 = vpop.f32.mrf.mxu0
      %4184 = vmatprep.mubr.f32.mxu0 0.0
      %4185 = vmatmul.mubr.f32.gmra.mxu0 %v4027
      %v4186 = vpop.f32.mrf.mxu0
      %v4187 = vadd.f32 0.0, %v4186
      %v4188 = vpop.f32.mrf.mxu0
      %4189 = vdwg.mxu0
      %v4190 = vadd.f32 %v3995, %v4112
      %v4191 = vadd.f32 %v3996, %v4117
      %v4192 = vadd.f32 %v3997, %v4122
      %v4193 = vadd.f32 %v3998, %v4127
      %v4194 = vadd.f32 %v3999, %v4132
      %v4195 = vadd.f32 %v4000, %v4137
      %v4196 = vadd.f32 %v4001, %v4142
      %v4197 = vadd.f32 %v4002, %v4147
      %v4198 = vadd.f32 %v4003, %v4152
      %v4199 = vadd.f32 %v4004, %v4157
      %v4200 = vadd.f32 %v4005, %v4162
      %v4201 = vadd.f32 %v4006, %v4167
      %v4202 = vadd.f32 %v4007, %v4172
      %v4203 = vadd.f32 %v4008, %v4177
      %v4204 = vadd.f32 %v4009, %v4182
      %v4205 = vadd.f32 %v4010, %v4187
      %v4206 = vld [vmem:[%s4011 + $0x8] sm:$0xff]
      %v4207 = vld [vmem:[%s4011 + $0x10] sm:$0xff]
      %v4208 = vld [vmem:[%s4011 + $0x28] sm:$0xff]
      %v4209 = vld [vmem:[%s4011 + $0x30] sm:$0xff]
      %v4210 = vld [vmem:[%s4011 + $0x48] sm:$0xff]
      %v4211 = vld [vmem:[%s4011 + $0x50] sm:$0xff]
      %v4212 = vld [vmem:[%s4011 + $0x68] sm:$0xff]
      %v4213 = vld [vmem:[%s4011 + $0x70] sm:$0xff]
      %v4214 = vld [vmem:[%s4011 + $0x88] sm:$0xff]
      %v4215 = vld [vmem:[%s4011 + $0x90] sm:$0xff]
      %v4216 = vld [vmem:[%s4011 + $0xa8] sm:$0xff]
      %v4217 = vld [vmem:[%s4011 + $0xb0] sm:$0xff]
      %v4218 = vld [vmem:[%s4011 + $0xc8] sm:$0xff]
      %v4219 = vld [vmem:[%s4011 + $0xd0] sm:$0xff]
      %v4220 = vld [vmem:[%s4011 + $0xe8] sm:$0xff]
      %v4221 = vld [vmem:[%s4011 + $0xf0] sm:$0xff]
      %s4222 = scalar_lea.vmem %s3, 896
      %v4223 = vld [vmem:[%s4222] sm:$0xff]
      %v4224 = vld [vmem:[%s4222 + $0x8] sm:$0xff]
      %v4225 = vld [vmem:[%s4222 + $0x10] sm:$0xff]
      %v4226 = vld [vmem:[%s4222 + $0x18] sm:$0xff]
      %v4227 = vld [vmem:[%s4222 + $0x20] sm:$0xff]
      %v4228 = vld [vmem:[%s4222 + $0x28] sm:$0xff]
      %v4229 = vld [vmem:[%s4222 + $0x30] sm:$0xff]
      %v4230 = vld [vmem:[%s4222 + $0x38] sm:$0xff]
      %v4231 = vld [vmem:[%s4222 + $0x40] sm:$0xff]
      %v4232 = vld [vmem:[%s4222 + $0x48] sm:$0xff]
      %v4233 = vld [vmem:[%s4222 + $0x50] sm:$0xff]
      %v4234 = vld [vmem:[%s4222 + $0x58] sm:$0xff]
      %v4235 = vld [vmem:[%s4222 + $0x60] sm:$0xff]
      %v4236 = vld [vmem:[%s4222 + $0x68] sm:$0xff]
      %v4237 = vld [vmem:[%s4222 + $0x70] sm:$0xff]
      %v4238 = vld [vmem:[%s4222 + $0x78] sm:$0xff]
      %4239 = vmatprep.subr.mxu0 0.0
      %4240 = vmatpush1.msra.mxu0 %v4238
      %4241 = vmatprep.subr.mxu0 0.0
      %4242 = vmatpush1.msra.mxu0 %v4237
      %4243 = vmatprep.subr.mxu0 0.0
      %4244 = vmatpush1.msra.mxu0 %v4236
      %4245 = vmatprep.subr.mxu0 0.0
      %4246 = vmatpush1.msra.mxu0 %v4235
      %4247 = vmatprep.subr.mxu0 0.0
      %4248 = vmatpush1.msra.mxu0 %v4234
      %4249 = vmatprep.subr.mxu0 0.0
      %4250 = vmatpush1.msra.mxu0 %v4233
      %4251 = vmatprep.subr.mxu0 0.0
      %4252 = vmatpush1.msra.mxu0 %v4232
      %4253 = vmatprep.subr.mxu0 0.0
      %4254 = vmatpush1.msra.mxu0 %v4231
      %4255 = vmatprep.subr.mxu0 0.0
      %4256 = vmatpush1.msra.mxu0 %v4230
      %4257 = vmatprep.subr.mxu0 0.0
      %4258 = vmatpush1.msra.mxu0 %v4229
      %4259 = vmatprep.subr.mxu0 0.0
      %4260 = vmatpush1.msra.mxu0 %v4228
      %4261 = vmatprep.subr.mxu0 0.0
      %4262 = vmatpush1.msra.mxu0 %v4227
      %4263 = vmatprep.subr.mxu0 0.0
      %4264 = vmatpush1.msra.mxu0 %v4226
      %4265 = vmatprep.subr.mxu0 0.0
      %4266 = vmatpush1.msra.mxu0 %v4225
      %4267 = vmatprep.subr.mxu0 0.0
      %4268 = vmatpush1.msra.mxu0 %v4224
      %4269 = vmatprep.subr.mxu0 0.0
      %4270 = vmatpush1.msra.mxu0 %v4223
      %4271 = vmatprep.subr.mxu0 0.0
      %4272 = vmatpush2.msra.mxu0 0.0
      %4273 = vmatprep.subr.mxu0 0.0
      %4274 = vmatpush2.msra.mxu0 0.0
      %4275 = vmatprep.subr.mxu0 0.0
      %4276 = vmatpush2.msra.mxu0 0.0
      %4277 = vmatprep.subr.mxu0 0.0
      %4278 = vmatpush2.msra.mxu0 0.0
      %4279 = vmatprep.subr.mxu0 0.0
      %4280 = vmatpush2.msra.mxu0 0.0
      %4281 = vmatprep.subr.mxu0 0.0
      %4282 = vmatpush2.msra.mxu0 0.0
      %4283 = vmatprep.subr.mxu0 0.0
      %4284 = vmatpush2.msra.mxu0 0.0
      %4285 = vmatprep.subr.mxu0 0.0
      %4286 = vmatpush2.msra.mxu0 0.0
      %4287 = vmatprep.subr.mxu0 0.0
      %4288 = vmatpush2.msra.mxu0 0.0
      %4289 = vmatprep.subr.mxu0 0.0
      %4290 = vmatpush2.msra.mxu0 0.0
      %4291 = vmatprep.subr.mxu0 0.0
      %4292 = vmatpush2.msra.mxu0 0.0
      %4293 = vmatprep.subr.mxu0 0.0
      %4294 = vmatpush2.msra.mxu0 0.0
      %4295 = vmatprep.subr.mxu0 0.0
      %4296 = vmatpush2.msra.mxu0 0.0
      %4297 = vmatprep.subr.mxu0 0.0
      %4298 = vmatpush2.msra.mxu0 0.0
      %4299 = vmatprep.subr.mxu0 0.0
      %4300 = vmatpush2.msra.mxu0 0.0
      %4301 = vmatprep.subr.mxu0 0.0
      %4302 = vmatpush2.msra.mxu0 0.0
      %4303 = vmatprep.mubr.f32.mxu0 0.0
      %4304 = vmatmul.mubr.f32.gmra.mxu0 %v4206
      %v4305 = vpop.f32.mrf.mxu0
      %v4306 = vadd.f32 0.0, %v4305
      %v4307 = vpop.f32.mrf.mxu0
      %4308 = vmatprep.mubr.f32.mxu0 0.0
      %4309 = vmatmul.mubr.f32.gmra.mxu0 %v4207
      %v4310 = vpop.f32.mrf.mxu0
      %v4311 = vadd.f32 0.0, %v4310
      %v4312 = vpop.f32.mrf.mxu0
      %4313 = vmatprep.mubr.f32.mxu0 0.0
      %4314 = vmatmul.mubr.f32.gmra.mxu0 %v4208
      %v4315 = vpop.f32.mrf.mxu0
      %v4316 = vadd.f32 0.0, %v4315
      %v4317 = vpop.f32.mrf.mxu0
      %4318 = vmatprep.mubr.f32.mxu0 0.0
      %4319 = vmatmul.mubr.f32.gmra.mxu0 %v4209
      %v4320 = vpop.f32.mrf.mxu0
      %v4321 = vadd.f32 0.0, %v4320
      %v4322 = vpop.f32.mrf.mxu0
      %4323 = vmatprep.mubr.f32.mxu0 0.0
      %4324 = vmatmul.mubr.f32.gmra.mxu0 %v4210
      %v4325 = vpop.f32.mrf.mxu0
      %v4326 = vadd.f32 0.0, %v4325
      %v4327 = vpop.f32.mrf.mxu0
      %4328 = vmatprep.mubr.f32.mxu0 0.0
      %4329 = vmatmul.mubr.f32.gmra.mxu0 %v4211
      %v4330 = vpop.f32.mrf.mxu0
      %v4331 = vadd.f32 0.0, %v4330
      %v4332 = vpop.f32.mrf.mxu0
      %4333 = vmatprep.mubr.f32.mxu0 0.0
      %4334 = vmatmul.mubr.f32.gmra.mxu0 %v4212
      %v4335 = vpop.f32.mrf.mxu0
      %v4336 = vadd.f32 0.0, %v4335
      %v4337 = vpop.f32.mrf.mxu0
      %4338 = vmatprep.mubr.f32.mxu0 0.0
      %4339 = vmatmul.mubr.f32.gmra.mxu0 %v4213
      %v4340 = vpop.f32.mrf.mxu0
      %v4341 = vadd.f32 0.0, %v4340
      %v4342 = vpop.f32.mrf.mxu0
      %4343 = vmatprep.mubr.f32.mxu0 0.0
      %4344 = vmatmul.mubr.f32.gmra.mxu0 %v4214
      %v4345 = vpop.f32.mrf.mxu0
      %v4346 = vadd.f32 0.0, %v4345
      %v4347 = vpop.f32.mrf.mxu0
      %4348 = vmatprep.mubr.f32.mxu0 0.0
      %4349 = vmatmul.mubr.f32.gmra.mxu0 %v4215
      %v4350 = vpop.f32.mrf.mxu0
      %v4351 = vadd.f32 0.0, %v4350
      %v4352 = vpop.f32.mrf.mxu0
      %4353 = vmatprep.mubr.f32.mxu0 0.0
      %4354 = vmatmul.mubr.f32.gmra.mxu0 %v4216
      %v4355 = vpop.f32.mrf.mxu0
      %v4356 = vadd.f32 0.0, %v4355
      %v4357 = vpop.f32.mrf.mxu0
      %4358 = vmatprep.mubr.f32.mxu0 0.0
      %4359 = vmatmul.mubr.f32.gmra.mxu0 %v4217
      %v4360 = vpop.f32.mrf.mxu0
      %v4361 = vadd.f32 0.0, %v4360
      %v4362 = vpop.f32.mrf.mxu0
      %4363 = vmatprep.mubr.f32.mxu0 0.0
      %4364 = vmatmul.mubr.f32.gmra.mxu0 %v4218
      %v4365 = vpop.f32.mrf.mxu0
      %v4366 = vadd.f32 0.0, %v4365
      %v4367 = vpop.f32.mrf.mxu0
      %4368 = vmatprep.mubr.f32.mxu0 0.0
      %4369 = vmatmul.mubr.f32.gmra.mxu0 %v4219
      %v4370 = vpop.f32.mrf.mxu0
      %v4371 = vadd.f32 0.0, %v4370
      %v4372 = vpop.f32.mrf.mxu0
      %4373 = vmatprep.mubr.f32.mxu0 0.0
      %4374 = vmatmul.mubr.f32.gmra.mxu0 %v4220
      %v4375 = vpop.f32.mrf.mxu0
      %v4376 = vadd.f32 0.0, %v4375
      %v4377 = vpop.f32.mrf.mxu0
      %4378 = vmatprep.mubr.f32.mxu0 0.0
      %4379 = vmatmul.mubr.f32.gmra.mxu0 %v4221
      %v4380 = vpop.f32.mrf.mxu0
      %v4381 = vadd.f32 0.0, %v4380
      %v4382 = vpop.f32.mrf.mxu0
      %4383 = vdwg.mxu0
      %v4384 = vadd.f32 %v4190, %v4306
      %v4385 = vadd.f32 %v4191, %v4311
      %v4386 = vadd.f32 %v4192, %v4316
      %v4387 = vadd.f32 %v4193, %v4321
      %v4388 = vadd.f32 %v4194, %v4326
      %v4389 = vadd.f32 %v4195, %v4331
      %v4390 = vadd.f32 %v4196, %v4336
      %v4391 = vadd.f32 %v4197, %v4341
      %v4392 = vadd.f32 %v4198, %v4346
      %v4393 = vadd.f32 %v4199, %v4351
      %v4394 = vadd.f32 %v4200, %v4356
      %v4395 = vadd.f32 %v4201, %v4361
      %v4396 = vadd.f32 %v4202, %v4366
      %v4397 = vadd.f32 %v4203, %v4371
      %v4398 = vadd.f32 %v4204, %v4376
      %v4399 = vadd.f32 %v4205, %v4381
      %v4400 = vld [vmem:[%s4011 + $0x9] sm:$0xff]
      %v4401 = vld [vmem:[%s4011 + $0x11] sm:$0xff]
      %v4402 = vld [vmem:[%s4011 + $0x29] sm:$0xff]
      %v4403 = vld [vmem:[%s4011 + $0x31] sm:$0xff]
      %v4404 = vld [vmem:[%s4011 + $0x49] sm:$0xff]
      %v4405 = vld [vmem:[%s4011 + $0x51] sm:$0xff]
      %v4406 = vld [vmem:[%s4011 + $0x69] sm:$0xff]
      %v4407 = vld [vmem:[%s4011 + $0x71] sm:$0xff]
      %v4408 = vld [vmem:[%s4011 + $0x89] sm:$0xff]
      %v4409 = vld [vmem:[%s4011 + $0x91] sm:$0xff]
      %v4410 = vld [vmem:[%s4011 + $0xa9] sm:$0xff]
      %v4411 = vld [vmem:[%s4011 + $0xb1] sm:$0xff]
      %v4412 = vld [vmem:[%s4011 + $0xc9] sm:$0xff]
      %v4413 = vld [vmem:[%s4011 + $0xd1] sm:$0xff]
      %v4414 = vld [vmem:[%s4011 + $0xe9] sm:$0xff]
      %v4415 = vld [vmem:[%s4011 + $0xf1] sm:$0xff]
      %s4416 = scalar_lea.vmem %s3, 1024
      %v4417 = vld [vmem:[%s4416] sm:$0xff]
      %v4418 = vld [vmem:[%s4416 + $0x8] sm:$0xff]
      %v4419 = vld [vmem:[%s4416 + $0x10] sm:$0xff]
      %v4420 = vld [vmem:[%s4416 + $0x18] sm:$0xff]
      %v4421 = vld [vmem:[%s4416 + $0x20] sm:$0xff]
      %v4422 = vld [vmem:[%s4416 + $0x28] sm:$0xff]
      %v4423 = vld [vmem:[%s4416 + $0x30] sm:$0xff]
      %v4424 = vld [vmem:[%s4416 + $0x38] sm:$0xff]
      %v4425 = vld [vmem:[%s4416 + $0x40] sm:$0xff]
      %v4426 = vld [vmem:[%s4416 + $0x48] sm:$0xff]
      %v4427 = vld [vmem:[%s4416 + $0x50] sm:$0xff]
      %v4428 = vld [vmem:[%s4416 + $0x58] sm:$0xff]
      %v4429 = vld [vmem:[%s4416 + $0x60] sm:$0xff]
      %v4430 = vld [vmem:[%s4416 + $0x68] sm:$0xff]
      %v4431 = vld [vmem:[%s4416 + $0x70] sm:$0xff]
      %v4432 = vld [vmem:[%s4416 + $0x78] sm:$0xff]
      %4433 = vmatprep.subr.mxu0 0.0
      %4434 = vmatpush1.msra.mxu0 %v4432
      %4435 = vmatprep.subr.mxu0 0.0
      %4436 = vmatpush1.msra.mxu0 %v4431
      %4437 = vmatprep.subr.mxu0 0.0
      %4438 = vmatpush1.msra.mxu0 %v4430
      %4439 = vmatprep.subr.mxu0 0.0
      %4440 = vmatpush1.msra.mxu0 %v4429
      %4441 = vmatprep.subr.mxu0 0.0
      %4442 = vmatpush1.msra.mxu0 %v4428
      %4443 = vmatprep.subr.mxu0 0.0
      %4444 = vmatpush1.msra.mxu0 %v4427
      %4445 = vmatprep.subr.mxu0 0.0
      %4446 = vmatpush1.msra.mxu0 %v4426
      %4447 = vmatprep.subr.mxu0 0.0
      %4448 = vmatpush1.msra.mxu0 %v4425
      %4449 = vmatprep.subr.mxu0 0.0
      %4450 = vmatpush1.msra.mxu0 %v4424
      %4451 = vmatprep.subr.mxu0 0.0
      %4452 = vmatpush1.msra.mxu0 %v4423
      %4453 = vmatprep.subr.mxu0 0.0
      %4454 = vmatpush1.msra.mxu0 %v4422
      %4455 = vmatprep.subr.mxu0 0.0
      %4456 = vmatpush1.msra.mxu0 %v4421
      %4457 = vmatprep.subr.mxu0 0.0
      %4458 = vmatpush1.msra.mxu0 %v4420
      %4459 = vmatprep.subr.mxu0 0.0
      %4460 = vmatpush1.msra.mxu0 %v4419
      %4461 = vmatprep.subr.mxu0 0.0
      %4462 = vmatpush1.msra.mxu0 %v4418
      %4463 = vmatprep.subr.mxu0 0.0
      %4464 = vmatpush1.msra.mxu0 %v4417
      %4465 = vmatprep.subr.mxu0 0.0
      %4466 = vmatpush2.msra.mxu0 0.0
      %4467 = vmatprep.subr.mxu0 0.0
      %4468 = vmatpush2.msra.mxu0 0.0
      %4469 = vmatprep.subr.mxu0 0.0
      %4470 = vmatpush2.msra.mxu0 0.0
      %4471 = vmatprep.subr.mxu0 0.0
      %4472 = vmatpush2.msra.mxu0 0.0
      %4473 = vmatprep.subr.mxu0 0.0
      %4474 = vmatpush2.msra.mxu0 0.0
      %4475 = vmatprep.subr.mxu0 0.0
      %4476 = vmatpush2.msra.mxu0 0.0
      %4477 = vmatprep.subr.mxu0 0.0
      %4478 = vmatpush2.msra.mxu0 0.0
      %4479 = vmatprep.subr.mxu0 0.0
      %4480 = vmatpush2.msra.mxu0 0.0
      %4481 = vmatprep.subr.mxu0 0.0
      %4482 = vmatpush2.msra.mxu0 0.0
      %4483 = vmatprep.subr.mxu0 0.0
      %4484 = vmatpush2.msra.mxu0 0.0
      %4485 = vmatprep.subr.mxu0 0.0
      %4486 = vmatpush2.msra.mxu0 0.0
      %4487 = vmatprep.subr.mxu0 0.0
      %4488 = vmatpush2.msra.mxu0 0.0
      %4489 = vmatprep.subr.mxu0 0.0
      %4490 = vmatpush2.msra.mxu0 0.0
      %4491 = vmatprep.subr.mxu0 0.0
      %4492 = vmatpush2.msra.mxu0 0.0
      %4493 = vmatprep.subr.mxu0 0.0
      %4494 = vmatpush2.msra.mxu0 0.0
      %4495 = vmatprep.subr.mxu0 0.0
      %4496 = vmatpush2.msra.mxu0 0.0
      %4497 = vmatprep.mubr.f32.mxu0 0.0
      %4498 = vmatmul.mubr.f32.gmra.mxu0 %v4400
      %v4499 = vpop.f32.mrf.mxu0
      %v4500 = vadd.f32 0.0, %v4499
      %v4501 = vpop.f32.mrf.mxu0
      %4502 = vmatprep.mubr.f32.mxu0 0.0
      %4503 = vmatmul.mubr.f32.gmra.mxu0 %v4401
      %v4504 = vpop.f32.mrf.mxu0
      %v4505 = vadd.f32 0.0, %v4504
      %v4506 = vpop.f32.mrf.mxu0
      %4507 = vmatprep.mubr.f32.mxu0 0.0
      %4508 = vmatmul.mubr.f32.gmra.mxu0 %v4402
      %v4509 = vpop.f32.mrf.mxu0
      %v4510 = vadd.f32 0.0, %v4509
      %v4511 = vpop.f32.mrf.mxu0
      %4512 = vmatprep.mubr.f32.mxu0 0.0
      %4513 = vmatmul.mubr.f32.gmra.mxu0 %v4403
      %v4514 = vpop.f32.mrf.mxu0
      %v4515 = vadd.f32 0.0, %v4514
      %v4516 = vpop.f32.mrf.mxu0
      %4517 = vmatprep.mubr.f32.mxu0 0.0
      %4518 = vmatmul.mubr.f32.gmra.mxu0 %v4404
      %v4519 = vpop.f32.mrf.mxu0
      %v4520 = vadd.f32 0.0, %v4519
      %v4521 = vpop.f32.mrf.mxu0
      %4522 = vmatprep.mubr.f32.mxu0 0.0
      %4523 = vmatmul.mubr.f32.gmra.mxu0 %v4405
      %v4524 = vpop.f32.mrf.mxu0
      %v4525 = vadd.f32 0.0, %v4524
      %v4526 = vpop.f32.mrf.mxu0
      %4527 = vmatprep.mubr.f32.mxu0 0.0
      %4528 = vmatmul.mubr.f32.gmra.mxu0 %v4406
      %v4529 = vpop.f32.mrf.mxu0
      %v4530 = vadd.f32 0.0, %v4529
      %v4531 = vpop.f32.mrf.mxu0
      %4532 = vmatprep.mubr.f32.mxu0 0.0
      %4533 = vmatmul.mubr.f32.gmra.mxu0 %v4407
      %v4534 = vpop.f32.mrf.mxu0
      %v4535 = vadd.f32 0.0, %v4534
      %v4536 = vpop.f32.mrf.mxu0
      %4537 = vmatprep.mubr.f32.mxu0 0.0
      %4538 = vmatmul.mubr.f32.gmra.mxu0 %v4408
      %v4539 = vpop.f32.mrf.mxu0
      %v4540 = vadd.f32 0.0, %v4539
      %v4541 = vpop.f32.mrf.mxu0
      %4542 = vmatprep.mubr.f32.mxu0 0.0
      %4543 = vmatmul.mubr.f32.gmra.mxu0 %v4409
      %v4544 = vpop.f32.mrf.mxu0
      %v4545 = vadd.f32 0.0, %v4544
      %v4546 = vpop.f32.mrf.mxu0
      %4547 = vmatprep.mubr.f32.mxu0 0.0
      %4548 = vmatmul.mubr.f32.gmra.mxu0 %v4410
      %v4549 = vpop.f32.mrf.mxu0
      %v4550 = vadd.f32 0.0, %v4549
      %v4551 = vpop.f32.mrf.mxu0
      %4552 = vmatprep.mubr.f32.mxu0 0.0
      %4553 = vmatmul.mubr.f32.gmra.mxu0 %v4411
      %v4554 = vpop.f32.mrf.mxu0
      %v4555 = vadd.f32 0.0, %v4554
      %v4556 = vpop.f32.mrf.mxu0
      %4557 = vmatprep.mubr.f32.mxu0 0.0
      %4558 = vmatmul.mubr.f32.gmra.mxu0 %v4412
      %v4559 = vpop.f32.mrf.mxu0
      %v4560 = vadd.f32 0.0, %v4559
      %v4561 = vpop.f32.mrf.mxu0
      %4562 = vmatprep.mubr.f32.mxu0 0.0
      %4563 = vmatmul.mubr.f32.gmra.mxu0 %v4413
      %v4564 = vpop.f32.mrf.mxu0
      %v4565 = vadd.f32 0.0, %v4564
      %v4566 = vpop.f32.mrf.mxu0
      %4567 = vmatprep.mubr.f32.mxu0 0.0
      %4568 = vmatmul.mubr.f32.gmra.mxu0 %v4414
      %v4569 = vpop.f32.mrf.mxu0
      %v4570 = vadd.f32 0.0, %v4569
      %v4571 = vpop.f32.mrf.mxu0
      %4572 = vmatprep.mubr.f32.mxu0 0.0
      %4573 = vmatmul.mubr.f32.gmra.mxu0 %v4415
      %v4574 = vpop.f32.mrf.mxu0
      %v4575 = vadd.f32 0.0, %v4574
      %v4576 = vpop.f32.mrf.mxu0
      %4577 = vdwg.mxu0
      %v4578 = vadd.f32 %v4384, %v4500
      %v4579 = vadd.f32 %v4385, %v4505
      %v4580 = vadd.f32 %v4386, %v4510
      %v4581 = vadd.f32 %v4387, %v4515
      %v4582 = vadd.f32 %v4388, %v4520
      %v4583 = vadd.f32 %v4389, %v4525
      %v4584 = vadd.f32 %v4390, %v4530
      %v4585 = vadd.f32 %v4391, %v4535
      %v4586 = vadd.f32 %v4392, %v4540
      %v4587 = vadd.f32 %v4393, %v4545
      %v4588 = vadd.f32 %v4394, %v4550
      %v4589 = vadd.f32 %v4395, %v4555
      %v4590 = vadd.f32 %v4396, %v4560
      %v4591 = vadd.f32 %v4397, %v4565
      %v4592 = vadd.f32 %v4398, %v4570
      %v4593 = vadd.f32 %v4399, %v4575
      %v4594 = vld [vmem:[%s4] sm:$0x1]
      %v4596 = vlaneseq
      %v4597 = vshrl.u32 %v4596, 7
      %v4598 = vsub.s32 0, %v4597
      %v4599 = vrot.slane %v4594, %v4598
      %v4601 = vadd.f32 %v4578, %v4599
      %v4602 = vadd.f32 %v4579, %v4599
      %v4603 = vadd.f32 %v4580, %v4599
      %v4604 = vadd.f32 %v4581, %v4599
      %v4605 = vadd.f32 %v4582, %v4599
      %v4606 = vadd.f32 %v4583, %v4599
      %v4607 = vadd.f32 %v4584, %v4599
      %v4608 = vadd.f32 %v4585, %v4599
      %v4609 = vadd.f32 %v4586, %v4599
      %v4610 = vadd.f32 %v4587, %v4599
      %v4611 = vadd.f32 %v4588, %v4599
      %v4612 = vadd.f32 %v4589, %v4599
      %v4613 = vadd.f32 %v4590, %v4599
      %v4614 = vadd.f32 %v4591, %v4599
      %v4615 = vadd.f32 %v4592, %v4599
      %v4616 = vadd.f32 %v4593, %v4599
      %v4617 = vmax.f32 %v4601, 0.0
      %v4618 = vmax.f32 %v4602, 0.0
      %v4619 = vmax.f32 %v4603, 0.0
      %v4620 = vmax.f32 %v4604, 0.0
      %v4621 = vmax.f32 %v4605, 0.0
      %v4622 = vmax.f32 %v4606, 0.0
      %v4623 = vmax.f32 %v4607, 0.0
      %v4624 = vmax.f32 %v4608, 0.0
      %v4625 = vmax.f32 %v4609, 0.0
      %v4626 = vmax.f32 %v4610, 0.0
      %v4627 = vmax.f32 %v4611, 0.0
      %v4628 = vmax.f32 %v4612, 0.0
      %v4629 = vmax.f32 %v4613, 0.0
      %v4630 = vmax.f32 %v4614, 0.0
      %v4631 = vmax.f32 %v4615, 0.0
      %v4632 = vmax.f32 %v4616, 0.0
      %4635 = vrot.lane.b32.xlu0 %v4621, 16
      %v4636 = vpop.permute.xlu0 %4635
      %4637 = vrot.lane.b32.xlu0 %v4622, 16
      %v4638 = vpop.permute.xlu0 %4637
      %4643 = vrot.lane.b32.xlu0 %v4625, 32
      %v4644 = vpop.permute.xlu0 %4643
      %4645 = vrot.lane.b32.xlu0 %v4626, 32
      %v4646 = vpop.permute.xlu0 %4645
      %4651 = vrot.lane.b32.xlu0 %v4629, 48
      %v4652 = vpop.permute.xlu0 %4651
      %4653 = vrot.lane.b32.xlu0 %v4630, 48
      %v4654 = vpop.permute.xlu0 %4653
      %vm4657 = vcmask 130048
      %v4658 = vsel %vm4657, %v4617, %v4636
      %v4659 = vsel %vm4657, %v4618, %v4638
      %vm4660 = vcmask 261120
      %v4661 = vsel %vm4660, %v4658, %v4644
      %v4662 = vsel %vm4660, %v4659, %v4646
      %vm4663 = vcmask 392192
      %v4664 = vsel %vm4663, %v4661, %v4652
      %v4665 = vsel %vm4663, %v4662, %v4654
      %4666 = vst.msk [vmem:[%s677 + $0x8] sm:$0xff] %vm668, %v4664
      %4667 = vst.msk [vmem:[%s677 + $0x10] sm:$0xff] %vm668, %v4665
      %4670 = vrot.lane.b32.xlu0 %v4617, 112
      %v4671 = vpop.permute.xlu0 %4670
      %4672 = vrot.lane.b32.xlu0 %v4618, 112
      %v4673 = vpop.permute.xlu0 %4672
      %4676 = vrot.lane.b32.xlu0 %v4625, 16
      %v4677 = vpop.permute.xlu0 %4676
      %4678 = vrot.lane.b32.xlu0 %v4626, 16
      %v4679 = vpop.permute.xlu0 %4678
      %4682 = vrot.lane.b32.xlu0 %v4629, 32
      %v4683 = vpop.permute.xlu0 %4682
      %4684 = vrot.lane.b32.xlu0 %v4630, 32
      %v4685 = vpop.permute.xlu0 %4684
      %v4688 = vsel %vm4657, %v4671, %v4621
      %v4689 = vsel %vm4657, %v4673, %v4622
      %v4690 = vsel %vm4660, %v4688, %v4677
      %v4691 = vsel %vm4660, %v4689, %v4679
      %v4692 = vsel %vm4663, %v4690, %v4683
      %v4693 = vsel %vm4663, %v4691, %v4685
      %4694 = vst.msk [vmem:[%s2122 + $0x8] sm:$0xff] %vm668, %v4692
      %4695 = vst.msk [vmem:[%s2122 + $0x10] sm:$0xff] %vm668, %v4693
      %4696 = vrot.lane.b32.xlu0 %v4617, 96
      %v4697 = vpop.permute.xlu0 %4696
      %4698 = vrot.lane.b32.xlu0 %v4618, 96
      %v4699 = vpop.permute.xlu0 %4698
      %4702 = vrot.lane.b32.xlu0 %v4621, 112
      %v4703 = vpop.permute.xlu0 %4702
      %4704 = vrot.lane.b32.xlu0 %v4622, 112
      %v4705 = vpop.permute.xlu0 %4704
      %4708 = vrot.lane.b32.xlu0 %v4629, 16
      %v4709 = vpop.permute.xlu0 %4708
      %4710 = vrot.lane.b32.xlu0 %v4630, 16
      %v4711 = vpop.permute.xlu0 %4710
      %v4714 = vsel %vm4657, %v4697, %v4703
      %v4715 = vsel %vm4657, %v4699, %v4705
      %v4716 = vsel %vm4660, %v4714, %v4625
      %v4717 = vsel %vm4660, %v4715, %v4626
      %v4718 = vsel %vm4663, %v4716, %v4709
      %v4719 = vsel %vm4663, %v4717, %v4711
      %s4720 = scalar_lea.vmem [#allocation2], 96
      %4721 = vst.msk [vmem:[%s4720 + $0x8] sm:$0xff] %vm668, %v4718
      %4722 = vst.msk [vmem:[%s4720 + $0x10] sm:$0xff] %vm668, %v4719
      %4723 = vrot.lane.b32.xlu0 %v4617, 80
      %v4724 = vpop.permute.xlu0 %4723
      %4725 = vrot.lane.b32.xlu0 %v4618, 80
      %v4726 = vpop.permute.xlu0 %4725
      %4729 = vrot.lane.b32.xlu0 %v4621, 96
      %v4730 = vpop.permute.xlu0 %4729
      %4731 = vrot.lane.b32.xlu0 %v4622, 96
      %v4732 = vpop.permute.xlu0 %4731
      %4735 = vrot.lane.b32.xlu0 %v4625, 112
      %v4736 = vpop.permute.xlu0 %4735
      %4737 = vrot.lane.b32.xlu0 %v4626, 112
      %v4738 = vpop.permute.xlu0 %4737
      %v4741 = vsel %vm4657, %v4724, %v4730
      %v4742 = vsel %vm4657, %v4726, %v4732
      %v4743 = vsel %vm4660, %v4741, %v4736
      %v4744 = vsel %vm4660, %v4742, %v4738
      %v4745 = vsel %vm4663, %v4743, %v4629
      %v4746 = vsel %vm4663, %v4744, %v4630
      %s4747 = scalar_lea.vmem [#allocation2], 128
      %4748 = vst.msk [vmem:[%s4747 + $0x8] sm:$0xff] %vm668, %v4745
      %4749 = vst.msk [vmem:[%s4747 + $0x10] sm:$0xff] %vm668, %v4746
      %4752 = vrot.lane.b32.xlu0 %v4623, 16
      %v4753 = vpop.permute.xlu0 %4752
      %4754 = vrot.lane.b32.xlu0 %v4624, 16
      %v4755 = vpop.permute.xlu0 %4754
      %4760 = vrot.lane.b32.xlu0 %v4627, 32
      %v4761 = vpop.permute.xlu0 %4760
      %4762 = vrot.lane.b32.xlu0 %v4628, 32
      %v4763 = vpop.permute.xlu0 %4762
      %4768 = vrot.lane.b32.xlu0 %v4631, 48
      %v4769 = vpop.permute.xlu0 %4768
      %4770 = vrot.lane.b32.xlu0 %v4632, 48
      %v4771 = vpop.permute.xlu0 %4770
      %v4774 = vsel %vm4657, %v4619, %v4753
      %v4775 = vsel %vm4657, %v4620, %v4755
      %v4776 = vsel %vm4660, %v4774, %v4761
      %v4777 = vsel %vm4660, %v4775, %v4763
      %v4778 = vsel %vm4663, %v4776, %v4769
      %v4779 = vsel %vm4663, %v4777, %v4771
      %s4780 = scalar_lea.vmem [#allocation2], 160
      %4781 = vst.msk [vmem:[%s4780 + $0x8] sm:$0xff] %vm668, %v4778
      %4782 = vst.msk [vmem:[%s4780 + $0x10] sm:$0xff] %vm668, %v4779
      %4785 = vrot.lane.b32.xlu0 %v4619, 112
      %v4786 = vpop.permute.xlu0 %4785
      %4787 = vrot.lane.b32.xlu0 %v4620, 112
      %v4788 = vpop.permute.xlu0 %4787
      %4791 = vrot.lane.b32.xlu0 %v4627, 16
      %v4792 = vpop.permute.xlu0 %4791
      %4793 = vrot.lane.b32.xlu0 %v4628, 16
      %v4794 = vpop.permute.xlu0 %4793
      %4797 = vrot.lane.b32.xlu0 %v4631, 32
      %v4798 = vpop.permute.xlu0 %4797
      %4799 = vrot.lane.b32.xlu0 %v4632, 32
      %v4800 = vpop.permute.xlu0 %4799
      %v4803 = vsel %vm4657, %v4786, %v4623
      %v4804 = vsel %vm4657, %v4788, %v4624
      %v4805 = vsel %vm4660, %v4803, %v4792
      %v4806 = vsel %vm4660, %v4804, %v4794
      %v4807 = vsel %vm4663, %v4805, %v4798
      %v4808 = vsel %vm4663, %v4806, %v4800
      %s4809 = scalar_lea.vmem [#allocation2], 192
      %4810 = vst.msk [vmem:[%s4809 + $0x8] sm:$0xff] %vm668, %v4807
      %4811 = vst.msk [vmem:[%s4809 + $0x10] sm:$0xff] %vm668, %v4808
      %4812 = vrot.lane.b32.xlu0 %v4619, 96
      %v4813 = vpop.permute.xlu0 %4812
      %4814 = vrot.lane.b32.xlu0 %v4620, 96
      %v4815 = vpop.permute.xlu0 %4814
      %4818 = vrot.lane.b32.xlu0 %v4623, 112
      %v4819 = vpop.permute.xlu0 %4818
      %4820 = vrot.lane.b32.xlu0 %v4624, 112
      %v4821 = vpop.permute.xlu0 %4820
      %4824 = vrot.lane.b32.xlu0 %v4631, 16
      %v4825 = vpop.permute.xlu0 %4824
      %4826 = vrot.lane.b32.xlu0 %v4632, 16
      %v4827 = vpop.permute.xlu0 %4826
      %v4830 = vsel %vm4657, %v4813, %v4819
      %v4831 = vsel %vm4657, %v4815, %v4821
      %v4832 = vsel %vm4660, %v4830, %v4627
      %v4833 = vsel %vm4660, %v4831, %v4628
      %v4834 = vsel %vm4663, %v4832, %v4825
      %v4835 = vsel %vm4663, %v4833, %v4827
      %s4836 = scalar_lea.vmem [#allocation2], 224
      %4837 = vst.msk [vmem:[%s4836 + $0x8] sm:$0xff] %vm668, %v4834
      %4838 = vst.msk [vmem:[%s4836 + $0x10] sm:$0xff] %vm668, %v4835
      %4839 = vrot.lane.b32.xlu0 %v4619, 80
      %v4840 = vpop.permute.xlu0 %4839
      %4841 = vrot.lane.b32.xlu0 %v4620, 80
      %v4842 = vpop.permute.xlu0 %4841
      %4845 = vrot.lane.b32.xlu0 %v4623, 96
      %v4846 = vpop.permute.xlu0 %4845
      %4847 = vrot.lane.b32.xlu0 %v4624, 96
      %v4848 = vpop.permute.xlu0 %4847
      %4851 = vrot.lane.b32.xlu0 %v4627, 112
      %v4852 = vpop.permute.xlu0 %4851
      %4853 = vrot.lane.b32.xlu0 %v4628, 112
      %v4854 = vpop.permute.xlu0 %4853
      %v4857 = vsel %vm4657, %v4840, %v4846
      %v4858 = vsel %vm4657, %v4842, %v4848
      %v4859 = vsel %vm4660, %v4857, %v4852
      %v4860 = vsel %vm4660, %v4858, %v4854
      %v4861 = vsel %vm4663, %v4859, %v4631
      %v4862 = vsel %vm4663, %v4860, %v4632
      %s4863 = scalar_lea.vmem [#allocation2], 256
      %4864 = vst.msk [vmem:[%s4863 + $0x8] sm:$0xff] %vm668, %v4861
      %4865 = vst.msk [vmem:[%s4863 + $0x10] sm:$0xff] %vm668, %v4862
      %v4866 = vld [vmem:[#allocation2 + $0x7] sm:$0xff]
      %v4867 = vld [vmem:[#allocation2 + $0xf] sm:$0xff]
      %v4868 = vld [vmem:[#allocation2 + $0x27] sm:$0xff]
      %v4869 = vld [vmem:[#allocation2 + $0x2f] sm:$0xff]
      %v4870 = vld [vmem:[#allocation2 + $0x47] sm:$0xff]
      %v4871 = vld [vmem:[#allocation2 + $0x4f] sm:$0xff]
      %v4872 = vld [vmem:[#allocation2 + $0x67] sm:$0xff]
      %v4873 = vld [vmem:[#allocation2 + $0x6f] sm:$0xff]
      %v4874 = vld [vmem:[#allocation2 + $0x87] sm:$0xff]
      %v4875 = vld [vmem:[#allocation2 + $0x8f] sm:$0xff]
      %v4876 = vld [vmem:[#allocation2 + $0xa7] sm:$0xff]
      %v4877 = vld [vmem:[#allocation2 + $0xaf] sm:$0xff]
      %v4878 = vld [vmem:[#allocation2 + $0xc7] sm:$0xff]
      %v4879 = vld [vmem:[#allocation2 + $0xcf] sm:$0xff]
      %v4880 = vld [vmem:[#allocation2 + $0xe7] sm:$0xff]
      %v4881 = vld [vmem:[#allocation2 + $0xef] sm:$0xff]
      %v4882 = vld [vmem:[%s5] sm:$0xff]
      %v4883 = vld [vmem:[%s5 + $0x8] sm:$0xff]
      %v4884 = vld [vmem:[%s5 + $0x10] sm:$0xff]
      %v4885 = vld [vmem:[%s5 + $0x18] sm:$0xff]
      %v4886 = vld [vmem:[%s5 + $0x20] sm:$0xff]
      %v4887 = vld [vmem:[%s5 + $0x28] sm:$0xff]
      %v4888 = vld [vmem:[%s5 + $0x30] sm:$0xff]
      %v4889 = vld [vmem:[%s5 + $0x38] sm:$0xff]
      %v4890 = vld [vmem:[#allocation2 + $0x8] sm:$0xff]
      %v4891 = vld [vmem:[#allocation2 + $0x10] sm:$0xff]
      %v4892 = vld [vmem:[#allocation2 + $0x28] sm:$0xff]
      %v4893 = vld [vmem:[#allocation2 + $0x30] sm:$0xff]
      %v4894 = vld [vmem:[#allocation2 + $0x48] sm:$0xff]
      %v4895 = vld [vmem:[#allocation2 + $0x50] sm:$0xff]
      %v4896 = vld [vmem:[#allocation2 + $0x68] sm:$0xff]
      %v4897 = vld [vmem:[#allocation2 + $0x70] sm:$0xff]
      %v4898 = vld [vmem:[#allocation2 + $0x88] sm:$0xff]
      %v4899 = vld [vmem:[#allocation2 + $0x90] sm:$0xff]
      %v4900 = vld [vmem:[#allocation2 + $0xa8] sm:$0xff]
      %v4901 = vld [vmem:[#allocation2 + $0xb0] sm:$0xff]
      %v4902 = vld [vmem:[#allocation2 + $0xc8] sm:$0xff]
      %v4903 = vld [vmem:[#allocation2 + $0xd0] sm:$0xff]
      %v4904 = vld [vmem:[#allocation2 + $0xe8] sm:$0xff]
      %v4905 = vld [vmem:[#allocation2 + $0xf0] sm:$0xff]
      %s4906 = scalar_lea.vmem %s5, 64
      %v4907 = vld [vmem:[%s4906] sm:$0xff]
      %v4908 = vld [vmem:[%s4906 + $0x8] sm:$0xff]
      %v4909 = vld [vmem:[%s4906 + $0x10] sm:$0xff]
      %v4910 = vld [vmem:[%s4906 + $0x18] sm:$0xff]
      %v4911 = vld [vmem:[%s4906 + $0x20] sm:$0xff]
      %v4912 = vld [vmem:[%s4906 + $0x28] sm:$0xff]
      %v4913 = vld [vmem:[%s4906 + $0x30] sm:$0xff]
      %v4914 = vld [vmem:[%s4906 + $0x38] sm:$0xff]
      %v4916 = vsel %vm668, %v4890, 0
      %v4919 = vsel %vm668, %v4891, 0
      %v4922 = vsel %vm668, %v4892, 0
      %v4925 = vsel %vm668, %v4893, 0
      %v4928 = vsel %vm668, %v4894, 0
      %v4931 = vsel %vm668, %v4895, 0
      %v4934 = vsel %vm668, %v4896, 0
      %v4937 = vsel %vm668, %v4897, 0
      %v4940 = vsel %vm668, %v4898, 0
      %v4943 = vsel %vm668, %v4899, 0
      %v4946 = vsel %vm668, %v4900, 0
      %v4949 = vsel %vm668, %v4901, 0
      %v4952 = vsel %vm668, %v4902, 0
      %v4955 = vsel %vm668, %v4903, 0
      %v4958 = vsel %vm668, %v4904, 0
      %v4961 = vsel %vm668, %v4905, 0
      %4963 = vmatprep.subr.mxu0 0.0
      %4964 = vmatpush1.msra.mxu0 0.0
      %4965 = vmatprep.subr.mxu0 0.0
      %4966 = vmatpush1.msra.mxu0 0.0
      %4967 = vmatprep.subr.mxu0 0.0
      %4968 = vmatpush1.msra.mxu0 0.0
      %4969 = vmatprep.subr.mxu0 0.0
      %4970 = vmatpush1.msra.mxu0 0.0
      %4971 = vmatprep.subr.mxu0 0.0
      %4972 = vmatpush1.msra.mxu0 0.0
      %4973 = vmatprep.subr.mxu0 0.0
      %4974 = vmatpush1.msra.mxu0 0.0
      %4975 = vmatprep.subr.mxu0 0.0
      %4976 = vmatpush1.msra.mxu0 0.0
      %4977 = vmatprep.subr.mxu0 0.0
      %4978 = vmatpush1.msra.mxu0 0.0
      %4979 = vmatprep.subr.mxu0 0.0
      %4980 = vmatpush1.msra.mxu0 %v4914
      %4981 = vmatprep.subr.mxu0 0.0
      %4982 = vmatpush1.msra.mxu0 %v4913
      %4983 = vmatprep.subr.mxu0 0.0
      %4984 = vmatpush1.msra.mxu0 %v4912
      %4985 = vmatprep.subr.mxu0 0.0
      %4986 = vmatpush1.msra.mxu0 %v4911
      %4987 = vmatprep.subr.mxu0 0.0
      %4988 = vmatpush1.msra.mxu0 %v4910
      %4989 = vmatprep.subr.mxu0 0.0
      %4990 = vmatpush1.msra.mxu0 %v4909
      %4991 = vmatprep.subr.mxu0 0.0
      %4992 = vmatpush1.msra.mxu0 %v4908
      %4993 = vmatprep.subr.mxu0 0.0
      %4994 = vmatpush1.msra.mxu0 %v4907
      %4995 = vmatprep.subr.mxu0 0.0
      %4996 = vmatpush2.msra.mxu0 0.0
      %4997 = vmatprep.subr.mxu0 0.0
      %4998 = vmatpush2.msra.mxu0 0.0
      %4999 = vmatprep.subr.mxu0 0.0
      %5000 = vmatpush2.msra.mxu0 0.0
      %5001 = vmatprep.subr.mxu0 0.0
      %5002 = vmatpush2.msra.mxu0 0.0
      %5003 = vmatprep.subr.mxu0 0.0
      %5004 = vmatpush2.msra.mxu0 0.0
      %5005 = vmatprep.subr.mxu0 0.0
      %5006 = vmatpush2.msra.mxu0 0.0
      %5007 = vmatprep.subr.mxu0 0.0
      %5008 = vmatpush2.msra.mxu0 0.0
      %5009 = vmatprep.subr.mxu0 0.0
      %5010 = vmatpush2.msra.mxu0 0.0
      %5011 = vmatprep.subr.mxu0 0.0
      %5012 = vmatpush2.msra.mxu0 0.0
      %5013 = vmatprep.subr.mxu0 0.0
      %5014 = vmatpush2.msra.mxu0 0.0
      %5015 = vmatprep.subr.mxu0 0.0
      %5016 = vmatpush2.msra.mxu0 0.0
      %5017 = vmatprep.subr.mxu0 0.0
      %5018 = vmatpush2.msra.mxu0 0.0
      %5019 = vmatprep.subr.mxu0 0.0
      %5020 = vmatpush2.msra.mxu0 0.0
      %5021 = vmatprep.subr.mxu0 0.0
      %5022 = vmatpush2.msra.mxu0 0.0
      %5023 = vmatprep.subr.mxu0 0.0
      %5024 = vmatpush2.msra.mxu0 0.0
      %5025 = vmatprep.subr.mxu0 0.0
      %5026 = vmatpush2.msra.mxu0 0.0
      %5027 = vmatprep.mubr.f32.mxu0 0.0
      %5028 = vmatmul.mubr.f32.gmra.mxu0 %v4916
      %v5029 = vpop.f32.mrf.mxu0
      %v5030 = vadd.f32 0.0, %v5029
      %v5031 = vpop.f32.mrf.mxu0
      %5032 = vmatprep.mubr.f32.mxu0 0.0
      %5033 = vmatmul.mubr.f32.gmra.mxu0 %v4919
      %v5034 = vpop.f32.mrf.mxu0
      %v5035 = vadd.f32 0.0, %v5034
      %v5036 = vpop.f32.mrf.mxu0
      %5037 = vmatprep.mubr.f32.mxu0 0.0
      %5038 = vmatmul.mubr.f32.gmra.mxu0 %v4922
      %v5039 = vpop.f32.mrf.mxu0
      %v5040 = vadd.f32 0.0, %v5039
      %v5041 = vpop.f32.mrf.mxu0
      %5042 = vmatprep.mubr.f32.mxu0 0.0
      %5043 = vmatmul.mubr.f32.gmra.mxu0 %v4925
      %v5044 = vpop.f32.mrf.mxu0
      %v5045 = vadd.f32 0.0, %v5044
      %v5046 = vpop.f32.mrf.mxu0
      %5047 = vmatprep.mubr.f32.mxu0 0.0
      %5048 = vmatmul.mubr.f32.gmra.mxu0 %v4928
      %v5049 = vpop.f32.mrf.mxu0
      %v5050 = vadd.f32 0.0, %v5049
      %v5051 = vpop.f32.mrf.mxu0
      %5052 = vmatprep.mubr.f32.mxu0 0.0
      %5053 = vmatmul.mubr.f32.gmra.mxu0 %v4931
      %v5054 = vpop.f32.mrf.mxu0
      %v5055 = vadd.f32 0.0, %v5054
      %v5056 = vpop.f32.mrf.mxu0
      %5057 = vmatprep.mubr.f32.mxu0 0.0
      %5058 = vmatmul.mubr.f32.gmra.mxu0 %v4934
      %v5059 = vpop.f32.mrf.mxu0
      %v5060 = vadd.f32 0.0, %v5059
      %v5061 = vpop.f32.mrf.mxu0
      %5062 = vmatprep.mubr.f32.mxu0 0.0
      %5063 = vmatmul.mubr.f32.gmra.mxu0 %v4937
      %v5064 = vpop.f32.mrf.mxu0
      %v5065 = vadd.f32 0.0, %v5064
      %v5066 = vpop.f32.mrf.mxu0
      %5067 = vmatprep.mubr.f32.mxu0 0.0
      %5068 = vmatmul.mubr.f32.gmra.mxu0 %v4940
      %v5069 = vpop.f32.mrf.mxu0
      %v5070 = vadd.f32 0.0, %v5069
      %v5071 = vpop.f32.mrf.mxu0
      %5072 = vmatprep.mubr.f32.mxu0 0.0
      %5073 = vmatmul.mubr.f32.gmra.mxu0 %v4943
      %v5074 = vpop.f32.mrf.mxu0
      %v5075 = vadd.f32 0.0, %v5074
      %v5076 = vpop.f32.mrf.mxu0
      %5077 = vmatprep.mubr.f32.mxu0 0.0
      %5078 = vmatmul.mubr.f32.gmra.mxu0 %v4946
      %v5079 = vpop.f32.mrf.mxu0
      %v5080 = vadd.f32 0.0, %v5079
      %v5081 = vpop.f32.mrf.mxu0
      %5082 = vmatprep.mubr.f32.mxu0 0.0
      %5083 = vmatmul.mubr.f32.gmra.mxu0 %v4949
      %v5084 = vpop.f32.mrf.mxu0
      %v5085 = vadd.f32 0.0, %v5084
      %v5086 = vpop.f32.mrf.mxu0
      %5087 = vmatprep.mubr.f32.mxu0 0.0
      %5088 = vmatmul.mubr.f32.gmra.mxu0 %v4952
      %v5089 = vpop.f32.mrf.mxu0
      %v5090 = vadd.f32 0.0, %v5089
      %v5091 = vpop.f32.mrf.mxu0
      %5092 = vmatprep.mubr.f32.mxu0 0.0
      %5093 = vmatmul.mubr.f32.gmra.mxu0 %v4955
      %v5094 = vpop.f32.mrf.mxu0
      %v5095 = vadd.f32 0.0, %v5094
      %v5096 = vpop.f32.mrf.mxu0
      %5097 = vmatprep.mubr.f32.mxu0 0.0
      %5098 = vmatmul.mubr.f32.gmra.mxu0 %v4958
      %v5099 = vpop.f32.mrf.mxu0
      %v5100 = vadd.f32 0.0, %v5099
      %v5101 = vpop.f32.mrf.mxu0
      %5102 = vmatprep.mubr.f32.mxu0 0.0
      %5103 = vmatmul.mubr.f32.gmra.mxu0 %v4961
      %v5104 = vpop.f32.mrf.mxu0
      %v5105 = vadd.f32 0.0, %v5104
      %v5106 = vpop.f32.mrf.mxu0
      %5107 = vdwg.mxu0
      %v5109 = vsel %vm668, %v4866, 0
      %v5112 = vsel %vm668, %v4867, 0
      %v5115 = vsel %vm668, %v4868, 0
      %v5118 = vsel %vm668, %v4869, 0
      %v5121 = vsel %vm668, %v4870, 0
      %v5124 = vsel %vm668, %v4871, 0
      %v5127 = vsel %vm668, %v4872, 0
      %v5130 = vsel %vm668, %v4873, 0
      %v5133 = vsel %vm668, %v4874, 0
      %v5136 = vsel %vm668, %v4875, 0
      %v5139 = vsel %vm668, %v4876, 0
      %v5142 = vsel %vm668, %v4877, 0
      %v5145 = vsel %vm668, %v4878, 0
      %v5148 = vsel %vm668, %v4879, 0
      %v5151 = vsel %vm668, %v4880, 0
      %v5154 = vsel %vm668, %v4881, 0
      %5156 = vmatprep.subr.mxu0 0.0
      %5157 = vmatpush1.msra.mxu0 0.0
      %5158 = vmatprep.subr.mxu0 0.0
      %5159 = vmatpush1.msra.mxu0 0.0
      %5160 = vmatprep.subr.mxu0 0.0
      %5161 = vmatpush1.msra.mxu0 0.0
      %5162 = vmatprep.subr.mxu0 0.0
      %5163 = vmatpush1.msra.mxu0 0.0
      %5164 = vmatprep.subr.mxu0 0.0
      %5165 = vmatpush1.msra.mxu0 0.0
      %5166 = vmatprep.subr.mxu0 0.0
      %5167 = vmatpush1.msra.mxu0 0.0
      %5168 = vmatprep.subr.mxu0 0.0
      %5169 = vmatpush1.msra.mxu0 0.0
      %5170 = vmatprep.subr.mxu0 0.0
      %5171 = vmatpush1.msra.mxu0 0.0
      %5172 = vmatprep.subr.mxu0 0.0
      %5173 = vmatpush1.msra.mxu0 %v4889
      %5174 = vmatprep.subr.mxu0 0.0
      %5175 = vmatpush1.msra.mxu0 %v4888
      %5176 = vmatprep.subr.mxu0 0.0
      %5177 = vmatpush1.msra.mxu0 %v4887
      %5178 = vmatprep.subr.mxu0 0.0
      %5179 = vmatpush1.msra.mxu0 %v4886
      %5180 = vmatprep.subr.mxu0 0.0
      %5181 = vmatpush1.msra.mxu0 %v4885
      %5182 = vmatprep.subr.mxu0 0.0
      %5183 = vmatpush1.msra.mxu0 %v4884
      %5184 = vmatprep.subr.mxu0 0.0
      %5185 = vmatpush1.msra.mxu0 %v4883
      %5186 = vmatprep.subr.mxu0 0.0
      %5187 = vmatpush1.msra.mxu0 %v4882
      %5188 = vmatprep.subr.mxu0 0.0
      %5189 = vmatpush2.msra.mxu0 0.0
      %5190 = vmatprep.subr.mxu0 0.0
      %5191 = vmatpush2.msra.mxu0 0.0
      %5192 = vmatprep.subr.mxu0 0.0
      %5193 = vmatpush2.msra.mxu0 0.0
      %5194 = vmatprep.subr.mxu0 0.0
      %5195 = vmatpush2.msra.mxu0 0.0
      %5196 = vmatprep.subr.mxu0 0.0
      %5197 = vmatpush2.msra.mxu0 0.0
      %5198 = vmatprep.subr.mxu0 0.0
      %5199 = vmatpush2.msra.mxu0 0.0
      %5200 = vmatprep.subr.mxu0 0.0
      %5201 = vmatpush2.msra.mxu0 0.0
      %5202 = vmatprep.subr.mxu0 0.0
      %5203 = vmatpush2.msra.mxu0 0.0
      %5204 = vmatprep.subr.mxu0 0.0
      %5205 = vmatpush2.msra.mxu0 0.0
      %5206 = vmatprep.subr.mxu0 0.0
      %5207 = vmatpush2.msra.mxu0 0.0
      %5208 = vmatprep.subr.mxu0 0.0
      %5209 = vmatpush2.msra.mxu0 0.0
      %5210 = vmatprep.subr.mxu0 0.0
      %5211 = vmatpush2.msra.mxu0 0.0
      %5212 = vmatprep.subr.mxu0 0.0
      %5213 = vmatpush2.msra.mxu0 0.0
      %5214 = vmatprep.subr.mxu0 0.0
      %5215 = vmatpush2.msra.mxu0 0.0
      %5216 = vmatprep.subr.mxu0 0.0
      %5217 = vmatpush2.msra.mxu0 0.0
      %5218 = vmatprep.subr.mxu0 0.0
      %5219 = vmatpush2.msra.mxu0 0.0
      %5220 = vmatprep.mubr.f32.mxu0 0.0
      %5221 = vmatmul.mubr.f32.gmra.mxu0 %v5109
      %v5222 = vpop.f32.mrf.mxu0
      %v5223 = vadd.f32 %v5030, %v5222
      %v5224 = vpop.f32.mrf.mxu0
      %5225 = vmatprep.mubr.f32.mxu0 0.0
      %5226 = vmatmul.mubr.f32.gmra.mxu0 %v5112
      %v5227 = vpop.f32.mrf.mxu0
      %v5228 = vadd.f32 %v5035, %v5227
      %v5229 = vpop.f32.mrf.mxu0
      %5230 = vmatprep.mubr.f32.mxu0 0.0
      %5231 = vmatmul.mubr.f32.gmra.mxu0 %v5115
      %v5232 = vpop.f32.mrf.mxu0
      %v5233 = vadd.f32 %v5040, %v5232
      %v5234 = vpop.f32.mrf.mxu0
      %5235 = vmatprep.mubr.f32.mxu0 0.0
      %5236 = vmatmul.mubr.f32.gmra.mxu0 %v5118
      %v5237 = vpop.f32.mrf.mxu0
      %v5238 = vadd.f32 %v5045, %v5237
      %v5239 = vpop.f32.mrf.mxu0
      %5240 = vmatprep.mubr.f32.mxu0 0.0
      %5241 = vmatmul.mubr.f32.gmra.mxu0 %v5121
      %v5242 = vpop.f32.mrf.mxu0
      %v5243 = vadd.f32 %v5050, %v5242
      %v5244 = vpop.f32.mrf.mxu0
      %5245 = vmatprep.mubr.f32.mxu0 0.0
      %5246 = vmatmul.mubr.f32.gmra.mxu0 %v5124
      %v5247 = vpop.f32.mrf.mxu0
      %v5248 = vadd.f32 %v5055, %v5247
      %v5249 = vpop.f32.mrf.mxu0
      %5250 = vmatprep.mubr.f32.mxu0 0.0
      %5251 = vmatmul.mubr.f32.gmra.mxu0 %v5127
      %v5252 = vpop.f32.mrf.mxu0
      %v5253 = vadd.f32 %v5060, %v5252
      %v5254 = vpop.f32.mrf.mxu0
      %5255 = vmatprep.mubr.f32.mxu0 0.0
      %5256 = vmatmul.mubr.f32.gmra.mxu0 %v5130
      %v5257 = vpop.f32.mrf.mxu0
      %v5258 = vadd.f32 %v5065, %v5257
      %v5259 = vpop.f32.mrf.mxu0
      %5260 = vmatprep.mubr.f32.mxu0 0.0
      %5261 = vmatmul.mubr.f32.gmra.mxu0 %v5133
      %v5262 = vpop.f32.mrf.mxu0
      %v5263 = vadd.f32 %v5070, %v5262
      %v5264 = vpop.f32.mrf.mxu0
      %5265 = vmatprep.mubr.f32.mxu0 0.0
      %5266 = vmatmul.mubr.f32.gmra.mxu0 %v5136
      %v5267 = vpop.f32.mrf.mxu0
      %v5268 = vadd.f32 %v5075, %v5267
      %v5269 = vpop.f32.mrf.mxu0
      %5270 = vmatprep.mubr.f32.mxu0 0.0
      %5271 = vmatmul.mubr.f32.gmra.mxu0 %v5139
      %v5272 = vpop.f32.mrf.mxu0
      %v5273 = vadd.f32 %v5080, %v5272
      %v5274 = vpop.f32.mrf.mxu0
      %5275 = vmatprep.mubr.f32.mxu0 0.0
      %5276 = vmatmul.mubr.f32.gmra.mxu0 %v5142
      %v5277 = vpop.f32.mrf.mxu0
      %v5278 = vadd.f32 %v5085, %v5277
      %v5279 = vpop.f32.mrf.mxu0
      %5280 = vmatprep.mubr.f32.mxu0 0.0
      %5281 = vmatmul.mubr.f32.gmra.mxu0 %v5145
      %v5282 = vpop.f32.mrf.mxu0
      %v5283 = vadd.f32 %v5090, %v5282
      %v5284 = vpop.f32.mrf.mxu0
      %5285 = vmatprep.mubr.f32.mxu0 0.0
      %5286 = vmatmul.mubr.f32.gmra.mxu0 %v5148
      %v5287 = vpop.f32.mrf.mxu0
      %v5288 = vadd.f32 %v5095, %v5287
      %v5289 = vpop.f32.mrf.mxu0
      %5290 = vmatprep.mubr.f32.mxu0 0.0
      %5291 = vmatmul.mubr.f32.gmra.mxu0 %v5151
      %v5292 = vpop.f32.mrf.mxu0
      %v5293 = vadd.f32 %v5100, %v5292
      %v5294 = vpop.f32.mrf.mxu0
      %5295 = vmatprep.mubr.f32.mxu0 0.0
      %5296 = vmatmul.mubr.f32.gmra.mxu0 %v5154
      %v5297 = vpop.f32.mrf.mxu0
      %v5298 = vadd.f32 %v5105, %v5297
      %v5299 = vpop.f32.mrf.mxu0
      %5300 = vdwg.mxu0
      %v5301 = vld [vmem:[#allocation2 + $0x9] sm:$0xff]
      %v5302 = vld [vmem:[#allocation2 + $0x11] sm:$0xff]
      %v5303 = vld [vmem:[#allocation2 + $0x29] sm:$0xff]
      %v5304 = vld [vmem:[#allocation2 + $0x31] sm:$0xff]
      %v5305 = vld [vmem:[#allocation2 + $0x49] sm:$0xff]
      %v5306 = vld [vmem:[#allocation2 + $0x51] sm:$0xff]
      %v5307 = vld [vmem:[#allocation2 + $0x69] sm:$0xff]
      %v5308 = vld [vmem:[#allocation2 + $0x71] sm:$0xff]
      %v5309 = vld [vmem:[#allocation2 + $0x89] sm:$0xff]
      %v5310 = vld [vmem:[#allocation2 + $0x91] sm:$0xff]
      %v5311 = vld [vmem:[#allocation2 + $0xa9] sm:$0xff]
      %v5312 = vld [vmem:[#allocation2 + $0xb1] sm:$0xff]
      %v5313 = vld [vmem:[#allocation2 + $0xc9] sm:$0xff]
      %v5314 = vld [vmem:[#allocation2 + $0xd1] sm:$0xff]
      %v5315 = vld [vmem:[#allocation2 + $0xe9] sm:$0xff]
      %v5316 = vld [vmem:[#allocation2 + $0xf1] sm:$0xff]
      %s5317 = scalar_lea.vmem %s5, 128
      %v5318 = vld [vmem:[%s5317] sm:$0xff]
      %v5319 = vld [vmem:[%s5317 + $0x8] sm:$0xff]
      %v5320 = vld [vmem:[%s5317 + $0x10] sm:$0xff]
      %v5321 = vld [vmem:[%s5317 + $0x18] sm:$0xff]
      %v5322 = vld [vmem:[%s5317 + $0x20] sm:$0xff]
      %v5323 = vld [vmem:[%s5317 + $0x28] sm:$0xff]
      %v5324 = vld [vmem:[%s5317 + $0x30] sm:$0xff]
      %v5325 = vld [vmem:[%s5317 + $0x38] sm:$0xff]
      %v5327 = vsel %vm668, %v5301, 0
      %v5330 = vsel %vm668, %v5302, 0
      %v5333 = vsel %vm668, %v5303, 0
      %v5336 = vsel %vm668, %v5304, 0
      %v5339 = vsel %vm668, %v5305, 0
      %v5342 = vsel %vm668, %v5306, 0
      %v5345 = vsel %vm668, %v5307, 0
      %v5348 = vsel %vm668, %v5308, 0
      %v5351 = vsel %vm668, %v5309, 0
      %v5354 = vsel %vm668, %v5310, 0
      %v5357 = vsel %vm668, %v5311, 0
      %v5360 = vsel %vm668, %v5312, 0
      %v5363 = vsel %vm668, %v5313, 0
      %v5366 = vsel %vm668, %v5314, 0
      %v5369 = vsel %vm668, %v5315, 0
      %v5372 = vsel %vm668, %v5316, 0
      %5374 = vmatprep.subr.mxu0 0.0
      %5375 = vmatpush1.msra.mxu0 0.0
      %5376 = vmatprep.subr.mxu0 0.0
      %5377 = vmatpush1.msra.mxu0 0.0
      %5378 = vmatprep.subr.mxu0 0.0
      %5379 = vmatpush1.msra.mxu0 0.0
      %5380 = vmatprep.subr.mxu0 0.0
      %5381 = vmatpush1.msra.mxu0 0.0
      %5382 = vmatprep.subr.mxu0 0.0
      %5383 = vmatpush1.msra.mxu0 0.0
      %5384 = vmatprep.subr.mxu0 0.0
      %5385 = vmatpush1.msra.mxu0 0.0
      %5386 = vmatprep.subr.mxu0 0.0
      %5387 = vmatpush1.msra.mxu0 0.0
      %5388 = vmatprep.subr.mxu0 0.0
      %5389 = vmatpush1.msra.mxu0 0.0
      %5390 = vmatprep.subr.mxu0 0.0
      %5391 = vmatpush1.msra.mxu0 %v5325
      %5392 = vmatprep.subr.mxu0 0.0
      %5393 = vmatpush1.msra.mxu0 %v5324
      %5394 = vmatprep.subr.mxu0 0.0
      %5395 = vmatpush1.msra.mxu0 %v5323
      %5396 = vmatprep.subr.mxu0 0.0
      %5397 = vmatpush1.msra.mxu0 %v5322
      %5398 = vmatprep.subr.mxu0 0.0
      %5399 = vmatpush1.msra.mxu0 %v5321
      %5400 = vmatprep.subr.mxu0 0.0
      %5401 = vmatpush1.msra.mxu0 %v5320
      %5402 = vmatprep.subr.mxu0 0.0
      %5403 = vmatpush1.msra.mxu0 %v5319
      %5404 = vmatprep.subr.mxu0 0.0
      %5405 = vmatpush1.msra.mxu0 %v5318
      %5406 = vmatprep.subr.mxu0 0.0
      %5407 = vmatpush2.msra.mxu0 0.0
      %5408 = vmatprep.subr.mxu0 0.0
      %5409 = vmatpush2.msra.mxu0 0.0
      %5410 = vmatprep.subr.mxu0 0.0
      %5411 = vmatpush2.msra.mxu0 0.0
      %5412 = vmatprep.subr.mxu0 0.0
      %5413 = vmatpush2.msra.mxu0 0.0
      %5414 = vmatprep.subr.mxu0 0.0
      %5415 = vmatpush2.msra.mxu0 0.0
      %5416 = vmatprep.subr.mxu0 0.0
      %5417 = vmatpush2.msra.mxu0 0.0
      %5418 = vmatprep.subr.mxu0 0.0
      %5419 = vmatpush2.msra.mxu0 0.0
      %5420 = vmatprep.subr.mxu0 0.0
      %5421 = vmatpush2.msra.mxu0 0.0
      %5422 = vmatprep.subr.mxu0 0.0
      %5423 = vmatpush2.msra.mxu0 0.0
      %5424 = vmatprep.subr.mxu0 0.0
      %5425 = vmatpush2.msra.mxu0 0.0
      %5426 = vmatprep.subr.mxu0 0.0
      %5427 = vmatpush2.msra.mxu0 0.0
      %5428 = vmatprep.subr.mxu0 0.0
      %5429 = vmatpush2.msra.mxu0 0.0
      %5430 = vmatprep.subr.mxu0 0.0
      %5431 = vmatpush2.msra.mxu0 0.0
      %5432 = vmatprep.subr.mxu0 0.0
      %5433 = vmatpush2.msra.mxu0 0.0
      %5434 = vmatprep.subr.mxu0 0.0
      %5435 = vmatpush2.msra.mxu0 0.0
      %5436 = vmatprep.subr.mxu0 0.0
      %5437 = vmatpush2.msra.mxu0 0.0
      %5438 = vmatprep.mubr.f32.mxu0 0.0
      %5439 = vmatmul.mubr.f32.gmra.mxu0 %v5327
      %v5440 = vpop.f32.mrf.mxu0
      %v5441 = vadd.f32 0.0, %v5440
      %v5442 = vpop.f32.mrf.mxu0
      %5443 = vmatprep.mubr.f32.mxu0 0.0
      %5444 = vmatmul.mubr.f32.gmra.mxu0 %v5330
      %v5445 = vpop.f32.mrf.mxu0
      %v5446 = vadd.f32 0.0, %v5445
      %v5447 = vpop.f32.mrf.mxu0
      %5448 = vmatprep.mubr.f32.mxu0 0.0
      %5449 = vmatmul.mubr.f32.gmra.mxu0 %v5333
      %v5450 = vpop.f32.mrf.mxu0
      %v5451 = vadd.f32 0.0, %v5450
      %v5452 = vpop.f32.mrf.mxu0
      %5453 = vmatprep.mubr.f32.mxu0 0.0
      %5454 = vmatmul.mubr.f32.gmra.mxu0 %v5336
      %v5455 = vpop.f32.mrf.mxu0
      %v5456 = vadd.f32 0.0, %v5455
      %v5457 = vpop.f32.mrf.mxu0
      %5458 = vmatprep.mubr.f32.mxu0 0.0
      %5459 = vmatmul.mubr.f32.gmra.mxu0 %v5339
      %v5460 = vpop.f32.mrf.mxu0
      %v5461 = vadd.f32 0.0, %v5460
      %v5462 = vpop.f32.mrf.mxu0
      %5463 = vmatprep.mubr.f32.mxu0 0.0
      %5464 = vmatmul.mubr.f32.gmra.mxu0 %v5342
      %v5465 = vpop.f32.mrf.mxu0
      %v5466 = vadd.f32 0.0, %v5465
      %v5467 = vpop.f32.mrf.mxu0
      %5468 = vmatprep.mubr.f32.mxu0 0.0
      %5469 = vmatmul.mubr.f32.gmra.mxu0 %v5345
      %v5470 = vpop.f32.mrf.mxu0
      %v5471 = vadd.f32 0.0, %v5470
      %v5472 = vpop.f32.mrf.mxu0
      %5473 = vmatprep.mubr.f32.mxu0 0.0
      %5474 = vmatmul.mubr.f32.gmra.mxu0 %v5348
      %v5475 = vpop.f32.mrf.mxu0
      %v5476 = vadd.f32 0.0, %v5475
      %v5477 = vpop.f32.mrf.mxu0
      %5478 = vmatprep.mubr.f32.mxu0 0.0
      %5479 = vmatmul.mubr.f32.gmra.mxu0 %v5351
      %v5480 = vpop.f32.mrf.mxu0
      %v5481 = vadd.f32 0.0, %v5480
      %v5482 = vpop.f32.mrf.mxu0
      %5483 = vmatprep.mubr.f32.mxu0 0.0
      %5484 = vmatmul.mubr.f32.gmra.mxu0 %v5354
      %v5485 = vpop.f32.mrf.mxu0
      %v5486 = vadd.f32 0.0, %v5485
      %v5487 = vpop.f32.mrf.mxu0
      %5488 = vmatprep.mubr.f32.mxu0 0.0
      %5489 = vmatmul.mubr.f32.gmra.mxu0 %v5357
      %v5490 = vpop.f32.mrf.mxu0
      %v5491 = vadd.f32 0.0, %v5490
      %v5492 = vpop.f32.mrf.mxu0
      %5493 = vmatprep.mubr.f32.mxu0 0.0
      %5494 = vmatmul.mubr.f32.gmra.mxu0 %v5360
      %v5495 = vpop.f32.mrf.mxu0
      %v5496 = vadd.f32 0.0, %v5495
      %v5497 = vpop.f32.mrf.mxu0
      %5498 = vmatprep.mubr.f32.mxu0 0.0
      %5499 = vmatmul.mubr.f32.gmra.mxu0 %v5363
      %v5500 = vpop.f32.mrf.mxu0
      %v5501 = vadd.f32 0.0, %v5500
      %v5502 = vpop.f32.mrf.mxu0
      %5503 = vmatprep.mubr.f32.mxu0 0.0
      %5504 = vmatmul.mubr.f32.gmra.mxu0 %v5366
      %v5505 = vpop.f32.mrf.mxu0
      %v5506 = vadd.f32 0.0, %v5505
      %v5507 = vpop.f32.mrf.mxu0
      %5508 = vmatprep.mubr.f32.mxu0 0.0
      %5509 = vmatmul.mubr.f32.gmra.mxu0 %v5369
      %v5510 = vpop.f32.mrf.mxu0
      %v5511 = vadd.f32 0.0, %v5510
      %v5512 = vpop.f32.mrf.mxu0
      %5513 = vmatprep.mubr.f32.mxu0 0.0
      %5514 = vmatmul.mubr.f32.gmra.mxu0 %v5372
      %v5515 = vpop.f32.mrf.mxu0
      %v5516 = vadd.f32 0.0, %v5515
      %v5517 = vpop.f32.mrf.mxu0
      %5518 = vdwg.mxu0
      %v5519 = vadd.f32 %v5223, %v5441
      %v5520 = vadd.f32 %v5228, %v5446
      %v5521 = vadd.f32 %v5233, %v5451
      %v5522 = vadd.f32 %v5238, %v5456
      %v5523 = vadd.f32 %v5243, %v5461
      %v5524 = vadd.f32 %v5248, %v5466
      %v5525 = vadd.f32 %v5253, %v5471
      %v5526 = vadd.f32 %v5258, %v5476
      %v5527 = vadd.f32 %v5263, %v5481
      %v5528 = vadd.f32 %v5268, %v5486
      %v5529 = vadd.f32 %v5273, %v5491
      %v5530 = vadd.f32 %v5278, %v5496
      %v5531 = vadd.f32 %v5283, %v5501
      %v5532 = vadd.f32 %v5288, %v5506
      %v5533 = vadd.f32 %v5293, %v5511
      %v5534 = vadd.f32 %v5298, %v5516
      %v5535 = vld [vmem:[%s677 + $0x7] sm:$0xff]
      %v5536 = vld [vmem:[%s677 + $0xf] sm:$0xff]
      %v5537 = vld [vmem:[%s677 + $0x27] sm:$0xff]
      %v5538 = vld [vmem:[%s677 + $0x2f] sm:$0xff]
      %v5539 = vld [vmem:[%s677 + $0x47] sm:$0xff]
      %v5540 = vld [vmem:[%s677 + $0x4f] sm:$0xff]
      %v5541 = vld [vmem:[%s677 + $0x67] sm:$0xff]
      %v5542 = vld [vmem:[%s677 + $0x6f] sm:$0xff]
      %v5543 = vld [vmem:[%s677 + $0x87] sm:$0xff]
      %v5544 = vld [vmem:[%s677 + $0x8f] sm:$0xff]
      %v5545 = vld [vmem:[%s677 + $0xa7] sm:$0xff]
      %v5546 = vld [vmem:[%s677 + $0xaf] sm:$0xff]
      %v5547 = vld [vmem:[%s677 + $0xc7] sm:$0xff]
      %v5548 = vld [vmem:[%s677 + $0xcf] sm:$0xff]
      %v5549 = vld [vmem:[%s677 + $0xe7] sm:$0xff]
      %v5550 = vld [vmem:[%s677 + $0xef] sm:$0xff]
      %s5551 = scalar_lea.vmem %s5, 192
      %v5552 = vld [vmem:[%s5551] sm:$0xff]
      %v5553 = vld [vmem:[%s5551 + $0x8] sm:$0xff]
      %v5554 = vld [vmem:[%s5551 + $0x10] sm:$0xff]
      %v5555 = vld [vmem:[%s5551 + $0x18] sm:$0xff]
      %v5556 = vld [vmem:[%s5551 + $0x20] sm:$0xff]
      %v5557 = vld [vmem:[%s5551 + $0x28] sm:$0xff]
      %v5558 = vld [vmem:[%s5551 + $0x30] sm:$0xff]
      %v5559 = vld [vmem:[%s5551 + $0x38] sm:$0xff]
      %v5561 = vsel %vm668, %v5535, 0
      %v5564 = vsel %vm668, %v5536, 0
      %v5567 = vsel %vm668, %v5537, 0
      %v5570 = vsel %vm668, %v5538, 0
      %v5573 = vsel %vm668, %v5539, 0
      %v5576 = vsel %vm668, %v5540, 0
      %v5579 = vsel %vm668, %v5541, 0
      %v5582 = vsel %vm668, %v5542, 0
      %v5585 = vsel %vm668, %v5543, 0
      %v5588 = vsel %vm668, %v5544, 0
      %v5591 = vsel %vm668, %v5545, 0
      %v5594 = vsel %vm668, %v5546, 0
      %v5597 = vsel %vm668, %v5547, 0
      %v5600 = vsel %vm668, %v5548, 0
      %v5603 = vsel %vm668, %v5549, 0
      %v5606 = vsel %vm668, %v5550, 0
      %5608 = vmatprep.subr.mxu0 0.0
      %5609 = vmatpush1.msra.mxu0 0.0
      %5610 = vmatprep.subr.mxu0 0.0
      %5611 = vmatpush1.msra.mxu0 0.0
      %5612 = vmatprep.subr.mxu0 0.0
      %5613 = vmatpush1.msra.mxu0 0.0
      %5614 = vmatprep.subr.mxu0 0.0
      %5615 = vmatpush1.msra.mxu0 0.0
      %5616 = vmatprep.subr.mxu0 0.0
      %5617 = vmatpush1.msra.mxu0 0.0
      %5618 = vmatprep.subr.mxu0 0.0
      %5619 = vmatpush1.msra.mxu0 0.0
      %5620 = vmatprep.subr.mxu0 0.0
      %5621 = vmatpush1.msra.mxu0 0.0
      %5622 = vmatprep.subr.mxu0 0.0
      %5623 = vmatpush1.msra.mxu0 0.0
      %5624 = vmatprep.subr.mxu0 0.0
      %5625 = vmatpush1.msra.mxu0 %v5559
      %5626 = vmatprep.subr.mxu0 0.0
      %5627 = vmatpush1.msra.mxu0 %v5558
      %5628 = vmatprep.subr.mxu0 0.0
      %5629 = vmatpush1.msra.mxu0 %v5557
      %5630 = vmatprep.subr.mxu0 0.0
      %5631 = vmatpush1.msra.mxu0 %v5556
      %5632 = vmatprep.subr.mxu0 0.0
      %5633 = vmatpush1.msra.mxu0 %v5555
      %5634 = vmatprep.subr.mxu0 0.0
      %5635 = vmatpush1.msra.mxu0 %v5554
      %5636 = vmatprep.subr.mxu0 0.0
      %5637 = vmatpush1.msra.mxu0 %v5553
      %5638 = vmatprep.subr.mxu0 0.0
      %5639 = vmatpush1.msra.mxu0 %v5552
      %5640 = vmatprep.subr.mxu0 0.0
      %5641 = vmatpush2.msra.mxu0 0.0
      %5642 = vmatprep.subr.mxu0 0.0
      %5643 = vmatpush2.msra.mxu0 0.0
      %5644 = vmatprep.subr.mxu0 0.0
      %5645 = vmatpush2.msra.mxu0 0.0
      %5646 = vmatprep.subr.mxu0 0.0
      %5647 = vmatpush2.msra.mxu0 0.0
      %5648 = vmatprep.subr.mxu0 0.0
      %5649 = vmatpush2.msra.mxu0 0.0
      %5650 = vmatprep.subr.mxu0 0.0
      %5651 = vmatpush2.msra.mxu0 0.0
      %5652 = vmatprep.subr.mxu0 0.0
      %5653 = vmatpush2.msra.mxu0 0.0
      %5654 = vmatprep.subr.mxu0 0.0
      %5655 = vmatpush2.msra.mxu0 0.0
      %5656 = vmatprep.subr.mxu0 0.0
      %5657 = vmatpush2.msra.mxu0 0.0
      %5658 = vmatprep.subr.mxu0 0.0
      %5659 = vmatpush2.msra.mxu0 0.0
      %5660 = vmatprep.subr.mxu0 0.0
      %5661 = vmatpush2.msra.mxu0 0.0
      %5662 = vmatprep.subr.mxu0 0.0
      %5663 = vmatpush2.msra.mxu0 0.0
      %5664 = vmatprep.subr.mxu0 0.0
      %5665 = vmatpush2.msra.mxu0 0.0
      %5666 = vmatprep.subr.mxu0 0.0
      %5667 = vmatpush2.msra.mxu0 0.0
      %5668 = vmatprep.subr.mxu0 0.0
      %5669 = vmatpush2.msra.mxu0 0.0
      %5670 = vmatprep.subr.mxu0 0.0
      %5671 = vmatpush2.msra.mxu0 0.0
      %5672 = vmatprep.mubr.f32.mxu0 0.0
      %5673 = vmatmul.mubr.f32.gmra.mxu0 %v5561
      %v5674 = vpop.f32.mrf.mxu0
      %v5675 = vadd.f32 0.0, %v5674
      %v5676 = vpop.f32.mrf.mxu0
      %5677 = vmatprep.mubr.f32.mxu0 0.0
      %5678 = vmatmul.mubr.f32.gmra.mxu0 %v5564
      %v5679 = vpop.f32.mrf.mxu0
      %v5680 = vadd.f32 0.0, %v5679
      %v5681 = vpop.f32.mrf.mxu0
      %5682 = vmatprep.mubr.f32.mxu0 0.0
      %5683 = vmatmul.mubr.f32.gmra.mxu0 %v5567
      %v5684 = vpop.f32.mrf.mxu0
      %v5685 = vadd.f32 0.0, %v5684
      %v5686 = vpop.f32.mrf.mxu0
      %5687 = vmatprep.mubr.f32.mxu0 0.0
      %5688 = vmatmul.mubr.f32.gmra.mxu0 %v5570
      %v5689 = vpop.f32.mrf.mxu0
      %v5690 = vadd.f32 0.0, %v5689
      %v5691 = vpop.f32.mrf.mxu0
      %5692 = vmatprep.mubr.f32.mxu0 0.0
      %5693 = vmatmul.mubr.f32.gmra.mxu0 %v5573
      %v5694 = vpop.f32.mrf.mxu0
      %v5695 = vadd.f32 0.0, %v5694
      %v5696 = vpop.f32.mrf.mxu0
      %5697 = vmatprep.mubr.f32.mxu0 0.0
      %5698 = vmatmul.mubr.f32.gmra.mxu0 %v5576
      %v5699 = vpop.f32.mrf.mxu0
      %v5700 = vadd.f32 0.0, %v5699
      %v5701 = vpop.f32.mrf.mxu0
      %5702 = vmatprep.mubr.f32.mxu0 0.0
      %5703 = vmatmul.mubr.f32.gmra.mxu0 %v5579
      %v5704 = vpop.f32.mrf.mxu0
      %v5705 = vadd.f32 0.0, %v5704
      %v5706 = vpop.f32.mrf.mxu0
      %5707 = vmatprep.mubr.f32.mxu0 0.0
      %5708 = vmatmul.mubr.f32.gmra.mxu0 %v5582
      %v5709 = vpop.f32.mrf.mxu0
      %v5710 = vadd.f32 0.0, %v5709
      %v5711 = vpop.f32.mrf.mxu0
      %5712 = vmatprep.mubr.f32.mxu0 0.0
      %5713 = vmatmul.mubr.f32.gmra.mxu0 %v5585
      %v5714 = vpop.f32.mrf.mxu0
      %v5715 = vadd.f32 0.0, %v5714
      %v5716 = vpop.f32.mrf.mxu0
      %5717 = vmatprep.mubr.f32.mxu0 0.0
      %5718 = vmatmul.mubr.f32.gmra.mxu0 %v5588
      %v5719 = vpop.f32.mrf.mxu0
      %v5720 = vadd.f32 0.0, %v5719
      %v5721 = vpop.f32.mrf.mxu0
      %5722 = vmatprep.mubr.f32.mxu0 0.0
      %5723 = vmatmul.mubr.f32.gmra.mxu0 %v5591
      %v5724 = vpop.f32.mrf.mxu0
      %v5725 = vadd.f32 0.0, %v5724
      %v5726 = vpop.f32.mrf.mxu0
      %5727 = vmatprep.mubr.f32.mxu0 0.0
      %5728 = vmatmul.mubr.f32.gmra.mxu0 %v5594
      %v5729 = vpop.f32.mrf.mxu0
      %v5730 = vadd.f32 0.0, %v5729
      %v5731 = vpop.f32.mrf.mxu0
      %5732 = vmatprep.mubr.f32.mxu0 0.0
      %5733 = vmatmul.mubr.f32.gmra.mxu0 %v5597
      %v5734 = vpop.f32.mrf.mxu0
      %v5735 = vadd.f32 0.0, %v5734
      %v5736 = vpop.f32.mrf.mxu0
      %5737 = vmatprep.mubr.f32.mxu0 0.0
      %5738 = vmatmul.mubr.f32.gmra.mxu0 %v5600
      %v5739 = vpop.f32.mrf.mxu0
      %v5740 = vadd.f32 0.0, %v5739
      %v5741 = vpop.f32.mrf.mxu0
      %5742 = vmatprep.mubr.f32.mxu0 0.0
      %5743 = vmatmul.mubr.f32.gmra.mxu0 %v5603
      %v5744 = vpop.f32.mrf.mxu0
      %v5745 = vadd.f32 0.0, %v5744
      %v5746 = vpop.f32.mrf.mxu0
      %5747 = vmatprep.mubr.f32.mxu0 0.0
      %5748 = vmatmul.mubr.f32.gmra.mxu0 %v5606
      %v5749 = vpop.f32.mrf.mxu0
      %v5750 = vadd.f32 0.0, %v5749
      %v5751 = vpop.f32.mrf.mxu0
      %5752 = vdwg.mxu0
      %v5753 = vadd.f32 %v5519, %v5675
      %v5754 = vadd.f32 %v5520, %v5680
      %v5755 = vadd.f32 %v5521, %v5685
      %v5756 = vadd.f32 %v5522, %v5690
      %v5757 = vadd.f32 %v5523, %v5695
      %v5758 = vadd.f32 %v5524, %v5700
      %v5759 = vadd.f32 %v5525, %v5705
      %v5760 = vadd.f32 %v5526, %v5710
      %v5761 = vadd.f32 %v5527, %v5715
      %v5762 = vadd.f32 %v5528, %v5720
      %v5763 = vadd.f32 %v5529, %v5725
      %v5764 = vadd.f32 %v5530, %v5730
      %v5765 = vadd.f32 %v5531, %v5735
      %v5766 = vadd.f32 %v5532, %v5740
      %v5767 = vadd.f32 %v5533, %v5745
      %v5768 = vadd.f32 %v5534, %v5750
      %v5769 = vld [vmem:[%s677 + $0x8] sm:$0xff]
      %v5770 = vld [vmem:[%s677 + $0x10] sm:$0xff]
      %v5771 = vld [vmem:[%s677 + $0x28] sm:$0xff]
      %v5772 = vld [vmem:[%s677 + $0x30] sm:$0xff]
      %v5773 = vld [vmem:[%s677 + $0x48] sm:$0xff]
      %v5774 = vld [vmem:[%s677 + $0x50] sm:$0xff]
      %v5775 = vld [vmem:[%s677 + $0x68] sm:$0xff]
      %v5776 = vld [vmem:[%s677 + $0x70] sm:$0xff]
      %v5777 = vld [vmem:[%s677 + $0x88] sm:$0xff]
      %v5778 = vld [vmem:[%s677 + $0x90] sm:$0xff]
      %v5779 = vld [vmem:[%s677 + $0xa8] sm:$0xff]
      %v5780 = vld [vmem:[%s677 + $0xb0] sm:$0xff]
      %v5781 = vld [vmem:[%s677 + $0xc8] sm:$0xff]
      %v5782 = vld [vmem:[%s677 + $0xd0] sm:$0xff]
      %v5783 = vld [vmem:[%s677 + $0xe8] sm:$0xff]
      %v5784 = vld [vmem:[%s677 + $0xf0] sm:$0xff]
      %s5785 = scalar_lea.vmem %s5, 256
      %v5786 = vld [vmem:[%s5785] sm:$0xff]
      %v5787 = vld [vmem:[%s5785 + $0x8] sm:$0xff]
      %v5788 = vld [vmem:[%s5785 + $0x10] sm:$0xff]
      %v5789 = vld [vmem:[%s5785 + $0x18] sm:$0xff]
      %v5790 = vld [vmem:[%s5785 + $0x20] sm:$0xff]
      %v5791 = vld [vmem:[%s5785 + $0x28] sm:$0xff]
      %v5792 = vld [vmem:[%s5785 + $0x30] sm:$0xff]
      %v5793 = vld [vmem:[%s5785 + $0x38] sm:$0xff]
      %v5795 = vsel %vm668, %v5769, 0
      %v5798 = vsel %vm668, %v5770, 0
      %v5801 = vsel %vm668, %v5771, 0
      %v5804 = vsel %vm668, %v5772, 0
      %v5807 = vsel %vm668, %v5773, 0
      %v5810 = vsel %vm668, %v5774, 0
      %v5813 = vsel %vm668, %v5775, 0
      %v5816 = vsel %vm668, %v5776, 0
      %v5819 = vsel %vm668, %v5777, 0
      %v5822 = vsel %vm668, %v5778, 0
      %v5825 = vsel %vm668, %v5779, 0
      %v5828 = vsel %vm668, %v5780, 0
      %v5831 = vsel %vm668, %v5781, 0
      %v5834 = vsel %vm668, %v5782, 0
      %v5837 = vsel %vm668, %v5783, 0
      %v5840 = vsel %vm668, %v5784, 0
      %5842 = vmatprep.subr.mxu0 0.0
      %5843 = vmatpush1.msra.mxu0 0.0
      %5844 = vmatprep.subr.mxu0 0.0
      %5845 = vmatpush1.msra.mxu0 0.0
      %5846 = vmatprep.subr.mxu0 0.0
      %5847 = vmatpush1.msra.mxu0 0.0
      %5848 = vmatprep.subr.mxu0 0.0
      %5849 = vmatpush1.msra.mxu0 0.0
      %5850 = vmatprep.subr.mxu0 0.0
      %5851 = vmatpush1.msra.mxu0 0.0
      %5852 = vmatprep.subr.mxu0 0.0
      %5853 = vmatpush1.msra.mxu0 0.0
      %5854 = vmatprep.subr.mxu0 0.0
      %5855 = vmatpush1.msra.mxu0 0.0
      %5856 = vmatprep.subr.mxu0 0.0
      %5857 = vmatpush1.msra.mxu0 0.0
      %5858 = vmatprep.subr.mxu0 0.0
      %5859 = vmatpush1.msra.mxu0 %v5793
      %5860 = vmatprep.subr.mxu0 0.0
      %5861 = vmatpush1.msra.mxu0 %v5792
      %5862 = vmatprep.subr.mxu0 0.0
      %5863 = vmatpush1.msra.mxu0 %v5791
      %5864 = vmatprep.subr.mxu0 0.0
      %5865 = vmatpush1.msra.mxu0 %v5790
      %5866 = vmatprep.subr.mxu0 0.0
      %5867 = vmatpush1.msra.mxu0 %v5789
      %5868 = vmatprep.subr.mxu0 0.0
      %5869 = vmatpush1.msra.mxu0 %v5788
      %5870 = vmatprep.subr.mxu0 0.0
      %5871 = vmatpush1.msra.mxu0 %v5787
      %5872 = vmatprep.subr.mxu0 0.0
      %5873 = vmatpush1.msra.mxu0 %v5786
      %5874 = vmatprep.subr.mxu0 0.0
      %5875 = vmatpush2.msra.mxu0 0.0
      %5876 = vmatprep.subr.mxu0 0.0
      %5877 = vmatpush2.msra.mxu0 0.0
      %5878 = vmatprep.subr.mxu0 0.0
      %5879 = vmatpush2.msra.mxu0 0.0
      %5880 = vmatprep.subr.mxu0 0.0
      %5881 = vmatpush2.msra.mxu0 0.0
      %5882 = vmatprep.subr.mxu0 0.0
      %5883 = vmatpush2.msra.mxu0 0.0
      %5884 = vmatprep.subr.mxu0 0.0
      %5885 = vmatpush2.msra.mxu0 0.0
      %5886 = vmatprep.subr.mxu0 0.0
      %5887 = vmatpush2.msra.mxu0 0.0
      %5888 = vmatprep.subr.mxu0 0.0
      %5889 = vmatpush2.msra.mxu0 0.0
      %5890 = vmatprep.subr.mxu0 0.0
      %5891 = vmatpush2.msra.mxu0 0.0
      %5892 = vmatprep.subr.mxu0 0.0
      %5893 = vmatpush2.msra.mxu0 0.0
      %5894 = vmatprep.subr.mxu0 0.0
      %5895 = vmatpush2.msra.mxu0 0.0
      %5896 = vmatprep.subr.mxu0 0.0
      %5897 = vmatpush2.msra.mxu0 0.0
      %5898 = vmatprep.subr.mxu0 0.0
      %5899 = vmatpush2.msra.mxu0 0.0
      %5900 = vmatprep.subr.mxu0 0.0
      %5901 = vmatpush2.msra.mxu0 0.0
      %5902 = vmatprep.subr.mxu0 0.0
      %5903 = vmatpush2.msra.mxu0 0.0
      %5904 = vmatprep.subr.mxu0 0.0
      %5905 = vmatpush2.msra.mxu0 0.0
      %5906 = vmatprep.mubr.f32.mxu0 0.0
      %5907 = vmatmul.mubr.f32.gmra.mxu0 %v5795
      %v5908 = vpop.f32.mrf.mxu0
      %v5909 = vadd.f32 0.0, %v5908
      %v5910 = vpop.f32.mrf.mxu0
      %5911 = vmatprep.mubr.f32.mxu0 0.0
      %5912 = vmatmul.mubr.f32.gmra.mxu0 %v5798
      %v5913 = vpop.f32.mrf.mxu0
      %v5914 = vadd.f32 0.0, %v5913
      %v5915 = vpop.f32.mrf.mxu0
      %5916 = vmatprep.mubr.f32.mxu0 0.0
      %5917 = vmatmul.mubr.f32.gmra.mxu0 %v5801
      %v5918 = vpop.f32.mrf.mxu0
      %v5919 = vadd.f32 0.0, %v5918
      %v5920 = vpop.f32.mrf.mxu0
      %5921 = vmatprep.mubr.f32.mxu0 0.0
      %5922 = vmatmul.mubr.f32.gmra.mxu0 %v5804
      %v5923 = vpop.f32.mrf.mxu0
      %v5924 = vadd.f32 0.0, %v5923
      %v5925 = vpop.f32.mrf.mxu0
      %5926 = vmatprep.mubr.f32.mxu0 0.0
      %5927 = vmatmul.mubr.f32.gmra.mxu0 %v5807
      %v5928 = vpop.f32.mrf.mxu0
      %v5929 = vadd.f32 0.0, %v5928
      %v5930 = vpop.f32.mrf.mxu0
      %5931 = vmatprep.mubr.f32.mxu0 0.0
      %5932 = vmatmul.mubr.f32.gmra.mxu0 %v5810
      %v5933 = vpop.f32.mrf.mxu0
      %v5934 = vadd.f32 0.0, %v5933
      %v5935 = vpop.f32.mrf.mxu0
      %5936 = vmatprep.mubr.f32.mxu0 0.0
      %5937 = vmatmul.mubr.f32.gmra.mxu0 %v5813
      %v5938 = vpop.f32.mrf.mxu0
      %v5939 = vadd.f32 0.0, %v5938
      %v5940 = vpop.f32.mrf.mxu0
      %5941 = vmatprep.mubr.f32.mxu0 0.0
      %5942 = vmatmul.mubr.f32.gmra.mxu0 %v5816
      %v5943 = vpop.f32.mrf.mxu0
      %v5944 = vadd.f32 0.0, %v5943
      %v5945 = vpop.f32.mrf.mxu0
      %5946 = vmatprep.mubr.f32.mxu0 0.0
      %5947 = vmatmul.mubr.f32.gmra.mxu0 %v5819
      %v5948 = vpop.f32.mrf.mxu0
      %v5949 = vadd.f32 0.0, %v5948
      %v5950 = vpop.f32.mrf.mxu0
      %5951 = vmatprep.mubr.f32.mxu0 0.0
      %5952 = vmatmul.mubr.f32.gmra.mxu0 %v5822
      %v5953 = vpop.f32.mrf.mxu0
      %v5954 = vadd.f32 0.0, %v5953
      %v5955 = vpop.f32.mrf.mxu0
      %5956 = vmatprep.mubr.f32.mxu0 0.0
      %5957 = vmatmul.mubr.f32.gmra.mxu0 %v5825
      %v5958 = vpop.f32.mrf.mxu0
      %v5959 = vadd.f32 0.0, %v5958
      %v5960 = vpop.f32.mrf.mxu0
      %5961 = vmatprep.mubr.f32.mxu0 0.0
      %5962 = vmatmul.mubr.f32.gmra.mxu0 %v5828
      %v5963 = vpop.f32.mrf.mxu0
      %v5964 = vadd.f32 0.0, %v5963
      %v5965 = vpop.f32.mrf.mxu0
      %5966 = vmatprep.mubr.f32.mxu0 0.0
      %5967 = vmatmul.mubr.f32.gmra.mxu0 %v5831
      %v5968 = vpop.f32.mrf.mxu0
      %v5969 = vadd.f32 0.0, %v5968
      %v5970 = vpop.f32.mrf.mxu0
      %5971 = vmatprep.mubr.f32.mxu0 0.0
      %5972 = vmatmul.mubr.f32.gmra.mxu0 %v5834
      %v5973 = vpop.f32.mrf.mxu0
      %v5974 = vadd.f32 0.0, %v5973
      %v5975 = vpop.f32.mrf.mxu0
      %5976 = vmatprep.mubr.f32.mxu0 0.0
      %5977 = vmatmul.mubr.f32.gmra.mxu0 %v5837
      %v5978 = vpop.f32.mrf.mxu0
      %v5979 = vadd.f32 0.0, %v5978
      %v5980 = vpop.f32.mrf.mxu0
      %5981 = vmatprep.mubr.f32.mxu0 0.0
      %5982 = vmatmul.mubr.f32.gmra.mxu0 %v5840
      %v5983 = vpop.f32.mrf.mxu0
      %v5984 = vadd.f32 0.0, %v5983
      %v5985 = vpop.f32.mrf.mxu0
      %5986 = vdwg.mxu0
      %v5987 = vadd.f32 %v5753, %v5909
      %v5988 = vadd.f32 %v5754, %v5914
      %v5989 = vadd.f32 %v5755, %v5919
      %v5990 = vadd.f32 %v5756, %v5924
      %v5991 = vadd.f32 %v5757, %v5929
      %v5992 = vadd.f32 %v5758, %v5934
      %v5993 = vadd.f32 %v5759, %v5939
      %v5994 = vadd.f32 %v5760, %v5944
      %v5995 = vadd.f32 %v5761, %v5949
      %v5996 = vadd.f32 %v5762, %v5954
      %v5997 = vadd.f32 %v5763, %v5959
      %v5998 = vadd.f32 %v5764, %v5964
      %v5999 = vadd.f32 %v5765, %v5969
      %v6000 = vadd.f32 %v5766, %v5974
      %v6001 = vadd.f32 %v5767, %v5979
      %v6002 = vadd.f32 %v5768, %v5984
      %v6003 = vld [vmem:[%s677 + $0x9] sm:$0xff]
      %v6004 = vld [vmem:[%s677 + $0x11] sm:$0xff]
      %v6005 = vld [vmem:[%s677 + $0x29] sm:$0xff]
      %v6006 = vld [vmem:[%s677 + $0x31] sm:$0xff]
      %v6007 = vld [vmem:[%s677 + $0x49] sm:$0xff]
      %v6008 = vld [vmem:[%s677 + $0x51] sm:$0xff]
      %v6009 = vld [vmem:[%s677 + $0x69] sm:$0xff]
      %v6010 = vld [vmem:[%s677 + $0x71] sm:$0xff]
      %v6011 = vld [vmem:[%s677 + $0x89] sm:$0xff]
      %v6012 = vld [vmem:[%s677 + $0x91] sm:$0xff]
      %v6013 = vld [vmem:[%s677 + $0xa9] sm:$0xff]
      %v6014 = vld [vmem:[%s677 + $0xb1] sm:$0xff]
      %v6015 = vld [vmem:[%s677 + $0xc9] sm:$0xff]
      %v6016 = vld [vmem:[%s677 + $0xd1] sm:$0xff]
      %v6017 = vld [vmem:[%s677 + $0xe9] sm:$0xff]
      %v6018 = vld [vmem:[%s677 + $0xf1] sm:$0xff]
      %s6019 = scalar_lea.vmem %s5, 320
      %v6020 = vld [vmem:[%s6019] sm:$0xff]
      %v6021 = vld [vmem:[%s6019 + $0x8] sm:$0xff]
      %v6022 = vld [vmem:[%s6019 + $0x10] sm:$0xff]
      %v6023 = vld [vmem:[%s6019 + $0x18] sm:$0xff]
      %v6024 = vld [vmem:[%s6019 + $0x20] sm:$0xff]
      %v6025 = vld [vmem:[%s6019 + $0x28] sm:$0xff]
      %v6026 = vld [vmem:[%s6019 + $0x30] sm:$0xff]
      %v6027 = vld [vmem:[%s6019 + $0x38] sm:$0xff]
      %v6029 = vsel %vm668, %v6003, 0
      %v6032 = vsel %vm668, %v6004, 0
      %v6035 = vsel %vm668, %v6005, 0
      %v6038 = vsel %vm668, %v6006, 0
      %v6041 = vsel %vm668, %v6007, 0
      %v6044 = vsel %vm668, %v6008, 0
      %v6047 = vsel %vm668, %v6009, 0
      %v6050 = vsel %vm668, %v6010, 0
      %v6053 = vsel %vm668, %v6011, 0
      %v6056 = vsel %vm668, %v6012, 0
      %v6059 = vsel %vm668, %v6013, 0
      %v6062 = vsel %vm668, %v6014, 0
      %v6065 = vsel %vm668, %v6015, 0
      %v6068 = vsel %vm668, %v6016, 0
      %v6071 = vsel %vm668, %v6017, 0
      %v6074 = vsel %vm668, %v6018, 0
      %6076 = vmatprep.subr.mxu0 0.0
      %6077 = vmatpush1.msra.mxu0 0.0
      %6078 = vmatprep.subr.mxu0 0.0
      %6079 = vmatpush1.msra.mxu0 0.0
      %6080 = vmatprep.subr.mxu0 0.0
      %6081 = vmatpush1.msra.mxu0 0.0
      %6082 = vmatprep.subr.mxu0 0.0
      %6083 = vmatpush1.msra.mxu0 0.0
      %6084 = vmatprep.subr.mxu0 0.0
      %6085 = vmatpush1.msra.mxu0 0.0
      %6086 = vmatprep.subr.mxu0 0.0
      %6087 = vmatpush1.msra.mxu0 0.0
      %6088 = vmatprep.subr.mxu0 0.0
      %6089 = vmatpush1.msra.mxu0 0.0
      %6090 = vmatprep.subr.mxu0 0.0
      %6091 = vmatpush1.msra.mxu0 0.0
      %6092 = vmatprep.subr.mxu0 0.0
      %6093 = vmatpush1.msra.mxu0 %v6027
      %6094 = vmatprep.subr.mxu0 0.0
      %6095 = vmatpush1.msra.mxu0 %v6026
      %6096 = vmatprep.subr.mxu0 0.0
      %6097 = vmatpush1.msra.mxu0 %v6025
      %6098 = vmatprep.subr.mxu0 0.0
      %6099 = vmatpush1.msra.mxu0 %v6024
      %6100 = vmatprep.subr.mxu0 0.0
      %6101 = vmatpush1.msra.mxu0 %v6023
      %6102 = vmatprep.subr.mxu0 0.0
      %6103 = vmatpush1.msra.mxu0 %v6022
      %6104 = vmatprep.subr.mxu0 0.0
      %6105 = vmatpush1.msra.mxu0 %v6021
      %6106 = vmatprep.subr.mxu0 0.0
      %6107 = vmatpush1.msra.mxu0 %v6020
      %6108 = vmatprep.subr.mxu0 0.0
      %6109 = vmatpush2.msra.mxu0 0.0
      %6110 = vmatprep.subr.mxu0 0.0
      %6111 = vmatpush2.msra.mxu0 0.0
      %6112 = vmatprep.subr.mxu0 0.0
      %6113 = vmatpush2.msra.mxu0 0.0
      %6114 = vmatprep.subr.mxu0 0.0
      %6115 = vmatpush2.msra.mxu0 0.0
      %6116 = vmatprep.subr.mxu0 0.0
      %6117 = vmatpush2.msra.mxu0 0.0
      %6118 = vmatprep.subr.mxu0 0.0
      %6119 = vmatpush2.msra.mxu0 0.0
      %6120 = vmatprep.subr.mxu0 0.0
      %6121 = vmatpush2.msra.mxu0 0.0
      %6122 = vmatprep.subr.mxu0 0.0
      %6123 = vmatpush2.msra.mxu0 0.0
      %6124 = vmatprep.subr.mxu0 0.0
      %6125 = vmatpush2.msra.mxu0 0.0
      %6126 = vmatprep.subr.mxu0 0.0
      %6127 = vmatpush2.msra.mxu0 0.0
      %6128 = vmatprep.subr.mxu0 0.0
      %6129 = vmatpush2.msra.mxu0 0.0
      %6130 = vmatprep.subr.mxu0 0.0
      %6131 = vmatpush2.msra.mxu0 0.0
      %6132 = vmatprep.subr.mxu0 0.0
      %6133 = vmatpush2.msra.mxu0 0.0
      %6134 = vmatprep.subr.mxu0 0.0
      %6135 = vmatpush2.msra.mxu0 0.0
      %6136 = vmatprep.subr.mxu0 0.0
      %6137 = vmatpush2.msra.mxu0 0.0
      %6138 = vmatprep.subr.mxu0 0.0
      %6139 = vmatpush2.msra.mxu0 0.0
      %6140 = vmatprep.mubr.f32.mxu0 0.0
      %6141 = vmatmul.mubr.f32.gmra.mxu0 %v6029
      %v6142 = vpop.f32.mrf.mxu0
      %v6143 = vadd.f32 0.0, %v6142
      %v6144 = vpop.f32.mrf.mxu0
      %6145 = vmatprep.mubr.f32.mxu0 0.0
      %6146 = vmatmul.mubr.f32.gmra.mxu0 %v6032
      %v6147 = vpop.f32.mrf.mxu0
      %v6148 = vadd.f32 0.0, %v6147
      %v6149 = vpop.f32.mrf.mxu0
      %6150 = vmatprep.mubr.f32.mxu0 0.0
      %6151 = vmatmul.mubr.f32.gmra.mxu0 %v6035
      %v6152 = vpop.f32.mrf.mxu0
      %v6153 = vadd.f32 0.0, %v6152
      %v6154 = vpop.f32.mrf.mxu0
      %6155 = vmatprep.mubr.f32.mxu0 0.0
      %6156 = vmatmul.mubr.f32.gmra.mxu0 %v6038
      %v6157 = vpop.f32.mrf.mxu0
      %v6158 = vadd.f32 0.0, %v6157
      %v6159 = vpop.f32.mrf.mxu0
      %6160 = vmatprep.mubr.f32.mxu0 0.0
      %6161 = vmatmul.mubr.f32.gmra.mxu0 %v6041
      %v6162 = vpop.f32.mrf.mxu0
      %v6163 = vadd.f32 0.0, %v6162
      %v6164 = vpop.f32.mrf.mxu0
      %6165 = vmatprep.mubr.f32.mxu0 0.0
      %6166 = vmatmul.mubr.f32.gmra.mxu0 %v6044
      %v6167 = vpop.f32.mrf.mxu0
      %v6168 = vadd.f32 0.0, %v6167
      %v6169 = vpop.f32.mrf.mxu0
      %6170 = vmatprep.mubr.f32.mxu0 0.0
      %6171 = vmatmul.mubr.f32.gmra.mxu0 %v6047
      %v6172 = vpop.f32.mrf.mxu0
      %v6173 = vadd.f32 0.0, %v6172
      %v6174 = vpop.f32.mrf.mxu0
      %6175 = vmatprep.mubr.f32.mxu0 0.0
      %6176 = vmatmul.mubr.f32.gmra.mxu0 %v6050
      %v6177 = vpop.f32.mrf.mxu0
      %v6178 = vadd.f32 0.0, %v6177
      %v6179 = vpop.f32.mrf.mxu0
      %6180 = vmatprep.mubr.f32.mxu0 0.0
      %6181 = vmatmul.mubr.f32.gmra.mxu0 %v6053
      %v6182 = vpop.f32.mrf.mxu0
      %v6183 = vadd.f32 0.0, %v6182
      %v6184 = vpop.f32.mrf.mxu0
      %6185 = vmatprep.mubr.f32.mxu0 0.0
      %6186 = vmatmul.mubr.f32.gmra.mxu0 %v6056
      %v6187 = vpop.f32.mrf.mxu0
      %v6188 = vadd.f32 0.0, %v6187
      %v6189 = vpop.f32.mrf.mxu0
      %6190 = vmatprep.mubr.f32.mxu0 0.0
      %6191 = vmatmul.mubr.f32.gmra.mxu0 %v6059
      %v6192 = vpop.f32.mrf.mxu0
      %v6193 = vadd.f32 0.0, %v6192
      %v6194 = vpop.f32.mrf.mxu0
      %6195 = vmatprep.mubr.f32.mxu0 0.0
      %6196 = vmatmul.mubr.f32.gmra.mxu0 %v6062
      %v6197 = vpop.f32.mrf.mxu0
      %v6198 = vadd.f32 0.0, %v6197
      %v6199 = vpop.f32.mrf.mxu0
      %6200 = vmatprep.mubr.f32.mxu0 0.0
      %6201 = vmatmul.mubr.f32.gmra.mxu0 %v6065
      %v6202 = vpop.f32.mrf.mxu0
      %v6203 = vadd.f32 0.0, %v6202
      %v6204 = vpop.f32.mrf.mxu0
      %6205 = vmatprep.mubr.f32.mxu0 0.0
      %6206 = vmatmul.mubr.f32.gmra.mxu0 %v6068
      %v6207 = vpop.f32.mrf.mxu0
      %v6208 = vadd.f32 0.0, %v6207
      %v6209 = vpop.f32.mrf.mxu0
      %6210 = vmatprep.mubr.f32.mxu0 0.0
      %6211 = vmatmul.mubr.f32.gmra.mxu0 %v6071
      %v6212 = vpop.f32.mrf.mxu0
      %v6213 = vadd.f32 0.0, %v6212
      %v6214 = vpop.f32.mrf.mxu0
      %6215 = vmatprep.mubr.f32.mxu0 0.0
      %6216 = vmatmul.mubr.f32.gmra.mxu0 %v6074
      %v6217 = vpop.f32.mrf.mxu0
      %v6218 = vadd.f32 0.0, %v6217
      %v6219 = vpop.f32.mrf.mxu0
      %6220 = vdwg.mxu0
      %v6221 = vadd.f32 %v5987, %v6143
      %v6222 = vadd.f32 %v5988, %v6148
      %v6223 = vadd.f32 %v5989, %v6153
      %v6224 = vadd.f32 %v5990, %v6158
      %v6225 = vadd.f32 %v5991, %v6163
      %v6226 = vadd.f32 %v5992, %v6168
      %v6227 = vadd.f32 %v5993, %v6173
      %v6228 = vadd.f32 %v5994, %v6178
      %v6229 = vadd.f32 %v5995, %v6183
      %v6230 = vadd.f32 %v5996, %v6188
      %v6231 = vadd.f32 %v5997, %v6193
      %v6232 = vadd.f32 %v5998, %v6198
      %v6233 = vadd.f32 %v5999, %v6203
      %v6234 = vadd.f32 %v6000, %v6208
      %v6235 = vadd.f32 %v6001, %v6213
      %v6236 = vadd.f32 %v6002, %v6218
      %v6237 = vld [vmem:[%s2122 + $0x7] sm:$0xff]
      %v6238 = vld [vmem:[%s2122 + $0xf] sm:$0xff]
      %v6239 = vld [vmem:[%s2122 + $0x27] sm:$0xff]
      %v6240 = vld [vmem:[%s2122 + $0x2f] sm:$0xff]
      %v6241 = vld [vmem:[%s2122 + $0x47] sm:$0xff]
      %v6242 = vld [vmem:[%s2122 + $0x4f] sm:$0xff]
      %v6243 = vld [vmem:[%s2122 + $0x67] sm:$0xff]
      %v6244 = vld [vmem:[%s2122 + $0x6f] sm:$0xff]
      %v6245 = vld [vmem:[%s2122 + $0x87] sm:$0xff]
      %v6246 = vld [vmem:[%s2122 + $0x8f] sm:$0xff]
      %v6247 = vld [vmem:[%s2122 + $0xa7] sm:$0xff]
      %v6248 = vld [vmem:[%s2122 + $0xaf] sm:$0xff]
      %v6249 = vld [vmem:[%s2122 + $0xc7] sm:$0xff]
      %v6250 = vld [vmem:[%s2122 + $0xcf] sm:$0xff]
      %v6251 = vld [vmem:[%s2122 + $0xe7] sm:$0xff]
      %v6252 = vld [vmem:[%s2122 + $0xef] sm:$0xff]
      %s6253 = scalar_lea.vmem %s5, 384
      %v6254 = vld [vmem:[%s6253] sm:$0xff]
      %v6255 = vld [vmem:[%s6253 + $0x8] sm:$0xff]
      %v6256 = vld [vmem:[%s6253 + $0x10] sm:$0xff]
      %v6257 = vld [vmem:[%s6253 + $0x18] sm:$0xff]
      %v6258 = vld [vmem:[%s6253 + $0x20] sm:$0xff]
      %v6259 = vld [vmem:[%s6253 + $0x28] sm:$0xff]
      %v6260 = vld [vmem:[%s6253 + $0x30] sm:$0xff]
      %v6261 = vld [vmem:[%s6253 + $0x38] sm:$0xff]
      %v6263 = vsel %vm668, %v6237, 0
      %v6266 = vsel %vm668, %v6238, 0
      %v6269 = vsel %vm668, %v6239, 0
      %v6272 = vsel %vm668, %v6240, 0
      %v6275 = vsel %vm668, %v6241, 0
      %v6278 = vsel %vm668, %v6242, 0
      %v6281 = vsel %vm668, %v6243, 0
      %v6284 = vsel %vm668, %v6244, 0
      %v6287 = vsel %vm668, %v6245, 0
      %v6290 = vsel %vm668, %v6246, 0
      %v6293 = vsel %vm668, %v6247, 0
      %v6296 = vsel %vm668, %v6248, 0
      %v6299 = vsel %vm668, %v6249, 0
      %v6302 = vsel %vm668, %v6250, 0
      %v6305 = vsel %vm668, %v6251, 0
      %v6308 = vsel %vm668, %v6252, 0
      %6310 = vmatprep.subr.mxu0 0.0
      %6311 = vmatpush1.msra.mxu0 0.0
      %6312 = vmatprep.subr.mxu0 0.0
      %6313 = vmatpush1.msra.mxu0 0.0
      %6314 = vmatprep.subr.mxu0 0.0
      %6315 = vmatpush1.msra.mxu0 0.0
      %6316 = vmatprep.subr.mxu0 0.0
      %6317 = vmatpush1.msra.mxu0 0.0
      %6318 = vmatprep.subr.mxu0 0.0
      %6319 = vmatpush1.msra.mxu0 0.0
      %6320 = vmatprep.subr.mxu0 0.0
      %6321 = vmatpush1.msra.mxu0 0.0
      %6322 = vmatprep.subr.mxu0 0.0
      %6323 = vmatpush1.msra.mxu0 0.0
      %6324 = vmatprep.subr.mxu0 0.0
      %6325 = vmatpush1.msra.mxu0 0.0
      %6326 = vmatprep.subr.mxu0 0.0
      %6327 = vmatpush1.msra.mxu0 %v6261
      %6328 = vmatprep.subr.mxu0 0.0
      %6329 = vmatpush1.msra.mxu0 %v6260
      %6330 = vmatprep.subr.mxu0 0.0
      %6331 = vmatpush1.msra.mxu0 %v6259
      %6332 = vmatprep.subr.mxu0 0.0
      %6333 = vmatpush1.msra.mxu0 %v6258
      %6334 = vmatprep.subr.mxu0 0.0
      %6335 = vmatpush1.msra.mxu0 %v6257
      %6336 = vmatprep.subr.mxu0 0.0
      %6337 = vmatpush1.msra.mxu0 %v6256
      %6338 = vmatprep.subr.mxu0 0.0
      %6339 = vmatpush1.msra.mxu0 %v6255
      %6340 = vmatprep.subr.mxu0 0.0
      %6341 = vmatpush1.msra.mxu0 %v6254
      %6342 = vmatprep.subr.mxu0 0.0
      %6343 = vmatpush2.msra.mxu0 0.0
      %6344 = vmatprep.subr.mxu0 0.0
      %6345 = vmatpush2.msra.mxu0 0.0
      %6346 = vmatprep.subr.mxu0 0.0
      %6347 = vmatpush2.msra.mxu0 0.0
      %6348 = vmatprep.subr.mxu0 0.0
      %6349 = vmatpush2.msra.mxu0 0.0
      %6350 = vmatprep.subr.mxu0 0.0
      %6351 = vmatpush2.msra.mxu0 0.0
      %6352 = vmatprep.subr.mxu0 0.0
      %6353 = vmatpush2.msra.mxu0 0.0
      %6354 = vmatprep.subr.mxu0 0.0
      %6355 = vmatpush2.msra.mxu0 0.0
      %6356 = vmatprep.subr.mxu0 0.0
      %6357 = vmatpush2.msra.mxu0 0.0
      %6358 = vmatprep.subr.mxu0 0.0
      %6359 = vmatpush2.msra.mxu0 0.0
      %6360 = vmatprep.subr.mxu0 0.0
      %6361 = vmatpush2.msra.mxu0 0.0
      %6362 = vmatprep.subr.mxu0 0.0
      %6363 = vmatpush2.msra.mxu0 0.0
      %6364 = vmatprep.subr.mxu0 0.0
      %6365 = vmatpush2.msra.mxu0 0.0
      %6366 = vmatprep.subr.mxu0 0.0
      %6367 = vmatpush2.msra.mxu0 0.0
      %6368 = vmatprep.subr.mxu0 0.0
      %6369 = vmatpush2.msra.mxu0 0.0
      %6370 = vmatprep.subr.mxu0 0.0
      %6371 = vmatpush2.msra.mxu0 0.0
      %6372 = vmatprep.subr.mxu0 0.0
      %6373 = vmatpush2.msra.mxu0 0.0
      %6374 = vmatprep.mubr.f32.mxu0 0.0
      %6375 = vmatmul.mubr.f32.gmra.mxu0 %v6263
      %v6376 = vpop.f32.mrf.mxu0
      %v6377 = vadd.f32 0.0, %v6376
      %v6378 = vpop.f32.mrf.mxu0
      %6379 = vmatprep.mubr.f32.mxu0 0.0
      %6380 = vmatmul.mubr.f32.gmra.mxu0 %v6266
      %v6381 = vpop.f32.mrf.mxu0
      %v6382 = vadd.f32 0.0, %v6381
      %v6383 = vpop.f32.mrf.mxu0
      %6384 = vmatprep.mubr.f32.mxu0 0.0
      %6385 = vmatmul.mubr.f32.gmra.mxu0 %v6269
      %v6386 = vpop.f32.mrf.mxu0
      %v6387 = vadd.f32 0.0, %v6386
      %v6388 = vpop.f32.mrf.mxu0
      %6389 = vmatprep.mubr.f32.mxu0 0.0
      %6390 = vmatmul.mubr.f32.gmra.mxu0 %v6272
      %v6391 = vpop.f32.mrf.mxu0
      %v6392 = vadd.f32 0.0, %v6391
      %v6393 = vpop.f32.mrf.mxu0
      %6394 = vmatprep.mubr.f32.mxu0 0.0
      %6395 = vmatmul.mubr.f32.gmra.mxu0 %v6275
      %v6396 = vpop.f32.mrf.mxu0
      %v6397 = vadd.f32 0.0, %v6396
      %v6398 = vpop.f32.mrf.mxu0
      %6399 = vmatprep.mubr.f32.mxu0 0.0
      %6400 = vmatmul.mubr.f32.gmra.mxu0 %v6278
      %v6401 = vpop.f32.mrf.mxu0
      %v6402 = vadd.f32 0.0, %v6401
      %v6403 = vpop.f32.mrf.mxu0
      %6404 = vmatprep.mubr.f32.mxu0 0.0
      %6405 = vmatmul.mubr.f32.gmra.mxu0 %v6281
      %v6406 = vpop.f32.mrf.mxu0
      %v6407 = vadd.f32 0.0, %v6406
      %v6408 = vpop.f32.mrf.mxu0
      %6409 = vmatprep.mubr.f32.mxu0 0.0
      %6410 = vmatmul.mubr.f32.gmra.mxu0 %v6284
      %v6411 = vpop.f32.mrf.mxu0
      %v6412 = vadd.f32 0.0, %v6411
      %v6413 = vpop.f32.mrf.mxu0
      %6414 = vmatprep.mubr.f32.mxu0 0.0
      %6415 = vmatmul.mubr.f32.gmra.mxu0 %v6287
      %v6416 = vpop.f32.mrf.mxu0
      %v6417 = vadd.f32 0.0, %v6416
      %v6418 = vpop.f32.mrf.mxu0
      %6419 = vmatprep.mubr.f32.mxu0 0.0
      %6420 = vmatmul.mubr.f32.gmra.mxu0 %v6290
      %v6421 = vpop.f32.mrf.mxu0
      %v6422 = vadd.f32 0.0, %v6421
      %v6423 = vpop.f32.mrf.mxu0
      %6424 = vmatprep.mubr.f32.mxu0 0.0
      %6425 = vmatmul.mubr.f32.gmra.mxu0 %v6293
      %v6426 = vpop.f32.mrf.mxu0
      %v6427 = vadd.f32 0.0, %v6426
      %v6428 = vpop.f32.mrf.mxu0
      %6429 = vmatprep.mubr.f32.mxu0 0.0
      %6430 = vmatmul.mubr.f32.gmra.mxu0 %v6296
      %v6431 = vpop.f32.mrf.mxu0
      %v6432 = vadd.f32 0.0, %v6431
      %v6433 = vpop.f32.mrf.mxu0
      %6434 = vmatprep.mubr.f32.mxu0 0.0
      %6435 = vmatmul.mubr.f32.gmra.mxu0 %v6299
      %v6436 = vpop.f32.mrf.mxu0
      %v6437 = vadd.f32 0.0, %v6436
      %v6438 = vpop.f32.mrf.mxu0
      %6439 = vmatprep.mubr.f32.mxu0 0.0
      %6440 = vmatmul.mubr.f32.gmra.mxu0 %v6302
      %v6441 = vpop.f32.mrf.mxu0
      %v6442 = vadd.f32 0.0, %v6441
      %v6443 = vpop.f32.mrf.mxu0
      %6444 = vmatprep.mubr.f32.mxu0 0.0
      %6445 = vmatmul.mubr.f32.gmra.mxu0 %v6305
      %v6446 = vpop.f32.mrf.mxu0
      %v6447 = vadd.f32 0.0, %v6446
      %v6448 = vpop.f32.mrf.mxu0
      %6449 = vmatprep.mubr.f32.mxu0 0.0
      %6450 = vmatmul.mubr.f32.gmra.mxu0 %v6308
      %v6451 = vpop.f32.mrf.mxu0
      %v6452 = vadd.f32 0.0, %v6451
      %v6453 = vpop.f32.mrf.mxu0
      %6454 = vdwg.mxu0
      %v6455 = vadd.f32 %v6221, %v6377
      %v6456 = vadd.f32 %v6222, %v6382
      %v6457 = vadd.f32 %v6223, %v6387
      %v6458 = vadd.f32 %v6224, %v6392
      %v6459 = vadd.f32 %v6225, %v6397
      %v6460 = vadd.f32 %v6226, %v6402
      %v6461 = vadd.f32 %v6227, %v6407
      %v6462 = vadd.f32 %v6228, %v6412
      %v6463 = vadd.f32 %v6229, %v6417
      %v6464 = vadd.f32 %v6230, %v6422
      %v6465 = vadd.f32 %v6231, %v6427
      %v6466 = vadd.f32 %v6232, %v6432
      %v6467 = vadd.f32 %v6233, %v6437
      %v6468 = vadd.f32 %v6234, %v6442
      %v6469 = vadd.f32 %v6235, %v6447
      %v6470 = vadd.f32 %v6236, %v6452
      %v6471 = vld [vmem:[%s2122 + $0x8] sm:$0xff]
      %v6472 = vld [vmem:[%s2122 + $0x10] sm:$0xff]
      %v6473 = vld [vmem:[%s2122 + $0x28] sm:$0xff]
      %v6474 = vld [vmem:[%s2122 + $0x30] sm:$0xff]
      %v6475 = vld [vmem:[%s2122 + $0x48] sm:$0xff]
      %v6476 = vld [vmem:[%s2122 + $0x50] sm:$0xff]
      %v6477 = vld [vmem:[%s2122 + $0x68] sm:$0xff]
      %v6478 = vld [vmem:[%s2122 + $0x70] sm:$0xff]
      %v6479 = vld [vmem:[%s2122 + $0x88] sm:$0xff]
      %v6480 = vld [vmem:[%s2122 + $0x90] sm:$0xff]
      %v6481 = vld [vmem:[%s2122 + $0xa8] sm:$0xff]
      %v6482 = vld [vmem:[%s2122 + $0xb0] sm:$0xff]
      %v6483 = vld [vmem:[%s2122 + $0xc8] sm:$0xff]
      %v6484 = vld [vmem:[%s2122 + $0xd0] sm:$0xff]
      %v6485 = vld [vmem:[%s2122 + $0xe8] sm:$0xff]
      %v6486 = vld [vmem:[%s2122 + $0xf0] sm:$0xff]
      %s6487 = scalar_lea.vmem %s5, 448
      %v6488 = vld [vmem:[%s6487] sm:$0xff]
      %v6489 = vld [vmem:[%s6487 + $0x8] sm:$0xff]
      %v6490 = vld [vmem:[%s6487 + $0x10] sm:$0xff]
      %v6491 = vld [vmem:[%s6487 + $0x18] sm:$0xff]
      %v6492 = vld [vmem:[%s6487 + $0x20] sm:$0xff]
      %v6493 = vld [vmem:[%s6487 + $0x28] sm:$0xff]
      %v6494 = vld [vmem:[%s6487 + $0x30] sm:$0xff]
      %v6495 = vld [vmem:[%s6487 + $0x38] sm:$0xff]
      %v6497 = vsel %vm668, %v6471, 0
      %v6500 = vsel %vm668, %v6472, 0
      %v6503 = vsel %vm668, %v6473, 0
      %v6506 = vsel %vm668, %v6474, 0
      %v6509 = vsel %vm668, %v6475, 0
      %v6512 = vsel %vm668, %v6476, 0
      %v6515 = vsel %vm668, %v6477, 0
      %v6518 = vsel %vm668, %v6478, 0
      %v6521 = vsel %vm668, %v6479, 0
      %v6524 = vsel %vm668, %v6480, 0
      %v6527 = vsel %vm668, %v6481, 0
      %v6530 = vsel %vm668, %v6482, 0
      %v6533 = vsel %vm668, %v6483, 0
      %v6536 = vsel %vm668, %v6484, 0
      %v6539 = vsel %vm668, %v6485, 0
      %v6542 = vsel %vm668, %v6486, 0
      %6544 = vmatprep.subr.mxu0 0.0
      %6545 = vmatpush1.msra.mxu0 0.0
      %6546 = vmatprep.subr.mxu0 0.0
      %6547 = vmatpush1.msra.mxu0 0.0
      %6548 = vmatprep.subr.mxu0 0.0
      %6549 = vmatpush1.msra.mxu0 0.0
      %6550 = vmatprep.subr.mxu0 0.0
      %6551 = vmatpush1.msra.mxu0 0.0
      %6552 = vmatprep.subr.mxu0 0.0
      %6553 = vmatpush1.msra.mxu0 0.0
      %6554 = vmatprep.subr.mxu0 0.0
      %6555 = vmatpush1.msra.mxu0 0.0
      %6556 = vmatprep.subr.mxu0 0.0
      %6557 = vmatpush1.msra.mxu0 0.0
      %6558 = vmatprep.subr.mxu0 0.0
      %6559 = vmatpush1.msra.mxu0 0.0
      %6560 = vmatprep.subr.mxu0 0.0
      %6561 = vmatpush1.msra.mxu0 %v6495
      %6562 = vmatprep.subr.mxu0 0.0
      %6563 = vmatpush1.msra.mxu0 %v6494
      %6564 = vmatprep.subr.mxu0 0.0
      %6565 = vmatpush1.msra.mxu0 %v6493
      %6566 = vmatprep.subr.mxu0 0.0
      %6567 = vmatpush1.msra.mxu0 %v6492
      %6568 = vmatprep.subr.mxu0 0.0
      %6569 = vmatpush1.msra.mxu0 %v6491
      %6570 = vmatprep.subr.mxu0 0.0
      %6571 = vmatpush1.msra.mxu0 %v6490
      %6572 = vmatprep.subr.mxu0 0.0
      %6573 = vmatpush1.msra.mxu0 %v6489
      %6574 = vmatprep.subr.mxu0 0.0
      %6575 = vmatpush1.msra.mxu0 %v6488
      %6576 = vmatprep.subr.mxu0 0.0
      %6577 = vmatpush2.msra.mxu0 0.0
      %6578 = vmatprep.subr.mxu0 0.0
      %6579 = vmatpush2.msra.mxu0 0.0
      %6580 = vmatprep.subr.mxu0 0.0
      %6581 = vmatpush2.msra.mxu0 0.0
      %6582 = vmatprep.subr.mxu0 0.0
      %6583 = vmatpush2.msra.mxu0 0.0
      %6584 = vmatprep.subr.mxu0 0.0
      %6585 = vmatpush2.msra.mxu0 0.0
      %6586 = vmatprep.subr.mxu0 0.0
      %6587 = vmatpush2.msra.mxu0 0.0
      %6588 = vmatprep.subr.mxu0 0.0
      %6589 = vmatpush2.msra.mxu0 0.0
      %6590 = vmatprep.subr.mxu0 0.0
      %6591 = vmatpush2.msra.mxu0 0.0
      %6592 = vmatprep.subr.mxu0 0.0
      %6593 = vmatpush2.msra.mxu0 0.0
      %6594 = vmatprep.subr.mxu0 0.0
      %6595 = vmatpush2.msra.mxu0 0.0
      %6596 = vmatprep.subr.mxu0 0.0
      %6597 = vmatpush2.msra.mxu0 0.0
      %6598 = vmatprep.subr.mxu0 0.0
      %6599 = vmatpush2.msra.mxu0 0.0
      %6600 = vmatprep.subr.mxu0 0.0
      %6601 = vmatpush2.msra.mxu0 0.0
      %6602 = vmatprep.subr.mxu0 0.0
      %6603 = vmatpush2.msra.mxu0 0.0
      %6604 = vmatprep.subr.mxu0 0.0
      %6605 = vmatpush2.msra.mxu0 0.0
      %6606 = vmatprep.subr.mxu0 0.0
      %6607 = vmatpush2.msra.mxu0 0.0
      %6608 = vmatprep.mubr.f32.mxu0 0.0
      %6609 = vmatmul.mubr.f32.gmra.mxu0 %v6497
      %v6610 = vpop.f32.mrf.mxu0
      %v6611 = vadd.f32 0.0, %v6610
      %v6612 = vpop.f32.mrf.mxu0
      %6613 = vmatprep.mubr.f32.mxu0 0.0
      %6614 = vmatmul.mubr.f32.gmra.mxu0 %v6500
      %v6615 = vpop.f32.mrf.mxu0
      %v6616 = vadd.f32 0.0, %v6615
      %v6617 = vpop.f32.mrf.mxu0
      %6618 = vmatprep.mubr.f32.mxu0 0.0
      %6619 = vmatmul.mubr.f32.gmra.mxu0 %v6503
      %v6620 = vpop.f32.mrf.mxu0
      %v6621 = vadd.f32 0.0, %v6620
      %v6622 = vpop.f32.mrf.mxu0
      %6623 = vmatprep.mubr.f32.mxu0 0.0
      %6624 = vmatmul.mubr.f32.gmra.mxu0 %v6506
      %v6625 = vpop.f32.mrf.mxu0
      %v6626 = vadd.f32 0.0, %v6625
      %v6627 = vpop.f32.mrf.mxu0
      %6628 = vmatprep.mubr.f32.mxu0 0.0
      %6629 = vmatmul.mubr.f32.gmra.mxu0 %v6509
      %v6630 = vpop.f32.mrf.mxu0
      %v6631 = vadd.f32 0.0, %v6630
      %v6632 = vpop.f32.mrf.mxu0
      %6633 = vmatprep.mubr.f32.mxu0 0.0
      %6634 = vmatmul.mubr.f32.gmra.mxu0 %v6512
      %v6635 = vpop.f32.mrf.mxu0
      %v6636 = vadd.f32 0.0, %v6635
      %v6637 = vpop.f32.mrf.mxu0
      %6638 = vmatprep.mubr.f32.mxu0 0.0
      %6639 = vmatmul.mubr.f32.gmra.mxu0 %v6515
      %v6640 = vpop.f32.mrf.mxu0
      %v6641 = vadd.f32 0.0, %v6640
      %v6642 = vpop.f32.mrf.mxu0
      %6643 = vmatprep.mubr.f32.mxu0 0.0
      %6644 = vmatmul.mubr.f32.gmra.mxu0 %v6518
      %v6645 = vpop.f32.mrf.mxu0
      %v6646 = vadd.f32 0.0, %v6645
      %v6647 = vpop.f32.mrf.mxu0
      %6648 = vmatprep.mubr.f32.mxu0 0.0
      %6649 = vmatmul.mubr.f32.gmra.mxu0 %v6521
      %v6650 = vpop.f32.mrf.mxu0
      %v6651 = vadd.f32 0.0, %v6650
      %v6652 = vpop.f32.mrf.mxu0
      %6653 = vmatprep.mubr.f32.mxu0 0.0
      %6654 = vmatmul.mubr.f32.gmra.mxu0 %v6524
      %v6655 = vpop.f32.mrf.mxu0
      %v6656 = vadd.f32 0.0, %v6655
      %v6657 = vpop.f32.mrf.mxu0
      %6658 = vmatprep.mubr.f32.mxu0 0.0
      %6659 = vmatmul.mubr.f32.gmra.mxu0 %v6527
      %v6660 = vpop.f32.mrf.mxu0
      %v6661 = vadd.f32 0.0, %v6660
      %v6662 = vpop.f32.mrf.mxu0
      %6663 = vmatprep.mubr.f32.mxu0 0.0
      %6664 = vmatmul.mubr.f32.gmra.mxu0 %v6530
      %v6665 = vpop.f32.mrf.mxu0
      %v6666 = vadd.f32 0.0, %v6665
      %v6667 = vpop.f32.mrf.mxu0
      %6668 = vmatprep.mubr.f32.mxu0 0.0
      %6669 = vmatmul.mubr.f32.gmra.mxu0 %v6533
      %v6670 = vpop.f32.mrf.mxu0
      %v6671 = vadd.f32 0.0, %v6670
      %v6672 = vpop.f32.mrf.mxu0
      %6673 = vmatprep.mubr.f32.mxu0 0.0
      %6674 = vmatmul.mubr.f32.gmra.mxu0 %v6536
      %v6675 = vpop.f32.mrf.mxu0
      %v6676 = vadd.f32 0.0, %v6675
      %v6677 = vpop.f32.mrf.mxu0
      %6678 = vmatprep.mubr.f32.mxu0 0.0
      %6679 = vmatmul.mubr.f32.gmra.mxu0 %v6539
      %v6680 = vpop.f32.mrf.mxu0
      %v6681 = vadd.f32 0.0, %v6680
      %v6682 = vpop.f32.mrf.mxu0
      %6683 = vmatprep.mubr.f32.mxu0 0.0
      %6684 = vmatmul.mubr.f32.gmra.mxu0 %v6542
      %v6685 = vpop.f32.mrf.mxu0
      %v6686 = vadd.f32 0.0, %v6685
      %v6687 = vpop.f32.mrf.mxu0
      %6688 = vdwg.mxu0
      %v6689 = vadd.f32 %v6455, %v6611
      %v6690 = vadd.f32 %v6456, %v6616
      %v6691 = vadd.f32 %v6457, %v6621
      %v6692 = vadd.f32 %v6458, %v6626
      %v6693 = vadd.f32 %v6459, %v6631
      %v6694 = vadd.f32 %v6460, %v6636
      %v6695 = vadd.f32 %v6461, %v6641
      %v6696 = vadd.f32 %v6462, %v6646
      %v6697 = vadd.f32 %v6463, %v6651
      %v6698 = vadd.f32 %v6464, %v6656
      %v6699 = vadd.f32 %v6465, %v6661
      %v6700 = vadd.f32 %v6466, %v6666
      %v6701 = vadd.f32 %v6467, %v6671
      %v6702 = vadd.f32 %v6468, %v6676
      %v6703 = vadd.f32 %v6469, %v6681
      %v6704 = vadd.f32 %v6470, %v6686
      %v6705 = vld [vmem:[%s2122 + $0x9] sm:$0xff]
      %v6706 = vld [vmem:[%s2122 + $0x11] sm:$0xff]
      %v6707 = vld [vmem:[%s2122 + $0x29] sm:$0xff]
      %v6708 = vld [vmem:[%s2122 + $0x31] sm:$0xff]
      %v6709 = vld [vmem:[%s2122 + $0x49] sm:$0xff]
      %v6710 = vld [vmem:[%s2122 + $0x51] sm:$0xff]
      %v6711 = vld [vmem:[%s2122 + $0x69] sm:$0xff]
      %v6712 = vld [vmem:[%s2122 + $0x71] sm:$0xff]
      %v6713 = vld [vmem:[%s2122 + $0x89] sm:$0xff]
      %v6714 = vld [vmem:[%s2122 + $0x91] sm:$0xff]
      %v6715 = vld [vmem:[%s2122 + $0xa9] sm:$0xff]
      %v6716 = vld [vmem:[%s2122 + $0xb1] sm:$0xff]
      %v6717 = vld [vmem:[%s2122 + $0xc9] sm:$0xff]
      %v6718 = vld [vmem:[%s2122 + $0xd1] sm:$0xff]
      %v6719 = vld [vmem:[%s2122 + $0xe9] sm:$0xff]
      %v6720 = vld [vmem:[%s2122 + $0xf1] sm:$0xff]
      %s6721 = scalar_lea.vmem %s5, 512
      %v6722 = vld [vmem:[%s6721] sm:$0xff]
      %v6723 = vld [vmem:[%s6721 + $0x8] sm:$0xff]
      %v6724 = vld [vmem:[%s6721 + $0x10] sm:$0xff]
      %v6725 = vld [vmem:[%s6721 + $0x18] sm:$0xff]
      %v6726 = vld [vmem:[%s6721 + $0x20] sm:$0xff]
      %v6727 = vld [vmem:[%s6721 + $0x28] sm:$0xff]
      %v6728 = vld [vmem:[%s6721 + $0x30] sm:$0xff]
      %v6729 = vld [vmem:[%s6721 + $0x38] sm:$0xff]
      %v6731 = vsel %vm668, %v6705, 0
      %v6734 = vsel %vm668, %v6706, 0
      %v6737 = vsel %vm668, %v6707, 0
      %v6740 = vsel %vm668, %v6708, 0
      %v6743 = vsel %vm668, %v6709, 0
      %v6746 = vsel %vm668, %v6710, 0
      %v6749 = vsel %vm668, %v6711, 0
      %v6752 = vsel %vm668, %v6712, 0
      %v6755 = vsel %vm668, %v6713, 0
      %v6758 = vsel %vm668, %v6714, 0
      %v6761 = vsel %vm668, %v6715, 0
      %v6764 = vsel %vm668, %v6716, 0
      %v6767 = vsel %vm668, %v6717, 0
      %v6770 = vsel %vm668, %v6718, 0
      %v6773 = vsel %vm668, %v6719, 0
      %v6776 = vsel %vm668, %v6720, 0
      %6778 = vmatprep.subr.mxu0 0.0
      %6779 = vmatpush1.msra.mxu0 0.0
      %6780 = vmatprep.subr.mxu0 0.0
      %6781 = vmatpush1.msra.mxu0 0.0
      %6782 = vmatprep.subr.mxu0 0.0
      %6783 = vmatpush1.msra.mxu0 0.0
      %6784 = vmatprep.subr.mxu0 0.0
      %6785 = vmatpush1.msra.mxu0 0.0
      %6786 = vmatprep.subr.mxu0 0.0
      %6787 = vmatpush1.msra.mxu0 0.0
      %6788 = vmatprep.subr.mxu0 0.0
      %6789 = vmatpush1.msra.mxu0 0.0
      %6790 = vmatprep.subr.mxu0 0.0
      %6791 = vmatpush1.msra.mxu0 0.0
      %6792 = vmatprep.subr.mxu0 0.0
      %6793 = vmatpush1.msra.mxu0 0.0
      %6794 = vmatprep.subr.mxu0 0.0
      %6795 = vmatpush1.msra.mxu0 %v6729
      %6796 = vmatprep.subr.mxu0 0.0
      %6797 = vmatpush1.msra.mxu0 %v6728
      %6798 = vmatprep.subr.mxu0 0.0
      %6799 = vmatpush1.msra.mxu0 %v6727
      %6800 = vmatprep.subr.mxu0 0.0
      %6801 = vmatpush1.msra.mxu0 %v6726
      %6802 = vmatprep.subr.mxu0 0.0
      %6803 = vmatpush1.msra.mxu0 %v6725
      %6804 = vmatprep.subr.mxu0 0.0
      %6805 = vmatpush1.msra.mxu0 %v6724
      %6806 = vmatprep.subr.mxu0 0.0
      %6807 = vmatpush1.msra.mxu0 %v6723
      %6808 = vmatprep.subr.mxu0 0.0
      %6809 = vmatpush1.msra.mxu0 %v6722
      %6810 = vmatprep.subr.mxu0 0.0
      %6811 = vmatpush2.msra.mxu0 0.0
      %6812 = vmatprep.subr.mxu0 0.0
      %6813 = vmatpush2.msra.mxu0 0.0
      %6814 = vmatprep.subr.mxu0 0.0
      %6815 = vmatpush2.msra.mxu0 0.0
      %6816 = vmatprep.subr.mxu0 0.0
      %6817 = vmatpush2.msra.mxu0 0.0
      %6818 = vmatprep.subr.mxu0 0.0
      %6819 = vmatpush2.msra.mxu0 0.0
      %6820 = vmatprep.subr.mxu0 0.0
      %6821 = vmatpush2.msra.mxu0 0.0
      %6822 = vmatprep.subr.mxu0 0.0
      %6823 = vmatpush2.msra.mxu0 0.0
      %6824 = vmatprep.subr.mxu0 0.0
      %6825 = vmatpush2.msra.mxu0 0.0
      %6826 = vmatprep.subr.mxu0 0.0
      %6827 = vmatpush2.msra.mxu0 0.0
      %6828 = vmatprep.subr.mxu0 0.0
      %6829 = vmatpush2.msra.mxu0 0.0
      %6830 = vmatprep.subr.mxu0 0.0
      %6831 = vmatpush2.msra.mxu0 0.0
      %6832 = vmatprep.subr.mxu0 0.0
      %6833 = vmatpush2.msra.mxu0 0.0
      %6834 = vmatprep.subr.mxu0 0.0
      %6835 = vmatpush2.msra.mxu0 0.0
      %6836 = vmatprep.subr.mxu0 0.0
      %6837 = vmatpush2.msra.mxu0 0.0
      %6838 = vmatprep.subr.mxu0 0.0
      %6839 = vmatpush2.msra.mxu0 0.0
      %6840 = vmatprep.subr.mxu0 0.0
      %6841 = vmatpush2.msra.mxu0 0.0
      %6842 = vmatprep.mubr.f32.mxu0 0.0
      %6843 = vmatmul.mubr.f32.gmra.mxu0 %v6731
      %v6844 = vpop.f32.mrf.mxu0
      %v6845 = vadd.f32 0.0, %v6844
      %v6846 = vpop.f32.mrf.mxu0
      %6847 = vmatprep.mubr.f32.mxu0 0.0
      %6848 = vmatmul.mubr.f32.gmra.mxu0 %v6734
      %v6849 = vpop.f32.mrf.mxu0
      %v6850 = vadd.f32 0.0, %v6849
      %v6851 = vpop.f32.mrf.mxu0
      %6852 = vmatprep.mubr.f32.mxu0 0.0
      %6853 = vmatmul.mubr.f32.gmra.mxu0 %v6737
      %v6854 = vpop.f32.mrf.mxu0
      %v6855 = vadd.f32 0.0, %v6854
      %v6856 = vpop.f32.mrf.mxu0
      %6857 = vmatprep.mubr.f32.mxu0 0.0
      %6858 = vmatmul.mubr.f32.gmra.mxu0 %v6740
      %v6859 = vpop.f32.mrf.mxu0
      %v6860 = vadd.f32 0.0, %v6859
      %v6861 = vpop.f32.mrf.mxu0
      %6862 = vmatprep.mubr.f32.mxu0 0.0
      %6863 = vmatmul.mubr.f32.gmra.mxu0 %v6743
      %v6864 = vpop.f32.mrf.mxu0
      %v6865 = vadd.f32 0.0, %v6864
      %v6866 = vpop.f32.mrf.mxu0
      %6867 = vmatprep.mubr.f32.mxu0 0.0
      %6868 = vmatmul.mubr.f32.gmra.mxu0 %v6746
      %v6869 = vpop.f32.mrf.mxu0
      %v6870 = vadd.f32 0.0, %v6869
      %v6871 = vpop.f32.mrf.mxu0
      %6872 = vmatprep.mubr.f32.mxu0 0.0
      %6873 = vmatmul.mubr.f32.gmra.mxu0 %v6749
      %v6874 = vpop.f32.mrf.mxu0
      %v6875 = vadd.f32 0.0, %v6874
      %v6876 = vpop.f32.mrf.mxu0
      %6877 = vmatprep.mubr.f32.mxu0 0.0
      %6878 = vmatmul.mubr.f32.gmra.mxu0 %v6752
      %v6879 = vpop.f32.mrf.mxu0
      %v6880 = vadd.f32 0.0, %v6879
      %v6881 = vpop.f32.mrf.mxu0
      %6882 = vmatprep.mubr.f32.mxu0 0.0
      %6883 = vmatmul.mubr.f32.gmra.mxu0 %v6755
      %v6884 = vpop.f32.mrf.mxu0
      %v6885 = vadd.f32 0.0, %v6884
      %v6886 = vpop.f32.mrf.mxu0
      %6887 = vmatprep.mubr.f32.mxu0 0.0
      %6888 = vmatmul.mubr.f32.gmra.mxu0 %v6758
      %v6889 = vpop.f32.mrf.mxu0
      %v6890 = vadd.f32 0.0, %v6889
      %v6891 = vpop.f32.mrf.mxu0
      %6892 = vmatprep.mubr.f32.mxu0 0.0
      %6893 = vmatmul.mubr.f32.gmra.mxu0 %v6761
      %v6894 = vpop.f32.mrf.mxu0
      %v6895 = vadd.f32 0.0, %v6894
      %v6896 = vpop.f32.mrf.mxu0
      %6897 = vmatprep.mubr.f32.mxu0 0.0
      %6898 = vmatmul.mubr.f32.gmra.mxu0 %v6764
      %v6899 = vpop.f32.mrf.mxu0
      %v6900 = vadd.f32 0.0, %v6899
      %v6901 = vpop.f32.mrf.mxu0
      %6902 = vmatprep.mubr.f32.mxu0 0.0
      %6903 = vmatmul.mubr.f32.gmra.mxu0 %v6767
      %v6904 = vpop.f32.mrf.mxu0
      %v6905 = vadd.f32 0.0, %v6904
      %v6906 = vpop.f32.mrf.mxu0
      %6907 = vmatprep.mubr.f32.mxu0 0.0
      %6908 = vmatmul.mubr.f32.gmra.mxu0 %v6770
      %v6909 = vpop.f32.mrf.mxu0
      %v6910 = vadd.f32 0.0, %v6909
      %v6911 = vpop.f32.mrf.mxu0
      %6912 = vmatprep.mubr.f32.mxu0 0.0
      %6913 = vmatmul.mubr.f32.gmra.mxu0 %v6773
      %v6914 = vpop.f32.mrf.mxu0
      %v6915 = vadd.f32 0.0, %v6914
      %v6916 = vpop.f32.mrf.mxu0
      %6917 = vmatprep.mubr.f32.mxu0 0.0
      %6918 = vmatmul.mubr.f32.gmra.mxu0 %v6776
      %v6919 = vpop.f32.mrf.mxu0
      %v6920 = vadd.f32 0.0, %v6919
      %v6921 = vpop.f32.mrf.mxu0
      %6922 = vdwg.mxu0
      %v6923 = vadd.f32 %v6689, %v6845
      %v6924 = vadd.f32 %v6690, %v6850
      %v6925 = vadd.f32 %v6691, %v6855
      %v6926 = vadd.f32 %v6692, %v6860
      %v6927 = vadd.f32 %v6693, %v6865
      %v6928 = vadd.f32 %v6694, %v6870
      %v6929 = vadd.f32 %v6695, %v6875
      %v6930 = vadd.f32 %v6696, %v6880
      %v6931 = vadd.f32 %v6697, %v6885
      %v6932 = vadd.f32 %v6698, %v6890
      %v6933 = vadd.f32 %v6699, %v6895
      %v6934 = vadd.f32 %v6700, %v6900
      %v6935 = vadd.f32 %v6701, %v6905
      %v6936 = vadd.f32 %v6702, %v6910
      %v6937 = vadd.f32 %v6703, %v6915
      %v6938 = vadd.f32 %v6704, %v6920
      %v6939 = vld [vmem:[%s6] sm:$0x1]
      %v6941 = vlaneseq
      %v6942 = vshrl.u32 %v6941, 7
      %v6943 = vsub.s32 0, %v6942
      %v6944 = vrot.slane %v6939, %v6943
      %v6946 = vadd.f32 %v6923, %v6944
      %v6947 = vadd.f32 %v6924, %v6944
      %v6948 = vadd.f32 %v6925, %v6944
      %v6949 = vadd.f32 %v6926, %v6944
      %v6950 = vadd.f32 %v6927, %v6944
      %v6951 = vadd.f32 %v6928, %v6944
      %v6952 = vadd.f32 %v6929, %v6944
      %v6953 = vadd.f32 %v6930, %v6944
      %v6954 = vadd.f32 %v6931, %v6944
      %v6955 = vadd.f32 %v6932, %v6944
      %v6956 = vadd.f32 %v6933, %v6944
      %v6957 = vadd.f32 %v6934, %v6944
      %v6958 = vadd.f32 %v6935, %v6944
      %v6959 = vadd.f32 %v6936, %v6944
      %v6960 = vadd.f32 %v6937, %v6944
      %v6961 = vadd.f32 %v6938, %v6944
      %v6962 = vmax.f32 %v6946, 0.0
      %v6963 = vmax.f32 %v6947, 0.0
      %v6964 = vmax.f32 %v6948, 0.0
      %v6965 = vmax.f32 %v6949, 0.0
      %v6966 = vmax.f32 %v6950, 0.0
      %v6967 = vmax.f32 %v6951, 0.0
      %v6968 = vmax.f32 %v6952, 0.0
      %v6969 = vmax.f32 %v6953, 0.0
      %v6970 = vmax.f32 %v6954, 0.0
      %v6971 = vmax.f32 %v6955, 0.0
      %v6972 = vmax.f32 %v6956, 0.0
      %v6973 = vmax.f32 %v6957, 0.0
      %v6974 = vmax.f32 %v6958, 0.0
      %v6975 = vmax.f32 %v6959, 0.0
      %v6976 = vmax.f32 %v6960, 0.0
      %v6977 = vmax.f32 %v6961, 0.0
      %6978 = vst [vmem:[%s702 + $0x8] sm:$0xff] %v6962
      %6979 = vst [vmem:[%s702 + $0x10] sm:$0xff] %v6963
      %6980 = vst [vmem:[%s702 + $0x28] sm:$0xff] %v6964
      %6981 = vst [vmem:[%s702 + $0x30] sm:$0xff] %v6965
      %6982 = vst [vmem:[%s702 + $0x48] sm:$0xff] %v6966
      %6983 = vst [vmem:[%s702 + $0x50] sm:$0xff] %v6967
      %6984 = vst [vmem:[%s702 + $0x68] sm:$0xff] %v6968
      %6985 = vst [vmem:[%s702 + $0x70] sm:$0xff] %v6969
      %6986 = vst [vmem:[%s702 + $0x88] sm:$0xff] %v6970
      %6987 = vst [vmem:[%s702 + $0x90] sm:$0xff] %v6971
      %6988 = vst [vmem:[%s702 + $0xa8] sm:$0xff] %v6972
      %6989 = vst [vmem:[%s702 + $0xb0] sm:$0xff] %v6973
      %6990 = vst [vmem:[%s702 + $0xc8] sm:$0xff] %v6974
      %6991 = vst [vmem:[%s702 + $0xd0] sm:$0xff] %v6975
      %6992 = vst [vmem:[%s702 + $0xe8] sm:$0xff] %v6976
      %6993 = vst [vmem:[%s702 + $0xf0] sm:$0xff] %v6977
      %v6994 = vld [vmem:[#allocation3 + $0x7] sm:$0xff]
      %v6995 = vld [vmem:[#allocation3 + $0xf] sm:$0xff]
      %v6996 = vld [vmem:[#allocation3 + $0x27] sm:$0xff]
      %v6997 = vld [vmem:[#allocation3 + $0x2f] sm:$0xff]
      %v6998 = vld [vmem:[#allocation3 + $0x47] sm:$0xff]
      %v6999 = vld [vmem:[#allocation3 + $0x4f] sm:$0xff]
      %v7000 = vld [vmem:[#allocation3 + $0x67] sm:$0xff]
      %v7001 = vld [vmem:[#allocation3 + $0x6f] sm:$0xff]
      %v7002 = vld [vmem:[#allocation3 + $0x87] sm:$0xff]
      %v7003 = vld [vmem:[#allocation3 + $0x8f] sm:$0xff]
      %v7004 = vld [vmem:[#allocation3 + $0xa7] sm:$0xff]
      %v7005 = vld [vmem:[#allocation3 + $0xaf] sm:$0xff]
      %v7006 = vld [vmem:[#allocation3 + $0xc7] sm:$0xff]
      %v7007 = vld [vmem:[#allocation3 + $0xcf] sm:$0xff]
      %v7008 = vld [vmem:[#allocation3 + $0xe7] sm:$0xff]
      %v7009 = vld [vmem:[#allocation3 + $0xef] sm:$0xff]
      %v7010 = vld [vmem:[%s7] sm:$0xff]
      %v7011 = vld [vmem:[%s7 + $0x8] sm:$0xff]
      %v7012 = vld [vmem:[%s7 + $0x10] sm:$0xff]
      %v7013 = vld [vmem:[%s7 + $0x18] sm:$0xff]
      %v7014 = vld [vmem:[%s7 + $0x20] sm:$0xff]
      %v7015 = vld [vmem:[%s7 + $0x28] sm:$0xff]
      %v7016 = vld [vmem:[%s7 + $0x30] sm:$0xff]
      %v7017 = vld [vmem:[%s7 + $0x38] sm:$0xff]
      %v7018 = vld [vmem:[%s7 + $0x40] sm:$0xff]
      %v7019 = vld [vmem:[%s7 + $0x48] sm:$0xff]
      %v7020 = vld [vmem:[%s7 + $0x50] sm:$0xff]
      %v7021 = vld [vmem:[%s7 + $0x58] sm:$0xff]
      %v7022 = vld [vmem:[%s7 + $0x60] sm:$0xff]
      %v7023 = vld [vmem:[%s7 + $0x68] sm:$0xff]
      %v7024 = vld [vmem:[%s7 + $0x70] sm:$0xff]
      %v7025 = vld [vmem:[%s7 + $0x78] sm:$0xff]
      %v7026 = vld [vmem:[#allocation3 + $0x8] sm:$0xff]
      %v7027 = vld [vmem:[#allocation3 + $0x10] sm:$0xff]
      %v7028 = vld [vmem:[#allocation3 + $0x28] sm:$0xff]
      %v7029 = vld [vmem:[#allocation3 + $0x30] sm:$0xff]
      %v7030 = vld [vmem:[#allocation3 + $0x48] sm:$0xff]
      %v7031 = vld [vmem:[#allocation3 + $0x50] sm:$0xff]
      %v7032 = vld [vmem:[#allocation3 + $0x68] sm:$0xff]
      %v7033 = vld [vmem:[#allocation3 + $0x70] sm:$0xff]
      %v7034 = vld [vmem:[#allocation3 + $0x88] sm:$0xff]
      %v7035 = vld [vmem:[#allocation3 + $0x90] sm:$0xff]
      %v7036 = vld [vmem:[#allocation3 + $0xa8] sm:$0xff]
      %v7037 = vld [vmem:[#allocation3 + $0xb0] sm:$0xff]
      %v7038 = vld [vmem:[#allocation3 + $0xc8] sm:$0xff]
      %v7039 = vld [vmem:[#allocation3 + $0xd0] sm:$0xff]
      %v7040 = vld [vmem:[#allocation3 + $0xe8] sm:$0xff]
      %v7041 = vld [vmem:[#allocation3 + $0xf0] sm:$0xff]
      %s7042 = scalar_lea.vmem %s7, 128
      %v7043 = vld [vmem:[%s7042] sm:$0xff]
      %v7044 = vld [vmem:[%s7042 + $0x8] sm:$0xff]
      %v7045 = vld [vmem:[%s7042 + $0x10] sm:$0xff]
      %v7046 = vld [vmem:[%s7042 + $0x18] sm:$0xff]
      %v7047 = vld [vmem:[%s7042 + $0x20] sm:$0xff]
      %v7048 = vld [vmem:[%s7042 + $0x28] sm:$0xff]
      %v7049 = vld [vmem:[%s7042 + $0x30] sm:$0xff]
      %v7050 = vld [vmem:[%s7042 + $0x38] sm:$0xff]
      %v7051 = vld [vmem:[%s7042 + $0x40] sm:$0xff]
      %v7052 = vld [vmem:[%s7042 + $0x48] sm:$0xff]
      %v7053 = vld [vmem:[%s7042 + $0x50] sm:$0xff]
      %v7054 = vld [vmem:[%s7042 + $0x58] sm:$0xff]
      %v7055 = vld [vmem:[%s7042 + $0x60] sm:$0xff]
      %v7056 = vld [vmem:[%s7042 + $0x68] sm:$0xff]
      %v7057 = vld [vmem:[%s7042 + $0x70] sm:$0xff]
      %v7058 = vld [vmem:[%s7042 + $0x78] sm:$0xff]
      %7059 = vmatprep.subr.mxu0 0.0
      %7060 = vmatpush1.msra.mxu0 %v7058
      %7061 = vmatprep.subr.mxu0 0.0
      %7062 = vmatpush1.msra.mxu0 %v7057
      %7063 = vmatprep.subr.mxu0 0.0
      %7064 = vmatpush1.msra.mxu0 %v7056
      %7065 = vmatprep.subr.mxu0 0.0
      %7066 = vmatpush1.msra.mxu0 %v7055
      %7067 = vmatprep.subr.mxu0 0.0
      %7068 = vmatpush1.msra.mxu0 %v7054
      %7069 = vmatprep.subr.mxu0 0.0
      %7070 = vmatpush1.msra.mxu0 %v7053
      %7071 = vmatprep.subr.mxu0 0.0
      %7072 = vmatpush1.msra.mxu0 %v7052
      %7073 = vmatprep.subr.mxu0 0.0
      %7074 = vmatpush1.msra.mxu0 %v7051
      %7075 = vmatprep.subr.mxu0 0.0
      %7076 = vmatpush1.msra.mxu0 %v7050
      %7077 = vmatprep.subr.mxu0 0.0
      %7078 = vmatpush1.msra.mxu0 %v7049
      %7079 = vmatprep.subr.mxu0 0.0
      %7080 = vmatpush1.msra.mxu0 %v7048
      %7081 = vmatprep.subr.mxu0 0.0
      %7082 = vmatpush1.msra.mxu0 %v7047
      %7083 = vmatprep.subr.mxu0 0.0
      %7084 = vmatpush1.msra.mxu0 %v7046
      %7085 = vmatprep.subr.mxu0 0.0
      %7086 = vmatpush1.msra.mxu0 %v7045
      %7087 = vmatprep.subr.mxu0 0.0
      %7088 = vmatpush1.msra.mxu0 %v7044
      %7089 = vmatprep.subr.mxu0 0.0
      %7090 = vmatpush1.msra.mxu0 %v7043
      %7091 = vmatprep.subr.mxu0 0.0
      %7092 = vmatpush2.msra.mxu0 0.0
      %7093 = vmatprep.subr.mxu0 0.0
      %7094 = vmatpush2.msra.mxu0 0.0
      %7095 = vmatprep.subr.mxu0 0.0
      %7096 = vmatpush2.msra.mxu0 0.0
      %7097 = vmatprep.subr.mxu0 0.0
      %7098 = vmatpush2.msra.mxu0 0.0
      %7099 = vmatprep.subr.mxu0 0.0
      %7100 = vmatpush2.msra.mxu0 0.0
      %7101 = vmatprep.subr.mxu0 0.0
      %7102 = vmatpush2.msra.mxu0 0.0
      %7103 = vmatprep.subr.mxu0 0.0
      %7104 = vmatpush2.msra.mxu0 0.0
      %7105 = vmatprep.subr.mxu0 0.0
      %7106 = vmatpush2.msra.mxu0 0.0
      %7107 = vmatprep.subr.mxu0 0.0
      %7108 = vmatpush2.msra.mxu0 0.0
      %7109 = vmatprep.subr.mxu0 0.0
      %7110 = vmatpush2.msra.mxu0 0.0
      %7111 = vmatprep.subr.mxu0 0.0
      %7112 = vmatpush2.msra.mxu0 0.0
      %7113 = vmatprep.subr.mxu0 0.0
      %7114 = vmatpush2.msra.mxu0 0.0
      %7115 = vmatprep.subr.mxu0 0.0
      %7116 = vmatpush2.msra.mxu0 0.0
      %7117 = vmatprep.subr.mxu0 0.0
      %7118 = vmatpush2.msra.mxu0 0.0
      %7119 = vmatprep.subr.mxu0 0.0
      %7120 = vmatpush2.msra.mxu0 0.0
      %7121 = vmatprep.subr.mxu0 0.0
      %7122 = vmatpush2.msra.mxu0 0.0
      %7123 = vmatprep.mubr.f32.mxu0 0.0
      %7124 = vmatmul.mubr.f32.gmra.mxu0 %v7026
      %v7125 = vpop.f32.mrf.mxu0
      %v7126 = vadd.f32 0.0, %v7125
      %v7127 = vpop.f32.mrf.mxu0
      %7128 = vmatprep.mubr.f32.mxu0 0.0
      %7129 = vmatmul.mubr.f32.gmra.mxu0 %v7027
      %v7130 = vpop.f32.mrf.mxu0
      %v7131 = vadd.f32 0.0, %v7130
      %v7132 = vpop.f32.mrf.mxu0
      %7133 = vmatprep.mubr.f32.mxu0 0.0
      %7134 = vmatmul.mubr.f32.gmra.mxu0 %v7028
      %v7135 = vpop.f32.mrf.mxu0
      %v7136 = vadd.f32 0.0, %v7135
      %v7137 = vpop.f32.mrf.mxu0
      %7138 = vmatprep.mubr.f32.mxu0 0.0
      %7139 = vmatmul.mubr.f32.gmra.mxu0 %v7029
      %v7140 = vpop.f32.mrf.mxu0
      %v7141 = vadd.f32 0.0, %v7140
      %v7142 = vpop.f32.mrf.mxu0
      %7143 = vmatprep.mubr.f32.mxu0 0.0
      %7144 = vmatmul.mubr.f32.gmra.mxu0 %v7030
      %v7145 = vpop.f32.mrf.mxu0
      %v7146 = vadd.f32 0.0, %v7145
      %v7147 = vpop.f32.mrf.mxu0
      %7148 = vmatprep.mubr.f32.mxu0 0.0
      %7149 = vmatmul.mubr.f32.gmra.mxu0 %v7031
      %v7150 = vpop.f32.mrf.mxu0
      %v7151 = vadd.f32 0.0, %v7150
      %v7152 = vpop.f32.mrf.mxu0
      %7153 = vmatprep.mubr.f32.mxu0 0.0
      %7154 = vmatmul.mubr.f32.gmra.mxu0 %v7032
      %v7155 = vpop.f32.mrf.mxu0
      %v7156 = vadd.f32 0.0, %v7155
      %v7157 = vpop.f32.mrf.mxu0
      %7158 = vmatprep.mubr.f32.mxu0 0.0
      %7159 = vmatmul.mubr.f32.gmra.mxu0 %v7033
      %v7160 = vpop.f32.mrf.mxu0
      %v7161 = vadd.f32 0.0, %v7160
      %v7162 = vpop.f32.mrf.mxu0
      %7163 = vmatprep.mubr.f32.mxu0 0.0
      %7164 = vmatmul.mubr.f32.gmra.mxu0 %v7034
      %v7165 = vpop.f32.mrf.mxu0
      %v7166 = vadd.f32 0.0, %v7165
      %v7167 = vpop.f32.mrf.mxu0
      %7168 = vmatprep.mubr.f32.mxu0 0.0
      %7169 = vmatmul.mubr.f32.gmra.mxu0 %v7035
      %v7170 = vpop.f32.mrf.mxu0
      %v7171 = vadd.f32 0.0, %v7170
      %v7172 = vpop.f32.mrf.mxu0
      %7173 = vmatprep.mubr.f32.mxu0 0.0
      %7174 = vmatmul.mubr.f32.gmra.mxu0 %v7036
      %v7175 = vpop.f32.mrf.mxu0
      %v7176 = vadd.f32 0.0, %v7175
      %v7177 = vpop.f32.mrf.mxu0
      %7178 = vmatprep.mubr.f32.mxu0 0.0
      %7179 = vmatmul.mubr.f32.gmra.mxu0 %v7037
      %v7180 = vpop.f32.mrf.mxu0
      %v7181 = vadd.f32 0.0, %v7180
      %v7182 = vpop.f32.mrf.mxu0
      %7183 = vmatprep.mubr.f32.mxu0 0.0
      %7184 = vmatmul.mubr.f32.gmra.mxu0 %v7038
      %v7185 = vpop.f32.mrf.mxu0
      %v7186 = vadd.f32 0.0, %v7185
      %v7187 = vpop.f32.mrf.mxu0
      %7188 = vmatprep.mubr.f32.mxu0 0.0
      %7189 = vmatmul.mubr.f32.gmra.mxu0 %v7039
      %v7190 = vpop.f32.mrf.mxu0
      %v7191 = vadd.f32 0.0, %v7190
      %v7192 = vpop.f32.mrf.mxu0
      %7193 = vmatprep.mubr.f32.mxu0 0.0
      %7194 = vmatmul.mubr.f32.gmra.mxu0 %v7040
      %v7195 = vpop.f32.mrf.mxu0
      %v7196 = vadd.f32 0.0, %v7195
      %v7197 = vpop.f32.mrf.mxu0
      %7198 = vmatprep.mubr.f32.mxu0 0.0
      %7199 = vmatmul.mubr.f32.gmra.mxu0 %v7041
      %v7200 = vpop.f32.mrf.mxu0
      %v7201 = vadd.f32 0.0, %v7200
      %v7202 = vpop.f32.mrf.mxu0
      %7203 = vdwg.mxu0
      %7204 = vmatprep.subr.mxu0 0.0
      %7205 = vmatpush1.msra.mxu0 %v7025
      %7206 = vmatprep.subr.mxu0 0.0
      %7207 = vmatpush1.msra.mxu0 %v7024
      %7208 = vmatprep.subr.mxu0 0.0
      %7209 = vmatpush1.msra.mxu0 %v7023
      %7210 = vmatprep.subr.mxu0 0.0
      %7211 = vmatpush1.msra.mxu0 %v7022
      %7212 = vmatprep.subr.mxu0 0.0
      %7213 = vmatpush1.msra.mxu0 %v7021
      %7214 = vmatprep.subr.mxu0 0.0
      %7215 = vmatpush1.msra.mxu0 %v7020
      %7216 = vmatprep.subr.mxu0 0.0
      %7217 = vmatpush1.msra.mxu0 %v7019
      %7218 = vmatprep.subr.mxu0 0.0
      %7219 = vmatpush1.msra.mxu0 %v7018
      %7220 = vmatprep.subr.mxu0 0.0
      %7221 = vmatpush1.msra.mxu0 %v7017
      %7222 = vmatprep.subr.mxu0 0.0
      %7223 = vmatpush1.msra.mxu0 %v7016
      %7224 = vmatprep.subr.mxu0 0.0
      %7225 = vmatpush1.msra.mxu0 %v7015
      %7226 = vmatprep.subr.mxu0 0.0
      %7227 = vmatpush1.msra.mxu0 %v7014
      %7228 = vmatprep.subr.mxu0 0.0
      %7229 = vmatpush1.msra.mxu0 %v7013
      %7230 = vmatprep.subr.mxu0 0.0
      %7231 = vmatpush1.msra.mxu0 %v7012
      %7232 = vmatprep.subr.mxu0 0.0
      %7233 = vmatpush1.msra.mxu0 %v7011
      %7234 = vmatprep.subr.mxu0 0.0
      %7235 = vmatpush1.msra.mxu0 %v7010
      %7236 = vmatprep.subr.mxu0 0.0
      %7237 = vmatpush2.msra.mxu0 0.0
      %7238 = vmatprep.subr.mxu0 0.0
      %7239 = vmatpush2.msra.mxu0 0.0
      %7240 = vmatprep.subr.mxu0 0.0
      %7241 = vmatpush2.msra.mxu0 0.0
      %7242 = vmatprep.subr.mxu0 0.0
      %7243 = vmatpush2.msra.mxu0 0.0
      %7244 = vmatprep.subr.mxu0 0.0
      %7245 = vmatpush2.msra.mxu0 0.0
      %7246 = vmatprep.subr.mxu0 0.0
      %7247 = vmatpush2.msra.mxu0 0.0
      %7248 = vmatprep.subr.mxu0 0.0
      %7249 = vmatpush2.msra.mxu0 0.0
      %7250 = vmatprep.subr.mxu0 0.0
      %7251 = vmatpush2.msra.mxu0 0.0
      %7252 = vmatprep.subr.mxu0 0.0
      %7253 = vmatpush2.msra.mxu0 0.0
      %7254 = vmatprep.subr.mxu0 0.0
      %7255 = vmatpush2.msra.mxu0 0.0
      %7256 = vmatprep.subr.mxu0 0.0
      %7257 = vmatpush2.msra.mxu0 0.0
      %7258 = vmatprep.subr.mxu0 0.0
      %7259 = vmatpush2.msra.mxu0 0.0
      %7260 = vmatprep.subr.mxu0 0.0
      %7261 = vmatpush2.msra.mxu0 0.0
      %7262 = vmatprep.subr.mxu0 0.0
      %7263 = vmatpush2.msra.mxu0 0.0
      %7264 = vmatprep.subr.mxu0 0.0
      %7265 = vmatpush2.msra.mxu0 0.0
      %7266 = vmatprep.subr.mxu0 0.0
      %7267 = vmatpush2.msra.mxu0 0.0
      %7268 = vmatprep.mubr.f32.mxu0 0.0
      %7269 = vmatmul.mubr.f32.gmra.mxu0 %v6994
      %v7270 = vpop.f32.mrf.mxu0
      %v7271 = vadd.f32 %v7126, %v7270
      %v7272 = vpop.f32.mrf.mxu0
      %7273 = vmatprep.mubr.f32.mxu0 0.0
      %7274 = vmatmul.mubr.f32.gmra.mxu0 %v6995
      %v7275 = vpop.f32.mrf.mxu0
      %v7276 = vadd.f32 %v7131, %v7275
      %v7277 = vpop.f32.mrf.mxu0
      %7278 = vmatprep.mubr.f32.mxu0 0.0
      %7279 = vmatmul.mubr.f32.gmra.mxu0 %v6996
      %v7280 = vpop.f32.mrf.mxu0
      %v7281 = vadd.f32 %v7136, %v7280
      %v7282 = vpop.f32.mrf.mxu0
      %7283 = vmatprep.mubr.f32.mxu0 0.0
      %7284 = vmatmul.mubr.f32.gmra.mxu0 %v6997
      %v7285 = vpop.f32.mrf.mxu0
      %v7286 = vadd.f32 %v7141, %v7285
      %v7287 = vpop.f32.mrf.mxu0
      %7288 = vmatprep.mubr.f32.mxu0 0.0
      %7289 = vmatmul.mubr.f32.gmra.mxu0 %v6998
      %v7290 = vpop.f32.mrf.mxu0
      %v7291 = vadd.f32 %v7146, %v7290
      %v7292 = vpop.f32.mrf.mxu0
      %7293 = vmatprep.mubr.f32.mxu0 0.0
      %7294 = vmatmul.mubr.f32.gmra.mxu0 %v6999
      %v7295 = vpop.f32.mrf.mxu0
      %v7296 = vadd.f32 %v7151, %v7295
      %v7297 = vpop.f32.mrf.mxu0
      %7298 = vmatprep.mubr.f32.mxu0 0.0
      %7299 = vmatmul.mubr.f32.gmra.mxu0 %v7000
      %v7300 = vpop.f32.mrf.mxu0
      %v7301 = vadd.f32 %v7156, %v7300
      %v7302 = vpop.f32.mrf.mxu0
      %7303 = vmatprep.mubr.f32.mxu0 0.0
      %7304 = vmatmul.mubr.f32.gmra.mxu0 %v7001
      %v7305 = vpop.f32.mrf.mxu0
      %v7306 = vadd.f32 %v7161, %v7305
      %v7307 = vpop.f32.mrf.mxu0
      %7308 = vmatprep.mubr.f32.mxu0 0.0
      %7309 = vmatmul.mubr.f32.gmra.mxu0 %v7002
      %v7310 = vpop.f32.mrf.mxu0
      %v7311 = vadd.f32 %v7166, %v7310
      %v7312 = vpop.f32.mrf.mxu0
      %7313 = vmatprep.mubr.f32.mxu0 0.0
      %7314 = vmatmul.mubr.f32.gmra.mxu0 %v7003
      %v7315 = vpop.f32.mrf.mxu0
      %v7316 = vadd.f32 %v7171, %v7315
      %v7317 = vpop.f32.mrf.mxu0
      %7318 = vmatprep.mubr.f32.mxu0 0.0
      %7319 = vmatmul.mubr.f32.gmra.mxu0 %v7004
      %v7320 = vpop.f32.mrf.mxu0
      %v7321 = vadd.f32 %v7176, %v7320
      %v7322 = vpop.f32.mrf.mxu0
      %7323 = vmatprep.mubr.f32.mxu0 0.0
      %7324 = vmatmul.mubr.f32.gmra.mxu0 %v7005
      %v7325 = vpop.f32.mrf.mxu0
      %v7326 = vadd.f32 %v7181, %v7325
      %v7327 = vpop.f32.mrf.mxu0
      %7328 = vmatprep.mubr.f32.mxu0 0.0
      %7329 = vmatmul.mubr.f32.gmra.mxu0 %v7006
      %v7330 = vpop.f32.mrf.mxu0
      %v7331 = vadd.f32 %v7186, %v7330
      %v7332 = vpop.f32.mrf.mxu0
      %7333 = vmatprep.mubr.f32.mxu0 0.0
      %7334 = vmatmul.mubr.f32.gmra.mxu0 %v7007
      %v7335 = vpop.f32.mrf.mxu0
      %v7336 = vadd.f32 %v7191, %v7335
      %v7337 = vpop.f32.mrf.mxu0
      %7338 = vmatprep.mubr.f32.mxu0 0.0
      %7339 = vmatmul.mubr.f32.gmra.mxu0 %v7008
      %v7340 = vpop.f32.mrf.mxu0
      %v7341 = vadd.f32 %v7196, %v7340
      %v7342 = vpop.f32.mrf.mxu0
      %7343 = vmatprep.mubr.f32.mxu0 0.0
      %7344 = vmatmul.mubr.f32.gmra.mxu0 %v7009
      %v7345 = vpop.f32.mrf.mxu0
      %v7346 = vadd.f32 %v7201, %v7345
      %v7347 = vpop.f32.mrf.mxu0
      %7348 = vdwg.mxu0
      %v7349 = vld [vmem:[#allocation3 + $0x9] sm:$0xff]
      %v7350 = vld [vmem:[#allocation3 + $0x11] sm:$0xff]
      %v7351 = vld [vmem:[#allocation3 + $0x29] sm:$0xff]
      %v7352 = vld [vmem:[#allocation3 + $0x31] sm:$0xff]
      %v7353 = vld [vmem:[#allocation3 + $0x49] sm:$0xff]
      %v7354 = vld [vmem:[#allocation3 + $0x51] sm:$0xff]
      %v7355 = vld [vmem:[#allocation3 + $0x69] sm:$0xff]
      %v7356 = vld [vmem:[#allocation3 + $0x71] sm:$0xff]
      %v7357 = vld [vmem:[#allocation3 + $0x89] sm:$0xff]
      %v7358 = vld [vmem:[#allocation3 + $0x91] sm:$0xff]
      %v7359 = vld [vmem:[#allocation3 + $0xa9] sm:$0xff]
      %v7360 = vld [vmem:[#allocation3 + $0xb1] sm:$0xff]
      %v7361 = vld [vmem:[#allocation3 + $0xc9] sm:$0xff]
      %v7362 = vld [vmem:[#allocation3 + $0xd1] sm:$0xff]
      %v7363 = vld [vmem:[#allocation3 + $0xe9] sm:$0xff]
      %v7364 = vld [vmem:[#allocation3 + $0xf1] sm:$0xff]
      %s7365 = scalar_lea.vmem %s7, 256
      %v7366 = vld [vmem:[%s7365] sm:$0xff]
      %v7367 = vld [vmem:[%s7365 + $0x8] sm:$0xff]
      %v7368 = vld [vmem:[%s7365 + $0x10] sm:$0xff]
      %v7369 = vld [vmem:[%s7365 + $0x18] sm:$0xff]
      %v7370 = vld [vmem:[%s7365 + $0x20] sm:$0xff]
      %v7371 = vld [vmem:[%s7365 + $0x28] sm:$0xff]
      %v7372 = vld [vmem:[%s7365 + $0x30] sm:$0xff]
      %v7373 = vld [vmem:[%s7365 + $0x38] sm:$0xff]
      %v7374 = vld [vmem:[%s7365 + $0x40] sm:$0xff]
      %v7375 = vld [vmem:[%s7365 + $0x48] sm:$0xff]
      %v7376 = vld [vmem:[%s7365 + $0x50] sm:$0xff]
      %v7377 = vld [vmem:[%s7365 + $0x58] sm:$0xff]
      %v7378 = vld [vmem:[%s7365 + $0x60] sm:$0xff]
      %v7379 = vld [vmem:[%s7365 + $0x68] sm:$0xff]
      %v7380 = vld [vmem:[%s7365 + $0x70] sm:$0xff]
      %v7381 = vld [vmem:[%s7365 + $0x78] sm:$0xff]
      %7382 = vmatprep.subr.mxu0 0.0
      %7383 = vmatpush1.msra.mxu0 %v7381
      %7384 = vmatprep.subr.mxu0 0.0
      %7385 = vmatpush1.msra.mxu0 %v7380
      %7386 = vmatprep.subr.mxu0 0.0
      %7387 = vmatpush1.msra.mxu0 %v7379
      %7388 = vmatprep.subr.mxu0 0.0
      %7389 = vmatpush1.msra.mxu0 %v7378
      %7390 = vmatprep.subr.mxu0 0.0
      %7391 = vmatpush1.msra.mxu0 %v7377
      %7392 = vmatprep.subr.mxu0 0.0
      %7393 = vmatpush1.msra.mxu0 %v7376
      %7394 = vmatprep.subr.mxu0 0.0
      %7395 = vmatpush1.msra.mxu0 %v7375
      %7396 = vmatprep.subr.mxu0 0.0
      %7397 = vmatpush1.msra.mxu0 %v7374
      %7398 = vmatprep.subr.mxu0 0.0
      %7399 = vmatpush1.msra.mxu0 %v7373
      %7400 = vmatprep.subr.mxu0 0.0
      %7401 = vmatpush1.msra.mxu0 %v7372
      %7402 = vmatprep.subr.mxu0 0.0
      %7403 = vmatpush1.msra.mxu0 %v7371
      %7404 = vmatprep.subr.mxu0 0.0
      %7405 = vmatpush1.msra.mxu0 %v7370
      %7406 = vmatprep.subr.mxu0 0.0
      %7407 = vmatpush1.msra.mxu0 %v7369
      %7408 = vmatprep.subr.mxu0 0.0
      %7409 = vmatpush1.msra.mxu0 %v7368
      %7410 = vmatprep.subr.mxu0 0.0
      %7411 = vmatpush1.msra.mxu0 %v7367
      %7412 = vmatprep.subr.mxu0 0.0
      %7413 = vmatpush1.msra.mxu0 %v7366
      %7414 = vmatprep.subr.mxu0 0.0
      %7415 = vmatpush2.msra.mxu0 0.0
      %7416 = vmatprep.subr.mxu0 0.0
      %7417 = vmatpush2.msra.mxu0 0.0
      %7418 = vmatprep.subr.mxu0 0.0
      %7419 = vmatpush2.msra.mxu0 0.0
      %7420 = vmatprep.subr.mxu0 0.0
      %7421 = vmatpush2.msra.mxu0 0.0
      %7422 = vmatprep.subr.mxu0 0.0
      %7423 = vmatpush2.msra.mxu0 0.0
      %7424 = vmatprep.subr.mxu0 0.0
      %7425 = vmatpush2.msra.mxu0 0.0
      %7426 = vmatprep.subr.mxu0 0.0
      %7427 = vmatpush2.msra.mxu0 0.0
      %7428 = vmatprep.subr.mxu0 0.0
      %7429 = vmatpush2.msra.mxu0 0.0
      %7430 = vmatprep.subr.mxu0 0.0
      %7431 = vmatpush2.msra.mxu0 0.0
      %7432 = vmatprep.subr.mxu0 0.0
      %7433 = vmatpush2.msra.mxu0 0.0
      %7434 = vmatprep.subr.mxu0 0.0
      %7435 = vmatpush2.msra.mxu0 0.0
      %7436 = vmatprep.subr.mxu0 0.0
      %7437 = vmatpush2.msra.mxu0 0.0
      %7438 = vmatprep.subr.mxu0 0.0
      %7439 = vmatpush2.msra.mxu0 0.0
      %7440 = vmatprep.subr.mxu0 0.0
      %7441 = vmatpush2.msra.mxu0 0.0
      %7442 = vmatprep.subr.mxu0 0.0
      %7443 = vmatpush2.msra.mxu0 0.0
      %7444 = vmatprep.subr.mxu0 0.0
      %7445 = vmatpush2.msra.mxu0 0.0
      %7446 = vmatprep.mubr.f32.mxu0 0.0
      %7447 = vmatmul.mubr.f32.gmra.mxu0 %v7349
      %v7448 = vpop.f32.mrf.mxu0
      %v7449 = vadd.f32 0.0, %v7448
      %v7450 = vpop.f32.mrf.mxu0
      %7451 = vmatprep.mubr.f32.mxu0 0.0
      %7452 = vmatmul.mubr.f32.gmra.mxu0 %v7350
      %v7453 = vpop.f32.mrf.mxu0
      %v7454 = vadd.f32 0.0, %v7453
      %v7455 = vpop.f32.mrf.mxu0
      %7456 = vmatprep.mubr.f32.mxu0 0.0
      %7457 = vmatmul.mubr.f32.gmra.mxu0 %v7351
      %v7458 = vpop.f32.mrf.mxu0
      %v7459 = vadd.f32 0.0, %v7458
      %v7460 = vpop.f32.mrf.mxu0
      %7461 = vmatprep.mubr.f32.mxu0 0.0
      %7462 = vmatmul.mubr.f32.gmra.mxu0 %v7352
      %v7463 = vpop.f32.mrf.mxu0
      %v7464 = vadd.f32 0.0, %v7463
      %v7465 = vpop.f32.mrf.mxu0
      %7466 = vmatprep.mubr.f32.mxu0 0.0
      %7467 = vmatmul.mubr.f32.gmra.mxu0 %v7353
      %v7468 = vpop.f32.mrf.mxu0
      %v7469 = vadd.f32 0.0, %v7468
      %v7470 = vpop.f32.mrf.mxu0
      %7471 = vmatprep.mubr.f32.mxu0 0.0
      %7472 = vmatmul.mubr.f32.gmra.mxu0 %v7354
      %v7473 = vpop.f32.mrf.mxu0
      %v7474 = vadd.f32 0.0, %v7473
      %v7475 = vpop.f32.mrf.mxu0
      %7476 = vmatprep.mubr.f32.mxu0 0.0
      %7477 = vmatmul.mubr.f32.gmra.mxu0 %v7355
      %v7478 = vpop.f32.mrf.mxu0
      %v7479 = vadd.f32 0.0, %v7478
      %v7480 = vpop.f32.mrf.mxu0
      %7481 = vmatprep.mubr.f32.mxu0 0.0
      %7482 = vmatmul.mubr.f32.gmra.mxu0 %v7356
      %v7483 = vpop.f32.mrf.mxu0
      %v7484 = vadd.f32 0.0, %v7483
      %v7485 = vpop.f32.mrf.mxu0
      %7486 = vmatprep.mubr.f32.mxu0 0.0
      %7487 = vmatmul.mubr.f32.gmra.mxu0 %v7357
      %v7488 = vpop.f32.mrf.mxu0
      %v7489 = vadd.f32 0.0, %v7488
      %v7490 = vpop.f32.mrf.mxu0
      %7491 = vmatprep.mubr.f32.mxu0 0.0
      %7492 = vmatmul.mubr.f32.gmra.mxu0 %v7358
      %v7493 = vpop.f32.mrf.mxu0
      %v7494 = vadd.f32 0.0, %v7493
      %v7495 = vpop.f32.mrf.mxu0
      %7496 = vmatprep.mubr.f32.mxu0 0.0
      %7497 = vmatmul.mubr.f32.gmra.mxu0 %v7359
      %v7498 = vpop.f32.mrf.mxu0
      %v7499 = vadd.f32 0.0, %v7498
      %v7500 = vpop.f32.mrf.mxu0
      %7501 = vmatprep.mubr.f32.mxu0 0.0
      %7502 = vmatmul.mubr.f32.gmra.mxu0 %v7360
      %v7503 = vpop.f32.mrf.mxu0
      %v7504 = vadd.f32 0.0, %v7503
      %v7505 = vpop.f32.mrf.mxu0
      %7506 = vmatprep.mubr.f32.mxu0 0.0
      %7507 = vmatmul.mubr.f32.gmra.mxu0 %v7361
      %v7508 = vpop.f32.mrf.mxu0
      %v7509 = vadd.f32 0.0, %v7508
      %v7510 = vpop.f32.mrf.mxu0
      %7511 = vmatprep.mubr.f32.mxu0 0.0
      %7512 = vmatmul.mubr.f32.gmra.mxu0 %v7362
      %v7513 = vpop.f32.mrf.mxu0
      %v7514 = vadd.f32 0.0, %v7513
      %v7515 = vpop.f32.mrf.mxu0
      %7516 = vmatprep.mubr.f32.mxu0 0.0
      %7517 = vmatmul.mubr.f32.gmra.mxu0 %v7363
      %v7518 = vpop.f32.mrf.mxu0
      %v7519 = vadd.f32 0.0, %v7518
      %v7520 = vpop.f32.mrf.mxu0
      %7521 = vmatprep.mubr.f32.mxu0 0.0
      %7522 = vmatmul.mubr.f32.gmra.mxu0 %v7364
      %v7523 = vpop.f32.mrf.mxu0
      %v7524 = vadd.f32 0.0, %v7523
      %v7525 = vpop.f32.mrf.mxu0
      %7526 = vdwg.mxu0
      %v7527 = vadd.f32 %v7271, %v7449
      %v7528 = vadd.f32 %v7276, %v7454
      %v7529 = vadd.f32 %v7281, %v7459
      %v7530 = vadd.f32 %v7286, %v7464
      %v7531 = vadd.f32 %v7291, %v7469
      %v7532 = vadd.f32 %v7296, %v7474
      %v7533 = vadd.f32 %v7301, %v7479
      %v7534 = vadd.f32 %v7306, %v7484
      %v7535 = vadd.f32 %v7311, %v7489
      %v7536 = vadd.f32 %v7316, %v7494
      %v7537 = vadd.f32 %v7321, %v7499
      %v7538 = vadd.f32 %v7326, %v7504
      %v7539 = vadd.f32 %v7331, %v7509
      %v7540 = vadd.f32 %v7336, %v7514
      %v7541 = vadd.f32 %v7341, %v7519
      %v7542 = vadd.f32 %v7346, %v7524
      %v7543 = vld [vmem:[%s702 + $0x7] sm:$0xff]
      %v7544 = vld [vmem:[%s702 + $0xf] sm:$0xff]
      %v7545 = vld [vmem:[%s702 + $0x27] sm:$0xff]
      %v7546 = vld [vmem:[%s702 + $0x2f] sm:$0xff]
      %v7547 = vld [vmem:[%s702 + $0x47] sm:$0xff]
      %v7548 = vld [vmem:[%s702 + $0x4f] sm:$0xff]
      %v7549 = vld [vmem:[%s702 + $0x67] sm:$0xff]
      %v7550 = vld [vmem:[%s702 + $0x6f] sm:$0xff]
      %v7551 = vld [vmem:[%s702 + $0x87] sm:$0xff]
      %v7552 = vld [vmem:[%s702 + $0x8f] sm:$0xff]
      %v7553 = vld [vmem:[%s702 + $0xa7] sm:$0xff]
      %v7554 = vld [vmem:[%s702 + $0xaf] sm:$0xff]
      %v7555 = vld [vmem:[%s702 + $0xc7] sm:$0xff]
      %v7556 = vld [vmem:[%s702 + $0xcf] sm:$0xff]
      %v7557 = vld [vmem:[%s702 + $0xe7] sm:$0xff]
      %v7558 = vld [vmem:[%s702 + $0xef] sm:$0xff]
      %s7559 = scalar_lea.vmem %s7, 384
      %v7560 = vld [vmem:[%s7559] sm:$0xff]
      %v7561 = vld [vmem:[%s7559 + $0x8] sm:$0xff]
      %v7562 = vld [vmem:[%s7559 + $0x10] sm:$0xff]
      %v7563 = vld [vmem:[%s7559 + $0x18] sm:$0xff]
      %v7564 = vld [vmem:[%s7559 + $0x20] sm:$0xff]
      %v7565 = vld [vmem:[%s7559 + $0x28] sm:$0xff]
      %v7566 = vld [vmem:[%s7559 + $0x30] sm:$0xff]
      %v7567 = vld [vmem:[%s7559 + $0x38] sm:$0xff]
      %v7568 = vld [vmem:[%s7559 + $0x40] sm:$0xff]
      %v7569 = vld [vmem:[%s7559 + $0x48] sm:$0xff]
      %v7570 = vld [vmem:[%s7559 + $0x50] sm:$0xff]
      %v7571 = vld [vmem:[%s7559 + $0x58] sm:$0xff]
      %v7572 = vld [vmem:[%s7559 + $0x60] sm:$0xff]
      %v7573 = vld [vmem:[%s7559 + $0x68] sm:$0xff]
      %v7574 = vld [vmem:[%s7559 + $0x70] sm:$0xff]
      %v7575 = vld [vmem:[%s7559 + $0x78] sm:$0xff]
      %7576 = vmatprep.subr.mxu0 0.0
      %7577 = vmatpush1.msra.mxu0 %v7575
      %7578 = vmatprep.subr.mxu0 0.0
      %7579 = vmatpush1.msra.mxu0 %v7574
      %7580 = vmatprep.subr.mxu0 0.0
      %7581 = vmatpush1.msra.mxu0 %v7573
      %7582 = vmatprep.subr.mxu0 0.0
      %7583 = vmatpush1.msra.mxu0 %v7572
      %7584 = vmatprep.subr.mxu0 0.0
      %7585 = vmatpush1.msra.mxu0 %v7571
      %7586 = vmatprep.subr.mxu0 0.0
      %7587 = vmatpush1.msra.mxu0 %v7570
      %7588 = vmatprep.subr.mxu0 0.0
      %7589 = vmatpush1.msra.mxu0 %v7569
      %7590 = vmatprep.subr.mxu0 0.0
      %7591 = vmatpush1.msra.mxu0 %v7568
      %7592 = vmatprep.subr.mxu0 0.0
      %7593 = vmatpush1.msra.mxu0 %v7567
      %7594 = vmatprep.subr.mxu0 0.0
      %7595 = vmatpush1.msra.mxu0 %v7566
      %7596 = vmatprep.subr.mxu0 0.0
      %7597 = vmatpush1.msra.mxu0 %v7565
      %7598 = vmatprep.subr.mxu0 0.0
      %7599 = vmatpush1.msra.mxu0 %v7564
      %7600 = vmatprep.subr.mxu0 0.0
      %7601 = vmatpush1.msra.mxu0 %v7563
      %7602 = vmatprep.subr.mxu0 0.0
      %7603 = vmatpush1.msra.mxu0 %v7562
      %7604 = vmatprep.subr.mxu0 0.0
      %7605 = vmatpush1.msra.mxu0 %v7561
      %7606 = vmatprep.subr.mxu0 0.0
      %7607 = vmatpush1.msra.mxu0 %v7560
      %7608 = vmatprep.subr.mxu0 0.0
      %7609 = vmatpush2.msra.mxu0 0.0
      %7610 = vmatprep.subr.mxu0 0.0
      %7611 = vmatpush2.msra.mxu0 0.0
      %7612 = vmatprep.subr.mxu0 0.0
      %7613 = vmatpush2.msra.mxu0 0.0
      %7614 = vmatprep.subr.mxu0 0.0
      %7615 = vmatpush2.msra.mxu0 0.0
      %7616 = vmatprep.subr.mxu0 0.0
      %7617 = vmatpush2.msra.mxu0 0.0
      %7618 = vmatprep.subr.mxu0 0.0
      %7619 = vmatpush2.msra.mxu0 0.0
      %7620 = vmatprep.subr.mxu0 0.0
      %7621 = vmatpush2.msra.mxu0 0.0
      %7622 = vmatprep.subr.mxu0 0.0
      %7623 = vmatpush2.msra.mxu0 0.0
      %7624 = vmatprep.subr.mxu0 0.0
      %7625 = vmatpush2.msra.mxu0 0.0
      %7626 = vmatprep.subr.mxu0 0.0
      %7627 = vmatpush2.msra.mxu0 0.0
      %7628 = vmatprep.subr.mxu0 0.0
      %7629 = vmatpush2.msra.mxu0 0.0
      %7630 = vmatprep.subr.mxu0 0.0
      %7631 = vmatpush2.msra.mxu0 0.0
      %7632 = vmatprep.subr.mxu0 0.0
      %7633 = vmatpush2.msra.mxu0 0.0
      %7634 = vmatprep.subr.mxu0 0.0
      %7635 = vmatpush2.msra.mxu0 0.0
      %7636 = vmatprep.subr.mxu0 0.0
      %7637 = vmatpush2.msra.mxu0 0.0
      %7638 = vmatprep.subr.mxu0 0.0
      %7639 = vmatpush2.msra.mxu0 0.0
      %7640 = vmatprep.mubr.f32.mxu0 0.0
      %7641 = vmatmul.mubr.f32.gmra.mxu0 %v7543
      %v7642 = vpop.f32.mrf.mxu0
      %v7643 = vadd.f32 0.0, %v7642
      %v7644 = vpop.f32.mrf.mxu0
      %7645 = vmatprep.mubr.f32.mxu0 0.0
      %7646 = vmatmul.mubr.f32.gmra.mxu0 %v7544
      %v7647 = vpop.f32.mrf.mxu0
      %v7648 = vadd.f32 0.0, %v7647
      %v7649 = vpop.f32.mrf.mxu0
      %7650 = vmatprep.mubr.f32.mxu0 0.0
      %7651 = vmatmul.mubr.f32.gmra.mxu0 %v7545
      %v7652 = vpop.f32.mrf.mxu0
      %v7653 = vadd.f32 0.0, %v7652
      %v7654 = vpop.f32.mrf.mxu0
      %7655 = vmatprep.mubr.f32.mxu0 0.0
      %7656 = vmatmul.mubr.f32.gmra.mxu0 %v7546
      %v7657 = vpop.f32.mrf.mxu0
      %v7658 = vadd.f32 0.0, %v7657
      %v7659 = vpop.f32.mrf.mxu0
      %7660 = vmatprep.mubr.f32.mxu0 0.0
      %7661 = vmatmul.mubr.f32.gmra.mxu0 %v7547
      %v7662 = vpop.f32.mrf.mxu0
      %v7663 = vadd.f32 0.0, %v7662
      %v7664 = vpop.f32.mrf.mxu0
      %7665 = vmatprep.mubr.f32.mxu0 0.0
      %7666 = vmatmul.mubr.f32.gmra.mxu0 %v7548
      %v7667 = vpop.f32.mrf.mxu0
      %v7668 = vadd.f32 0.0, %v7667
      %v7669 = vpop.f32.mrf.mxu0
      %7670 = vmatprep.mubr.f32.mxu0 0.0
      %7671 = vmatmul.mubr.f32.gmra.mxu0 %v7549
      %v7672 = vpop.f32.mrf.mxu0
      %v7673 = vadd.f32 0.0, %v7672
      %v7674 = vpop.f32.mrf.mxu0
      %7675 = vmatprep.mubr.f32.mxu0 0.0
      %7676 = vmatmul.mubr.f32.gmra.mxu0 %v7550
      %v7677 = vpop.f32.mrf.mxu0
      %v7678 = vadd.f32 0.0, %v7677
      %v7679 = vpop.f32.mrf.mxu0
      %7680 = vmatprep.mubr.f32.mxu0 0.0
      %7681 = vmatmul.mubr.f32.gmra.mxu0 %v7551
      %v7682 = vpop.f32.mrf.mxu0
      %v7683 = vadd.f32 0.0, %v7682
      %v7684 = vpop.f32.mrf.mxu0
      %7685 = vmatprep.mubr.f32.mxu0 0.0
      %7686 = vmatmul.mubr.f32.gmra.mxu0 %v7552
      %v7687 = vpop.f32.mrf.mxu0
      %v7688 = vadd.f32 0.0, %v7687
      %v7689 = vpop.f32.mrf.mxu0
      %7690 = vmatprep.mubr.f32.mxu0 0.0
      %7691 = vmatmul.mubr.f32.gmra.mxu0 %v7553
      %v7692 = vpop.f32.mrf.mxu0
      %v7693 = vadd.f32 0.0, %v7692
      %v7694 = vpop.f32.mrf.mxu0
      %7695 = vmatprep.mubr.f32.mxu0 0.0
      %7696 = vmatmul.mubr.f32.gmra.mxu0 %v7554
      %v7697 = vpop.f32.mrf.mxu0
      %v7698 = vadd.f32 0.0, %v7697
      %v7699 = vpop.f32.mrf.mxu0
      %7700 = vmatprep.mubr.f32.mxu0 0.0
      %7701 = vmatmul.mubr.f32.gmra.mxu0 %v7555
      %v7702 = vpop.f32.mrf.mxu0
      %v7703 = vadd.f32 0.0, %v7702
      %v7704 = vpop.f32.mrf.mxu0
      %7705 = vmatprep.mubr.f32.mxu0 0.0
      %7706 = vmatmul.mubr.f32.gmra.mxu0 %v7556
      %v7707 = vpop.f32.mrf.mxu0
      %v7708 = vadd.f32 0.0, %v7707
      %v7709 = vpop.f32.mrf.mxu0
      %7710 = vmatprep.mubr.f32.mxu0 0.0
      %7711 = vmatmul.mubr.f32.gmra.mxu0 %v7557
      %v7712 = vpop.f32.mrf.mxu0
      %v7713 = vadd.f32 0.0, %v7712
      %v7714 = vpop.f32.mrf.mxu0
      %7715 = vmatprep.mubr.f32.mxu0 0.0
      %7716 = vmatmul.mubr.f32.gmra.mxu0 %v7558
      %v7717 = vpop.f32.mrf.mxu0
      %v7718 = vadd.f32 0.0, %v7717
      %v7719 = vpop.f32.mrf.mxu0
      %7720 = vdwg.mxu0
      %v7721 = vadd.f32 %v7527, %v7643
      %v7722 = vadd.f32 %v7528, %v7648
      %v7723 = vadd.f32 %v7529, %v7653
      %v7724 = vadd.f32 %v7530, %v7658
      %v7725 = vadd.f32 %v7531, %v7663
      %v7726 = vadd.f32 %v7532, %v7668
      %v7727 = vadd.f32 %v7533, %v7673
      %v7728 = vadd.f32 %v7534, %v7678
      %v7729 = vadd.f32 %v7535, %v7683
      %v7730 = vadd.f32 %v7536, %v7688
      %v7731 = vadd.f32 %v7537, %v7693
      %v7732 = vadd.f32 %v7538, %v7698
      %v7733 = vadd.f32 %v7539, %v7703
      %v7734 = vadd.f32 %v7540, %v7708
      %v7735 = vadd.f32 %v7541, %v7713
      %v7736 = vadd.f32 %v7542, %v7718
      %v7737 = vld [vmem:[%s702 + $0x8] sm:$0xff]
      %v7738 = vld [vmem:[%s702 + $0x10] sm:$0xff]
      %v7739 = vld [vmem:[%s702 + $0x28] sm:$0xff]
      %v7740 = vld [vmem:[%s702 + $0x30] sm:$0xff]
      %v7741 = vld [vmem:[%s702 + $0x48] sm:$0xff]
      %v7742 = vld [vmem:[%s702 + $0x50] sm:$0xff]
      %v7743 = vld [vmem:[%s702 + $0x68] sm:$0xff]
      %v7744 = vld [vmem:[%s702 + $0x70] sm:$0xff]
      %v7745 = vld [vmem:[%s702 + $0x88] sm:$0xff]
      %v7746 = vld [vmem:[%s702 + $0x90] sm:$0xff]
      %v7747 = vld [vmem:[%s702 + $0xa8] sm:$0xff]
      %v7748 = vld [vmem:[%s702 + $0xb0] sm:$0xff]
      %v7749 = vld [vmem:[%s702 + $0xc8] sm:$0xff]
      %v7750 = vld [vmem:[%s702 + $0xd0] sm:$0xff]
      %v7751 = vld [vmem:[%s702 + $0xe8] sm:$0xff]
      %v7752 = vld [vmem:[%s702 + $0xf0] sm:$0xff]
      %s7753 = scalar_lea.vmem %s7, 512
      %v7754 = vld [vmem:[%s7753] sm:$0xff]
      %v7755 = vld [vmem:[%s7753 + $0x8] sm:$0xff]
      %v7756 = vld [vmem:[%s7753 + $0x10] sm:$0xff]
      %v7757 = vld [vmem:[%s7753 + $0x18] sm:$0xff]
      %v7758 = vld [vmem:[%s7753 + $0x20] sm:$0xff]
      %v7759 = vld [vmem:[%s7753 + $0x28] sm:$0xff]
      %v7760 = vld [vmem:[%s7753 + $0x30] sm:$0xff]
      %v7761 = vld [vmem:[%s7753 + $0x38] sm:$0xff]
      %v7762 = vld [vmem:[%s7753 + $0x40] sm:$0xff]
      %v7763 = vld [vmem:[%s7753 + $0x48] sm:$0xff]
      %v7764 = vld [vmem:[%s7753 + $0x50] sm:$0xff]
      %v7765 = vld [vmem:[%s7753 + $0x58] sm:$0xff]
      %v7766 = vld [vmem:[%s7753 + $0x60] sm:$0xff]
      %v7767 = vld [vmem:[%s7753 + $0x68] sm:$0xff]
      %v7768 = vld [vmem:[%s7753 + $0x70] sm:$0xff]
      %v7769 = vld [vmem:[%s7753 + $0x78] sm:$0xff]
      %7770 = vmatprep.subr.mxu0 0.0
      %7771 = vmatpush1.msra.mxu0 %v7769
      %7772 = vmatprep.subr.mxu0 0.0
      %7773 = vmatpush1.msra.mxu0 %v7768
      %7774 = vmatprep.subr.mxu0 0.0
      %7775 = vmatpush1.msra.mxu0 %v7767
      %7776 = vmatprep.subr.mxu0 0.0
      %7777 = vmatpush1.msra.mxu0 %v7766
      %7778 = vmatprep.subr.mxu0 0.0
      %7779 = vmatpush1.msra.mxu0 %v7765
      %7780 = vmatprep.subr.mxu0 0.0
      %7781 = vmatpush1.msra.mxu0 %v7764
      %7782 = vmatprep.subr.mxu0 0.0
      %7783 = vmatpush1.msra.mxu0 %v7763
      %7784 = vmatprep.subr.mxu0 0.0
      %7785 = vmatpush1.msra.mxu0 %v7762
      %7786 = vmatprep.subr.mxu0 0.0
      %7787 = vmatpush1.msra.mxu0 %v7761
      %7788 = vmatprep.subr.mxu0 0.0
      %7789 = vmatpush1.msra.mxu0 %v7760
      %7790 = vmatprep.subr.mxu0 0.0
      %7791 = vmatpush1.msra.mxu0 %v7759
      %7792 = vmatprep.subr.mxu0 0.0
      %7793 = vmatpush1.msra.mxu0 %v7758
      %7794 = vmatprep.subr.mxu0 0.0
      %7795 = vmatpush1.msra.mxu0 %v7757
      %7796 = vmatprep.subr.mxu0 0.0
      %7797 = vmatpush1.msra.mxu0 %v7756
      %7798 = vmatprep.subr.mxu0 0.0
      %7799 = vmatpush1.msra.mxu0 %v7755
      %7800 = vmatprep.subr.mxu0 0.0
      %7801 = vmatpush1.msra.mxu0 %v7754
      %7802 = vmatprep.subr.mxu0 0.0
      %7803 = vmatpush2.msra.mxu0 0.0
      %7804 = vmatprep.subr.mxu0 0.0
      %7805 = vmatpush2.msra.mxu0 0.0
      %7806 = vmatprep.subr.mxu0 0.0
      %7807 = vmatpush2.msra.mxu0 0.0
      %7808 = vmatprep.subr.mxu0 0.0
      %7809 = vmatpush2.msra.mxu0 0.0
      %7810 = vmatprep.subr.mxu0 0.0
      %7811 = vmatpush2.msra.mxu0 0.0
      %7812 = vmatprep.subr.mxu0 0.0
      %7813 = vmatpush2.msra.mxu0 0.0
      %7814 = vmatprep.subr.mxu0 0.0
      %7815 = vmatpush2.msra.mxu0 0.0
      %7816 = vmatprep.subr.mxu0 0.0
      %7817 = vmatpush2.msra.mxu0 0.0
      %7818 = vmatprep.subr.mxu0 0.0
      %7819 = vmatpush2.msra.mxu0 0.0
      %7820 = vmatprep.subr.mxu0 0.0
      %7821 = vmatpush2.msra.mxu0 0.0
      %7822 = vmatprep.subr.mxu0 0.0
      %7823 = vmatpush2.msra.mxu0 0.0
      %7824 = vmatprep.subr.mxu0 0.0
      %7825 = vmatpush2.msra.mxu0 0.0
      %7826 = vmatprep.subr.mxu0 0.0
      %7827 = vmatpush2.msra.mxu0 0.0
      %7828 = vmatprep.subr.mxu0 0.0
      %7829 = vmatpush2.msra.mxu0 0.0
      %7830 = vmatprep.subr.mxu0 0.0
      %7831 = vmatpush2.msra.mxu0 0.0
      %7832 = vmatprep.subr.mxu0 0.0
      %7833 = vmatpush2.msra.mxu0 0.0
      %7834 = vmatprep.mubr.f32.mxu0 0.0
      %7835 = vmatmul.mubr.f32.gmra.mxu0 %v7737
      %v7836 = vpop.f32.mrf.mxu0
      %v7837 = vadd.f32 0.0, %v7836
      %v7838 = vpop.f32.mrf.mxu0
      %7839 = vmatprep.mubr.f32.mxu0 0.0
      %7840 = vmatmul.mubr.f32.gmra.mxu0 %v7738
      %v7841 = vpop.f32.mrf.mxu0
      %v7842 = vadd.f32 0.0, %v7841
      %v7843 = vpop.f32.mrf.mxu0
      %7844 = vmatprep.mubr.f32.mxu0 0.0
      %7845 = vmatmul.mubr.f32.gmra.mxu0 %v7739
      %v7846 = vpop.f32.mrf.mxu0
      %v7847 = vadd.f32 0.0, %v7846
      %v7848 = vpop.f32.mrf.mxu0
      %7849 = vmatprep.mubr.f32.mxu0 0.0
      %7850 = vmatmul.mubr.f32.gmra.mxu0 %v7740
      %v7851 = vpop.f32.mrf.mxu0
      %v7852 = vadd.f32 0.0, %v7851
      %v7853 = vpop.f32.mrf.mxu0
      %7854 = vmatprep.mubr.f32.mxu0 0.0
      %7855 = vmatmul.mubr.f32.gmra.mxu0 %v7741
      %v7856 = vpop.f32.mrf.mxu0
      %v7857 = vadd.f32 0.0, %v7856
      %v7858 = vpop.f32.mrf.mxu0
      %7859 = vmatprep.mubr.f32.mxu0 0.0
      %7860 = vmatmul.mubr.f32.gmra.mxu0 %v7742
      %v7861 = vpop.f32.mrf.mxu0
      %v7862 = vadd.f32 0.0, %v7861
      %v7863 = vpop.f32.mrf.mxu0
      %7864 = vmatprep.mubr.f32.mxu0 0.0
      %7865 = vmatmul.mubr.f32.gmra.mxu0 %v7743
      %v7866 = vpop.f32.mrf.mxu0
      %v7867 = vadd.f32 0.0, %v7866
      %v7868 = vpop.f32.mrf.mxu0
      %7869 = vmatprep.mubr.f32.mxu0 0.0
      %7870 = vmatmul.mubr.f32.gmra.mxu0 %v7744
      %v7871 = vpop.f32.mrf.mxu0
      %v7872 = vadd.f32 0.0, %v7871
      %v7873 = vpop.f32.mrf.mxu0
      %7874 = vmatprep.mubr.f32.mxu0 0.0
      %7875 = vmatmul.mubr.f32.gmra.mxu0 %v7745
      %v7876 = vpop.f32.mrf.mxu0
      %v7877 = vadd.f32 0.0, %v7876
      %v7878 = vpop.f32.mrf.mxu0
      %7879 = vmatprep.mubr.f32.mxu0 0.0
      %7880 = vmatmul.mubr.f32.gmra.mxu0 %v7746
      %v7881 = vpop.f32.mrf.mxu0
      %v7882 = vadd.f32 0.0, %v7881
      %v7883 = vpop.f32.mrf.mxu0
      %7884 = vmatprep.mubr.f32.mxu0 0.0
      %7885 = vmatmul.mubr.f32.gmra.mxu0 %v7747
      %v7886 = vpop.f32.mrf.mxu0
      %v7887 = vadd.f32 0.0, %v7886
      %v7888 = vpop.f32.mrf.mxu0
      %7889 = vmatprep.mubr.f32.mxu0 0.0
      %7890 = vmatmul.mubr.f32.gmra.mxu0 %v7748
      %v7891 = vpop.f32.mrf.mxu0
      %v7892 = vadd.f32 0.0, %v7891
      %v7893 = vpop.f32.mrf.mxu0
      %7894 = vmatprep.mubr.f32.mxu0 0.0
      %7895 = vmatmul.mubr.f32.gmra.mxu0 %v7749
      %v7896 = vpop.f32.mrf.mxu0
      %v7897 = vadd.f32 0.0, %v7896
      %v7898 = vpop.f32.mrf.mxu0
      %7899 = vmatprep.mubr.f32.mxu0 0.0
      %7900 = vmatmul.mubr.f32.gmra.mxu0 %v7750
      %v7901 = vpop.f32.mrf.mxu0
      %v7902 = vadd.f32 0.0, %v7901
      %v7903 = vpop.f32.mrf.mxu0
      %7904 = vmatprep.mubr.f32.mxu0 0.0
      %7905 = vmatmul.mubr.f32.gmra.mxu0 %v7751
      %v7906 = vpop.f32.mrf.mxu0
      %v7907 = vadd.f32 0.0, %v7906
      %v7908 = vpop.f32.mrf.mxu0
      %7909 = vmatprep.mubr.f32.mxu0 0.0
      %7910 = vmatmul.mubr.f32.gmra.mxu0 %v7752
      %v7911 = vpop.f32.mrf.mxu0
      %v7912 = vadd.f32 0.0, %v7911
      %v7913 = vpop.f32.mrf.mxu0
      %7914 = vdwg.mxu0
      %v7915 = vadd.f32 %v7721, %v7837
      %v7916 = vadd.f32 %v7722, %v7842
      %v7917 = vadd.f32 %v7723, %v7847
      %v7918 = vadd.f32 %v7724, %v7852
      %v7919 = vadd.f32 %v7725, %v7857
      %v7920 = vadd.f32 %v7726, %v7862
      %v7921 = vadd.f32 %v7727, %v7867
      %v7922 = vadd.f32 %v7728, %v7872
      %v7923 = vadd.f32 %v7729, %v7877
      %v7924 = vadd.f32 %v7730, %v7882
      %v7925 = vadd.f32 %v7731, %v7887
      %v7926 = vadd.f32 %v7732, %v7892
      %v7927 = vadd.f32 %v7733, %v7897
      %v7928 = vadd.f32 %v7734, %v7902
      %v7929 = vadd.f32 %v7735, %v7907
      %v7930 = vadd.f32 %v7736, %v7912
      %v7931 = vld [vmem:[%s702 + $0x9] sm:$0xff]
      %v7932 = vld [vmem:[%s702 + $0x11] sm:$0xff]
      %v7933 = vld [vmem:[%s702 + $0x29] sm:$0xff]
      %v7934 = vld [vmem:[%s702 + $0x31] sm:$0xff]
      %v7935 = vld [vmem:[%s702 + $0x49] sm:$0xff]
      %v7936 = vld [vmem:[%s702 + $0x51] sm:$0xff]
      %v7937 = vld [vmem:[%s702 + $0x69] sm:$0xff]
      %v7938 = vld [vmem:[%s702 + $0x71] sm:$0xff]
      %v7939 = vld [vmem:[%s702 + $0x89] sm:$0xff]
      %v7940 = vld [vmem:[%s702 + $0x91] sm:$0xff]
      %v7941 = vld [vmem:[%s702 + $0xa9] sm:$0xff]
      %v7942 = vld [vmem:[%s702 + $0xb1] sm:$0xff]
      %v7943 = vld [vmem:[%s702 + $0xc9] sm:$0xff]
      %v7944 = vld [vmem:[%s702 + $0xd1] sm:$0xff]
      %v7945 = vld [vmem:[%s702 + $0xe9] sm:$0xff]
      %v7946 = vld [vmem:[%s702 + $0xf1] sm:$0xff]
      %s7947 = scalar_lea.vmem %s7, 640
      %v7948 = vld [vmem:[%s7947] sm:$0xff]
      %v7949 = vld [vmem:[%s7947 + $0x8] sm:$0xff]
      %v7950 = vld [vmem:[%s7947 + $0x10] sm:$0xff]
      %v7951 = vld [vmem:[%s7947 + $0x18] sm:$0xff]
      %v7952 = vld [vmem:[%s7947 + $0x20] sm:$0xff]
      %v7953 = vld [vmem:[%s7947 + $0x28] sm:$0xff]
      %v7954 = vld [vmem:[%s7947 + $0x30] sm:$0xff]
      %v7955 = vld [vmem:[%s7947 + $0x38] sm:$0xff]
      %v7956 = vld [vmem:[%s7947 + $0x40] sm:$0xff]
      %v7957 = vld [vmem:[%s7947 + $0x48] sm:$0xff]
      %v7958 = vld [vmem:[%s7947 + $0x50] sm:$0xff]
      %v7959 = vld [vmem:[%s7947 + $0x58] sm:$0xff]
      %v7960 = vld [vmem:[%s7947 + $0x60] sm:$0xff]
      %v7961 = vld [vmem:[%s7947 + $0x68] sm:$0xff]
      %v7962 = vld [vmem:[%s7947 + $0x70] sm:$0xff]
      %v7963 = vld [vmem:[%s7947 + $0x78] sm:$0xff]
      %7964 = vmatprep.subr.mxu0 0.0
      %7965 = vmatpush1.msra.mxu0 %v7963
      %7966 = vmatprep.subr.mxu0 0.0
      %7967 = vmatpush1.msra.mxu0 %v7962
      %7968 = vmatprep.subr.mxu0 0.0
      %7969 = vmatpush1.msra.mxu0 %v7961
      %7970 = vmatprep.subr.mxu0 0.0
      %7971 = vmatpush1.msra.mxu0 %v7960
      %7972 = vmatprep.subr.mxu0 0.0
      %7973 = vmatpush1.msra.mxu0 %v7959
      %7974 = vmatprep.subr.mxu0 0.0
      %7975 = vmatpush1.msra.mxu0 %v7958
      %7976 = vmatprep.subr.mxu0 0.0
      %7977 = vmatpush1.msra.mxu0 %v7957
      %7978 = vmatprep.subr.mxu0 0.0
      %7979 = vmatpush1.msra.mxu0 %v7956
      %7980 = vmatprep.subr.mxu0 0.0
      %7981 = vmatpush1.msra.mxu0 %v7955
      %7982 = vmatprep.subr.mxu0 0.0
      %7983 = vmatpush1.msra.mxu0 %v7954
      %7984 = vmatprep.subr.mxu0 0.0
      %7985 = vmatpush1.msra.mxu0 %v7953
      %7986 = vmatprep.subr.mxu0 0.0
      %7987 = vmatpush1.msra.mxu0 %v7952
      %7988 = vmatprep.subr.mxu0 0.0
      %7989 = vmatpush1.msra.mxu0 %v7951
      %7990 = vmatprep.subr.mxu0 0.0
      %7991 = vmatpush1.msra.mxu0 %v7950
      %7992 = vmatprep.subr.mxu0 0.0
      %7993 = vmatpush1.msra.mxu0 %v7949
      %7994 = vmatprep.subr.mxu0 0.0
      %7995 = vmatpush1.msra.mxu0 %v7948
      %7996 = vmatprep.subr.mxu0 0.0
      %7997 = vmatpush2.msra.mxu0 0.0
      %7998 = vmatprep.subr.mxu0 0.0
      %7999 = vmatpush2.msra.mxu0 0.0
      %8000 = vmatprep.subr.mxu0 0.0
      %8001 = vmatpush2.msra.mxu0 0.0
      %8002 = vmatprep.subr.mxu0 0.0
      %8003 = vmatpush2.msra.mxu0 0.0
      %8004 = vmatprep.subr.mxu0 0.0
      %8005 = vmatpush2.msra.mxu0 0.0
      %8006 = vmatprep.subr.mxu0 0.0
      %8007 = vmatpush2.msra.mxu0 0.0
      %8008 = vmatprep.subr.mxu0 0.0
      %8009 = vmatpush2.msra.mxu0 0.0
      %8010 = vmatprep.subr.mxu0 0.0
      %8011 = vmatpush2.msra.mxu0 0.0
      %8012 = vmatprep.subr.mxu0 0.0
      %8013 = vmatpush2.msra.mxu0 0.0
      %8014 = vmatprep.subr.mxu0 0.0
      %8015 = vmatpush2.msra.mxu0 0.0
      %8016 = vmatprep.subr.mxu0 0.0
      %8017 = vmatpush2.msra.mxu0 0.0
      %8018 = vmatprep.subr.mxu0 0.0
      %8019 = vmatpush2.msra.mxu0 0.0
      %8020 = vmatprep.subr.mxu0 0.0
      %8021 = vmatpush2.msra.mxu0 0.0
      %8022 = vmatprep.subr.mxu0 0.0
      %8023 = vmatpush2.msra.mxu0 0.0
      %8024 = vmatprep.subr.mxu0 0.0
      %8025 = vmatpush2.msra.mxu0 0.0
      %8026 = vmatprep.subr.mxu0 0.0
      %8027 = vmatpush2.msra.mxu0 0.0
      %8028 = vmatprep.mubr.f32.mxu0 0.0
      %8029 = vmatmul.mubr.f32.gmra.mxu0 %v7931
      %v8030 = vpop.f32.mrf.mxu0
      %v8031 = vadd.f32 0.0, %v8030
      %v8032 = vpop.f32.mrf.mxu0
      %8033 = vmatprep.mubr.f32.mxu0 0.0
      %8034 = vmatmul.mubr.f32.gmra.mxu0 %v7932
      %v8035 = vpop.f32.mrf.mxu0
      %v8036 = vadd.f32 0.0, %v8035
      %v8037 = vpop.f32.mrf.mxu0
      %8038 = vmatprep.mubr.f32.mxu0 0.0
      %8039 = vmatmul.mubr.f32.gmra.mxu0 %v7933
      %v8040 = vpop.f32.mrf.mxu0
      %v8041 = vadd.f32 0.0, %v8040
      %v8042 = vpop.f32.mrf.mxu0
      %8043 = vmatprep.mubr.f32.mxu0 0.0
      %8044 = vmatmul.mubr.f32.gmra.mxu0 %v7934
      %v8045 = vpop.f32.mrf.mxu0
      %v8046 = vadd.f32 0.0, %v8045
      %v8047 = vpop.f32.mrf.mxu0
      %8048 = vmatprep.mubr.f32.mxu0 0.0
      %8049 = vmatmul.mubr.f32.gmra.mxu0 %v7935
      %v8050 = vpop.f32.mrf.mxu0
      %v8051 = vadd.f32 0.0, %v8050
      %v8052 = vpop.f32.mrf.mxu0
      %8053 = vmatprep.mubr.f32.mxu0 0.0
      %8054 = vmatmul.mubr.f32.gmra.mxu0 %v7936
      %v8055 = vpop.f32.mrf.mxu0
      %v8056 = vadd.f32 0.0, %v8055
      %v8057 = vpop.f32.mrf.mxu0
      %8058 = vmatprep.mubr.f32.mxu0 0.0
      %8059 = vmatmul.mubr.f32.gmra.mxu0 %v7937
      %v8060 = vpop.f32.mrf.mxu0
      %v8061 = vadd.f32 0.0, %v8060
      %v8062 = vpop.f32.mrf.mxu0
      %8063 = vmatprep.mubr.f32.mxu0 0.0
      %8064 = vmatmul.mubr.f32.gmra.mxu0 %v7938
      %v8065 = vpop.f32.mrf.mxu0
      %v8066 = vadd.f32 0.0, %v8065
      %v8067 = vpop.f32.mrf.mxu0
      %8068 = vmatprep.mubr.f32.mxu0 0.0
      %8069 = vmatmul.mubr.f32.gmra.mxu0 %v7939
      %v8070 = vpop.f32.mrf.mxu0
      %v8071 = vadd.f32 0.0, %v8070
      %v8072 = vpop.f32.mrf.mxu0
      %8073 = vmatprep.mubr.f32.mxu0 0.0
      %8074 = vmatmul.mubr.f32.gmra.mxu0 %v7940
      %v8075 = vpop.f32.mrf.mxu0
      %v8076 = vadd.f32 0.0, %v8075
      %v8077 = vpop.f32.mrf.mxu0
      %8078 = vmatprep.mubr.f32.mxu0 0.0
      %8079 = vmatmul.mubr.f32.gmra.mxu0 %v7941
      %v8080 = vpop.f32.mrf.mxu0
      %v8081 = vadd.f32 0.0, %v8080
      %v8082 = vpop.f32.mrf.mxu0
      %8083 = vmatprep.mubr.f32.mxu0 0.0
      %8084 = vmatmul.mubr.f32.gmra.mxu0 %v7942
      %v8085 = vpop.f32.mrf.mxu0
      %v8086 = vadd.f32 0.0, %v8085
      %v8087 = vpop.f32.mrf.mxu0
      %8088 = vmatprep.mubr.f32.mxu0 0.0
      %8089 = vmatmul.mubr.f32.gmra.mxu0 %v7943
      %v8090 = vpop.f32.mrf.mxu0
      %v8091 = vadd.f32 0.0, %v8090
      %v8092 = vpop.f32.mrf.mxu0
      %8093 = vmatprep.mubr.f32.mxu0 0.0
      %8094 = vmatmul.mubr.f32.gmra.mxu0 %v7944
      %v8095 = vpop.f32.mrf.mxu0
      %v8096 = vadd.f32 0.0, %v8095
      %v8097 = vpop.f32.mrf.mxu0
      %8098 = vmatprep.mubr.f32.mxu0 0.0
      %8099 = vmatmul.mubr.f32.gmra.mxu0 %v7945
      %v8100 = vpop.f32.mrf.mxu0
      %v8101 = vadd.f32 0.0, %v8100
      %v8102 = vpop.f32.mrf.mxu0
      %8103 = vmatprep.mubr.f32.mxu0 0.0
      %8104 = vmatmul.mubr.f32.gmra.mxu0 %v7946
      %v8105 = vpop.f32.mrf.mxu0
      %v8106 = vadd.f32 0.0, %v8105
      %v8107 = vpop.f32.mrf.mxu0
      %8108 = vdwg.mxu0
      %v8109 = vadd.f32 %v7915, %v8031
      %v8110 = vadd.f32 %v7916, %v8036
      %v8111 = vadd.f32 %v7917, %v8041
      %v8112 = vadd.f32 %v7918, %v8046
      %v8113 = vadd.f32 %v7919, %v8051
      %v8114 = vadd.f32 %v7920, %v8056
      %v8115 = vadd.f32 %v7921, %v8061
      %v8116 = vadd.f32 %v7922, %v8066
      %v8117 = vadd.f32 %v7923, %v8071
      %v8118 = vadd.f32 %v7924, %v8076
      %v8119 = vadd.f32 %v7925, %v8081
      %v8120 = vadd.f32 %v7926, %v8086
      %v8121 = vadd.f32 %v7927, %v8091
      %v8122 = vadd.f32 %v7928, %v8096
      %v8123 = vadd.f32 %v7929, %v8101
      %v8124 = vadd.f32 %v7930, %v8106
      %v8125 = vld [vmem:[%s4011 + $0x7] sm:$0xff]
      %v8126 = vld [vmem:[%s4011 + $0xf] sm:$0xff]
      %v8127 = vld [vmem:[%s4011 + $0x27] sm:$0xff]
      %v8128 = vld [vmem:[%s4011 + $0x2f] sm:$0xff]
      %v8129 = vld [vmem:[%s4011 + $0x47] sm:$0xff]
      %v8130 = vld [vmem:[%s4011 + $0x4f] sm:$0xff]
      %v8131 = vld [vmem:[%s4011 + $0x67] sm:$0xff]
      %v8132 = vld [vmem:[%s4011 + $0x6f] sm:$0xff]
      %v8133 = vld [vmem:[%s4011 + $0x87] sm:$0xff]
      %v8134 = vld [vmem:[%s4011 + $0x8f] sm:$0xff]
      %v8135 = vld [vmem:[%s4011 + $0xa7] sm:$0xff]
      %v8136 = vld [vmem:[%s4011 + $0xaf] sm:$0xff]
      %v8137 = vld [vmem:[%s4011 + $0xc7] sm:$0xff]
      %v8138 = vld [vmem:[%s4011 + $0xcf] sm:$0xff]
      %v8139 = vld [vmem:[%s4011 + $0xe7] sm:$0xff]
      %v8140 = vld [vmem:[%s4011 + $0xef] sm:$0xff]
      %s8141 = scalar_lea.vmem %s7, 768
      %v8142 = vld [vmem:[%s8141] sm:$0xff]
      %v8143 = vld [vmem:[%s8141 + $0x8] sm:$0xff]
      %v8144 = vld [vmem:[%s8141 + $0x10] sm:$0xff]
      %v8145 = vld [vmem:[%s8141 + $0x18] sm:$0xff]
      %v8146 = vld [vmem:[%s8141 + $0x20] sm:$0xff]
      %v8147 = vld [vmem:[%s8141 + $0x28] sm:$0xff]
      %v8148 = vld [vmem:[%s8141 + $0x30] sm:$0xff]
      %v8149 = vld [vmem:[%s8141 + $0x38] sm:$0xff]
      %v8150 = vld [vmem:[%s8141 + $0x40] sm:$0xff]
      %v8151 = vld [vmem:[%s8141 + $0x48] sm:$0xff]
      %v8152 = vld [vmem:[%s8141 + $0x50] sm:$0xff]
      %v8153 = vld [vmem:[%s8141 + $0x58] sm:$0xff]
      %v8154 = vld [vmem:[%s8141 + $0x60] sm:$0xff]
      %v8155 = vld [vmem:[%s8141 + $0x68] sm:$0xff]
      %v8156 = vld [vmem:[%s8141 + $0x70] sm:$0xff]
      %v8157 = vld [vmem:[%s8141 + $0x78] sm:$0xff]
      %8158 = vmatprep.subr.mxu0 0.0
      %8159 = vmatpush1.msra.mxu0 %v8157
      %8160 = vmatprep.subr.mxu0 0.0
      %8161 = vmatpush1.msra.mxu0 %v8156
      %8162 = vmatprep.subr.mxu0 0.0
      %8163 = vmatpush1.msra.mxu0 %v8155
      %8164 = vmatprep.subr.mxu0 0.0
      %8165 = vmatpush1.msra.mxu0 %v8154
      %8166 = vmatprep.subr.mxu0 0.0
      %8167 = vmatpush1.msra.mxu0 %v8153
      %8168 = vmatprep.subr.mxu0 0.0
      %8169 = vmatpush1.msra.mxu0 %v8152
      %8170 = vmatprep.subr.mxu0 0.0
      %8171 = vmatpush1.msra.mxu0 %v8151
      %8172 = vmatprep.subr.mxu0 0.0
      %8173 = vmatpush1.msra.mxu0 %v8150
      %8174 = vmatprep.subr.mxu0 0.0
      %8175 = vmatpush1.msra.mxu0 %v8149
      %8176 = vmatprep.subr.mxu0 0.0
      %8177 = vmatpush1.msra.mxu0 %v8148
      %8178 = vmatprep.subr.mxu0 0.0
      %8179 = vmatpush1.msra.mxu0 %v8147
      %8180 = vmatprep.subr.mxu0 0.0
      %8181 = vmatpush1.msra.mxu0 %v8146
      %8182 = vmatprep.subr.mxu0 0.0
      %8183 = vmatpush1.msra.mxu0 %v8145
      %8184 = vmatprep.subr.mxu0 0.0
      %8185 = vmatpush1.msra.mxu0 %v8144
      %8186 = vmatprep.subr.mxu0 0.0
      %8187 = vmatpush1.msra.mxu0 %v8143
      %8188 = vmatprep.subr.mxu0 0.0
      %8189 = vmatpush1.msra.mxu0 %v8142
      %8190 = vmatprep.subr.mxu0 0.0
      %8191 = vmatpush2.msra.mxu0 0.0
      %8192 = vmatprep.subr.mxu0 0.0
      %8193 = vmatpush2.msra.mxu0 0.0
      %8194 = vmatprep.subr.mxu0 0.0
      %8195 = vmatpush2.msra.mxu0 0.0
      %8196 = vmatprep.subr.mxu0 0.0
      %8197 = vmatpush2.msra.mxu0 0.0
      %8198 = vmatprep.subr.mxu0 0.0
      %8199 = vmatpush2.msra.mxu0 0.0
      %8200 = vmatprep.subr.mxu0 0.0
      %8201 = vmatpush2.msra.mxu0 0.0
      %8202 = vmatprep.subr.mxu0 0.0
      %8203 = vmatpush2.msra.mxu0 0.0
      %8204 = vmatprep.subr.mxu0 0.0
      %8205 = vmatpush2.msra.mxu0 0.0
      %8206 = vmatprep.subr.mxu0 0.0
      %8207 = vmatpush2.msra.mxu0 0.0
      %8208 = vmatprep.subr.mxu0 0.0
      %8209 = vmatpush2.msra.mxu0 0.0
      %8210 = vmatprep.subr.mxu0 0.0
      %8211 = vmatpush2.msra.mxu0 0.0
      %8212 = vmatprep.subr.mxu0 0.0
      %8213 = vmatpush2.msra.mxu0 0.0
      %8214 = vmatprep.subr.mxu0 0.0
      %8215 = vmatpush2.msra.mxu0 0.0
      %8216 = vmatprep.subr.mxu0 0.0
      %8217 = vmatpush2.msra.mxu0 0.0
      %8218 = vmatprep.subr.mxu0 0.0
      %8219 = vmatpush2.msra.mxu0 0.0
      %8220 = vmatprep.subr.mxu0 0.0
      %8221 = vmatpush2.msra.mxu0 0.0
      %8222 = vmatprep.mubr.f32.mxu0 0.0
      %8223 = vmatmul.mubr.f32.gmra.mxu0 %v8125
      %v8224 = vpop.f32.mrf.mxu0
      %v8225 = vadd.f32 0.0, %v8224
      %v8226 = vpop.f32.mrf.mxu0
      %8227 = vmatprep.mubr.f32.mxu0 0.0
      %8228 = vmatmul.mubr.f32.gmra.mxu0 %v8126
      %v8229 = vpop.f32.mrf.mxu0
      %v8230 = vadd.f32 0.0, %v8229
      %v8231 = vpop.f32.mrf.mxu0
      %8232 = vmatprep.mubr.f32.mxu0 0.0
      %8233 = vmatmul.mubr.f32.gmra.mxu0 %v8127
      %v8234 = vpop.f32.mrf.mxu0
      %v8235 = vadd.f32 0.0, %v8234
      %v8236 = vpop.f32.mrf.mxu0
      %8237 = vmatprep.mubr.f32.mxu0 0.0
      %8238 = vmatmul.mubr.f32.gmra.mxu0 %v8128
      %v8239 = vpop.f32.mrf.mxu0
      %v8240 = vadd.f32 0.0, %v8239
      %v8241 = vpop.f32.mrf.mxu0
      %8242 = vmatprep.mubr.f32.mxu0 0.0
      %8243 = vmatmul.mubr.f32.gmra.mxu0 %v8129
      %v8244 = vpop.f32.mrf.mxu0
      %v8245 = vadd.f32 0.0, %v8244
      %v8246 = vpop.f32.mrf.mxu0
      %8247 = vmatprep.mubr.f32.mxu0 0.0
      %8248 = vmatmul.mubr.f32.gmra.mxu0 %v8130
      %v8249 = vpop.f32.mrf.mxu0
      %v8250 = vadd.f32 0.0, %v8249
      %v8251 = vpop.f32.mrf.mxu0
      %8252 = vmatprep.mubr.f32.mxu0 0.0
      %8253 = vmatmul.mubr.f32.gmra.mxu0 %v8131
      %v8254 = vpop.f32.mrf.mxu0
      %v8255 = vadd.f32 0.0, %v8254
      %v8256 = vpop.f32.mrf.mxu0
      %8257 = vmatprep.mubr.f32.mxu0 0.0
      %8258 = vmatmul.mubr.f32.gmra.mxu0 %v8132
      %v8259 = vpop.f32.mrf.mxu0
      %v8260 = vadd.f32 0.0, %v8259
      %v8261 = vpop.f32.mrf.mxu0
      %8262 = vmatprep.mubr.f32.mxu0 0.0
      %8263 = vmatmul.mubr.f32.gmra.mxu0 %v8133
      %v8264 = vpop.f32.mrf.mxu0
      %v8265 = vadd.f32 0.0, %v8264
      %v8266 = vpop.f32.mrf.mxu0
      %8267 = vmatprep.mubr.f32.mxu0 0.0
      %8268 = vmatmul.mubr.f32.gmra.mxu0 %v8134
      %v8269 = vpop.f32.mrf.mxu0
      %v8270 = vadd.f32 0.0, %v8269
      %v8271 = vpop.f32.mrf.mxu0
      %8272 = vmatprep.mubr.f32.mxu0 0.0
      %8273 = vmatmul.mubr.f32.gmra.mxu0 %v8135
      %v8274 = vpop.f32.mrf.mxu0
      %v8275 = vadd.f32 0.0, %v8274
      %v8276 = vpop.f32.mrf.mxu0
      %8277 = vmatprep.mubr.f32.mxu0 0.0
      %8278 = vmatmul.mubr.f32.gmra.mxu0 %v8136
      %v8279 = vpop.f32.mrf.mxu0
      %v8280 = vadd.f32 0.0, %v8279
      %v8281 = vpop.f32.mrf.mxu0
      %8282 = vmatprep.mubr.f32.mxu0 0.0
      %8283 = vmatmul.mubr.f32.gmra.mxu0 %v8137
      %v8284 = vpop.f32.mrf.mxu0
      %v8285 = vadd.f32 0.0, %v8284
      %v8286 = vpop.f32.mrf.mxu0
      %8287 = vmatprep.mubr.f32.mxu0 0.0
      %8288 = vmatmul.mubr.f32.gmra.mxu0 %v8138
      %v8289 = vpop.f32.mrf.mxu0
      %v8290 = vadd.f32 0.0, %v8289
      %v8291 = vpop.f32.mrf.mxu0
      %8292 = vmatprep.mubr.f32.mxu0 0.0
      %8293 = vmatmul.mubr.f32.gmra.mxu0 %v8139
      %v8294 = vpop.f32.mrf.mxu0
      %v8295 = vadd.f32 0.0, %v8294
      %v8296 = vpop.f32.mrf.mxu0
      %8297 = vmatprep.mubr.f32.mxu0 0.0
      %8298 = vmatmul.mubr.f32.gmra.mxu0 %v8140
      %v8299 = vpop.f32.mrf.mxu0
      %v8300 = vadd.f32 0.0, %v8299
      %v8301 = vpop.f32.mrf.mxu0
      %8302 = vdwg.mxu0
      %v8303 = vadd.f32 %v8109, %v8225
      %v8304 = vadd.f32 %v8110, %v8230
      %v8305 = vadd.f32 %v8111, %v8235
      %v8306 = vadd.f32 %v8112, %v8240
      %v8307 = vadd.f32 %v8113, %v8245
      %v8308 = vadd.f32 %v8114, %v8250
      %v8309 = vadd.f32 %v8115, %v8255
      %v8310 = vadd.f32 %v8116, %v8260
      %v8311 = vadd.f32 %v8117, %v8265
      %v8312 = vadd.f32 %v8118, %v8270
      %v8313 = vadd.f32 %v8119, %v8275
      %v8314 = vadd.f32 %v8120, %v8280
      %v8315 = vadd.f32 %v8121, %v8285
      %v8316 = vadd.f32 %v8122, %v8290
      %v8317 = vadd.f32 %v8123, %v8295
      %v8318 = vadd.f32 %v8124, %v8300
      %v8319 = vld [vmem:[%s4011 + $0x8] sm:$0xff]
      %v8320 = vld [vmem:[%s4011 + $0x10] sm:$0xff]
      %v8321 = vld [vmem:[%s4011 + $0x28] sm:$0xff]
      %v8322 = vld [vmem:[%s4011 + $0x30] sm:$0xff]
      %v8323 = vld [vmem:[%s4011 + $0x48] sm:$0xff]
      %v8324 = vld [vmem:[%s4011 + $0x50] sm:$0xff]
      %v8325 = vld [vmem:[%s4011 + $0x68] sm:$0xff]
      %v8326 = vld [vmem:[%s4011 + $0x70] sm:$0xff]
      %v8327 = vld [vmem:[%s4011 + $0x88] sm:$0xff]
      %v8328 = vld [vmem:[%s4011 + $0x90] sm:$0xff]
      %v8329 = vld [vmem:[%s4011 + $0xa8] sm:$0xff]
      %v8330 = vld [vmem:[%s4011 + $0xb0] sm:$0xff]
      %v8331 = vld [vmem:[%s4011 + $0xc8] sm:$0xff]
      %v8332 = vld [vmem:[%s4011 + $0xd0] sm:$0xff]
      %v8333 = vld [vmem:[%s4011 + $0xe8] sm:$0xff]
      %v8334 = vld [vmem:[%s4011 + $0xf0] sm:$0xff]
      %s8335 = scalar_lea.vmem %s7, 896
      %v8336 = vld [vmem:[%s8335] sm:$0xff]
      %v8337 = vld [vmem:[%s8335 + $0x8] sm:$0xff]
      %v8338 = vld [vmem:[%s8335 + $0x10] sm:$0xff]
      %v8339 = vld [vmem:[%s8335 + $0x18] sm:$0xff]
      %v8340 = vld [vmem:[%s8335 + $0x20] sm:$0xff]
      %v8341 = vld [vmem:[%s8335 + $0x28] sm:$0xff]
      %v8342 = vld [vmem:[%s8335 + $0x30] sm:$0xff]
      %v8343 = vld [vmem:[%s8335 + $0x38] sm:$0xff]
      %v8344 = vld [vmem:[%s8335 + $0x40] sm:$0xff]
      %v8345 = vld [vmem:[%s8335 + $0x48] sm:$0xff]
      %v8346 = vld [vmem:[%s8335 + $0x50] sm:$0xff]
      %v8347 = vld [vmem:[%s8335 + $0x58] sm:$0xff]
      %v8348 = vld [vmem:[%s8335 + $0x60] sm:$0xff]
      %v8349 = vld [vmem:[%s8335 + $0x68] sm:$0xff]
      %v8350 = vld [vmem:[%s8335 + $0x70] sm:$0xff]
      %v8351 = vld [vmem:[%s8335 + $0x78] sm:$0xff]
      %8352 = vmatprep.subr.mxu0 0.0
      %8353 = vmatpush1.msra.mxu0 %v8351
      %8354 = vmatprep.subr.mxu0 0.0
      %8355 = vmatpush1.msra.mxu0 %v8350
      %8356 = vmatprep.subr.mxu0 0.0
      %8357 = vmatpush1.msra.mxu0 %v8349
      %8358 = vmatprep.subr.mxu0 0.0
      %8359 = vmatpush1.msra.mxu0 %v8348
      %8360 = vmatprep.subr.mxu0 0.0
      %8361 = vmatpush1.msra.mxu0 %v8347
      %8362 = vmatprep.subr.mxu0 0.0
      %8363 = vmatpush1.msra.mxu0 %v8346
      %8364 = vmatprep.subr.mxu0 0.0
      %8365 = vmatpush1.msra.mxu0 %v8345
      %8366 = vmatprep.subr.mxu0 0.0
      %8367 = vmatpush1.msra.mxu0 %v8344
      %8368 = vmatprep.subr.mxu0 0.0
      %8369 = vmatpush1.msra.mxu0 %v8343
      %8370 = vmatprep.subr.mxu0 0.0
      %8371 = vmatpush1.msra.mxu0 %v8342
      %8372 = vmatprep.subr.mxu0 0.0
      %8373 = vmatpush1.msra.mxu0 %v8341
      %8374 = vmatprep.subr.mxu0 0.0
      %8375 = vmatpush1.msra.mxu0 %v8340
      %8376 = vmatprep.subr.mxu0 0.0
      %8377 = vmatpush1.msra.mxu0 %v8339
      %8378 = vmatprep.subr.mxu0 0.0
      %8379 = vmatpush1.msra.mxu0 %v8338
      %8380 = vmatprep.subr.mxu0 0.0
      %8381 = vmatpush1.msra.mxu0 %v8337
      %8382 = vmatprep.subr.mxu0 0.0
      %8383 = vmatpush1.msra.mxu0 %v8336
      %8384 = vmatprep.subr.mxu0 0.0
      %8385 = vmatpush2.msra.mxu0 0.0
      %8386 = vmatprep.subr.mxu0 0.0
      %8387 = vmatpush2.msra.mxu0 0.0
      %8388 = vmatprep.subr.mxu0 0.0
      %8389 = vmatpush2.msra.mxu0 0.0
      %8390 = vmatprep.subr.mxu0 0.0
      %8391 = vmatpush2.msra.mxu0 0.0
      %8392 = vmatprep.subr.mxu0 0.0
      %8393 = vmatpush2.msra.mxu0 0.0
      %8394 = vmatprep.subr.mxu0 0.0
      %8395 = vmatpush2.msra.mxu0 0.0
      %8396 = vmatprep.subr.mxu0 0.0
      %8397 = vmatpush2.msra.mxu0 0.0
      %8398 = vmatprep.subr.mxu0 0.0
      %8399 = vmatpush2.msra.mxu0 0.0
      %8400 = vmatprep.subr.mxu0 0.0
      %8401 = vmatpush2.msra.mxu0 0.0
      %8402 = vmatprep.subr.mxu0 0.0
      %8403 = vmatpush2.msra.mxu0 0.0
      %8404 = vmatprep.subr.mxu0 0.0
      %8405 = vmatpush2.msra.mxu0 0.0
      %8406 = vmatprep.subr.mxu0 0.0
      %8407 = vmatpush2.msra.mxu0 0.0
      %8408 = vmatprep.subr.mxu0 0.0
      %8409 = vmatpush2.msra.mxu0 0.0
      %8410 = vmatprep.subr.mxu0 0.0
      %8411 = vmatpush2.msra.mxu0 0.0
      %8412 = vmatprep.subr.mxu0 0.0
      %8413 = vmatpush2.msra.mxu0 0.0
      %8414 = vmatprep.subr.mxu0 0.0
      %8415 = vmatpush2.msra.mxu0 0.0
      %8416 = vmatprep.mubr.f32.mxu0 0.0
      %8417 = vmatmul.mubr.f32.gmra.mxu0 %v8319
      %v8418 = vpop.f32.mrf.mxu0
      %v8419 = vadd.f32 0.0, %v8418
      %v8420 = vpop.f32.mrf.mxu0
      %8421 = vmatprep.mubr.f32.mxu0 0.0
      %8422 = vmatmul.mubr.f32.gmra.mxu0 %v8320
      %v8423 = vpop.f32.mrf.mxu0
      %v8424 = vadd.f32 0.0, %v8423
      %v8425 = vpop.f32.mrf.mxu0
      %8426 = vmatprep.mubr.f32.mxu0 0.0
      %8427 = vmatmul.mubr.f32.gmra.mxu0 %v8321
      %v8428 = vpop.f32.mrf.mxu0
      %v8429 = vadd.f32 0.0, %v8428
      %v8430 = vpop.f32.mrf.mxu0
      %8431 = vmatprep.mubr.f32.mxu0 0.0
      %8432 = vmatmul.mubr.f32.gmra.mxu0 %v8322
      %v8433 = vpop.f32.mrf.mxu0
      %v8434 = vadd.f32 0.0, %v8433
      %v8435 = vpop.f32.mrf.mxu0
      %8436 = vmatprep.mubr.f32.mxu0 0.0
      %8437 = vmatmul.mubr.f32.gmra.mxu0 %v8323
      %v8438 = vpop.f32.mrf.mxu0
      %v8439 = vadd.f32 0.0, %v8438
      %v8440 = vpop.f32.mrf.mxu0
      %8441 = vmatprep.mubr.f32.mxu0 0.0
      %8442 = vmatmul.mubr.f32.gmra.mxu0 %v8324
      %v8443 = vpop.f32.mrf.mxu0
      %v8444 = vadd.f32 0.0, %v8443
      %v8445 = vpop.f32.mrf.mxu0
      %8446 = vmatprep.mubr.f32.mxu0 0.0
      %8447 = vmatmul.mubr.f32.gmra.mxu0 %v8325
      %v8448 = vpop.f32.mrf.mxu0
      %v8449 = vadd.f32 0.0, %v8448
      %v8450 = vpop.f32.mrf.mxu0
      %8451 = vmatprep.mubr.f32.mxu0 0.0
      %8452 = vmatmul.mubr.f32.gmra.mxu0 %v8326
      %v8453 = vpop.f32.mrf.mxu0
      %v8454 = vadd.f32 0.0, %v8453
      %v8455 = vpop.f32.mrf.mxu0
      %8456 = vmatprep.mubr.f32.mxu0 0.0
      %8457 = vmatmul.mubr.f32.gmra.mxu0 %v8327
      %v8458 = vpop.f32.mrf.mxu0
      %v8459 = vadd.f32 0.0, %v8458
      %v8460 = vpop.f32.mrf.mxu0
      %8461 = vmatprep.mubr.f32.mxu0 0.0
      %8462 = vmatmul.mubr.f32.gmra.mxu0 %v8328
      %v8463 = vpop.f32.mrf.mxu0
      %v8464 = vadd.f32 0.0, %v8463
      %v8465 = vpop.f32.mrf.mxu0
      %8466 = vmatprep.mubr.f32.mxu0 0.0
      %8467 = vmatmul.mubr.f32.gmra.mxu0 %v8329
      %v8468 = vpop.f32.mrf.mxu0
      %v8469 = vadd.f32 0.0, %v8468
      %v8470 = vpop.f32.mrf.mxu0
      %8471 = vmatprep.mubr.f32.mxu0 0.0
      %8472 = vmatmul.mubr.f32.gmra.mxu0 %v8330
      %v8473 = vpop.f32.mrf.mxu0
      %v8474 = vadd.f32 0.0, %v8473
      %v8475 = vpop.f32.mrf.mxu0
      %8476 = vmatprep.mubr.f32.mxu0 0.0
      %8477 = vmatmul.mubr.f32.gmra.mxu0 %v8331
      %v8478 = vpop.f32.mrf.mxu0
      %v8479 = vadd.f32 0.0, %v8478
      %v8480 = vpop.f32.mrf.mxu0
      %8481 = vmatprep.mubr.f32.mxu0 0.0
      %8482 = vmatmul.mubr.f32.gmra.mxu0 %v8332
      %v8483 = vpop.f32.mrf.mxu0
      %v8484 = vadd.f32 0.0, %v8483
      %v8485 = vpop.f32.mrf.mxu0
      %8486 = vmatprep.mubr.f32.mxu0 0.0
      %8487 = vmatmul.mubr.f32.gmra.mxu0 %v8333
      %v8488 = vpop.f32.mrf.mxu0
      %v8489 = vadd.f32 0.0, %v8488
      %v8490 = vpop.f32.mrf.mxu0
      %8491 = vmatprep.mubr.f32.mxu0 0.0
      %8492 = vmatmul.mubr.f32.gmra.mxu0 %v8334
      %v8493 = vpop.f32.mrf.mxu0
      %v8494 = vadd.f32 0.0, %v8493
      %v8495 = vpop.f32.mrf.mxu0
      %8496 = vdwg.mxu0
      %v8497 = vadd.f32 %v8303, %v8419
      %v8498 = vadd.f32 %v8304, %v8424
      %v8499 = vadd.f32 %v8305, %v8429
      %v8500 = vadd.f32 %v8306, %v8434
      %v8501 = vadd.f32 %v8307, %v8439
      %v8502 = vadd.f32 %v8308, %v8444
      %v8503 = vadd.f32 %v8309, %v8449
      %v8504 = vadd.f32 %v8310, %v8454
      %v8505 = vadd.f32 %v8311, %v8459
      %v8506 = vadd.f32 %v8312, %v8464
      %v8507 = vadd.f32 %v8313, %v8469
      %v8508 = vadd.f32 %v8314, %v8474
      %v8509 = vadd.f32 %v8315, %v8479
      %v8510 = vadd.f32 %v8316, %v8484
      %v8511 = vadd.f32 %v8317, %v8489
      %v8512 = vadd.f32 %v8318, %v8494
      %v8513 = vld [vmem:[%s4011 + $0x9] sm:$0xff]
      %v8514 = vld [vmem:[%s4011 + $0x11] sm:$0xff]
      %v8515 = vld [vmem:[%s4011 + $0x29] sm:$0xff]
      %v8516 = vld [vmem:[%s4011 + $0x31] sm:$0xff]
      %v8517 = vld [vmem:[%s4011 + $0x49] sm:$0xff]
      %v8518 = vld [vmem:[%s4011 + $0x51] sm:$0xff]
      %v8519 = vld [vmem:[%s4011 + $0x69] sm:$0xff]
      %v8520 = vld [vmem:[%s4011 + $0x71] sm:$0xff]
      %v8521 = vld [vmem:[%s4011 + $0x89] sm:$0xff]
      %v8522 = vld [vmem:[%s4011 + $0x91] sm:$0xff]
      %v8523 = vld [vmem:[%s4011 + $0xa9] sm:$0xff]
      %v8524 = vld [vmem:[%s4011 + $0xb1] sm:$0xff]
      %v8525 = vld [vmem:[%s4011 + $0xc9] sm:$0xff]
      %v8526 = vld [vmem:[%s4011 + $0xd1] sm:$0xff]
      %v8527 = vld [vmem:[%s4011 + $0xe9] sm:$0xff]
      %v8528 = vld [vmem:[%s4011 + $0xf1] sm:$0xff]
      %s8529 = scalar_lea.vmem %s7, 1024
      %v8530 = vld [vmem:[%s8529] sm:$0xff]
      %v8531 = vld [vmem:[%s8529 + $0x8] sm:$0xff]
      %v8532 = vld [vmem:[%s8529 + $0x10] sm:$0xff]
      %v8533 = vld [vmem:[%s8529 + $0x18] sm:$0xff]
      %v8534 = vld [vmem:[%s8529 + $0x20] sm:$0xff]
      %v8535 = vld [vmem:[%s8529 + $0x28] sm:$0xff]
      %v8536 = vld [vmem:[%s8529 + $0x30] sm:$0xff]
      %v8537 = vld [vmem:[%s8529 + $0x38] sm:$0xff]
      %v8538 = vld [vmem:[%s8529 + $0x40] sm:$0xff]
      %v8539 = vld [vmem:[%s8529 + $0x48] sm:$0xff]
      %v8540 = vld [vmem:[%s8529 + $0x50] sm:$0xff]
      %v8541 = vld [vmem:[%s8529 + $0x58] sm:$0xff]
      %v8542 = vld [vmem:[%s8529 + $0x60] sm:$0xff]
      %v8543 = vld [vmem:[%s8529 + $0x68] sm:$0xff]
      %v8544 = vld [vmem:[%s8529 + $0x70] sm:$0xff]
      %v8545 = vld [vmem:[%s8529 + $0x78] sm:$0xff]
      %8546 = vmatprep.subr.mxu0 0.0
      %8547 = vmatpush1.msra.mxu0 %v8545
      %8548 = vmatprep.subr.mxu0 0.0
      %8549 = vmatpush1.msra.mxu0 %v8544
      %8550 = vmatprep.subr.mxu0 0.0
      %8551 = vmatpush1.msra.mxu0 %v8543
      %8552 = vmatprep.subr.mxu0 0.0
      %8553 = vmatpush1.msra.mxu0 %v8542
      %8554 = vmatprep.subr.mxu0 0.0
      %8555 = vmatpush1.msra.mxu0 %v8541
      %8556 = vmatprep.subr.mxu0 0.0
      %8557 = vmatpush1.msra.mxu0 %v8540
      %8558 = vmatprep.subr.mxu0 0.0
      %8559 = vmatpush1.msra.mxu0 %v8539
      %8560 = vmatprep.subr.mxu0 0.0
      %8561 = vmatpush1.msra.mxu0 %v8538
      %8562 = vmatprep.subr.mxu0 0.0
      %8563 = vmatpush1.msra.mxu0 %v8537
      %8564 = vmatprep.subr.mxu0 0.0
      %8565 = vmatpush1.msra.mxu0 %v8536
      %8566 = vmatprep.subr.mxu0 0.0
      %8567 = vmatpush1.msra.mxu0 %v8535
      %8568 = vmatprep.subr.mxu0 0.0
      %8569 = vmatpush1.msra.mxu0 %v8534
      %8570 = vmatprep.subr.mxu0 0.0
      %8571 = vmatpush1.msra.mxu0 %v8533
      %8572 = vmatprep.subr.mxu0 0.0
      %8573 = vmatpush1.msra.mxu0 %v8532
      %8574 = vmatprep.subr.mxu0 0.0
      %8575 = vmatpush1.msra.mxu0 %v8531
      %8576 = vmatprep.subr.mxu0 0.0
      %8577 = vmatpush1.msra.mxu0 %v8530
      %8578 = vmatprep.subr.mxu0 0.0
      %8579 = vmatpush2.msra.mxu0 0.0
      %8580 = vmatprep.subr.mxu0 0.0
      %8581 = vmatpush2.msra.mxu0 0.0
      %8582 = vmatprep.subr.mxu0 0.0
      %8583 = vmatpush2.msra.mxu0 0.0
      %8584 = vmatprep.subr.mxu0 0.0
      %8585 = vmatpush2.msra.mxu0 0.0
      %8586 = vmatprep.subr.mxu0 0.0
      %8587 = vmatpush2.msra.mxu0 0.0
      %8588 = vmatprep.subr.mxu0 0.0
      %8589 = vmatpush2.msra.mxu0 0.0
      %8590 = vmatprep.subr.mxu0 0.0
      %8591 = vmatpush2.msra.mxu0 0.0
      %8592 = vmatprep.subr.mxu0 0.0
      %8593 = vmatpush2.msra.mxu0 0.0
      %8594 = vmatprep.subr.mxu0 0.0
      %8595 = vmatpush2.msra.mxu0 0.0
      %8596 = vmatprep.subr.mxu0 0.0
      %8597 = vmatpush2.msra.mxu0 0.0
      %8598 = vmatprep.subr.mxu0 0.0
      %8599 = vmatpush2.msra.mxu0 0.0
      %8600 = vmatprep.subr.mxu0 0.0
      %8601 = vmatpush2.msra.mxu0 0.0
      %8602 = vmatprep.subr.mxu0 0.0
      %8603 = vmatpush2.msra.mxu0 0.0
      %8604 = vmatprep.subr.mxu0 0.0
      %8605 = vmatpush2.msra.mxu0 0.0
      %8606 = vmatprep.subr.mxu0 0.0
      %8607 = vmatpush2.msra.mxu0 0.0
      %8608 = vmatprep.subr.mxu0 0.0
      %8609 = vmatpush2.msra.mxu0 0.0
      %8610 = vmatprep.mubr.f32.mxu0 0.0
      %8611 = vmatmul.mubr.f32.gmra.mxu0 %v8513
      %v8612 = vpop.f32.mrf.mxu0
      %v8613 = vadd.f32 0.0, %v8612
      %v8614 = vpop.f32.mrf.mxu0
      %8615 = vmatprep.mubr.f32.mxu0 0.0
      %8616 = vmatmul.mubr.f32.gmra.mxu0 %v8514
      %v8617 = vpop.f32.mrf.mxu0
      %v8618 = vadd.f32 0.0, %v8617
      %v8619 = vpop.f32.mrf.mxu0
      %8620 = vmatprep.mubr.f32.mxu0 0.0
      %8621 = vmatmul.mubr.f32.gmra.mxu0 %v8515
      %v8622 = vpop.f32.mrf.mxu0
      %v8623 = vadd.f32 0.0, %v8622
      %v8624 = vpop.f32.mrf.mxu0
      %8625 = vmatprep.mubr.f32.mxu0 0.0
      %8626 = vmatmul.mubr.f32.gmra.mxu0 %v8516
      %v8627 = vpop.f32.mrf.mxu0
      %v8628 = vadd.f32 0.0, %v8627
      %v8629 = vpop.f32.mrf.mxu0
      %8630 = vmatprep.mubr.f32.mxu0 0.0
      %8631 = vmatmul.mubr.f32.gmra.mxu0 %v8517
      %v8632 = vpop.f32.mrf.mxu0
      %v8633 = vadd.f32 0.0, %v8632
      %v8634 = vpop.f32.mrf.mxu0
      %8635 = vmatprep.mubr.f32.mxu0 0.0
      %8636 = vmatmul.mubr.f32.gmra.mxu0 %v8518
      %v8637 = vpop.f32.mrf.mxu0
      %v8638 = vadd.f32 0.0, %v8637
      %v8639 = vpop.f32.mrf.mxu0
      %8640 = vmatprep.mubr.f32.mxu0 0.0
      %8641 = vmatmul.mubr.f32.gmra.mxu0 %v8519
      %v8642 = vpop.f32.mrf.mxu0
      %v8643 = vadd.f32 0.0, %v8642
      %v8644 = vpop.f32.mrf.mxu0
      %8645 = vmatprep.mubr.f32.mxu0 0.0
      %8646 = vmatmul.mubr.f32.gmra.mxu0 %v8520
      %v8647 = vpop.f32.mrf.mxu0
      %v8648 = vadd.f32 0.0, %v8647
      %v8649 = vpop.f32.mrf.mxu0
      %8650 = vmatprep.mubr.f32.mxu0 0.0
      %8651 = vmatmul.mubr.f32.gmra.mxu0 %v8521
      %v8652 = vpop.f32.mrf.mxu0
      %v8653 = vadd.f32 0.0, %v8652
      %v8654 = vpop.f32.mrf.mxu0
      %8655 = vmatprep.mubr.f32.mxu0 0.0
      %8656 = vmatmul.mubr.f32.gmra.mxu0 %v8522
      %v8657 = vpop.f32.mrf.mxu0
      %v8658 = vadd.f32 0.0, %v8657
      %v8659 = vpop.f32.mrf.mxu0
      %8660 = vmatprep.mubr.f32.mxu0 0.0
      %8661 = vmatmul.mubr.f32.gmra.mxu0 %v8523
      %v8662 = vpop.f32.mrf.mxu0
      %v8663 = vadd.f32 0.0, %v8662
      %v8664 = vpop.f32.mrf.mxu0
      %8665 = vmatprep.mubr.f32.mxu0 0.0
      %8666 = vmatmul.mubr.f32.gmra.mxu0 %v8524
      %v8667 = vpop.f32.mrf.mxu0
      %v8668 = vadd.f32 0.0, %v8667
      %v8669 = vpop.f32.mrf.mxu0
      %8670 = vmatprep.mubr.f32.mxu0 0.0
      %8671 = vmatmul.mubr.f32.gmra.mxu0 %v8525
      %v8672 = vpop.f32.mrf.mxu0
      %v8673 = vadd.f32 0.0, %v8672
      %v8674 = vpop.f32.mrf.mxu0
      %8675 = vmatprep.mubr.f32.mxu0 0.0
      %8676 = vmatmul.mubr.f32.gmra.mxu0 %v8526
      %v8677 = vpop.f32.mrf.mxu0
      %v8678 = vadd.f32 0.0, %v8677
      %v8679 = vpop.f32.mrf.mxu0
      %8680 = vmatprep.mubr.f32.mxu0 0.0
      %8681 = vmatmul.mubr.f32.gmra.mxu0 %v8527
      %v8682 = vpop.f32.mrf.mxu0
      %v8683 = vadd.f32 0.0, %v8682
      %v8684 = vpop.f32.mrf.mxu0
      %8685 = vmatprep.mubr.f32.mxu0 0.0
      %8686 = vmatmul.mubr.f32.gmra.mxu0 %v8528
      %v8687 = vpop.f32.mrf.mxu0
      %v8688 = vadd.f32 0.0, %v8687
      %v8689 = vpop.f32.mrf.mxu0
      %8690 = vdwg.mxu0
      %v8691 = vadd.f32 %v8497, %v8613
      %v8692 = vadd.f32 %v8498, %v8618
      %v8693 = vadd.f32 %v8499, %v8623
      %v8694 = vadd.f32 %v8500, %v8628
      %v8695 = vadd.f32 %v8501, %v8633
      %v8696 = vadd.f32 %v8502, %v8638
      %v8697 = vadd.f32 %v8503, %v8643
      %v8698 = vadd.f32 %v8504, %v8648
      %v8699 = vadd.f32 %v8505, %v8653
      %v8700 = vadd.f32 %v8506, %v8658
      %v8701 = vadd.f32 %v8507, %v8663
      %v8702 = vadd.f32 %v8508, %v8668
      %v8703 = vadd.f32 %v8509, %v8673
      %v8704 = vadd.f32 %v8510, %v8678
      %v8705 = vadd.f32 %v8511, %v8683
      %v8706 = vadd.f32 %v8512, %v8688
      %v8707 = vld [vmem:[%s8] sm:$0x1]
      %v8709 = vlaneseq
      %v8710 = vshrl.u32 %v8709, 7
      %v8711 = vsub.s32 0, %v8710
      %v8712 = vrot.slane %v8707, %v8711
      %v8714 = vadd.f32 %v8691, %v8712
      %v8715 = vadd.f32 %v8692, %v8712
      %v8716 = vadd.f32 %v8693, %v8712
      %v8717 = vadd.f32 %v8694, %v8712
      %v8718 = vadd.f32 %v8695, %v8712
      %v8719 = vadd.f32 %v8696, %v8712
      %v8720 = vadd.f32 %v8697, %v8712
      %v8721 = vadd.f32 %v8698, %v8712
      %v8722 = vadd.f32 %v8699, %v8712
      %v8723 = vadd.f32 %v8700, %v8712
      %v8724 = vadd.f32 %v8701, %v8712
      %v8725 = vadd.f32 %v8702, %v8712
      %v8726 = vadd.f32 %v8703, %v8712
      %v8727 = vadd.f32 %v8704, %v8712
      %v8728 = vadd.f32 %v8705, %v8712
      %v8729 = vadd.f32 %v8706, %v8712
      %8730 = vst.msk [vmem:[%s663] sm:$0xff] %vm668, %v8714
      %8731 = vst.msk [vmem:[%s663 + $0x8] sm:$0xff] %vm668, %v8715
      %8732 = vst.msk [vmem:[%s663 + $0x10] sm:$0xff] %vm668, %v8716
      %8733 = vst.msk [vmem:[%s663 + $0x18] sm:$0xff] %vm668, %v8717
      %8734 = vst.msk [vmem:[%s663 + $0x20] sm:$0xff] %vm668, %v8718
      %8735 = vst.msk [vmem:[%s663 + $0x28] sm:$0xff] %vm668, %v8719
      %8736 = vst.msk [vmem:[%s663 + $0x30] sm:$0xff] %vm668, %v8720
      %8737 = vst.msk [vmem:[%s663 + $0x38] sm:$0xff] %vm668, %v8721
      %8738 = vst.msk [vmem:[%s663 + $0x40] sm:$0xff] %vm668, %v8722
      %8739 = vst.msk [vmem:[%s663 + $0x48] sm:$0xff] %vm668, %v8723
      %8740 = vst.msk [vmem:[%s663 + $0x50] sm:$0xff] %vm668, %v8724
      %8741 = vst.msk [vmem:[%s663 + $0x58] sm:$0xff] %vm668, %v8725
      %8742 = vst.msk [vmem:[%s663 + $0x60] sm:$0xff] %vm668, %v8726
      %8743 = vst.msk [vmem:[%s663 + $0x68] sm:$0xff] %vm668, %v8727
      %8744 = vst.msk [vmem:[%s663 + $0x70] sm:$0xff] %vm668, %v8728
      %8745 = vst.msk [vmem:[%s663 + $0x78] sm:$0xff] %vm668, %v8729
      %v8746 = vld [vmem:[%s9] sm:$0xff]
      %v8747 = vld [vmem:[%s10] sm:$0xff]
      %v8748 = vld [vmem:[%s10 + $0x8] sm:$0xff]
      %v8749 = vld [vmem:[%s10 + $0x10] sm:$0xff]
      %v8750 = vld [vmem:[%s10 + $0x18] sm:$0xff]
      %v8751 = vld [vmem:[%s11] sm:$0xff]
      %v8752 = vld [vmem:[%s11 + $0x8] sm:$0xff]
      %v8753 = vld [vmem:[%s11 + $0x10] sm:$0xff]
      %v8754 = vld [vmem:[%s11 + $0x18] sm:$0xff]
      %8756 = vset.pattern.permute.xlu0 0
      %8757 = vperm.xlu0 %8756, %v8751
      %v8758 = vpop.permute.xlu0 %8757
      %8761 = vset.pattern.permute.xlu0 0
      %8762 = vperm.xlu0 %8761, %v8752
      %v8763 = vpop.permute.xlu0 %8762
      %8766 = vset.pattern.permute.xlu0 0
      %8767 = vperm.xlu0 %8766, %v8753
      %v8768 = vpop.permute.xlu0 %8767
      %8771 = vset.pattern.permute.xlu0 0
      %8772 = vperm.xlu0 %8771, %v8754
      %v8773 = vpop.permute.xlu0 %8772
      %vm8775 = vcmask 64512
      %v8777 = vsel %vm8775, %v8747, 0
      %v8780 = vsel %vm8775, %v8748, 0
      %v8783 = vsel %vm8775, %v8749, 0
      %v8786 = vsel %vm8775, %v8750, 0
      %8788 = vmatprep.subr.mxu0 0.0
      %8789 = vmatpush1.msra.mxu0 0.0
      %8790 = vmatprep.subr.mxu0 0.0
      %8791 = vmatpush1.msra.mxu0 0.0
      %8792 = vmatprep.subr.mxu0 0.0
      %8793 = vmatpush1.msra.mxu0 0.0
      %8794 = vmatprep.subr.mxu0 0.0
      %8795 = vmatpush1.msra.mxu0 0.0
      %8796 = vmatprep.subr.mxu0 0.0
      %8797 = vmatpush1.msra.mxu0 0.0
      %8798 = vmatprep.subr.mxu0 0.0
      %8799 = vmatpush1.msra.mxu0 0.0
      %8800 = vmatprep.subr.mxu0 0.0
      %8801 = vmatpush1.msra.mxu0 0.0
      %8802 = vmatprep.subr.mxu0 0.0
      %8803 = vmatpush1.msra.mxu0 0.0
      %8804 = vmatprep.subr.mxu0 0.0
      %8805 = vmatpush1.msra.mxu0 0.0
      %8806 = vmatprep.subr.mxu0 0.0
      %8807 = vmatpush1.msra.mxu0 0.0
      %8808 = vmatprep.subr.mxu0 0.0
      %8809 = vmatpush1.msra.mxu0 0.0
      %8810 = vmatprep.subr.mxu0 0.0
      %8811 = vmatpush1.msra.mxu0 0.0
      %8812 = vmatprep.subr.mxu0 0.0
      %8813 = vmatpush1.msra.mxu0 0.0
      %8814 = vmatprep.subr.mxu0 0.0
      %8815 = vmatpush1.msra.mxu0 0.0
      %8816 = vmatprep.subr.mxu0 0.0
      %8817 = vmatpush1.msra.mxu0 0.0
      %8818 = vmatprep.subr.mxu0 0.0
      %8819 = vmatpush1.msra.mxu0 %v8746
      %8820 = vmatprep.subr.mxu0 0.0
      %8821 = vmatpush2.msra.mxu0 0.0
      %8822 = vmatprep.subr.mxu0 0.0
      %8823 = vmatpush2.msra.mxu0 0.0
      %8824 = vmatprep.subr.mxu0 0.0
      %8825 = vmatpush2.msra.mxu0 0.0
      %8826 = vmatprep.subr.mxu0 0.0
      %8827 = vmatpush2.msra.mxu0 0.0
      %8828 = vmatprep.subr.mxu0 0.0
      %8829 = vmatpush2.msra.mxu0 0.0
      %8830 = vmatprep.subr.mxu0 0.0
      %8831 = vmatpush2.msra.mxu0 0.0
      %8832 = vmatprep.subr.mxu0 0.0
      %8833 = vmatpush2.msra.mxu0 0.0
      %8834 = vmatprep.subr.mxu0 0.0
      %8835 = vmatpush2.msra.mxu0 0.0
      %8836 = vmatprep.subr.mxu0 0.0
      %8837 = vmatpush2.msra.mxu0 0.0
      %8838 = vmatprep.subr.mxu0 0.0
      %8839 = vmatpush2.msra.mxu0 0.0
      %8840 = vmatprep.subr.mxu0 0.0
      %8841 = vmatpush2.msra.mxu0 0.0
      %8842 = vmatprep.subr.mxu0 0.0
      %8843 = vmatpush2.msra.mxu0 0.0
      %8844 = vmatprep.subr.mxu0 0.0
      %8845 = vmatpush2.msra.mxu0 0.0
      %8846 = vmatprep.subr.mxu0 0.0
      %8847 = vmatpush2.msra.mxu0 0.0
      %8848 = vmatprep.subr.mxu0 0.0
      %8849 = vmatpush2.msra.mxu0 0.0
      %8850 = vmatprep.subr.mxu0 0.0
      %8851 = vmatpush2.msra.mxu0 0.0
      %8852 = vmatprep.mubr.f32.mxu0 0.0
      %8853 = vmatmul.mubr.f32.gmra.mxu0 %v8777
      %v8854 = vpop.f32.mrf.mxu0
      %v8855 = vadd.f32 %v8758, %v8854
      %v8856 = vpop.f32.mrf.mxu0
      %8857 = vmatprep.mubr.f32.mxu0 0.0
      %8858 = vmatmul.mubr.f32.gmra.mxu0 %v8780
      %v8859 = vpop.f32.mrf.mxu0
      %v8860 = vadd.f32 %v8763, %v8859
      %v8861 = vpop.f32.mrf.mxu0
      %8862 = vmatprep.mubr.f32.mxu0 0.0
      %8863 = vmatmul.mubr.f32.gmra.mxu0 %v8783
      %v8864 = vpop.f32.mrf.mxu0
      %v8865 = vadd.f32 %v8768, %v8864
      %v8866 = vpop.f32.mrf.mxu0
      %8867 = vmatprep.mubr.f32.mxu0 0.0
      %8868 = vmatmul.mubr.f32.gmra.mxu0 %v8786
      %v8869 = vpop.f32.mrf.mxu0
      %v8870 = vadd.f32 %v8773, %v8869
      %v8871 = vpop.f32.mrf.mxu0
      %8872 = vdwg.mxu0
      %v8873 = vmax.f32 %v8855, 0.0
      %v8874 = vmax.f32 %v8860, 0.0
      %v8875 = vmax.f32 %v8865, 0.0
      %v8876 = vmax.f32 %v8870, 0.0
      %v8877 = vld [vmem:[%s12] sm:$0xff]
      %v8878 = vld [vmem:[%s13] sm:$0xff]
      %8880 = vset.pattern.permute.xlu0 0
      %8881 = vperm.xlu0 %8880, %v8878
      %v8882 = vpop.permute.xlu0 %8881
      %v8885 = vsel %vm4660, %v8877, 0
      %8887 = vmatprep.subr.mxu0 0.0
      %8888 = vmatpush1.msra.mxu0 0.0
      %8889 = vmatprep.subr.mxu0 0.0
      %8890 = vmatpush1.msra.mxu0 0.0
      %8891 = vmatprep.subr.mxu0 0.0
      %8892 = vmatpush1.msra.mxu0 0.0
      %8893 = vmatprep.subr.mxu0 0.0
      %8894 = vmatpush1.msra.mxu0 0.0
      %8895 = vmatprep.subr.mxu0 0.0
      %8896 = vmatpush1.msra.mxu0 0.0
      %8897 = vmatprep.subr.mxu0 0.0
      %8898 = vmatpush1.msra.mxu0 0.0
      %8899 = vmatprep.subr.mxu0 0.0
      %8900 = vmatpush1.msra.mxu0 0.0
      %8901 = vmatprep.subr.mxu0 0.0
      %8902 = vmatpush1.msra.mxu0 0.0
      %8903 = vmatprep.subr.mxu0 0.0
      %8904 = vmatpush1.msra.mxu0 0.0
      %8905 = vmatprep.subr.mxu0 0.0
      %8906 = vmatpush1.msra.mxu0 0.0
      %8907 = vmatprep.subr.mxu0 0.0
      %8908 = vmatpush1.msra.mxu0 0.0
      %8909 = vmatprep.subr.mxu0 0.0
      %8910 = vmatpush1.msra.mxu0 0.0
      %8911 = vmatprep.subr.mxu0 0.0
      %8912 = vmatpush1.msra.mxu0 %v8876
      %8913 = vmatprep.subr.mxu0 0.0
      %8914 = vmatpush1.msra.mxu0 %v8875
      %8915 = vmatprep.subr.mxu0 0.0
      %8916 = vmatpush1.msra.mxu0 %v8874
      %8917 = vmatprep.subr.mxu0 0.0
      %8918 = vmatpush1.msra.mxu0 %v8873
      %8919 = vmatprep.subr.mxu0 0.0
      %8920 = vmatpush2.msra.mxu0 0.0
      %8921 = vmatprep.subr.mxu0 0.0
      %8922 = vmatpush2.msra.mxu0 0.0
      %8923 = vmatprep.subr.mxu0 0.0
      %8924 = vmatpush2.msra.mxu0 0.0
      %8925 = vmatprep.subr.mxu0 0.0
      %8926 = vmatpush2.msra.mxu0 0.0
      %8927 = vmatprep.subr.mxu0 0.0
      %8928 = vmatpush2.msra.mxu0 0.0
      %8929 = vmatprep.subr.mxu0 0.0
      %8930 = vmatpush2.msra.mxu0 0.0
      %8931 = vmatprep.subr.mxu0 0.0
      %8932 = vmatpush2.msra.mxu0 0.0
      %8933 = vmatprep.subr.mxu0 0.0
      %8934 = vmatpush2.msra.mxu0 0.0
      %8935 = vmatprep.subr.mxu0 0.0
      %8936 = vmatpush2.msra.mxu0 0.0
      %8937 = vmatprep.subr.mxu0 0.0
      %8938 = vmatpush2.msra.mxu0 0.0
      %8939 = vmatprep.subr.mxu0 0.0
      %8940 = vmatpush2.msra.mxu0 0.0
      %8941 = vmatprep.subr.mxu0 0.0
      %8942 = vmatpush2.msra.mxu0 0.0
      %8943 = vmatprep.subr.mxu0 0.0
      %8944 = vmatpush2.msra.mxu0 0.0
      %8945 = vmatprep.subr.mxu0 0.0
      %8946 = vmatpush2.msra.mxu0 0.0
      %8947 = vmatprep.subr.mxu0 0.0
      %8948 = vmatpush2.msra.mxu0 0.0
      %8949 = vmatprep.subr.mxu0 0.0
      %8950 = vmatpush2.msra.mxu0 0.0
      %8951 = vmatprep.mubr.f32.mxu0 0.0
      %8952 = vmatmul.mubr.f32.gmra.mxu0 %v8885
      %v8953 = vpop.f32.mrf.mxu0
      %v8954 = vadd.f32 %v8882, %v8953
      %v8955 = vpop.f32.mrf.mxu0
      %8956 = vdwg.mxu0
      %v8957 = vmax.f32 %v8954, 0.0
      %v8958 = vld [vmem:[%s14] sm:$0xff]
      %v8959 = vld [vmem:[%s14 + $0x8] sm:$0xff]
      %v8960 = vld [vmem:[%s14 + $0x10] sm:$0xff]
      %v8961 = vld [vmem:[%s14 + $0x18] sm:$0xff]
      %v8962 = vld [vmem:[%s15] sm:$0xff]
      %v8963 = vld [vmem:[%s15 + $0x8] sm:$0xff]
      %v8964 = vld [vmem:[%s15 + $0x10] sm:$0xff]
      %v8965 = vld [vmem:[%s15 + $0x18] sm:$0xff]
      %8967 = vset.pattern.permute.xlu0 0
      %8968 = vperm.xlu0 %8967, %v8962
      %v8969 = vpop.permute.xlu0 %8968
      %8972 = vset.pattern.permute.xlu0 0
      %8973 = vperm.xlu0 %8972, %v8963
      %v8974 = vpop.permute.xlu0 %8973
      %8977 = vset.pattern.permute.xlu0 0
      %8978 = vperm.xlu0 %8977, %v8964
      %v8979 = vpop.permute.xlu0 %8978
      %8982 = vset.pattern.permute.xlu0 0
      %8983 = vperm.xlu0 %8982, %v8965
      %v8984 = vpop.permute.xlu0 %8983
      %v8987 = vsel %vm8775, %v8958, 0
      %v8990 = vsel %vm8775, %v8959, 0
      %v8993 = vsel %vm8775, %v8960, 0
      %v8996 = vsel %vm8775, %v8961, 0
      %8998 = vmatprep.subr.mxu0 0.0
      %8999 = vmatpush1.msra.mxu0 0.0
      %9000 = vmatprep.subr.mxu0 0.0
      %9001 = vmatpush1.msra.mxu0 0.0
      %9002 = vmatprep.subr.mxu0 0.0
      %9003 = vmatpush1.msra.mxu0 0.0
      %9004 = vmatprep.subr.mxu0 0.0
      %9005 = vmatpush1.msra.mxu0 0.0
      %9006 = vmatprep.subr.mxu0 0.0
      %9007 = vmatpush1.msra.mxu0 0.0
      %9008 = vmatprep.subr.mxu0 0.0
      %9009 = vmatpush1.msra.mxu0 0.0
      %9010 = vmatprep.subr.mxu0 0.0
      %9011 = vmatpush1.msra.mxu0 0.0
      %9012 = vmatprep.subr.mxu0 0.0
      %9013 = vmatpush1.msra.mxu0 0.0
      %9014 = vmatprep.subr.mxu0 0.0
      %9015 = vmatpush1.msra.mxu0 0.0
      %9016 = vmatprep.subr.mxu0 0.0
      %9017 = vmatpush1.msra.mxu0 0.0
      %9018 = vmatprep.subr.mxu0 0.0
      %9019 = vmatpush1.msra.mxu0 0.0
      %9020 = vmatprep.subr.mxu0 0.0
      %9021 = vmatpush1.msra.mxu0 0.0
      %9022 = vmatprep.subr.mxu0 0.0
      %9023 = vmatpush1.msra.mxu0 0.0
      %9024 = vmatprep.subr.mxu0 0.0
      %9025 = vmatpush1.msra.mxu0 0.0
      %9026 = vmatprep.subr.mxu0 0.0
      %9027 = vmatpush1.msra.mxu0 0.0
      %9028 = vmatprep.subr.mxu0 0.0
      %9029 = vmatpush1.msra.mxu0 %v8957
      %9030 = vmatprep.subr.mxu0 0.0
      %9031 = vmatpush2.msra.mxu0 0.0
      %9032 = vmatprep.subr.mxu0 0.0
      %9033 = vmatpush2.msra.mxu0 0.0
      %9034 = vmatprep.subr.mxu0 0.0
      %9035 = vmatpush2.msra.mxu0 0.0
      %9036 = vmatprep.subr.mxu0 0.0
      %9037 = vmatpush2.msra.mxu0 0.0
      %9038 = vmatprep.subr.mxu0 0.0
      %9039 = vmatpush2.msra.mxu0 0.0
      %9040 = vmatprep.subr.mxu0 0.0
      %9041 = vmatpush2.msra.mxu0 0.0
      %9042 = vmatprep.subr.mxu0 0.0
      %9043 = vmatpush2.msra.mxu0 0.0
      %9044 = vmatprep.subr.mxu0 0.0
      %9045 = vmatpush2.msra.mxu0 0.0
      %9046 = vmatprep.subr.mxu0 0.0
      %9047 = vmatpush2.msra.mxu0 0.0
      %9048 = vmatprep.subr.mxu0 0.0
      %9049 = vmatpush2.msra.mxu0 0.0
      %9050 = vmatprep.subr.mxu0 0.0
      %9051 = vmatpush2.msra.mxu0 0.0
      %9052 = vmatprep.subr.mxu0 0.0
      %9053 = vmatpush2.msra.mxu0 0.0
      %9054 = vmatprep.subr.mxu0 0.0
      %9055 = vmatpush2.msra.mxu0 0.0
      %9056 = vmatprep.subr.mxu0 0.0
      %9057 = vmatpush2.msra.mxu0 0.0
      %9058 = vmatprep.subr.mxu0 0.0
      %9059 = vmatpush2.msra.mxu0 0.0
      %9060 = vmatprep.subr.mxu0 0.0
      %9061 = vmatpush2.msra.mxu0 0.0
      %9062 = vmatprep.mubr.f32.mxu0 0.0
      %9063 = vmatmul.mubr.f32.gmra.mxu0 %v8987
      %v9064 = vpop.f32.mrf.mxu0
      %v9065 = vadd.f32 %v8969, %v9064
      %v9066 = vpop.f32.mrf.mxu0
      %9067 = vmatprep.mubr.f32.mxu0 0.0
      %9068 = vmatmul.mubr.f32.gmra.mxu0 %v8990
      %v9069 = vpop.f32.mrf.mxu0
      %v9070 = vadd.f32 %v8974, %v9069
      %v9071 = vpop.f32.mrf.mxu0
      %9072 = vmatprep.mubr.f32.mxu0 0.0
      %9073 = vmatmul.mubr.f32.gmra.mxu0 %v8993
      %v9074 = vpop.f32.mrf.mxu0
      %v9075 = vadd.f32 %v8979, %v9074
      %v9076 = vpop.f32.mrf.mxu0
      %9077 = vmatprep.mubr.f32.mxu0 0.0
      %9078 = vmatmul.mubr.f32.gmra.mxu0 %v8996
      %v9079 = vpop.f32.mrf.mxu0
      %v9080 = vadd.f32 %v8984, %v9079
      %v9081 = vpop.f32.mrf.mxu0
      %9082 = vdwg.mxu0
      %v9083 = vmax.f32 %v9065, 0.0
      %v9084 = vmax.f32 %v9070, 0.0
      %v9085 = vmax.f32 %v9075, 0.0
      %v9086 = vmax.f32 %v9080, 0.0
      %v9087 = vld [vmem:[%s16] sm:$0xff]
      %v9088 = vld [vmem:[%s17] sm:$0xff]
      %9090 = vset.pattern.permute.xlu0 0
      %9091 = vperm.xlu0 %9090, %v9088
      %v9092 = vpop.permute.xlu0 %9091
      %v9095 = vsel %vm4660, %v9087, 0
      %9097 = vmatprep.subr.mxu0 0.0
      %9098 = vmatpush1.msra.mxu0 0.0
      %9099 = vmatprep.subr.mxu0 0.0
      %9100 = vmatpush1.msra.mxu0 0.0
      %9101 = vmatprep.subr.mxu0 0.0
      %9102 = vmatpush1.msra.mxu0 0.0
      %9103 = vmatprep.subr.mxu0 0.0
      %9104 = vmatpush1.msra.mxu0 0.0
      %9105 = vmatprep.subr.mxu0 0.0
      %9106 = vmatpush1.msra.mxu0 0.0
      %9107 = vmatprep.subr.mxu0 0.0
      %9108 = vmatpush1.msra.mxu0 0.0
      %9109 = vmatprep.subr.mxu0 0.0
      %9110 = vmatpush1.msra.mxu0 0.0
      %9111 = vmatprep.subr.mxu0 0.0
      %9112 = vmatpush1.msra.mxu0 0.0
      %9113 = vmatprep.subr.mxu0 0.0
      %9114 = vmatpush1.msra.mxu0 0.0
      %9115 = vmatprep.subr.mxu0 0.0
      %9116 = vmatpush1.msra.mxu0 0.0
      %9117 = vmatprep.subr.mxu0 0.0
      %9118 = vmatpush1.msra.mxu0 0.0
      %9119 = vmatprep.subr.mxu0 0.0
      %9120 = vmatpush1.msra.mxu0 0.0
      %9121 = vmatprep.subr.mxu0 0.0
      %9122 = vmatpush1.msra.mxu0 %v9086
      %9123 = vmatprep.subr.mxu0 0.0
      %9124 = vmatpush1.msra.mxu0 %v9085
      %9125 = vmatprep.subr.mxu0 0.0
      %9126 = vmatpush1.msra.mxu0 %v9084
      %9127 = vmatprep.subr.mxu0 0.0
      %9128 = vmatpush1.msra.mxu0 %v9083
      %9129 = vmatprep.subr.mxu0 0.0
      %9130 = vmatpush2.msra.mxu0 0.0
      %9131 = vmatprep.subr.mxu0 0.0
      %9132 = vmatpush2.msra.mxu0 0.0
      %9133 = vmatprep.subr.mxu0 0.0
      %9134 = vmatpush2.msra.mxu0 0.0
      %9135 = vmatprep.subr.mxu0 0.0
      %9136 = vmatpush2.msra.mxu0 0.0
      %9137 = vmatprep.subr.mxu0 0.0
      %9138 = vmatpush2.msra.mxu0 0.0
      %9139 = vmatprep.subr.mxu0 0.0
      %9140 = vmatpush2.msra.mxu0 0.0
      %9141 = vmatprep.subr.mxu0 0.0
      %9142 = vmatpush2.msra.mxu0 0.0
      %9143 = vmatprep.subr.mxu0 0.0
      %9144 = vmatpush2.msra.mxu0 0.0
      %9145 = vmatprep.subr.mxu0 0.0
      %9146 = vmatpush2.msra.mxu0 0.0
      %9147 = vmatprep.subr.mxu0 0.0
      %9148 = vmatpush2.msra.mxu0 0.0
      %9149 = vmatprep.subr.mxu0 0.0
      %9150 = vmatpush2.msra.mxu0 0.0
      %9151 = vmatprep.subr.mxu0 0.0
      %9152 = vmatpush2.msra.mxu0 0.0
      %9153 = vmatprep.subr.mxu0 0.0
      %9154 = vmatpush2.msra.mxu0 0.0
      %9155 = vmatprep.subr.mxu0 0.0
      %9156 = vmatpush2.msra.mxu0 0.0
      %9157 = vmatprep.subr.mxu0 0.0
      %9158 = vmatpush2.msra.mxu0 0.0
      %9159 = vmatprep.subr.mxu0 0.0
      %9160 = vmatpush2.msra.mxu0 0.0
      %9161 = vmatprep.mubr.f32.mxu0 0.0
      %9162 = vmatmul.mubr.f32.gmra.mxu0 %v9095
      %v9163 = vpop.f32.mrf.mxu0
      %v9164 = vadd.f32 %v9092, %v9163
      %v9165 = vpop.f32.mrf.mxu0
      %9166 = vdwg.mxu0
      %v9167 = vld [vmem:[%s18] sm:$0xf]
      %v9168 = vld [vmem:[%s19] sm:$0xf]
      %9170 = vset.pattern.permute.xlu0 0
      %9171 = vperm.xlu0 %9170, %v9168
      %v9172 = vpop.permute.xlu0 %9171
      %v9175 = vsel %vm8775, %v9167, 0
      %9177 = vmatprep.subr.mxu0 0.0
      %9178 = vmatpush1.msra.mxu0 0.0
      %9179 = vmatprep.subr.mxu0 0.0
      %9180 = vmatpush1.msra.mxu0 0.0
      %9181 = vmatprep.subr.mxu0 0.0
      %9182 = vmatpush1.msra.mxu0 0.0
      %9183 = vmatprep.subr.mxu0 0.0
      %9184 = vmatpush1.msra.mxu0 0.0
      %9185 = vmatprep.subr.mxu0 0.0
      %9186 = vmatpush1.msra.mxu0 0.0
      %9187 = vmatprep.subr.mxu0 0.0
      %9188 = vmatpush1.msra.mxu0 0.0
      %9189 = vmatprep.subr.mxu0 0.0
      %9190 = vmatpush1.msra.mxu0 0.0
      %9191 = vmatprep.subr.mxu0 0.0
      %9192 = vmatpush1.msra.mxu0 0.0
      %9193 = vmatprep.subr.mxu0 0.0
      %9194 = vmatpush1.msra.mxu0 0.0
      %9195 = vmatprep.subr.mxu0 0.0
      %9196 = vmatpush1.msra.mxu0 0.0
      %9197 = vmatprep.subr.mxu0 0.0
      %9198 = vmatpush1.msra.mxu0 0.0
      %9199 = vmatprep.subr.mxu0 0.0
      %9200 = vmatpush1.msra.mxu0 0.0
      %9201 = vmatprep.subr.mxu0 0.0
      %9202 = vmatpush1.msra.mxu0 0.0
      %9203 = vmatprep.subr.mxu0 0.0
      %9204 = vmatpush1.msra.mxu0 0.0
      %9205 = vmatprep.subr.mxu0 0.0
      %9206 = vmatpush1.msra.mxu0 0.0
      %9207 = vmatprep.subr.mxu0 0.0
      %9208 = vmatpush1.msra.mxu0 %v9164
      %9209 = vmatprep.subr.mxu0 0.0
      %9210 = vmatpush2.msra.mxu0 0.0
      %9211 = vmatprep.subr.mxu0 0.0
      %9212 = vmatpush2.msra.mxu0 0.0
      %9213 = vmatprep.subr.mxu0 0.0
      %9214 = vmatpush2.msra.mxu0 0.0
      %9215 = vmatprep.subr.mxu0 0.0
      %9216 = vmatpush2.msra.mxu0 0.0
      %9217 = vmatprep.subr.mxu0 0.0
      %9218 = vmatpush2.msra.mxu0 0.0
      %9219 = vmatprep.subr.mxu0 0.0
      %9220 = vmatpush2.msra.mxu0 0.0
      %9221 = vmatprep.subr.mxu0 0.0
      %9222 = vmatpush2.msra.mxu0 0.0
      %9223 = vmatprep.subr.mxu0 0.0
      %9224 = vmatpush2.msra.mxu0 0.0
      %9225 = vmatprep.subr.mxu0 0.0
      %9226 = vmatpush2.msra.mxu0 0.0
      %9227 = vmatprep.subr.mxu0 0.0
      %9228 = vmatpush2.msra.mxu0 0.0
      %9229 = vmatprep.subr.mxu0 0.0
      %9230 = vmatpush2.msra.mxu0 0.0
      %9231 = vmatprep.subr.mxu0 0.0
      %9232 = vmatpush2.msra.mxu0 0.0
      %9233 = vmatprep.subr.mxu0 0.0
      %9234 = vmatpush2.msra.mxu0 0.0
      %9235 = vmatprep.subr.mxu0 0.0
      %9236 = vmatpush2.msra.mxu0 0.0
      %9237 = vmatprep.subr.mxu0 0.0
      %9238 = vmatpush2.msra.mxu0 0.0
      %9239 = vmatprep.subr.mxu0 0.0
      %9240 = vmatpush2.msra.mxu0 0.0
      %9241 = vmatprep.mubr.f32.mxu0 0.0
      %9242 = vmatmul.mubr.f32.gmra.mxu0 %v9175
      %v9243 = vpop.f32.mrf.mxu0
      %v9244 = vadd.f32 %v9172, %v9243
      %v9245 = vpop.f32.mrf.mxu0
      %9246 = vdwg.mxu0
      %9247 = vst [vmem:[%s667] sm:$0xf] %v9244
      %p9248 = scmp.lt.s32.totalorder %s33, 1
      %s9249 = scalar_select %p9248, %s33, 1
      %s9250 = smul.addr %s9249, 16
      %s9251 = smul.addr %s9250, 8
      %s9252 = scalar_lea.vmem %s20, %s9251
      %p9253 = scmp.lt.s32.totalorder %s33, 1
      %s9254 = scalar_select %p9253, %s33, 1
      %s9255 = smul.addr %s9254, 4
      %s9256 = scalar_lea.vmem %s21, %s9255
      // Predicated region
      $region101: #{pallas_forward.1} parent=99 // pred_check
        %p9257 = pneg %p476
      $region102: #{pallas_forward.1} parent=99 // pred_check_branch
        %9259 = sbr.rel (%p9257) target = $region104
      $region103: #{pallas_forward.1} parent=99 // pred_region
        _
      $region104: #{pallas_forward.1} parent=99 // pred_fallthru
        _
      // Predicated region
      $region105: #{pallas_forward.1} parent=99 // pred_check
        %p9260 = pneg %p502
      $region106: #{pallas_forward.1} parent=99 // pred_check_branch
        %9262 = sbr.rel (%p9260) target = $region108
      $region107: #{pallas_forward.1} parent=99 // pred_region
        _
      $region108: #{pallas_forward.1} parent=99 // pred_fallthru
        _
    $region100: #{pallas_forward.1} parent=5 // pred_fallthru
      _
    %p9263 = scmp.le.s32.totalorder 2, %s28
    // Predicated region
    $region109: #{pallas_forward.1} parent=5 // pred_check
      %p9264 = pneg %p9263
    $region110: #{pallas_forward.1} parent=5 // pred_check_branch
      %9266 = sbr.rel (%p9264) target = $region112
    $region111: #{pallas_forward.1} parent=5 // pred_region
      %s9267 = ssub.s32 %s28, 2
      // Predicated region
      $region113: #{pallas_forward.1} parent=111 // pred_check
        %p9268 = pneg %p482
      $region114: #{pallas_forward.1} parent=111 // pred_check_branch
        %9270 = sbr.rel (%p9268) target = $region116
      $region115: #{pallas_forward.1} parent=111 // pred_region
        %p9271 = scmp.lt.s32.totalorder %s34, 1
        %s9272 = scalar_select %p9271, %s34, 1
        %s9273 = smul.addr %s9272, 16
        %s9274 = smul.addr %s9273, 8
        %s9275 = scalar_lea.vmem %s20, %s9274
      $region116: #{pallas_forward.1} parent=111 // pred_fallthru
        _
      // Predicated region
      $region117: #{pallas_forward.1} parent=111 // pred_check
        %p9276 = pneg %p508
      $region118: #{pallas_forward.1} parent=111 // pred_check_branch
        %9278 = sbr.rel (%p9276) target = $region120
      $region119: #{pallas_forward.1} parent=111 // pred_region
        %p9279 = scmp.lt.s32.totalorder %s34, 1
        %s9280 = scalar_select %p9279, %s34, 1
        %s9281 = smul.addr %s9280, 4
        %s9282 = scalar_lea.vmem %s21, %s9281
      $region120: #{pallas_forward.1} parent=111 // pred_fallthru
        _
    $region112: #{pallas_forward.1} parent=5 // pred_fallthru
      _
  $region6: #{pallas_forward.1} parent=0 // loop_footer
    %s32 = sadd.s32 1, %s28
  $region7: #{pallas_forward.1} parent=0 // loop_footer_branch
    %27 = sbr.rel target = $region3
  $region8: #{pallas_forward.1} parent=0 // loop_exit
    _

</llo_original>
